<compile_context>
chip_gen: v6e
topology: v6e:2x2x1
jax: 0.10.0
libtpu: 0.0.40
codegen_flags: <defaults>
</compile_context>

<pallas_src>
import jax
import jax.numpy as jnp
from jax.experimental import pallas as pl
from jax.experimental.pallas import tpu as pltpu

KH = KW = 3  # ConvTranspose2d kernel size


def _fused_kernel(w_ref, xr_ref, o_ref):
    # w_ref : SMEM, flat (Cout*9,) raw ConvTranspose2d weight, index c*9+kh*3+kw
    # xr_ref: VMEM, (N, 1, 3H, 2W) nearest-upsampled input (5, 1, 66, 24)
    # o_ref : VMEM, (N, Cout, 60, 20) final output (written once, final layout)
    N = xr_ref.shape[0]
    Cout, HU, WU = o_ref.shape[1], o_ref.shape[2], o_ref.shape[3]

    # Flipped weights, read once from SMEM (45 scalars), hoisted out of loops.
    # wv[c][a*3+b] == W[0, c, 2-a, 2-b]
    wv = [
        [w_ref[c * (KH * KW) + (KH - 1 - a) * KW + (KW - 1 - b)]
         for a in range(KH) for b in range(KW)]
        for c in range(Cout)
    ]

    for n in range(N):
        # Keep only Cout accumulators live; iterate the 9 taps outermost so a
        # single (60, 20) window is live at a time (avoids vreg spills).
        accs = [None] * Cout
        for a in range(KH):
            for b in range(KW):
                t = a * KW + b
                win = xr_ref[n, 0, 3 * a:3 * a + HU, 2 * b:2 * b + WU]  # (60,20)
                for c in range(Cout):
                    term = win * wv[c][t]
                    accs[c] = term if accs[c] is None else accs[c] + term

        for c in range(Cout):
            acc = accs[c]                                   # conv-t output (upsampled grid)
            y = jnp.where(acc > 0, acc, acc * 0.345)        # torch.where(x1>0, x1, 0.345*x1)
            th = jnp.tanh(y)                                # tanh(x4)**2
            o_ref[n, c] = (th * th).astype(o_ref.dtype)     # direct store, final NCHW layout


def _model_forward(x, w):
    """x: (N, 1, H, W) f32; w: ConvTranspose2d weight (1, Cout, 3, 3) f32."""
    N, Cin, H, W = x.shape
    assert Cin == 1
    Cout = w.shape[1]
    HO, WO = H - (KH - 1), W - (KW - 1)          # 22->20, 12->10
    HU, WU = 3 * HO, 2 * WO                      # 60, 20

    # Exact nearest-neighbor repeat of the 5 KB input (xr[I,J] = x[I//3, J//2]).
    # This is the upsample moved to the input side of the pointwise-after-conv
    # pipeline; the kernel then emits the final tensor with no post ops.
    xr = jnp.repeat(jnp.repeat(x, 3, axis=2), 2, axis=3)    # (N, 1, 66, 24)

    w_flat = w.reshape(-1).astype(jnp.float32)               # index c*9 + kh*3 + kw

    out = pl.pallas_call(
        _fused_kernel,
        out_shape=jax.ShapeDtypeStruct((N, Cout, HU, WU), x.dtype),
        grid_spec=pltpu.PrefetchScalarGridSpec(
            num_scalar_prefetch=0,
            grid=(1,),                                       # single grid step
            in_specs=[
                pl.BlockSpec(memory_space=pltpu.MemorySpace.SMEM),      # weights
                pl.BlockSpec((N, 1, 3 * H, 2 * W), lambda i: (0, 0, 0, 0)),
            ],
            out_specs=pl.BlockSpec((N, Cout, HU, WU), lambda i: (0, 0, 0, 0)),
        ),
        compiler_params=pltpu.CompilerParams(
            dimension_semantics=("arbitrary",)),
    )(w_flat, xr)
    return out


# One dispatch for the whole forward pass (tiny input repeat + pallas kernel).
model_forward = jax.jit(_model_forward)


def _reference(x, w):
    """Pure-JAX reference: conv-as-correlation at (20,10), then output repeat."""
    N, _, H, W = x.shape
    Cout = w.shape[1]
    HO, WO = H - (KH - 1), W - (KW - 1)
    wf = w[0, :, ::-1, ::-1]                                 # wf[c,a,b] = W[0,c,2-a,2-b]
    acc = jnp.zeros((N, Cout, HO, WO), jnp.float32)
    for a in range(KH):
        for b in range(KW):
            acc = acc + x[:, :, a:a + HO, b:b + WO] * wf[:, a, b][None, :, None, None]
    y = jnp.where(acc > 0, acc, acc * 0.345)
    g = jnp.tanh(y) ** 2
    return jnp.repeat(jnp.repeat(g, 3, axis=2), 2, axis=3)


if __name__ == "__main__":
    key = jax.random.PRNGKey(0)
    kx, kw = jax.random.split(key)

    # Input matching the module's driver: torch.randn(5, 1, 22, 12)
    x = jax.random.normal(kx, (5, 1, 22, 12), dtype=jnp.float32)
    # Deterministic ConvTranspose2d weight, shape (in_ch=1, out_ch=5, 3, 3)
    w = 0.1 * jax.random.normal(kw, (1, 5, 3, 3), dtype=jnp.float32)

    out = model_forward(x, w)
    out = jax.block_until_ready(out)

    assert out.shape == (5, 5, 60, 20), out.shape
    assert bool(jnp.all(jnp.isfinite(out)))

    ref = jax.block_until_ready(_reference(x, w))
    assert bool(jnp.allclose(out, ref, atol=1e-4, rtol=1e-4)), (
        float(jnp.max(jnp.abs(out - ref))))

    print("KERNEL_OK")
</pallas_src>

<mosaic_0001>
module attributes {stable_mosaic.version = 11 : i64} {
  func.func @_fused_kernel(%arg0: i32, %arg1: memref<45xf32, #tpu.memory_space<smem>>, %arg2: memref<5x1x66x24xf32, #tpu.memory_space<vmem>>, %arg3: memref<5x5x60x20xf32, #tpu.memory_space<vmem>>) attributes {dimension_semantics = [#tpu.dimension_semantics<arbitrary>], iteration_bounds = array<i64: 1>, scalar_prefetch = 0 : i64, scratch_operands = 0 : i64, tpu.core_type = #tpu.core_type<tc>, window_params = [{transform_indices = @transform_0, window_bounds = array<i64: 45>}, {pipeline_mode = #tpu.pipeline_mode<synchronous>, transform_indices = @transform_1, window_bounds = array<i64: 5, 1, 66, 24>}, {pipeline_mode = #tpu.pipeline_mode<synchronous>, transform_indices = @transform_2, window_bounds = array<i64: 5, 5, 60, 20>}]} {
    %c8 = arith.constant 8 : index
    %0 = memref.load %arg1[%c8] : memref<45xf32, #tpu.memory_space<smem>>
    %c7 = arith.constant 7 : index
    %1 = memref.load %arg1[%c7] : memref<45xf32, #tpu.memory_space<smem>>
    %c6 = arith.constant 6 : index
    %2 = memref.load %arg1[%c6] : memref<45xf32, #tpu.memory_space<smem>>
    %c5 = arith.constant 5 : index
    %3 = memref.load %arg1[%c5] : memref<45xf32, #tpu.memory_space<smem>>
    %c4 = arith.constant 4 : index
    %4 = memref.load %arg1[%c4] : memref<45xf32, #tpu.memory_space<smem>>
    %c3 = arith.constant 3 : index
    %5 = memref.load %arg1[%c3] : memref<45xf32, #tpu.memory_space<smem>>
    %c2 = arith.constant 2 : index
    %6 = memref.load %arg1[%c2] : memref<45xf32, #tpu.memory_space<smem>>
    %c1 = arith.constant 1 : index
    %7 = memref.load %arg1[%c1] : memref<45xf32, #tpu.memory_space<smem>>
    %c0 = arith.constant 0 : index
    %8 = memref.load %arg1[%c0] : memref<45xf32, #tpu.memory_space<smem>>
    %c17 = arith.constant 17 : index
    %9 = memref.load %arg1[%c17] : memref<45xf32, #tpu.memory_space<smem>>
    %c16 = arith.constant 16 : index
    %10 = memref.load %arg1[%c16] : memref<45xf32, #tpu.memory_space<smem>>
    %c15 = arith.constant 15 : index
    %11 = memref.load %arg1[%c15] : memref<45xf32, #tpu.memory_space<smem>>
    %c14 = arith.constant 14 : index
    %12 = memref.load %arg1[%c14] : memref<45xf32, #tpu.memory_space<smem>>
    %c13 = arith.constant 13 : index
    %13 = memref.load %arg1[%c13] : memref<45xf32, #tpu.memory_space<smem>>
    %c12 = arith.constant 12 : index
    %14 = memref.load %arg1[%c12] : memref<45xf32, #tpu.memory_space<smem>>
    %c11 = arith.constant 11 : index
    %15 = memref.load %arg1[%c11] : memref<45xf32, #tpu.memory_space<smem>>
    %c10 = arith.constant 10 : index
    %16 = memref.load %arg1[%c10] : memref<45xf32, #tpu.memory_space<smem>>
    %c9 = arith.constant 9 : index
    %17 = memref.load %arg1[%c9] : memref<45xf32, #tpu.memory_space<smem>>
    %c26 = arith.constant 26 : index
    %18 = memref.load %arg1[%c26] : memref<45xf32, #tpu.memory_space<smem>>
    %c25 = arith.constant 25 : index
    %19 = memref.load %arg1[%c25] : memref<45xf32, #tpu.memory_space<smem>>
    %c24 = arith.constant 24 : index
    %20 = memref.load %arg1[%c24] : memref<45xf32, #tpu.memory_space<smem>>
    %c23 = arith.constant 23 : index
    %21 = memref.load %arg1[%c23] : memref<45xf32, #tpu.memory_space<smem>>
    %c22 = arith.constant 22 : index
    %22 = memref.load %arg1[%c22] : memref<45xf32, #tpu.memory_space<smem>>
    %c21 = arith.constant 21 : index
    %23 = memref.load %arg1[%c21] : memref<45xf32, #tpu.memory_space<smem>>
    %c20 = arith.constant 20 : index
    %24 = memref.load %arg1[%c20] : memref<45xf32, #tpu.memory_space<smem>>
    %c19 = arith.constant 19 : index
    %25 = memref.load %arg1[%c19] : memref<45xf32, #tpu.memory_space<smem>>
    %c18 = arith.constant 18 : index
    %26 = memref.load %arg1[%c18] : memref<45xf32, #tpu.memory_space<smem>>
    %c35 = arith.constant 35 : index
    %27 = memref.load %arg1[%c35] : memref<45xf32, #tpu.memory_space<smem>>
    %c34 = arith.constant 34 : index
    %28 = memref.load %arg1[%c34] : memref<45xf32, #tpu.memory_space<smem>>
    %c33 = arith.constant 33 : index
    %29 = memref.load %arg1[%c33] : memref<45xf32, #tpu.memory_space<smem>>
    %c32 = arith.constant 32 : index
    %30 = memref.load %arg1[%c32] : memref<45xf32, #tpu.memory_space<smem>>
    %c31 = arith.constant 31 : index
    %31 = memref.load %arg1[%c31] : memref<45xf32, #tpu.memory_space<smem>>
    %c30 = arith.constant 30 : index
    %32 = memref.load %arg1[%c30] : memref<45xf32, #tpu.memory_space<smem>>
    %c29 = arith.constant 29 : index
    %33 = memref.load %arg1[%c29] : memref<45xf32, #tpu.memory_space<smem>>
    %c28 = arith.constant 28 : index
    %34 = memref.load %arg1[%c28] : memref<45xf32, #tpu.memory_space<smem>>
    %c27 = arith.constant 27 : index
    %35 = memref.load %arg1[%c27] : memref<45xf32, #tpu.memory_space<smem>>
    %c44 = arith.constant 44 : index
    %36 = memref.load %arg1[%c44] : memref<45xf32, #tpu.memory_space<smem>>
    %c43 = arith.constant 43 : index
    %37 = memref.load %arg1[%c43] : memref<45xf32, #tpu.memory_space<smem>>
    %c42 = arith.constant 42 : index
    %38 = memref.load %arg1[%c42] : memref<45xf32, #tpu.memory_space<smem>>
    %c41 = arith.constant 41 : index
    %39 = memref.load %arg1[%c41] : memref<45xf32, #tpu.memory_space<smem>>
    %c40 = arith.constant 40 : index
    %40 = memref.load %arg1[%c40] : memref<45xf32, #tpu.memory_space<smem>>
    %c39 = arith.constant 39 : index
    %41 = memref.load %arg1[%c39] : memref<45xf32, #tpu.memory_space<smem>>
    %c38 = arith.constant 38 : index
    %42 = memref.load %arg1[%c38] : memref<45xf32, #tpu.memory_space<smem>>
    %c37 = arith.constant 37 : index
    %43 = memref.load %arg1[%c37] : memref<45xf32, #tpu.memory_space<smem>>
    %c36 = arith.constant 36 : index
    %44 = memref.load %arg1[%c36] : memref<45xf32, #tpu.memory_space<smem>>
    %c0_0 = arith.constant 0 : index
    %c0_1 = arith.constant 0 : index
    %c0_2 = arith.constant 0 : index
    %c0_3 = arith.constant 0 : index
    %45 = vector.load %arg2[%c0_0, %c0_1, %c0_2, %c0_3] : memref<5x1x66x24xf32, #tpu.memory_space<vmem>>, vector<1x1x60x20xf32>
    %46 = vector.shape_cast %45 : vector<1x1x60x20xf32> to vector<60x20xf32>
    %47 = vector.broadcast %0 : f32 to vector<60x20xf32>
    %48 = arith.mulf %46, %47 : vector<60x20xf32>
    %49 = vector.broadcast %9 : f32 to vector<60x20xf32>
    %50 = arith.mulf %46, %49 : vector<60x20xf32>
    %51 = vector.broadcast %18 : f32 to vector<60x20xf32>
    %52 = arith.mulf %46, %51 : vector<60x20xf32>
    %53 = vector.broadcast %27 : f32 to vector<60x20xf32>
    %54 = arith.mulf %46, %53 : vector<60x20xf32>
    %55 = vector.broadcast %36 : f32 to vector<60x20xf32>
    %56 = arith.mulf %46, %55 : vector<60x20xf32>
    %c0_4 = arith.constant 0 : index
    %c0_5 = arith.constant 0 : index
    %c0_6 = arith.constant 0 : index
    %c2_7 = arith.constant 2 : index
    %57 = vector.load %arg2[%c0_4, %c0_5, %c0_6, %c2_7] : memref<5x1x66x24xf32, #tpu.memory_space<vmem>>, vector<1x1x60x20xf32>
    %58 = vector.shape_cast %57 : vector<1x1x60x20xf32> to vector<60x20xf32>
    %59 = vector.broadcast %1 : f32 to vector<60x20xf32>
    %60 = arith.mulf %58, %59 : vector<60x20xf32>
    %61 = arith.addf %48, %60 : vector<60x20xf32>
    %62 = vector.broadcast %10 : f32 to vector<60x20xf32>
    %63 = arith.mulf %58, %62 : vector<60x20xf32>
    %64 = arith.addf %50, %63 : vector<60x20xf32>
    %65 = vector.broadcast %19 : f32 to vector<60x20xf32>
    %66 = arith.mulf %58, %65 : vector<60x20xf32>
    %67 = arith.addf %52, %66 : vector<60x20xf32>
    %68 = vector.broadcast %28 : f32 to vector<60x20xf32>
    %69 = arith.mulf %58, %68 : vector<60x20xf32>
    %70 = arith.addf %54, %69 : vector<60x20xf32>
    %71 = vector.broadcast %37 : f32 to vector<60x20xf32>
    %72 = arith.mulf %58, %71 : vector<60x20xf32>
    %73 = arith.addf %56, %72 : vector<60x20xf32>
    %c0_8 = arith.constant 0 : index
    %c0_9 = arith.constant 0 : index
    %c0_10 = arith.constant 0 : index
    %c4_11 = arith.constant 4 : index
    %74 = vector.load %arg2[%c0_8, %c0_9, %c0_10, %c4_11] : memref<5x1x66x24xf32, #tpu.memory_space<vmem>>, vector<1x1x60x20xf32>
    %75 = vector.shape_cast %74 : vector<1x1x60x20xf32> to vector<60x20xf32>
    %76 = vector.broadcast %2 : f32 to vector<60x20xf32>
    %77 = arith.mulf %75, %76 : vector<60x20xf32>
    %78 = arith.addf %61, %77 : vector<60x20xf32>
    %79 = vector.broadcast %11 : f32 to vector<60x20xf32>
    %80 = arith.mulf %75, %79 : vector<60x20xf32>
    %81 = arith.addf %64, %80 : vector<60x20xf32>
    %82 = vector.broadcast %20 : f32 to vector<60x20xf32>
    %83 = arith.mulf %75, %82 : vector<60x20xf32>
    %84 = arith.addf %67, %83 : vector<60x20xf32>
    %85 = vector.broadcast %29 : f32 to vector<60x20xf32>
    %86 = arith.mulf %75, %85 : vector<60x20xf32>
    %87 = arith.addf %70, %86 : vector<60x20xf32>
    %88 = vector.broadcast %38 : f32 to vector<60x20xf32>
    %89 = arith.mulf %75, %88 : vector<60x20xf32>
    %90 = arith.addf %73, %89 : vector<60x20xf32>
    %c0_12 = arith.constant 0 : index
    %c0_13 = arith.constant 0 : index
    %c3_14 = arith.constant 3 : index
    %c0_15 = arith.constant 0 : index
    %91 = vector.load %arg2[%c0_12, %c0_13, %c3_14, %c0_15] : memref<5x1x66x24xf32, #tpu.memory_space<vmem>>, vector<1x1x60x20xf32>
    %92 = vector.shape_cast %91 : vector<1x1x60x20xf32> to vector<60x20xf32>
    %93 = vector.broadcast %3 : f32 to vector<60x20xf32>
    %94 = arith.mulf %92, %93 : vector<60x20xf32>
    %95 = arith.addf %78, %94 : vector<60x20xf32>
    %96 = vector.broadcast %12 : f32 to vector<60x20xf32>
    %97 = arith.mulf %92, %96 : vector<60x20xf32>
    %98 = arith.addf %81, %97 : vector<60x20xf32>
    %99 = vector.broadcast %21 : f32 to vector<60x20xf32>
    %100 = arith.mulf %92, %99 : vector<60x20xf32>
    %101 = arith.addf %84, %100 : vector<60x20xf32>
    %102 = vector.broadcast %30 : f32 to vector<60x20xf32>
    %103 = arith.mulf %92, %102 : vector<60x20xf32>
    %104 = arith.addf %87, %103 : vector<60x20xf32>
    %105 = vector.broadcast %39 : f32 to vector<60x20xf32>
    %106 = arith.mulf %92, %105 : vector<60x20xf32>
    %107 = arith.addf %90, %106 : vector<60x20xf32>
    %c0_16 = arith.constant 0 : index
    %c0_17 = arith.constant 0 : index
    %c3_18 = arith.constant 3 : index
    %c2_19 = arith.constant 2 : index
    %108 = vector.load %arg2[%c0_16, %c0_17, %c3_18, %c2_19] : memref<5x1x66x24xf32, #tpu.memory_space<vmem>>, vector<1x1x60x20xf32>
    %109 = vector.shape_cast %108 : vector<1x1x60x20xf32> to vector<60x20xf32>
    %110 = vector.broadcast %4 : f32 to vector<60x20xf32>
    %111 = arith.mulf %109, %110 : vector<60x20xf32>
    %112 = arith.addf %95, %111 : vector<60x20xf32>
    %113 = vector.broadcast %13 : f32 to vector<60x20xf32>
    %114 = arith.mulf %109, %113 : vector<60x20xf32>
    %115 = arith.addf %98, %114 : vector<60x20xf32>
    %116 = vector.broadcast %22 : f32 to vector<60x20xf32>
    %117 = arith.mulf %109, %116 : vector<60x20xf32>
    %118 = arith.addf %101, %117 : vector<60x20xf32>
    %119 = vector.broadcast %31 : f32 to vector<60x20xf32>
    %120 = arith.mulf %109, %119 : vector<60x20xf32>
    %121 = arith.addf %104, %120 : vector<60x20xf32>
    %122 = vector.broadcast %40 : f32 to vector<60x20xf32>
    %123 = arith.mulf %109, %122 : vector<60x20xf32>
    %124 = arith.addf %107, %123 : vector<60x20xf32>
    %c0_20 = arith.constant 0 : index
    %c0_21 = arith.constant 0 : index
    %c3_22 = arith.constant 3 : index
    %c4_23 = arith.constant 4 : index
    %125 = vector.load %arg2[%c0_20, %c0_21, %c3_22, %c4_23] : memref<5x1x66x24xf32, #tpu.memory_space<vmem>>, vector<1x1x60x20xf32>
    %126 = vector.shape_cast %125 : vector<1x1x60x20xf32> to vector<60x20xf32>
    %127 = vector.broadcast %5 : f32 to vector<60x20xf32>
    %128 = arith.mulf %126, %127 : vector<60x20xf32>
    %129 = arith.addf %112, %128 : vector<60x20xf32>
    %130 = vector.broadcast %14 : f32 to vector<60x20xf32>
    %131 = arith.mulf %126, %130 : vector<60x20xf32>
    %132 = arith.addf %115, %131 : vector<60x20xf32>
    %133 = vector.broadcast %23 : f32 to vector<60x20xf32>
    %134 = arith.mulf %126, %133 : vector<60x20xf32>
    %135 = arith.addf %118, %134 : vector<60x20xf32>
    %136 = vector.broadcast %32 : f32 to vector<60x20xf32>
    %137 = arith.mulf %126, %136 : vector<60x20xf32>
    %138 = arith.addf %121, %137 : vector<60x20xf32>
    %139 = vector.broadcast %41 : f32 to vector<60x20xf32>
    %140 = arith.mulf %126, %139 : vector<60x20xf32>
    %141 = arith.addf %124, %140 : vector<60x20xf32>
    %c0_24 = arith.constant 0 : index
    %c0_25 = arith.constant 0 : index
    %c6_26 = arith.constant 6 : index
    %c0_27 = arith.constant 0 : index
    %142 = vector.load %arg2[%c0_24, %c0_25, %c6_26, %c0_27] : memref<5x1x66x24xf32, #tpu.memory_space<vmem>>, vector<1x1x60x20xf32>
    %143 = vector.shape_cast %142 : vector<1x1x60x20xf32> to vector<60x20xf32>
    %144 = vector.broadcast %6 : f32 to vector<60x20xf32>
    %145 = arith.mulf %143, %144 : vector<60x20xf32>
    %146 = arith.addf %129, %145 : vector<60x20xf32>
    %147 = vector.broadcast %15 : f32 to vector<60x20xf32>
    %148 = arith.mulf %143, %147 : vector<60x20xf32>
    %149 = arith.addf %132, %148 : vector<60x20xf32>
    %150 = vector.broadcast %24 : f32 to vector<60x20xf32>
    %151 = arith.mulf %143, %150 : vector<60x20xf32>
    %152 = arith.addf %135, %151 : vector<60x20xf32>
    %153 = vector.broadcast %33 : f32 to vector<60x20xf32>
    %154 = arith.mulf %143, %153 : vector<60x20xf32>
    %155 = arith.addf %138, %154 : vector<60x20xf32>
    %156 = vector.broadcast %42 : f32 to vector<60x20xf32>
    %157 = arith.mulf %143, %156 : vector<60x20xf32>
    %158 = arith.addf %141, %157 : vector<60x20xf32>
    %c0_28 = arith.constant 0 : index
    %c0_29 = arith.constant 0 : index
    %c6_30 = arith.constant 6 : index
    %c2_31 = arith.constant 2 : index
    %159 = vector.load %arg2[%c0_28, %c0_29, %c6_30, %c2_31] : memref<5x1x66x24xf32, #tpu.memory_space<vmem>>, vector<1x1x60x20xf32>
    %160 = vector.shape_cast %159 : vector<1x1x60x20xf32> to vector<60x20xf32>
    %161 = vector.broadcast %7 : f32 to vector<60x20xf32>
    %162 = arith.mulf %160, %161 : vector<60x20xf32>
    %163 = arith.addf %146, %162 : vector<60x20xf32>
    %164 = vector.broadcast %16 : f32 to vector<60x20xf32>
    %165 = arith.mulf %160, %164 : vector<60x20xf32>
    %166 = arith.addf %149, %165 : vector<60x20xf32>
    %167 = vector.broadcast %25 : f32 to vector<60x20xf32>
    %168 = arith.mulf %160, %167 : vector<60x20xf32>
    %169 = arith.addf %152, %168 : vector<60x20xf32>
    %170 = vector.broadcast %34 : f32 to vector<60x20xf32>
    %171 = arith.mulf %160, %170 : vector<60x20xf32>
    %172 = arith.addf %155, %171 : vector<60x20xf32>
    %173 = vector.broadcast %43 : f32 to vector<60x20xf32>
    %174 = arith.mulf %160, %173 : vector<60x20xf32>
    %175 = arith.addf %158, %174 : vector<60x20xf32>
    %c0_32 = arith.constant 0 : index
    %c0_33 = arith.constant 0 : index
    %c6_34 = arith.constant 6 : index
    %c4_35 = arith.constant 4 : index
    %176 = vector.load %arg2[%c0_32, %c0_33, %c6_34, %c4_35] : memref<5x1x66x24xf32, #tpu.memory_space<vmem>>, vector<1x1x60x20xf32>
    %177 = vector.shape_cast %176 : vector<1x1x60x20xf32> to vector<60x20xf32>
    %178 = vector.broadcast %8 : f32 to vector<60x20xf32>
    %179 = arith.mulf %177, %178 : vector<60x20xf32>
    %180 = arith.addf %163, %179 : vector<60x20xf32>
    %181 = vector.broadcast %17 : f32 to vector<60x20xf32>
    %182 = arith.mulf %177, %181 : vector<60x20xf32>
    %183 = arith.addf %166, %182 : vector<60x20xf32>
    %184 = vector.broadcast %26 : f32 to vector<60x20xf32>
    %185 = arith.mulf %177, %184 : vector<60x20xf32>
    %186 = arith.addf %169, %185 : vector<60x20xf32>
    %187 = vector.broadcast %35 : f32 to vector<60x20xf32>
    %188 = arith.mulf %177, %187 : vector<60x20xf32>
    %189 = arith.addf %172, %188 : vector<60x20xf32>
    %190 = vector.broadcast %44 : f32 to vector<60x20xf32>
    %191 = arith.mulf %177, %190 : vector<60x20xf32>
    %192 = arith.addf %175, %191 : vector<60x20xf32>
    %cst = arith.constant 0.000000e+00 : f32
    %193 = vector.broadcast %cst : f32 to vector<60x20xf32>
    %194 = arith.cmpf ogt, %180, %193 : vector<60x20xf32>
    %cst_36 = arith.constant 3.450000e-01 : f32
    %195 = vector.broadcast %cst_36 : f32 to vector<60x20xf32>
    %196 = arith.mulf %180, %195 : vector<60x20xf32>
    %197 = arith.select %194, %180, %196 : vector<60x20xi1>, vector<60x20xf32>
    %198 = math.tanh %197 : vector<60x20xf32>
    %199 = arith.mulf %198, %198 : vector<60x20xf32>
    %c0_37 = arith.constant 0 : index
    %c0_38 = arith.constant 0 : index
    %c0_39 = arith.constant 0 : index
    %c0_40 = arith.constant 0 : index
    %200 = vector.load %arg3[%c0_37, %c0_38, %c0_39, %c0_40] : memref<5x5x60x20xf32, #tpu.memory_space<vmem>>, vector<1x1x60x20xf32>
    %201 = vector.shape_cast %200 : vector<1x1x60x20xf32> to vector<60x20xf32>
    %202 = vector.shape_cast %199 : vector<60x20xf32> to vector<1x1x60x20xf32>
    tpu.vector_store %arg3[%c0_37, %c0_38, %c0_39, %c0_40], %202 {strides = array<i32>} : memref<5x5x60x20xf32, #tpu.memory_space<vmem>>, vector<1x1x60x20xf32>,
    %cst_41 = arith.constant 0.000000e+00 : f32
    %203 = vector.broadcast %cst_41 : f32 to vector<60x20xf32>
    %204 = arith.cmpf ogt, %183, %203 : vector<60x20xf32>
    %cst_42 = arith.constant 3.450000e-01 : f32
    %205 = vector.broadcast %cst_42 : f32 to vector<60x20xf32>
    %206 = arith.mulf %183, %205 : vector<60x20xf32>
    %207 = arith.select %204, %183, %206 : vector<60x20xi1>, vector<60x20xf32>
    %208 = math.tanh %207 : vector<60x20xf32>
    %209 = arith.mulf %208, %208 : vector<60x20xf32>
    %c0_43 = arith.constant 0 : index
    %c1_44 = arith.constant 1 : index
    %c0_45 = arith.constant 0 : index
    %c0_46 = arith.constant 0 : index
    %210 = vector.load %arg3[%c0_43, %c1_44, %c0_45, %c0_46] : memref<5x5x60x20xf32, #tpu.memory_space<vmem>>, vector<1x1x60x20xf32>
    %211 = vector.shape_cast %210 : vector<1x1x60x20xf32> to vector<60x20xf32>
    %212 = vector.shape_cast %209 : vector<60x20xf32> to vector<1x1x60x20xf32>
    tpu.vector_store %arg3[%c0_43, %c1_44, %c0_45, %c0_46], %212 {strides = array<i32>} : memref<5x5x60x20xf32, #tpu.memory_space<vmem>>, vector<1x1x60x20xf32>,
    %cst_47 = arith.constant 0.000000e+00 : f32
    %213 = vector.broadcast %cst_47 : f32 to vector<60x20xf32>
    %214 = arith.cmpf ogt, %186, %213 : vector<60x20xf32>
    %cst_48 = arith.constant 3.450000e-01 : f32
    %215 = vector.broadcast %cst_48 : f32 to vector<60x20xf32>
    %216 = arith.mulf %186, %215 : vector<60x20xf32>
    %217 = arith.select %214, %186, %216 : vector<60x20xi1>, vector<60x20xf32>
    %218 = math.tanh %217 : vector<60x20xf32>
    %219 = arith.mulf %218, %218 : vector<60x20xf32>
    %c0_49 = arith.constant 0 : index
    %c2_50 = arith.constant 2 : index
    %c0_51 = arith.constant 0 : index
    %c0_52 = arith.constant 0 : index
    %220 = vector.load %arg3[%c0_49, %c2_50, %c0_51, %c0_52] : memref<5x5x60x20xf32, #tpu.memory_space<vmem>>, vector<1x1x60x20xf32>
    %221 = vector.shape_cast %220 : vector<1x1x60x20xf32> to vector<60x20xf32>
    %222 = vector.shape_cast %219 : vector<60x20xf32> to vector<1x1x60x20xf32>
    tpu.vector_store %arg3[%c0_49, %c2_50, %c0_51, %c0_52], %222 {strides = array<i32>} : memref<5x5x60x20xf32, #tpu.memory_space<vmem>>, vector<1x1x60x20xf32>,
    %cst_53 = arith.constant 0.000000e+00 : f32
    %223 = vector.broadcast %cst_53 : f32 to vector<60x20xf32>
    %224 = arith.cmpf ogt, %189, %223 : vector<60x20xf32>
    %cst_54 = arith.constant 3.450000e-01 : f32
    %225 = vector.broadcast %cst_54 : f32 to vector<60x20xf32>
    %226 = arith.mulf %189, %225 : vector<60x20xf32>
    %227 = arith.select %224, %189, %226 : vector<60x20xi1>, vector<60x20xf32>
    %228 = math.tanh %227 : vector<60x20xf32>
    %229 = arith.mulf %228, %228 : vector<60x20xf32>
    %c0_55 = arith.constant 0 : index
    %c3_56 = arith.constant 3 : index
    %c0_57 = arith.constant 0 : index
    %c0_58 = arith.constant 0 : index
    %230 = vector.load %arg3[%c0_55, %c3_56, %c0_57, %c0_58] : memref<5x5x60x20xf32, #tpu.memory_space<vmem>>, vector<1x1x60x20xf32>
    %231 = vector.shape_cast %230 : vector<1x1x60x20xf32> to vector<60x20xf32>
    %232 = vector.shape_cast %229 : vector<60x20xf32> to vector<1x1x60x20xf32>
    tpu.vector_store %arg3[%c0_55, %c3_56, %c0_57, %c0_58], %232 {strides = array<i32>} : memref<5x5x60x20xf32, #tpu.memory_space<vmem>>, vector<1x1x60x20xf32>,
    %cst_59 = arith.constant 0.000000e+00 : f32
    %233 = vector.broadcast %cst_59 : f32 to vector<60x20xf32>
    %234 = arith.cmpf ogt, %192, %233 : vector<60x20xf32>
    %cst_60 = arith.constant 3.450000e-01 : f32
    %235 = vector.broadcast %cst_60 : f32 to vector<60x20xf32>
    %236 = arith.mulf %192, %235 : vector<60x20xf32>
    %237 = arith.select %234, %192, %236 : vector<60x20xi1>, vector<60x20xf32>
    %238 = math.tanh %237 : vector<60x20xf32>
    %239 = arith.mulf %238, %238 : vector<60x20xf32>
    %c0_61 = arith.constant 0 : index
    %c4_62 = arith.constant 4 : index
    %c0_63 = arith.constant 0 : index
    %c0_64 = arith.constant 0 : index
    %240 = vector.load %arg3[%c0_61, %c4_62, %c0_63, %c0_64] : memref<5x5x60x20xf32, #tpu.memory_space<vmem>>, vector<1x1x60x20xf32>
    %241 = vector.shape_cast %240 : vector<1x1x60x20xf32> to vector<60x20xf32>
    %242 = vector.shape_cast %239 : vector<60x20xf32> to vector<1x1x60x20xf32>
    tpu.vector_store %arg3[%c0_61, %c4_62, %c0_63, %c0_64], %242 {strides = array<i32>} : memref<5x5x60x20xf32, #tpu.memory_space<vmem>>, vector<1x1x60x20xf32>,
    %c1_65 = arith.constant 1 : index
    %c0_66 = arith.constant 0 : index
    %c0_67 = arith.constant 0 : index
    %c0_68 = arith.constant 0 : index
    %243 = vector.load %arg2[%c1_65, %c0_66, %c0_67, %c0_68] : memref<5x1x66x24xf32, #tpu.memory_space<vmem>>, vector<1x1x60x20xf32>
    %244 = vector.shape_cast %243 : vector<1x1x60x20xf32> to vector<60x20xf32>
    %245 = vector.broadcast %0 : f32 to vector<60x20xf32>
    %246 = arith.mulf %244, %245 : vector<60x20xf32>
    %247 = vector.broadcast %9 : f32 to vector<60x20xf32>
    %248 = arith.mulf %244, %247 : vector<60x20xf32>
    %249 = vector.broadcast %18 : f32 to vector<60x20xf32>
    %250 = arith.mulf %244, %249 : vector<60x20xf32>
    %251 = vector.broadcast %27 : f32 to vector<60x20xf32>
    %252 = arith.mulf %244, %251 : vector<60x20xf32>
    %253 = vector.broadcast %36 : f32 to vector<60x20xf32>
    %254 = arith.mulf %244, %253 : vector<60x20xf32>
    %c1_69 = arith.constant 1 : index
    %c0_70 = arith.constant 0 : index
    %c0_71 = arith.constant 0 : index
    %c2_72 = arith.constant 2 : index
    %255 = vector.load %arg2[%c1_69, %c0_70, %c0_71, %c2_72] : memref<5x1x66x24xf32, #tpu.memory_space<vmem>>, vector<1x1x60x20xf32>
    %256 = vector.shape_cast %255 : vector<1x1x60x20xf32> to vector<60x20xf32>
    %257 = vector.broadcast %1 : f32 to vector<60x20xf32>
    %258 = arith.mulf %256, %257 : vector<60x20xf32>
    %259 = arith.addf %246, %258 : vector<60x20xf32>
    %260 = vector.broadcast %10 : f32 to vector<60x20xf32>
    %261 = arith.mulf %256, %260 : vector<60x20xf32>
    %262 = arith.addf %248, %261 : vector<60x20xf32>
    %263 = vector.broadcast %19 : f32 to vector<60x20xf32>
    %264 = arith.mulf %256, %263 : vector<60x20xf32>
    %265 = arith.addf %250, %264 : vector<60x20xf32>
    %266 = vector.broadcast %28 : f32 to vector<60x20xf32>
    %267 = arith.mulf %256, %266 : vector<60x20xf32>
    %268 = arith.addf %252, %267 : vector<60x20xf32>
    %269 = vector.broadcast %37 : f32 to vector<60x20xf32>
    %270 = arith.mulf %256, %269 : vector<60x20xf32>
    %271 = arith.addf %254, %270 : vector<60x20xf32>
    %c1_73 = arith.constant 1 : index
    %c0_74 = arith.constant 0 : index
    %c0_75 = arith.constant 0 : index
    %c4_76 = arith.constant 4 : index
    %272 = vector.load %arg2[%c1_73, %c0_74, %c0_75, %c4_76] : memref<5x1x66x24xf32, #tpu.memory_space<vmem>>, vector<1x1x60x20xf32>
    %273 = vector.shape_cast %272 : vector<1x1x60x20xf32> to vector<60x20xf32>
    %274 = vector.broadcast %2 : f32 to vector<60x20xf32>
    %275 = arith.mulf %273, %274 : vector<60x20xf32>
    %276 = arith.addf %259, %275 : vector<60x20xf32>
    %277 = vector.broadcast %11 : f32 to vector<60x20xf32>
    %278 = arith.mulf %273, %277 : vector<60x20xf32>
    %279 = arith.addf %262, %278 : vector<60x20xf32>
    %280 = vector.broadcast %20 : f32 to vector<60x20xf32>
    %281 = arith.mulf %273, %280 : vector<60x20xf32>
    %282 = arith.addf %265, %281 : vector<60x20xf32>
    %283 = vector.broadcast %29 : f32 to vector<60x20xf32>
    %284 = arith.mulf %273, %283 : vector<60x20xf32>
    %285 = arith.addf %268, %284 : vector<60x20xf32>
    %286 = vector.broadcast %38 : f32 to vector<60x20xf32>
    %287 = arith.mulf %273, %286 : vector<60x20xf32>
    %288 = arith.addf %271, %287 : vector<60x20xf32>
    %c1_77 = arith.constant 1 : index
    %c0_78 = arith.constant 0 : index
    %c3_79 = arith.constant 3 : index
    %c0_80 = arith.constant 0 : index
    %289 = vector.load %arg2[%c1_77, %c0_78, %c3_79, %c0_80] : memref<5x1x66x24xf32, #tpu.memory_space<vmem>>, vector<1x1x60x20xf32>
    %290 = vector.shape_cast %289 : vector<1x1x60x20xf32> to vector<60x20xf32>
    %291 = vector.broadcast %3 : f32 to vector<60x20xf32>
    %292 = arith.mulf %290, %291 : vector<60x20xf32>
    %293 = arith.addf %276, %292 : vector<60x20xf32>
    %294 = vector.broadcast %12 : f32 to vector<60x20xf32>
    %295 = arith.mulf %290, %294 : vector<60x20xf32>
    %296 = arith.addf %279, %295 : vector<60x20xf32>
    %297 = vector.broadcast %21 : f32 to vector<60x20xf32>
    %298 = arith.mulf %290, %297 : vector<60x20xf32>
    %299 = arith.addf %282, %298 : vector<60x20xf32>
    %300 = vector.broadcast %30 : f32 to vector<60x20xf32>
    %301 = arith.mulf %290, %300 : vector<60x20xf32>
    %302 = arith.addf %285, %301 : vector<60x20xf32>
    %303 = vector.broadcast %39 : f32 to vector<60x20xf32>
    %304 = arith.mulf %290, %303 : vector<60x20xf32>
    %305 = arith.addf %288, %304 : vector<60x20xf32>
    %c1_81 = arith.constant 1 : index
    %c0_82 = arith.constant 0 : index
    %c3_83 = arith.constant 3 : index
    %c2_84 = arith.constant 2 : index
    %306 = vector.load %arg2[%c1_81, %c0_82, %c3_83, %c2_84] : memref<5x1x66x24xf32, #tpu.memory_space<vmem>>, vector<1x1x60x20xf32>
    %307 = vector.shape_cast %306 : vector<1x1x60x20xf32> to vector<60x20xf32>
    %308 = vector.broadcast %4 : f32 to vector<60x20xf32>
    %309 = arith.mulf %307, %308 : vector<60x20xf32>
    %310 = arith.addf %293, %309 : vector<60x20xf32>
    %311 = vector.broadcast %13 : f32 to vector<60x20xf32>
    %312 = arith.mulf %307, %311 : vector<60x20xf32>
    %313 = arith.addf %296, %312 : vector<60x20xf32>
    %314 = vector.broadcast %22 : f32 to vector<60x20xf32>
    %315 = arith.mulf %307, %314 : vector<60x20xf32>
    %316 = arith.addf %299, %315 : vector<60x20xf32>
    %317 = vector.broadcast %31 : f32 to vector<60x20xf32>
    %318 = arith.mulf %307, %317 : vector<60x20xf32>
    %319 = arith.addf %302, %318 : vector<60x20xf32>
    %320 = vector.broadcast %40 : f32 to vector<60x20xf32>
    %321 = arith.mulf %307, %320 : vector<60x20xf32>
    %322 = arith.addf %305, %321 : vector<60x20xf32>
    %c1_85 = arith.constant 1 : index
    %c0_86 = arith.constant 0 : index
    %c3_87 = arith.constant 3 : index
    %c4_88 = arith.constant 4 : index
    %323 = vector.load %arg2[%c1_85, %c0_86, %c3_87, %c4_88] : memref<5x1x66x24xf32, #tpu.memory_space<vmem>>, vector<1x1x60x20xf32>
    %324 = vector.shape_cast %323 : vector<1x1x60x20xf32> to vector<60x20xf32>
    %325 = vector.broadcast %5 : f32 to vector<60x20xf32>
    %326 = arith.mulf %324, %325 : vector<60x20xf32>
    %327 = arith.addf %310, %326 : vector<60x20xf32>
    %328 = vector.broadcast %14 : f32 to vector<60x20xf32>
    %329 = arith.mulf %324, %328 : vector<60x20xf32>
    %330 = arith.addf %313, %329 : vector<60x20xf32>
    %331 = vector.broadcast %23 : f32 to vector<60x20xf32>
    %332 = arith.mulf %324, %331 : vector<60x20xf32>
    %333 = arith.addf %316, %332 : vector<60x20xf32>
    %334 = vector.broadcast %32 : f32 to vector<60x20xf32>
    %335 = arith.mulf %324, %334 : vector<60x20xf32>
    %336 = arith.addf %319, %335 : vector<60x20xf32>
    %337 = vector.broadcast %41 : f32 to vector<60x20xf32>
    %338 = arith.mulf %324, %337 : vector<60x20xf32>
    %339 = arith.addf %322, %338 : vector<60x20xf32>
    %c1_89 = arith.constant 1 : index
    %c0_90 = arith.constant 0 : index
    %c6_91 = arith.constant 6 : index
    %c0_92 = arith.constant 0 : index
    %340 = vector.load %arg2[%c1_89, %c0_90, %c6_91, %c0_92] : memref<5x1x66x24xf32, #tpu.memory_space<vmem>>, vector<1x1x60x20xf32>
    %341 = vector.shape_cast %340 : vector<1x1x60x20xf32> to vector<60x20xf32>
    %342 = vector.broadcast %6 : f32 to vector<60x20xf32>
    %343 = arith.mulf %341, %342 : vector<60x20xf32>
    %344 = arith.addf %327, %343 : vector<60x20xf32>
    %345 = vector.broadcast %15 : f32 to vector<60x20xf32>
    %346 = arith.mulf %341, %345 : vector<60x20xf32>
    %347 = arith.addf %330, %346 : vector<60x20xf32>
    %348 = vector.broadcast %24 : f32 to vector<60x20xf32>
    %349 = arith.mulf %341, %348 : vector<60x20xf32>
    %350 = arith.addf %333, %349 : vector<60x20xf32>
    %351 = vector.broadcast %33 : f32 to vector<60x20xf32>
    %352 = arith.mulf %341, %351 : vector<60x20xf32>
    %353 = arith.addf %336, %352 : vector<60x20xf32>
    %354 = vector.broadcast %42 : f32 to vector<60x20xf32>
    %355 = arith.mulf %341, %354 : vector<60x20xf32>
    %356 = arith.addf %339, %355 : vector<60x20xf32>
    %c1_93 = arith.constant 1 : index
    %c0_94 = arith.constant 0 : index
    %c6_95 = arith.constant 6 : index
    %c2_96 = arith.constant 2 : index
    %357 = vector.load %arg2[%c1_93, %c0_94, %c6_95, %c2_96] : memref<5x1x66x24xf32, #tpu.memory_space<vmem>>, vector<1x1x60x20xf32>
    %358 = vector.shape_cast %357 : vector<1x1x60x20xf32> to vector<60x20xf32>
    %359 = vector.broadcast %7 : f32 to vector<60x20xf32>
    %360 = arith.mulf %358, %359 : vector<60x20xf32>
    %361 = arith.addf %344, %360 : vector<60x20xf32>
    %362 = vector.broadcast %16 : f32 to vector<60x20xf32>
    %363 = arith.mulf %358, %362 : vector<60x20xf32>
    %364 = arith.addf %347, %363 : vector<60x20xf32>
    %365 = vector.broadcast %25 : f32 to vector<60x20xf32>
    %366 = arith.mulf %358, %365 : vector<60x20xf32>
    %367 = arith.addf %350, %366 : vector<60x20xf32>
    %368 = vector.broadcast %34 : f32 to vector<60x20xf32>
    %369 = arith.mulf %358, %368 : vector<60x20xf32>
    %370 = arith.addf %353, %369 : vector<60x20xf32>
    %371 = vector.broadcast %43 : f32 to vector<60x20xf32>
    %372 = arith.mulf %358, %371 : vector<60x20xf32>
    %373 = arith.addf %356, %372 : vector<60x20xf32>
    %c1_97 = arith.constant 1 : index
    %c0_98 = arith.constant 0 : index
    %c6_99 = arith.constant 6 : index
    %c4_100 = arith.constant 4 : index
    %374 = vector.load %arg2[%c1_97, %c0_98, %c6_99, %c4_100] : memref<5x1x66x24xf32, #tpu.memory_space<vmem>>, vector<1x1x60x20xf32>
    %375 = vector.shape_cast %374 : vector<1x1x60x20xf32> to vector<60x20xf32>
    %376 = vector.broadcast %8 : f32 to vector<60x20xf32>
    %377 = arith.mulf %375, %376 : vector<60x20xf32>
    %378 = arith.addf %361, %377 : vector<60x20xf32>
    %379 = vector.broadcast %17 : f32 to vector<60x20xf32>
    %380 = arith.mulf %375, %379 : vector<60x20xf32>
    %381 = arith.addf %364, %380 : vector<60x20xf32>
    %382 = vector.broadcast %26 : f32 to vector<60x20xf32>
    %383 = arith.mulf %375, %382 : vector<60x20xf32>
    %384 = arith.addf %367, %383 : vector<60x20xf32>
    %385 = vector.broadcast %35 : f32 to vector<60x20xf32>
    %386 = arith.mulf %375, %385 : vector<60x20xf32>
    %387 = arith.addf %370, %386 : vector<60x20xf32>
    %388 = vector.broadcast %44 : f32 to vector<60x20xf32>
    %389 = arith.mulf %375, %388 : vector<60x20xf32>
    %390 = arith.addf %373, %389 : vector<60x20xf32>
    %cst_101 = arith.constant 0.000000e+00 : f32
    %391 = vector.broadcast %cst_101 : f32 to vector<60x20xf32>
    %392 = arith.cmpf ogt, %378, %391 : vector<60x20xf32>
    %cst_102 = arith.constant 3.450000e-01 : f32
    %393 = vector.broadcast %cst_102 : f32 to vector<60x20xf32>
    %394 = arith.mulf %378, %393 : vector<60x20xf32>
    %395 = arith.select %392, %378, %394 : vector<60x20xi1>, vector<60x20xf32>
    %396 = math.tanh %395 : vector<60x20xf32>
    %397 = arith.mulf %396, %396 : vector<60x20xf32>
    %c1_103 = arith.constant 1 : index
    %c0_104 = arith.constant 0 : index
    %c0_105 = arith.constant 0 : index
    %c0_106 = arith.constant 0 : index
    %398 = vector.load %arg3[%c1_103, %c0_104, %c0_105, %c0_106] : memref<5x5x60x20xf32, #tpu.memory_space<vmem>>, vector<1x1x60x20xf32>
    %399 = vector.shape_cast %398 : vector<1x1x60x20xf32> to vector<60x20xf32>
    %400 = vector.shape_cast %397 : vector<60x20xf32> to vector<1x1x60x20xf32>
    tpu.vector_store %arg3[%c1_103, %c0_104, %c0_105, %c0_106], %400 {strides = array<i32>} : memref<5x5x60x20xf32, #tpu.memory_space<vmem>>, vector<1x1x60x20xf32>,
    %cst_107 = arith.constant 0.000000e+00 : f32
    %401 = vector.broadcast %cst_107 : f32 to vector<60x20xf32>
    %402 = arith.cmpf ogt, %381, %401 : vector<60x20xf32>
    %cst_108 = arith.constant 3.450000e-01 : f32
    %403 = vector.broadcast %cst_108 : f32 to vector<60x20xf32>
    %404 = arith.mulf %381, %403 : vector<60x20xf32>
    %405 = arith.select %402, %381, %404 : vector<60x20xi1>, vector<60x20xf32>
    %406 = math.tanh %405 : vector<60x20xf32>
    %407 = arith.mulf %406, %406 : vector<60x20xf32>
    %c1_109 = arith.constant 1 : index
    %c1_110 = arith.constant 1 : index
    %c0_111 = arith.constant 0 : index
    %c0_112 = arith.constant 0 : index
    %408 = vector.load %arg3[%c1_109, %c1_110, %c0_111, %c0_112] : memref<5x5x60x20xf32, #tpu.memory_space<vmem>>, vector<1x1x60x20xf32>
    %409 = vector.shape_cast %408 : vector<1x1x60x20xf32> to vector<60x20xf32>
    %410 = vector.shape_cast %407 : vector<60x20xf32> to vector<1x1x60x20xf32>
    tpu.vector_store %arg3[%c1_109, %c1_110, %c0_111, %c0_112], %410 {strides = array<i32>} : memref<5x5x60x20xf32, #tpu.memory_space<vmem>>, vector<1x1x60x20xf32>,
    %cst_113 = arith.constant 0.000000e+00 : f32
    %411 = vector.broadcast %cst_113 : f32 to vector<60x20xf32>
    %412 = arith.cmpf ogt, %384, %411 : vector<60x20xf32>
    %cst_114 = arith.constant 3.450000e-01 : f32
    %413 = vector.broadcast %cst_114 : f32 to vector<60x20xf32>
    %414 = arith.mulf %384, %413 : vector<60x20xf32>
    %415 = arith.select %412, %384, %414 : vector<60x20xi1>, vector<60x20xf32>
    %416 = math.tanh %415 : vector<60x20xf32>
    %417 = arith.mulf %416, %416 : vector<60x20xf32>
    %c1_115 = arith.constant 1 : index
    %c2_116 = arith.constant 2 : index
    %c0_117 = arith.constant 0 : index
    %c0_118 = arith.constant 0 : index
    %418 = vector.load %arg3[%c1_115, %c2_116, %c0_117, %c0_118] : memref<5x5x60x20xf32, #tpu.memory_space<vmem>>, vector<1x1x60x20xf32>
    %419 = vector.shape_cast %418 : vector<1x1x60x20xf32> to vector<60x20xf32>
    %420 = vector.shape_cast %417 : vector<60x20xf32> to vector<1x1x60x20xf32>
    tpu.vector_store %arg3[%c1_115, %c2_116, %c0_117, %c0_118], %420 {strides = array<i32>} : memref<5x5x60x20xf32, #tpu.memory_space<vmem>>, vector<1x1x60x20xf32>,
    %cst_119 = arith.constant 0.000000e+00 : f32
    %421 = vector.broadcast %cst_119 : f32 to vector<60x20xf32>
    %422 = arith.cmpf ogt, %387, %421 : vector<60x20xf32>
    %cst_120 = arith.constant 3.450000e-01 : f32
    %423 = vector.broadcast %cst_120 : f32 to vector<60x20xf32>
    %424 = arith.mulf %387, %423 : vector<60x20xf32>
    %425 = arith.select %422, %387, %424 : vector<60x20xi1>, vector<60x20xf32>
    %426 = math.tanh %425 : vector<60x20xf32>
    %427 = arith.mulf %426, %426 : vector<60x20xf32>
    %c1_121 = arith.constant 1 : index
    %c3_122 = arith.constant 3 : index
    %c0_123 = arith.constant 0 : index
    %c0_124 = arith.constant 0 : index
    %428 = vector.load %arg3[%c1_121, %c3_122, %c0_123, %c0_124] : memref<5x5x60x20xf32, #tpu.memory_space<vmem>>, vector<1x1x60x20xf32>
    %429 = vector.shape_cast %428 : vector<1x1x60x20xf32> to vector<60x20xf32>
    %430 = vector.shape_cast %427 : vector<60x20xf32> to vector<1x1x60x20xf32>
    tpu.vector_store %arg3[%c1_121, %c3_122, %c0_123, %c0_124], %430 {strides = array<i32>} : memref<5x5x60x20xf32, #tpu.memory_space<vmem>>, vector<1x1x60x20xf32>,
    %cst_125 = arith.constant 0.000000e+00 : f32
    %431 = vector.broadcast %cst_125 : f32 to vector<60x20xf32>
    %432 = arith.cmpf ogt, %390, %431 : vector<60x20xf32>
    %cst_126 = arith.constant 3.450000e-01 : f32
    %433 = vector.broadcast %cst_126 : f32 to vector<60x20xf32>
    %434 = arith.mulf %390, %433 : vector<60x20xf32>
    %435 = arith.select %432, %390, %434 : vector<60x20xi1>, vector<60x20xf32>
    %436 = math.tanh %435 : vector<60x20xf32>
    %437 = arith.mulf %436, %436 : vector<60x20xf32>
    %c1_127 = arith.constant 1 : index
    %c4_128 = arith.constant 4 : index
    %c0_129 = arith.constant 0 : index
    %c0_130 = arith.constant 0 : index
    %438 = vector.load %arg3[%c1_127, %c4_128, %c0_129, %c0_130] : memref<5x5x60x20xf32, #tpu.memory_space<vmem>>, vector<1x1x60x20xf32>
    %439 = vector.shape_cast %438 : vector<1x1x60x20xf32> to vector<60x20xf32>
    %440 = vector.shape_cast %437 : vector<60x20xf32> to vector<1x1x60x20xf32>
    tpu.vector_store %arg3[%c1_127, %c4_128, %c0_129, %c0_130], %440 {strides = array<i32>} : memref<5x5x60x20xf32, #tpu.memory_space<vmem>>, vector<1x1x60x20xf32>,
    %c2_131 = arith.constant 2 : index
    %c0_132 = arith.constant 0 : index
    %c0_133 = arith.constant 0 : index
    %c0_134 = arith.constant 0 : index
    %441 = vector.load %arg2[%c2_131, %c0_132, %c0_133, %c0_134] : memref<5x1x66x24xf32, #tpu.memory_space<vmem>>, vector<1x1x60x20xf32>
    %442 = vector.shape_cast %441 : vector<1x1x60x20xf32> to vector<60x20xf32>
    %443 = vector.broadcast %0 : f32 to vector<60x20xf32>
    %444 = arith.mulf %442, %443 : vector<60x20xf32>
    %445 = vector.broadcast %9 : f32 to vector<60x20xf32>
    %446 = arith.mulf %442, %445 : vector<60x20xf32>
    %447 = vector.broadcast %18 : f32 to vector<60x20xf32>
    %448 = arith.mulf %442, %447 : vector<60x20xf32>
    %449 = vector.broadcast %27 : f32 to vector<60x20xf32>
    %450 = arith.mulf %442, %449 : vector<60x20xf32>
    %451 = vector.broadcast %36 : f32 to vector<60x20xf32>
    %452 = arith.mulf %442, %451 : vector<60x20xf32>
    %c2_135 = arith.constant 2 : index
    %c0_136 = arith.constant 0 : index
    %c0_137 = arith.constant 0 : index
    %c2_138 = arith.constant 2 : index
    %453 = vector.load %arg2[%c2_135, %c0_136, %c0_137, %c2_138] : memref<5x1x66x24xf32, #tpu.memory_space<vmem>>, vector<1x1x60x20xf32>
    %454 = vector.shape_cast %453 : vector<1x1x60x20xf32> to vector<60x20xf32>
    %455 = vector.broadcast %1 : f32 to vector<60x20xf32>
    %456 = arith.mulf %454, %455 : vector<60x20xf32>
    %457 = arith.addf %444, %456 : vector<60x20xf32>
    %458 = vector.broadcast %10 : f32 to vector<60x20xf32>
    %459 = arith.mulf %454, %458 : vector<60x20xf32>
    %460 = arith.addf %446, %459 : vector<60x20xf32>
    %461 = vector.broadcast %19 : f32 to vector<60x20xf32>
    %462 = arith.mulf %454, %461 : vector<60x20xf32>
    %463 = arith.addf %448, %462 : vector<60x20xf32>
    %464 = vector.broadcast %28 : f32 to vector<60x20xf32>
    %465 = arith.mulf %454, %464 : vector<60x20xf32>
    %466 = arith.addf %450, %465 : vector<60x20xf32>
    %467 = vector.broadcast %37 : f32 to vector<60x20xf32>
    %468 = arith.mulf %454, %467 : vector<60x20xf32>
    %469 = arith.addf %452, %468 : vector<60x20xf32>
    %c2_139 = arith.constant 2 : index
    %c0_140 = arith.constant 0 : index
    %c0_141 = arith.constant 0 : index
    %c4_142 = arith.constant 4 : index
    %470 = vector.load %arg2[%c2_139, %c0_140, %c0_141, %c4_142] : memref<5x1x66x24xf32, #tpu.memory_space<vmem>>, vector<1x1x60x20xf32>
    %471 = vector.shape_cast %470 : vector<1x1x60x20xf32> to vector<60x20xf32>
    %472 = vector.broadcast %2 : f32 to vector<60x20xf32>
    %473 = arith.mulf %471, %472 : vector<60x20xf32>
    %474 = arith.addf %457, %473 : vector<60x20xf32>
    %475 = vector.broadcast %11 : f32 to vector<60x20xf32>
    %476 = arith.mulf %471, %475 : vector<60x20xf32>
    %477 = arith.addf %460, %476 : vector<60x20xf32>
    %478 = vector.broadcast %20 : f32 to vector<60x20xf32>
    %479 = arith.mulf %471, %478 : vector<60x20xf32>
    %480 = arith.addf %463, %479 : vector<60x20xf32>
    %481 = vector.broadcast %29 : f32 to vector<60x20xf32>
    %482 = arith.mulf %471, %481 : vector<60x20xf32>
    %483 = arith.addf %466, %482 : vector<60x20xf32>
    %484 = vector.broadcast %38 : f32 to vector<60x20xf32>
    %485 = arith.mulf %471, %484 : vector<60x20xf32>
    %486 = arith.addf %469, %485 : vector<60x20xf32>
    %c2_143 = arith.constant 2 : index
    %c0_144 = arith.constant 0 : index
    %c3_145 = arith.constant 3 : index
    %c0_146 = arith.constant 0 : index
    %487 = vector.load %arg2[%c2_143, %c0_144, %c3_145, %c0_146] : memref<5x1x66x24xf32, #tpu.memory_space<vmem>>, vector<1x1x60x20xf32>
    %488 = vector.shape_cast %487 : vector<1x1x60x20xf32> to vector<60x20xf32>
    %489 = vector.broadcast %3 : f32 to vector<60x20xf32>
    %490 = arith.mulf %488, %489 : vector<60x20xf32>
    %491 = arith.addf %474, %490 : vector<60x20xf32>
    %492 = vector.broadcast %12 : f32 to vector<60x20xf32>
    %493 = arith.mulf %488, %492 : vector<60x20xf32>
    %494 = arith.addf %477, %493 : vector<60x20xf32>
    %495 = vector.broadcast %21 : f32 to vector<60x20xf32>
    %496 = arith.mulf %488, %495 : vector<60x20xf32>
    %497 = arith.addf %480, %496 : vector<60x20xf32>
    %498 = vector.broadcast %30 : f32 to vector<60x20xf32>
    %499 = arith.mulf %488, %498 : vector<60x20xf32>
    %500 = arith.addf %483, %499 : vector<60x20xf32>
    %501 = vector.broadcast %39 : f32 to vector<60x20xf32>
    %502 = arith.mulf %488, %501 : vector<60x20xf32>
    %503 = arith.addf %486, %502 : vector<60x20xf32>
    %c2_147 = arith.constant 2 : index
    %c0_148 = arith.constant 0 : index
    %c3_149 = arith.constant 3 : index
    %c2_150 = arith.constant 2 : index
    %504 = vector.load %arg2[%c2_147, %c0_148, %c3_149, %c2_150] : memref<5x1x66x24xf32, #tpu.memory_space<vmem>>, vector<1x1x60x20xf32>
    %505 = vector.shape_cast %504 : vector<1x1x60x20xf32> to vector<60x20xf32>
    %506 = vector.broadcast %4 : f32 to vector<60x20xf32>
    %507 = arith.mulf %505, %506 : vector<60x20xf32>
    %508 = arith.addf %491, %507 : vector<60x20xf32>
    %509 = vector.broadcast %13 : f32 to vector<60x20xf32>
    %510 = arith.mulf %505, %509 : vector<60x20xf32>
    %511 = arith.addf %494, %510 : vector<60x20xf32>
    %512 = vector.broadcast %22 : f32 to vector<60x20xf32>
    %513 = arith.mulf %505, %512 : vector<60x20xf32>
    %514 = arith.addf %497, %513 : vector<60x20xf32>
    %515 = vector.broadcast %31 : f32 to vector<60x20xf32>
    %516 = arith.mulf %505, %515 : vector<60x20xf32>
    %517 = arith.addf %500, %516 : vector<60x20xf32>
    %518 = vector.broadcast %40 : f32 to vector<60x20xf32>
    %519 = arith.mulf %505, %518 : vector<60x20xf32>
    %520 = arith.addf %503, %519 : vector<60x20xf32>
    %c2_151 = arith.constant 2 : index
    %c0_152 = arith.constant 0 : index
    %c3_153 = arith.constant 3 : index
    %c4_154 = arith.constant 4 : index
    %521 = vector.load %arg2[%c2_151, %c0_152, %c3_153, %c4_154] : memref<5x1x66x24xf32, #tpu.memory_space<vmem>>, vector<1x1x60x20xf32>
    %522 = vector.shape_cast %521 : vector<1x1x60x20xf32> to vector<60x20xf32>
    %523 = vector.broadcast %5 : f32 to vector<60x20xf32>
    %524 = arith.mulf %522, %523 : vector<60x20xf32>
    %525 = arith.addf %508, %524 : vector<60x20xf32>
    %526 = vector.broadcast %14 : f32 to vector<60x20xf32>
    %527 = arith.mulf %522, %526 : vector<60x20xf32>
    %528 = arith.addf %511, %527 : vector<60x20xf32>
    %529 = vector.broadcast %23 : f32 to vector<60x20xf32>
    %530 = arith.mulf %522, %529 : vector<60x20xf32>
    %531 = arith.addf %514, %530 : vector<60x20xf32>
    %532 = vector.broadcast %32 : f32 to vector<60x20xf32>
    %533 = arith.mulf %522, %532 : vector<60x20xf32>
    %534 = arith.addf %517, %533 : vector<60x20xf32>
    %535 = vector.broadcast %41 : f32 to vector<60x20xf32>
    %536 = arith.mulf %522, %535 : vector<60x20xf32>
    %537 = arith.addf %520, %536 : vector<60x20xf32>
    %c2_155 = arith.constant 2 : index
    %c0_156 = arith.constant 0 : index
    %c6_157 = arith.constant 6 : index
    %c0_158 = arith.constant 0 : index
    %538 = vector.load %arg2[%c2_155, %c0_156, %c6_157, %c0_158] : memref<5x1x66x24xf32, #tpu.memory_space<vmem>>, vector<1x1x60x20xf32>
    %539 = vector.shape_cast %538 : vector<1x1x60x20xf32> to vector<60x20xf32>
    %540 = vector.broadcast %6 : f32 to vector<60x20xf32>
    %541 = arith.mulf %539, %540 : vector<60x20xf32>
    %542 = arith.addf %525, %541 : vector<60x20xf32>
    %543 = vector.broadcast %15 : f32 to vector<60x20xf32>
    %544 = arith.mulf %539, %543 : vector<60x20xf32>
    %545 = arith.addf %528, %544 : vector<60x20xf32>
    %546 = vector.broadcast %24 : f32 to vector<60x20xf32>
    %547 = arith.mulf %539, %546 : vector<60x20xf32>
    %548 = arith.addf %531, %547 : vector<60x20xf32>
    %549 = vector.broadcast %33 : f32 to vector<60x20xf32>
    %550 = arith.mulf %539, %549 : vector<60x20xf32>
    %551 = arith.addf %534, %550 : vector<60x20xf32>
    %552 = vector.broadcast %42 : f32 to vector<60x20xf32>
    %553 = arith.mulf %539, %552 : vector<60x20xf32>
    %554 = arith.addf %537, %553 : vector<60x20xf32>
    %c2_159 = arith.constant 2 : index
    %c0_160 = arith.constant 0 : index
    %c6_161 = arith.constant 6 : index
    %c2_162 = arith.constant 2 : index
    %555 = vector.load %arg2[%c2_159, %c0_160, %c6_161, %c2_162] : memref<5x1x66x24xf32, #tpu.memory_space<vmem>>, vector<1x1x60x20xf32>
    %556 = vector.shape_cast %555 : vector<1x1x60x20xf32> to vector<60x20xf32>
    %557 = vector.broadcast %7 : f32 to vector<60x20xf32>
    %558 = arith.mulf %556, %557 : vector<60x20xf32>
    %559 = arith.addf %542, %558 : vector<60x20xf32>
    %560 = vector.broadcast %16 : f32 to vector<60x20xf32>
    %561 = arith.mulf %556, %560 : vector<60x20xf32>
    %562 = arith.addf %545, %561 : vector<60x20xf32>
    %563 = vector.broadcast %25 : f32 to vector<60x20xf32>
    %564 = arith.mulf %556, %563 : vector<60x20xf32>
    %565 = arith.addf %548, %564 : vector<60x20xf32>
    %566 = vector.broadcast %34 : f32 to vector<60x20xf32>
    %567 = arith.mulf %556, %566 : vector<60x20xf32>
    %568 = arith.addf %551, %567 : vector<60x20xf32>
    %569 = vector.broadcast %43 : f32 to vector<60x20xf32>
    %570 = arith.mulf %556, %569 : vector<60x20xf32>
    %571 = arith.addf %554, %570 : vector<60x20xf32>
    %c2_163 = arith.constant 2 : index
    %c0_164 = arith.constant 0 : index
    %c6_165 = arith.constant 6 : index
    %c4_166 = arith.constant 4 : index
    %572 = vector.load %arg2[%c2_163, %c0_164, %c6_165, %c4_166] : memref<5x1x66x24xf32, #tpu.memory_space<vmem>>, vector<1x1x60x20xf32>
    %573 = vector.shape_cast %572 : vector<1x1x60x20xf32> to vector<60x20xf32>
    %574 = vector.broadcast %8 : f32 to vector<60x20xf32>
    %575 = arith.mulf %573, %574 : vector<60x20xf32>
    %576 = arith.addf %559, %575 : vector<60x20xf32>
    %577 = vector.broadcast %17 : f32 to vector<60x20xf32>
    %578 = arith.mulf %573, %577 : vector<60x20xf32>
    %579 = arith.addf %562, %578 : vector<60x20xf32>
    %580 = vector.broadcast %26 : f32 to vector<60x20xf32>
    %581 = arith.mulf %573, %580 : vector<60x20xf32>
    %582 = arith.addf %565, %581 : vector<60x20xf32>
    %583 = vector.broadcast %35 : f32 to vector<60x20xf32>
    %584 = arith.mulf %573, %583 : vector<60x20xf32>
    %585 = arith.addf %568, %584 : vector<60x20xf32>
    %586 = vector.broadcast %44 : f32 to vector<60x20xf32>
    %587 = arith.mulf %573, %586 : vector<60x20xf32>
    %588 = arith.addf %571, %587 : vector<60x20xf32>
    %cst_167 = arith.constant 0.000000e+00 : f32
    %589 = vector.broadcast %cst_167 : f32 to vector<60x20xf32>
    %590 = arith.cmpf ogt, %576, %589 : vector<60x20xf32>
    %cst_168 = arith.constant 3.450000e-01 : f32
    %591 = vector.broadcast %cst_168 : f32 to vector<60x20xf32>
    %592 = arith.mulf %576, %591 : vector<60x20xf32>
    %593 = arith.select %590, %576, %592 : vector<60x20xi1>, vector<60x20xf32>
    %594 = math.tanh %593 : vector<60x20xf32>
    %595 = arith.mulf %594, %594 : vector<60x20xf32>
    %c2_169 = arith.constant 2 : index
    %c0_170 = arith.constant 0 : index
    %c0_171 = arith.constant 0 : index
    %c0_172 = arith.constant 0 : index
    %596 = vector.load %arg3[%c2_169, %c0_170, %c0_171, %c0_172] : memref<5x5x60x20xf32, #tpu.memory_space<vmem>>, vector<1x1x60x20xf32>
    %597 = vector.shape_cast %596 : vector<1x1x60x20xf32> to vector<60x20xf32>
    %598 = vector.shape_cast %595 : vector<60x20xf32> to vector<1x1x60x20xf32>
    tpu.vector_store %arg3[%c2_169, %c0_170, %c0_171, %c0_172], %598 {strides = array<i32>} : memref<5x5x60x20xf32, #tpu.memory_space<vmem>>, vector<1x1x60x20xf32>,
    %cst_173 = arith.constant 0.000000e+00 : f32
    %599 = vector.broadcast %cst_173 : f32 to vector<60x20xf32>
    %600 = arith.cmpf ogt, %579, %599 : vector<60x20xf32>
    %cst_174 = arith.constant 3.450000e-01 : f32
    %601 = vector.broadcast %cst_174 : f32 to vector<60x20xf32>
    %602 = arith.mulf %579, %601 : vector<60x20xf32>
    %603 = arith.select %600, %579, %602 : vector<60x20xi1>, vector<60x20xf32>
    %604 = math.tanh %603 : vector<60x20xf32>
    %605 = arith.mulf %604, %604 : vector<60x20xf32>
    %c2_175 = arith.constant 2 : index
    %c1_176 = arith.constant 1 : index
    %c0_177 = arith.constant 0 : index
    %c0_178 = arith.constant 0 : index
    %606 = vector.load %arg3[%c2_175, %c1_176, %c0_177, %c0_178] : memref<5x5x60x20xf32, #tpu.memory_space<vmem>>, vector<1x1x60x20xf32>
    %607 = vector.shape_cast %606 : vector<1x1x60x20xf32> to vector<60x20xf32>
    %608 = vector.shape_cast %605 : vector<60x20xf32> to vector<1x1x60x20xf32>
    tpu.vector_store %arg3[%c2_175, %c1_176, %c0_177, %c0_178], %608 {strides = array<i32>} : memref<5x5x60x20xf32, #tpu.memory_space<vmem>>, vector<1x1x60x20xf32>,
    %cst_179 = arith.constant 0.000000e+00 : f32
    %609 = vector.broadcast %cst_179 : f32 to vector<60x20xf32>
    %610 = arith.cmpf ogt, %582, %609 : vector<60x20xf32>
    %cst_180 = arith.constant 3.450000e-01 : f32
    %611 = vector.broadcast %cst_180 : f32 to vector<60x20xf32>
    %612 = arith.mulf %582, %611 : vector<60x20xf32>
    %613 = arith.select %610, %582, %612 : vector<60x20xi1>, vector<60x20xf32>
    %614 = math.tanh %613 : vector<60x20xf32>
    %615 = arith.mulf %614, %614 : vector<60x20xf32>
    %c2_181 = arith.constant 2 : index
    %c2_182 = arith.constant 2 : index
    %c0_183 = arith.constant 0 : index
    %c0_184 = arith.constant 0 : index
    %616 = vector.load %arg3[%c2_181, %c2_182, %c0_183, %c0_184] : memref<5x5x60x20xf32, #tpu.memory_space<vmem>>, vector<1x1x60x20xf32>
    %617 = vector.shape_cast %616 : vector<1x1x60x20xf32> to vector<60x20xf32>
    %618 = vector.shape_cast %615 : vector<60x20xf32> to vector<1x1x60x20xf32>
    tpu.vector_store %arg3[%c2_181, %c2_182, %c0_183, %c0_184], %618 {strides = array<i32>} : memref<5x5x60x20xf32, #tpu.memory_space<vmem>>, vector<1x1x60x20xf32>,
    %cst_185 = arith.constant 0.000000e+00 : f32
    %619 = vector.broadcast %cst_185 : f32 to vector<60x20xf32>
    %620 = arith.cmpf ogt, %585, %619 : vector<60x20xf32>
    %cst_186 = arith.constant 3.450000e-01 : f32
    %621 = vector.broadcast %cst_186 : f32 to vector<60x20xf32>
    %622 = arith.mulf %585, %621 : vector<60x20xf32>
    %623 = arith.select %620, %585, %622 : vector<60x20xi1>, vector<60x20xf32>
    %624 = math.tanh %623 : vector<60x20xf32>
    %625 = arith.mulf %624, %624 : vector<60x20xf32>
    %c2_187 = arith.constant 2 : index
    %c3_188 = arith.constant 3 : index
    %c0_189 = arith.constant 0 : index
    %c0_190 = arith.constant 0 : index
    %626 = vector.load %arg3[%c2_187, %c3_188, %c0_189, %c0_190] : memref<5x5x60x20xf32, #tpu.memory_space<vmem>>, vector<1x1x60x20xf32>
    %627 = vector.shape_cast %626 : vector<1x1x60x20xf32> to vector<60x20xf32>
    %628 = vector.shape_cast %625 : vector<60x20xf32> to vector<1x1x60x20xf32>
    tpu.vector_store %arg3[%c2_187, %c3_188, %c0_189, %c0_190], %628 {strides = array<i32>} : memref<5x5x60x20xf32, #tpu.memory_space<vmem>>, vector<1x1x60x20xf32>,
    %cst_191 = arith.constant 0.000000e+00 : f32
    %629 = vector.broadcast %cst_191 : f32 to vector<60x20xf32>
    %630 = arith.cmpf ogt, %588, %629 : vector<60x20xf32>
    %cst_192 = arith.constant 3.450000e-01 : f32
    %631 = vector.broadcast %cst_192 : f32 to vector<60x20xf32>
    %632 = arith.mulf %588, %631 : vector<60x20xf32>
    %633 = arith.select %630, %588, %632 : vector<60x20xi1>, vector<60x20xf32>
    %634 = math.tanh %633 : vector<60x20xf32>
    %635 = arith.mulf %634, %634 : vector<60x20xf32>
    %c2_193 = arith.constant 2 : index
    %c4_194 = arith.constant 4 : index
    %c0_195 = arith.constant 0 : index
    %c0_196 = arith.constant 0 : index
    %636 = vector.load %arg3[%c2_193, %c4_194, %c0_195, %c0_196] : memref<5x5x60x20xf32, #tpu.memory_space<vmem>>, vector<1x1x60x20xf32>
    %637 = vector.shape_cast %636 : vector<1x1x60x20xf32> to vector<60x20xf32>
    %638 = vector.shape_cast %635 : vector<60x20xf32> to vector<1x1x60x20xf32>
    tpu.vector_store %arg3[%c2_193, %c4_194, %c0_195, %c0_196], %638 {strides = array<i32>} : memref<5x5x60x20xf32, #tpu.memory_space<vmem>>, vector<1x1x60x20xf32>,
    %c3_197 = arith.constant 3 : index
    %c0_198 = arith.constant 0 : index
    %c0_199 = arith.constant 0 : index
    %c0_200 = arith.constant 0 : index
    %639 = vector.load %arg2[%c3_197, %c0_198, %c0_199, %c0_200] : memref<5x1x66x24xf32, #tpu.memory_space<vmem>>, vector<1x1x60x20xf32>
    %640 = vector.shape_cast %639 : vector<1x1x60x20xf32> to vector<60x20xf32>
    %641 = vector.broadcast %0 : f32 to vector<60x20xf32>
    %642 = arith.mulf %640, %641 : vector<60x20xf32>
    %643 = vector.broadcast %9 : f32 to vector<60x20xf32>
    %644 = arith.mulf %640, %643 : vector<60x20xf32>
    %645 = vector.broadcast %18 : f32 to vector<60x20xf32>
    %646 = arith.mulf %640, %645 : vector<60x20xf32>
    %647 = vector.broadcast %27 : f32 to vector<60x20xf32>
    %648 = arith.mulf %640, %647 : vector<60x20xf32>
    %649 = vector.broadcast %36 : f32 to vector<60x20xf32>
    %650 = arith.mulf %640, %649 : vector<60x20xf32>
    %c3_201 = arith.constant 3 : index
    %c0_202 = arith.constant 0 : index
    %c0_203 = arith.constant 0 : index
    %c2_204 = arith.constant 2 : index
    %651 = vector.load %arg2[%c3_201, %c0_202, %c0_203, %c2_204] : memref<5x1x66x24xf32, #tpu.memory_space<vmem>>, vector<1x1x60x20xf32>
    %652 = vector.shape_cast %651 : vector<1x1x60x20xf32> to vector<60x20xf32>
    %653 = vector.broadcast %1 : f32 to vector<60x20xf32>
    %654 = arith.mulf %652, %653 : vector<60x20xf32>
    %655 = arith.addf %642, %654 : vector<60x20xf32>
    %656 = vector.broadcast %10 : f32 to vector<60x20xf32>
    %657 = arith.mulf %652, %656 : vector<60x20xf32>
    %658 = arith.addf %644, %657 : vector<60x20xf32>
    %659 = vector.broadcast %19 : f32 to vector<60x20xf32>
    %660 = arith.mulf %652, %659 : vector<60x20xf32>
    %661 = arith.addf %646, %660 : vector<60x20xf32>
    %662 = vector.broadcast %28 : f32 to vector<60x20xf32>
    %663 = arith.mulf %652, %662 : vector<60x20xf32>
    %664 = arith.addf %648, %663 : vector<60x20xf32>
    %665 = vector.broadcast %37 : f32 to vector<60x20xf32>
    %666 = arith.mulf %652, %665 : vector<60x20xf32>
    %667 = arith.addf %650, %666 : vector<60x20xf32>
    %c3_205 = arith.constant 3 : index
    %c0_206 = arith.constant 0 : index
    %c0_207 = arith.constant 0 : index
    %c4_208 = arith.constant 4 : index
    %668 = vector.load %arg2[%c3_205, %c0_206, %c0_207, %c4_208] : memref<5x1x66x24xf32, #tpu.memory_space<vmem>>, vector<1x1x60x20xf32>
    %669 = vector.shape_cast %668 : vector<1x1x60x20xf32> to vector<60x20xf32>
    %670 = vector.broadcast %2 : f32 to vector<60x20xf32>
    %671 = arith.mulf %669, %670 : vector<60x20xf32>
    %672 = arith.addf %655, %671 : vector<60x20xf32>
    %673 = vector.broadcast %11 : f32 to vector<60x20xf32>
    %674 = arith.mulf %669, %673 : vector<60x20xf32>
    %675 = arith.addf %658, %674 : vector<60x20xf32>
    %676 = vector.broadcast %20 : f32 to vector<60x20xf32>
    %677 = arith.mulf %669, %676 : vector<60x20xf32>
    %678 = arith.addf %661, %677 : vector<60x20xf32>
    %679 = vector.broadcast %29 : f32 to vector<60x20xf32>
    %680 = arith.mulf %669, %679 : vector<60x20xf32>
    %681 = arith.addf %664, %680 : vector<60x20xf32>
    %682 = vector.broadcast %38 : f32 to vector<60x20xf32>
    %683 = arith.mulf %669, %682 : vector<60x20xf32>
    %684 = arith.addf %667, %683 : vector<60x20xf32>
    %c3_209 = arith.constant 3 : index
    %c0_210 = arith.constant 0 : index
    %c3_211 = arith.constant 3 : index
    %c0_212 = arith.constant 0 : index
    %685 = vector.load %arg2[%c3_209, %c0_210, %c3_211, %c0_212] : memref<5x1x66x24xf32, #tpu.memory_space<vmem>>, vector<1x1x60x20xf32>
    %686 = vector.shape_cast %685 : vector<1x1x60x20xf32> to vector<60x20xf32>
    %687 = vector.broadcast %3 : f32 to vector<60x20xf32>
    %688 = arith.mulf %686, %687 : vector<60x20xf32>
    %689 = arith.addf %672, %688 : vector<60x20xf32>
    %690 = vector.broadcast %12 : f32 to vector<60x20xf32>
    %691 = arith.mulf %686, %690 : vector<60x20xf32>
    %692 = arith.addf %675, %691 : vector<60x20xf32>
    %693 = vector.broadcast %21 : f32 to vector<60x20xf32>
    %694 = arith.mulf %686, %693 : vector<60x20xf32>
    %695 = arith.addf %678, %694 : vector<60x20xf32>
    %696 = vector.broadcast %30 : f32 to vector<60x20xf32>
    %697 = arith.mulf %686, %696 : vector<60x20xf32>
    %698 = arith.addf %681, %697 : vector<60x20xf32>
    %699 = vector.broadcast %39 : f32 to vector<60x20xf32>
    %700 = arith.mulf %686, %699 : vector<60x20xf32>
    %701 = arith.addf %684, %700 : vector<60x20xf32>
    %c3_213 = arith.constant 3 : index
    %c0_214 = arith.constant 0 : index
    %c3_215 = arith.constant 3 : index
    %c2_216 = arith.constant 2 : index
    %702 = vector.load %arg2[%c3_213, %c0_214, %c3_215, %c2_216] : memref<5x1x66x24xf32, #tpu.memory_space<vmem>>, vector<1x1x60x20xf32>
    %703 = vector.shape_cast %702 : vector<1x1x60x20xf32> to vector<60x20xf32>
    %704 = vector.broadcast %4 : f32 to vector<60x20xf32>
    %705 = arith.mulf %703, %704 : vector<60x20xf32>
    %706 = arith.addf %689, %705 : vector<60x20xf32>
    %707 = vector.broadcast %13 : f32 to vector<60x20xf32>
    %708 = arith.mulf %703, %707 : vector<60x20xf32>
    %709 = arith.addf %692, %708 : vector<60x20xf32>
    %710 = vector.broadcast %22 : f32 to vector<60x20xf32>
    %711 = arith.mulf %703, %710 : vector<60x20xf32>
    %712 = arith.addf %695, %711 : vector<60x20xf32>
    %713 = vector.broadcast %31 : f32 to vector<60x20xf32>
    %714 = arith.mulf %703, %713 : vector<60x20xf32>
    %715 = arith.addf %698, %714 : vector<60x20xf32>
    %716 = vector.broadcast %40 : f32 to vector<60x20xf32>
    %717 = arith.mulf %703, %716 : vector<60x20xf32>
    %718 = arith.addf %701, %717 : vector<60x20xf32>
    %c3_217 = arith.constant 3 : index
    %c0_218 = arith.constant 0 : index
    %c3_219 = arith.constant 3 : index
    %c4_220 = arith.constant 4 : index
    %719 = vector.load %arg2[%c3_217, %c0_218, %c3_219, %c4_220] : memref<5x1x66x24xf32, #tpu.memory_space<vmem>>, vector<1x1x60x20xf32>
    %720 = vector.shape_cast %719 : vector<1x1x60x20xf32> to vector<60x20xf32>
    %721 = vector.broadcast %5 : f32 to vector<60x20xf32>
    %722 = arith.mulf %720, %721 : vector<60x20xf32>
    %723 = arith.addf %706, %722 : vector<60x20xf32>
    %724 = vector.broadcast %14 : f32 to vector<60x20xf32>
    %725 = arith.mulf %720, %724 : vector<60x20xf32>
    %726 = arith.addf %709, %725 : vector<60x20xf32>
    %727 = vector.broadcast %23 : f32 to vector<60x20xf32>
    %728 = arith.mulf %720, %727 : vector<60x20xf32>
    %729 = arith.addf %712, %728 : vector<60x20xf32>
    %730 = vector.broadcast %32 : f32 to vector<60x20xf32>
    %731 = arith.mulf %720, %730 : vector<60x20xf32>
    %732 = arith.addf %715, %731 : vector<60x20xf32>
    %733 = vector.broadcast %41 : f32 to vector<60x20xf32>
    %734 = arith.mulf %720, %733 : vector<60x20xf32>
    %735 = arith.addf %718, %734 : vector<60x20xf32>
    %c3_221 = arith.constant 3 : index
    %c0_222 = arith.constant 0 : index
    %c6_223 = arith.constant 6 : index
    %c0_224 = arith.constant 0 : index
    %736 = vector.load %arg2[%c3_221, %c0_222, %c6_223, %c0_224] : memref<5x1x66x24xf32, #tpu.memory_space<vmem>>, vector<1x1x60x20xf32>
    %737 = vector.shape_cast %736 : vector<1x1x60x20xf32> to vector<60x20xf32>
    %738 = vector.broadcast %6 : f32 to vector<60x20xf32>
    %739 = arith.mulf %737, %738 : vector<60x20xf32>
    %740 = arith.addf %723, %739 : vector<60x20xf32>
    %741 = vector.broadcast %15 : f32 to vector<60x20xf32>
    %742 = arith.mulf %737, %741 : vector<60x20xf32>
    %743 = arith.addf %726, %742 : vector<60x20xf32>
    %744 = vector.broadcast %24 : f32 to vector<60x20xf32>
    %745 = arith.mulf %737, %744 : vector<60x20xf32>
    %746 = arith.addf %729, %745 : vector<60x20xf32>
    %747 = vector.broadcast %33 : f32 to vector<60x20xf32>
    %748 = arith.mulf %737, %747 : vector<60x20xf32>
    %749 = arith.addf %732, %748 : vector<60x20xf32>
    %750 = vector.broadcast %42 : f32 to vector<60x20xf32>
    %751 = arith.mulf %737, %750 : vector<60x20xf32>
    %752 = arith.addf %735, %751 : vector<60x20xf32>
    %c3_225 = arith.constant 3 : index
    %c0_226 = arith.constant 0 : index
    %c6_227 = arith.constant 6 : index
    %c2_228 = arith.constant 2 : index
    %753 = vector.load %arg2[%c3_225, %c0_226, %c6_227, %c2_228] : memref<5x1x66x24xf32, #tpu.memory_space<vmem>>, vector<1x1x60x20xf32>
    %754 = vector.shape_cast %753 : vector<1x1x60x20xf32> to vector<60x20xf32>
    %755 = vector.broadcast %7 : f32 to vector<60x20xf32>
    %756 = arith.mulf %754, %755 : vector<60x20xf32>
    %757 = arith.addf %740, %756 : vector<60x20xf32>
    %758 = vector.broadcast %16 : f32 to vector<60x20xf32>
    %759 = arith.mulf %754, %758 : vector<60x20xf32>
    %760 = arith.addf %743, %759 : vector<60x20xf32>
    %761 = vector.broadcast %25 : f32 to vector<60x20xf32>
    %762 = arith.mulf %754, %761 : vector<60x20xf32>
    %763 = arith.addf %746, %762 : vector<60x20xf32>
    %764 = vector.broadcast %34 : f32 to vector<60x20xf32>
    %765 = arith.mulf %754, %764 : vector<60x20xf32>
    %766 = arith.addf %749, %765 : vector<60x20xf32>
    %767 = vector.broadcast %43 : f32 to vector<60x20xf32>
    %768 = arith.mulf %754, %767 : vector<60x20xf32>
    %769 = arith.addf %752, %768 : vector<60x20xf32>
    %c3_229 = arith.constant 3 : index
    %c0_230 = arith.constant 0 : index
    %c6_231 = arith.constant 6 : index
    %c4_232 = arith.constant 4 : index
    %770 = vector.load %arg2[%c3_229, %c0_230, %c6_231, %c4_232] : memref<5x1x66x24xf32, #tpu.memory_space<vmem>>, vector<1x1x60x20xf32>
    %771 = vector.shape_cast %770 : vector<1x1x60x20xf32> to vector<60x20xf32>
    %772 = vector.broadcast %8 : f32 to vector<60x20xf32>
    %773 = arith.mulf %771, %772 : vector<60x20xf32>
    %774 = arith.addf %757, %773 : vector<60x20xf32>
    %775 = vector.broadcast %17 : f32 to vector<60x20xf32>
    %776 = arith.mulf %771, %775 : vector<60x20xf32>
    %777 = arith.addf %760, %776 : vector<60x20xf32>
    %778 = vector.broadcast %26 : f32 to vector<60x20xf32>
    %779 = arith.mulf %771, %778 : vector<60x20xf32>
    %780 = arith.addf %763, %779 : vector<60x20xf32>
    %781 = vector.broadcast %35 : f32 to vector<60x20xf32>
    %782 = arith.mulf %771, %781 : vector<60x20xf32>
    %783 = arith.addf %766, %782 : vector<60x20xf32>
    %784 = vector.broadcast %44 : f32 to vector<60x20xf32>
    %785 = arith.mulf %771, %784 : vector<60x20xf32>
    %786 = arith.addf %769, %785 : vector<60x20xf32>
    %cst_233 = arith.constant 0.000000e+00 : f32
    %787 = vector.broadcast %cst_233 : f32 to vector<60x20xf32>
    %788 = arith.cmpf ogt, %774, %787 : vector<60x20xf32>
    %cst_234 = arith.constant 3.450000e-01 : f32
    %789 = vector.broadcast %cst_234 : f32 to vector<60x20xf32>
    %790 = arith.mulf %774, %789 : vector<60x20xf32>
    %791 = arith.select %788, %774, %790 : vector<60x20xi1>, vector<60x20xf32>
    %792 = math.tanh %791 : vector<60x20xf32>
    %793 = arith.mulf %792, %792 : vector<60x20xf32>
    %c3_235 = arith.constant 3 : index
    %c0_236 = arith.constant 0 : index
    %c0_237 = arith.constant 0 : index
    %c0_238 = arith.constant 0 : index
    %794 = vector.load %arg3[%c3_235, %c0_236, %c0_237, %c0_238] : memref<5x5x60x20xf32, #tpu.memory_space<vmem>>, vector<1x1x60x20xf32>
    %795 = vector.shape_cast %794 : vector<1x1x60x20xf32> to vector<60x20xf32>
    %796 = vector.shape_cast %793 : vector<60x20xf32> to vector<1x1x60x20xf32>
    tpu.vector_store %arg3[%c3_235, %c0_236, %c0_237, %c0_238], %796 {strides = array<i32>} : memref<5x5x60x20xf32, #tpu.memory_space<vmem>>, vector<1x1x60x20xf32>,
    %cst_239 = arith.constant 0.000000e+00 : f32
    %797 = vector.broadcast %cst_239 : f32 to vector<60x20xf32>
    %798 = arith.cmpf ogt, %777, %797 : vector<60x20xf32>
    %cst_240 = arith.constant 3.450000e-01 : f32
    %799 = vector.broadcast %cst_240 : f32 to vector<60x20xf32>
    %800 = arith.mulf %777, %799 : vector<60x20xf32>
    %801 = arith.select %798, %777, %800 : vector<60x20xi1>, vector<60x20xf32>
    %802 = math.tanh %801 : vector<60x20xf32>
    %803 = arith.mulf %802, %802 : vector<60x20xf32>
    %c3_241 = arith.constant 3 : index
    %c1_242 = arith.constant 1 : index
    %c0_243 = arith.constant 0 : index
    %c0_244 = arith.constant 0 : index
    %804 = vector.load %arg3[%c3_241, %c1_242, %c0_243, %c0_244] : memref<5x5x60x20xf32, #tpu.memory_space<vmem>>, vector<1x1x60x20xf32>
    %805 = vector.shape_cast %804 : vector<1x1x60x20xf32> to vector<60x20xf32>
    %806 = vector.shape_cast %803 : vector<60x20xf32> to vector<1x1x60x20xf32>
    tpu.vector_store %arg3[%c3_241, %c1_242, %c0_243, %c0_244], %806 {strides = array<i32>} : memref<5x5x60x20xf32, #tpu.memory_space<vmem>>, vector<1x1x60x20xf32>,
    %cst_245 = arith.constant 0.000000e+00 : f32
    %807 = vector.broadcast %cst_245 : f32 to vector<60x20xf32>
    %808 = arith.cmpf ogt, %780, %807 : vector<60x20xf32>
    %cst_246 = arith.constant 3.450000e-01 : f32
    %809 = vector.broadcast %cst_246 : f32 to vector<60x20xf32>
    %810 = arith.mulf %780, %809 : vector<60x20xf32>
    %811 = arith.select %808, %780, %810 : vector<60x20xi1>, vector<60x20xf32>
    %812 = math.tanh %811 : vector<60x20xf32>
    %813 = arith.mulf %812, %812 : vector<60x20xf32>
    %c3_247 = arith.constant 3 : index
    %c2_248 = arith.constant 2 : index
    %c0_249 = arith.constant 0 : index
    %c0_250 = arith.constant 0 : index
    %814 = vector.load %arg3[%c3_247, %c2_248, %c0_249, %c0_250] : memref<5x5x60x20xf32, #tpu.memory_space<vmem>>, vector<1x1x60x20xf32>
    %815 = vector.shape_cast %814 : vector<1x1x60x20xf32> to vector<60x20xf32>
    %816 = vector.shape_cast %813 : vector<60x20xf32> to vector<1x1x60x20xf32>
    tpu.vector_store %arg3[%c3_247, %c2_248, %c0_249, %c0_250], %816 {strides = array<i32>} : memref<5x5x60x20xf32, #tpu.memory_space<vmem>>, vector<1x1x60x20xf32>,
    %cst_251 = arith.constant 0.000000e+00 : f32
    %817 = vector.broadcast %cst_251 : f32 to vector<60x20xf32>
    %818 = arith.cmpf ogt, %783, %817 : vector<60x20xf32>
    %cst_252 = arith.constant 3.450000e-01 : f32
    %819 = vector.broadcast %cst_252 : f32 to vector<60x20xf32>
    %820 = arith.mulf %783, %819 : vector<60x20xf32>
    %821 = arith.select %818, %783, %820 : vector<60x20xi1>, vector<60x20xf32>
    %822 = math.tanh %821 : vector<60x20xf32>
    %823 = arith.mulf %822, %822 : vector<60x20xf32>
    %c3_253 = arith.constant 3 : index
    %c3_254 = arith.constant 3 : index
    %c0_255 = arith.constant 0 : index
    %c0_256 = arith.constant 0 : index
    %824 = vector.load %arg3[%c3_253, %c3_254, %c0_255, %c0_256] : memref<5x5x60x20xf32, #tpu.memory_space<vmem>>, vector<1x1x60x20xf32>
    %825 = vector.shape_cast %824 : vector<1x1x60x20xf32> to vector<60x20xf32>
    %826 = vector.shape_cast %823 : vector<60x20xf32> to vector<1x1x60x20xf32>
    tpu.vector_store %arg3[%c3_253, %c3_254, %c0_255, %c0_256], %826 {strides = array<i32>} : memref<5x5x60x20xf32, #tpu.memory_space<vmem>>, vector<1x1x60x20xf32>,
    %cst_257 = arith.constant 0.000000e+00 : f32
    %827 = vector.broadcast %cst_257 : f32 to vector<60x20xf32>
    %828 = arith.cmpf ogt, %786, %827 : vector<60x20xf32>
    %cst_258 = arith.constant 3.450000e-01 : f32
    %829 = vector.broadcast %cst_258 : f32 to vector<60x20xf32>
    %830 = arith.mulf %786, %829 : vector<60x20xf32>
    %831 = arith.select %828, %786, %830 : vector<60x20xi1>, vector<60x20xf32>
    %832 = math.tanh %831 : vector<60x20xf32>
    %833 = arith.mulf %832, %832 : vector<60x20xf32>
    %c3_259 = arith.constant 3 : index
    %c4_260 = arith.constant 4 : index
    %c0_261 = arith.constant 0 : index
    %c0_262 = arith.constant 0 : index
    %834 = vector.load %arg3[%c3_259, %c4_260, %c0_261, %c0_262] : memref<5x5x60x20xf32, #tpu.memory_space<vmem>>, vector<1x1x60x20xf32>
    %835 = vector.shape_cast %834 : vector<1x1x60x20xf32> to vector<60x20xf32>
    %836 = vector.shape_cast %833 : vector<60x20xf32> to vector<1x1x60x20xf32>
    tpu.vector_store %arg3[%c3_259, %c4_260, %c0_261, %c0_262], %836 {strides = array<i32>} : memref<5x5x60x20xf32, #tpu.memory_space<vmem>>, vector<1x1x60x20xf32>,
    %c4_263 = arith.constant 4 : index
    %c0_264 = arith.constant 0 : index
    %c0_265 = arith.constant 0 : index
    %c0_266 = arith.constant 0 : index
    %837 = vector.load %arg2[%c4_263, %c0_264, %c0_265, %c0_266] : memref<5x1x66x24xf32, #tpu.memory_space<vmem>>, vector<1x1x60x20xf32>
    %838 = vector.shape_cast %837 : vector<1x1x60x20xf32> to vector<60x20xf32>
    %839 = vector.broadcast %0 : f32 to vector<60x20xf32>
    %840 = arith.mulf %838, %839 : vector<60x20xf32>
    %841 = vector.broadcast %9 : f32 to vector<60x20xf32>
    %842 = arith.mulf %838, %841 : vector<60x20xf32>
    %843 = vector.broadcast %18 : f32 to vector<60x20xf32>
    %844 = arith.mulf %838, %843 : vector<60x20xf32>
    %845 = vector.broadcast %27 : f32 to vector<60x20xf32>
    %846 = arith.mulf %838, %845 : vector<60x20xf32>
    %847 = vector.broadcast %36 : f32 to vector<60x20xf32>
    %848 = arith.mulf %838, %847 : vector<60x20xf32>
    %c4_267 = arith.constant 4 : index
    %c0_268 = arith.constant 0 : index
    %c0_269 = arith.constant 0 : index
    %c2_270 = arith.constant 2 : index
    %849 = vector.load %arg2[%c4_267, %c0_268, %c0_269, %c2_270] : memref<5x1x66x24xf32, #tpu.memory_space<vmem>>, vector<1x1x60x20xf32>
    %850 = vector.shape_cast %849 : vector<1x1x60x20xf32> to vector<60x20xf32>
    %851 = vector.broadcast %1 : f32 to vector<60x20xf32>
    %852 = arith.mulf %850, %851 : vector<60x20xf32>
    %853 = arith.addf %840, %852 : vector<60x20xf32>
    %854 = vector.broadcast %10 : f32 to vector<60x20xf32>
    %855 = arith.mulf %850, %854 : vector<60x20xf32>
    %856 = arith.addf %842, %855 : vector<60x20xf32>
    %857 = vector.broadcast %19 : f32 to vector<60x20xf32>
    %858 = arith.mulf %850, %857 : vector<60x20xf32>
    %859 = arith.addf %844, %858 : vector<60x20xf32>
    %860 = vector.broadcast %28 : f32 to vector<60x20xf32>
    %861 = arith.mulf %850, %860 : vector<60x20xf32>
    %862 = arith.addf %846, %861 : vector<60x20xf32>
    %863 = vector.broadcast %37 : f32 to vector<60x20xf32>
    %864 = arith.mulf %850, %863 : vector<60x20xf32>
    %865 = arith.addf %848, %864 : vector<60x20xf32>
    %c4_271 = arith.constant 4 : index
    %c0_272 = arith.constant 0 : index
    %c0_273 = arith.constant 0 : index
    %c4_274 = arith.constant 4 : index
    %866 = vector.load %arg2[%c4_271, %c0_272, %c0_273, %c4_274] : memref<5x1x66x24xf32, #tpu.memory_space<vmem>>, vector<1x1x60x20xf32>
    %867 = vector.shape_cast %866 : vector<1x1x60x20xf32> to vector<60x20xf32>
    %868 = vector.broadcast %2 : f32 to vector<60x20xf32>
    %869 = arith.mulf %867, %868 : vector<60x20xf32>
    %870 = arith.addf %853, %869 : vector<60x20xf32>
    %871 = vector.broadcast %11 : f32 to vector<60x20xf32>
    %872 = arith.mulf %867, %871 : vector<60x20xf32>
    %873 = arith.addf %856, %872 : vector<60x20xf32>
    %874 = vector.broadcast %20 : f32 to vector<60x20xf32>
    %875 = arith.mulf %867, %874 : vector<60x20xf32>
    %876 = arith.addf %859, %875 : vector<60x20xf32>
    %877 = vector.broadcast %29 : f32 to vector<60x20xf32>
    %878 = arith.mulf %867, %877 : vector<60x20xf32>
    %879 = arith.addf %862, %878 : vector<60x20xf32>
    %880 = vector.broadcast %38 : f32 to vector<60x20xf32>
    %881 = arith.mulf %867, %880 : vector<60x20xf32>
    %882 = arith.addf %865, %881 : vector<60x20xf32>
    %c4_275 = arith.constant 4 : index
    %c0_276 = arith.constant 0 : index
    %c3_277 = arith.constant 3 : index
    %c0_278 = arith.constant 0 : index
    %883 = vector.load %arg2[%c4_275, %c0_276, %c3_277, %c0_278] : memref<5x1x66x24xf32, #tpu.memory_space<vmem>>, vector<1x1x60x20xf32>
    %884 = vector.shape_cast %883 : vector<1x1x60x20xf32> to vector<60x20xf32>
    %885 = vector.broadcast %3 : f32 to vector<60x20xf32>
    %886 = arith.mulf %884, %885 : vector<60x20xf32>
    %887 = arith.addf %870, %886 : vector<60x20xf32>
    %888 = vector.broadcast %12 : f32 to vector<60x20xf32>
    %889 = arith.mulf %884, %888 : vector<60x20xf32>
    %890 = arith.addf %873, %889 : vector<60x20xf32>
    %891 = vector.broadcast %21 : f32 to vector<60x20xf32>
    %892 = arith.mulf %884, %891 : vector<60x20xf32>
    %893 = arith.addf %876, %892 : vector<60x20xf32>
    %894 = vector.broadcast %30 : f32 to vector<60x20xf32>
    %895 = arith.mulf %884, %894 : vector<60x20xf32>
    %896 = arith.addf %879, %895 : vector<60x20xf32>
    %897 = vector.broadcast %39 : f32 to vector<60x20xf32>
    %898 = arith.mulf %884, %897 : vector<60x20xf32>
    %899 = arith.addf %882, %898 : vector<60x20xf32>
    %c4_279 = arith.constant 4 : index
    %c0_280 = arith.constant 0 : index
    %c3_281 = arith.constant 3 : index
    %c2_282 = arith.constant 2 : index
    %900 = vector.load %arg2[%c4_279, %c0_280, %c3_281, %c2_282] : memref<5x1x66x24xf32, #tpu.memory_space<vmem>>, vector<1x1x60x20xf32>
    %901 = vector.shape_cast %900 : vector<1x1x60x20xf32> to vector<60x20xf32>
    %902 = vector.broadcast %4 : f32 to vector<60x20xf32>
    %903 = arith.mulf %901, %902 : vector<60x20xf32>
    %904 = arith.addf %887, %903 : vector<60x20xf32>
    %905 = vector.broadcast %13 : f32 to vector<60x20xf32>
    %906 = arith.mulf %901, %905 : vector<60x20xf32>
    %907 = arith.addf %890, %906 : vector<60x20xf32>
    %908 = vector.broadcast %22 : f32 to vector<60x20xf32>
    %909 = arith.mulf %901, %908 : vector<60x20xf32>
    %910 = arith.addf %893, %909 : vector<60x20xf32>
    %911 = vector.broadcast %31 : f32 to vector<60x20xf32>
    %912 = arith.mulf %901, %911 : vector<60x20xf32>
    %913 = arith.addf %896, %912 : vector<60x20xf32>
    %914 = vector.broadcast %40 : f32 to vector<60x20xf32>
    %915 = arith.mulf %901, %914 : vector<60x20xf32>
    %916 = arith.addf %899, %915 : vector<60x20xf32>
    %c4_283 = arith.constant 4 : index
    %c0_284 = arith.constant 0 : index
    %c3_285 = arith.constant 3 : index
    %c4_286 = arith.constant 4 : index
    %917 = vector.load %arg2[%c4_283, %c0_284, %c3_285, %c4_286] : memref<5x1x66x24xf32, #tpu.memory_space<vmem>>, vector<1x1x60x20xf32>
    %918 = vector.shape_cast %917 : vector<1x1x60x20xf32> to vector<60x20xf32>
    %919 = vector.broadcast %5 : f32 to vector<60x20xf32>
    %920 = arith.mulf %918, %919 : vector<60x20xf32>
    %921 = arith.addf %904, %920 : vector<60x20xf32>
    %922 = vector.broadcast %14 : f32 to vector<60x20xf32>
    %923 = arith.mulf %918, %922 : vector<60x20xf32>
    %924 = arith.addf %907, %923 : vector<60x20xf32>
    %925 = vector.broadcast %23 : f32 to vector<60x20xf32>
    %926 = arith.mulf %918, %925 : vector<60x20xf32>
    %927 = arith.addf %910, %926 : vector<60x20xf32>
    %928 = vector.broadcast %32 : f32 to vector<60x20xf32>
    %929 = arith.mulf %918, %928 : vector<60x20xf32>
    %930 = arith.addf %913, %929 : vector<60x20xf32>
    %931 = vector.broadcast %41 : f32 to vector<60x20xf32>
    %932 = arith.mulf %918, %931 : vector<60x20xf32>
    %933 = arith.addf %916, %932 : vector<60x20xf32>
    %c4_287 = arith.constant 4 : index
    %c0_288 = arith.constant 0 : index
    %c6_289 = arith.constant 6 : index
    %c0_290 = arith.constant 0 : index
    %934 = vector.load %arg2[%c4_287, %c0_288, %c6_289, %c0_290] : memref<5x1x66x24xf32, #tpu.memory_space<vmem>>, vector<1x1x60x20xf32>
    %935 = vector.shape_cast %934 : vector<1x1x60x20xf32> to vector<60x20xf32>
    %936 = vector.broadcast %6 : f32 to vector<60x20xf32>
    %937 = arith.mulf %935, %936 : vector<60x20xf32>
    %938 = arith.addf %921, %937 : vector<60x20xf32>
    %939 = vector.broadcast %15 : f32 to vector<60x20xf32>
    %940 = arith.mulf %935, %939 : vector<60x20xf32>
    %941 = arith.addf %924, %940 : vector<60x20xf32>
    %942 = vector.broadcast %24 : f32 to vector<60x20xf32>
    %943 = arith.mulf %935, %942 : vector<60x20xf32>
    %944 = arith.addf %927, %943 : vector<60x20xf32>
    %945 = vector.broadcast %33 : f32 to vector<60x20xf32>
    %946 = arith.mulf %935, %945 : vector<60x20xf32>
    %947 = arith.addf %930, %946 : vector<60x20xf32>
    %948 = vector.broadcast %42 : f32 to vector<60x20xf32>
    %949 = arith.mulf %935, %948 : vector<60x20xf32>
    %950 = arith.addf %933, %949 : vector<60x20xf32>
    %c4_291 = arith.constant 4 : index
    %c0_292 = arith.constant 0 : index
    %c6_293 = arith.constant 6 : index
    %c2_294 = arith.constant 2 : index
    %951 = vector.load %arg2[%c4_291, %c0_292, %c6_293, %c2_294] : memref<5x1x66x24xf32, #tpu.memory_space<vmem>>, vector<1x1x60x20xf32>
    %952 = vector.shape_cast %951 : vector<1x1x60x20xf32> to vector<60x20xf32>
    %953 = vector.broadcast %7 : f32 to vector<60x20xf32>
    %954 = arith.mulf %952, %953 : vector<60x20xf32>
    %955 = arith.addf %938, %954 : vector<60x20xf32>
    %956 = vector.broadcast %16 : f32 to vector<60x20xf32>
    %957 = arith.mulf %952, %956 : vector<60x20xf32>
    %958 = arith.addf %941, %957 : vector<60x20xf32>
    %959 = vector.broadcast %25 : f32 to vector<60x20xf32>
    %960 = arith.mulf %952, %959 : vector<60x20xf32>
    %961 = arith.addf %944, %960 : vector<60x20xf32>
    %962 = vector.broadcast %34 : f32 to vector<60x20xf32>
    %963 = arith.mulf %952, %962 : vector<60x20xf32>
    %964 = arith.addf %947, %963 : vector<60x20xf32>
    %965 = vector.broadcast %43 : f32 to vector<60x20xf32>
    %966 = arith.mulf %952, %965 : vector<60x20xf32>
    %967 = arith.addf %950, %966 : vector<60x20xf32>
    %c4_295 = arith.constant 4 : index
    %c0_296 = arith.constant 0 : index
    %c6_297 = arith.constant 6 : index
    %c4_298 = arith.constant 4 : index
    %968 = vector.load %arg2[%c4_295, %c0_296, %c6_297, %c4_298] : memref<5x1x66x24xf32, #tpu.memory_space<vmem>>, vector<1x1x60x20xf32>
    %969 = vector.shape_cast %968 : vector<1x1x60x20xf32> to vector<60x20xf32>
    %970 = vector.broadcast %8 : f32 to vector<60x20xf32>
    %971 = arith.mulf %969, %970 : vector<60x20xf32>
    %972 = arith.addf %955, %971 : vector<60x20xf32>
    %973 = vector.broadcast %17 : f32 to vector<60x20xf32>
    %974 = arith.mulf %969, %973 : vector<60x20xf32>
    %975 = arith.addf %958, %974 : vector<60x20xf32>
    %976 = vector.broadcast %26 : f32 to vector<60x20xf32>
    %977 = arith.mulf %969, %976 : vector<60x20xf32>
    %978 = arith.addf %961, %977 : vector<60x20xf32>
    %979 = vector.broadcast %35 : f32 to vector<60x20xf32>
    %980 = arith.mulf %969, %979 : vector<60x20xf32>
    %981 = arith.addf %964, %980 : vector<60x20xf32>
    %982 = vector.broadcast %44 : f32 to vector<60x20xf32>
    %983 = arith.mulf %969, %982 : vector<60x20xf32>
    %984 = arith.addf %967, %983 : vector<60x20xf32>
    %cst_299 = arith.constant 0.000000e+00 : f32
    %985 = vector.broadcast %cst_299 : f32 to vector<60x20xf32>
    %986 = arith.cmpf ogt, %972, %985 : vector<60x20xf32>
    %cst_300 = arith.constant 3.450000e-01 : f32
    %987 = vector.broadcast %cst_300 : f32 to vector<60x20xf32>
    %988 = arith.mulf %972, %987 : vector<60x20xf32>
    %989 = arith.select %986, %972, %988 : vector<60x20xi1>, vector<60x20xf32>
    %990 = math.tanh %989 : vector<60x20xf32>
    %991 = arith.mulf %990, %990 : vector<60x20xf32>
    %c4_301 = arith.constant 4 : index
    %c0_302 = arith.constant 0 : index
    %c0_303 = arith.constant 0 : index
    %c0_304 = arith.constant 0 : index
    %992 = vector.load %arg3[%c4_301, %c0_302, %c0_303, %c0_304] : memref<5x5x60x20xf32, #tpu.memory_space<vmem>>, vector<1x1x60x20xf32>
    %993 = vector.shape_cast %992 : vector<1x1x60x20xf32> to vector<60x20xf32>
    %994 = vector.shape_cast %991 : vector<60x20xf32> to vector<1x1x60x20xf32>
    tpu.vector_store %arg3[%c4_301, %c0_302, %c0_303, %c0_304], %994 {strides = array<i32>} : memref<5x5x60x20xf32, #tpu.memory_space<vmem>>, vector<1x1x60x20xf32>,
    %cst_305 = arith.constant 0.000000e+00 : f32
    %995 = vector.broadcast %cst_305 : f32 to vector<60x20xf32>
    %996 = arith.cmpf ogt, %975, %995 : vector<60x20xf32>
    %cst_306 = arith.constant 3.450000e-01 : f32
    %997 = vector.broadcast %cst_306 : f32 to vector<60x20xf32>
    %998 = arith.mulf %975, %997 : vector<60x20xf32>
    %999 = arith.select %996, %975, %998 : vector<60x20xi1>, vector<60x20xf32>
    %1000 = math.tanh %999 : vector<60x20xf32>
    %1001 = arith.mulf %1000, %1000 : vector<60x20xf32>
    %c4_307 = arith.constant 4 : index
    %c1_308 = arith.constant 1 : index
    %c0_309 = arith.constant 0 : index
    %c0_310 = arith.constant 0 : index
    %1002 = vector.load %arg3[%c4_307, %c1_308, %c0_309, %c0_310] : memref<5x5x60x20xf32, #tpu.memory_space<vmem>>, vector<1x1x60x20xf32>
    %1003 = vector.shape_cast %1002 : vector<1x1x60x20xf32> to vector<60x20xf32>
    %1004 = vector.shape_cast %1001 : vector<60x20xf32> to vector<1x1x60x20xf32>
    tpu.vector_store %arg3[%c4_307, %c1_308, %c0_309, %c0_310], %1004 {strides = array<i32>} : memref<5x5x60x20xf32, #tpu.memory_space<vmem>>, vector<1x1x60x20xf32>,
    %cst_311 = arith.constant 0.000000e+00 : f32
    %1005 = vector.broadcast %cst_311 : f32 to vector<60x20xf32>
    %1006 = arith.cmpf ogt, %978, %1005 : vector<60x20xf32>
    %cst_312 = arith.constant 3.450000e-01 : f32
    %1007 = vector.broadcast %cst_312 : f32 to vector<60x20xf32>
    %1008 = arith.mulf %978, %1007 : vector<60x20xf32>
    %1009 = arith.select %1006, %978, %1008 : vector<60x20xi1>, vector<60x20xf32>
    %1010 = math.tanh %1009 : vector<60x20xf32>
    %1011 = arith.mulf %1010, %1010 : vector<60x20xf32>
    %c4_313 = arith.constant 4 : index
    %c2_314 = arith.constant 2 : index
    %c0_315 = arith.constant 0 : index
    %c0_316 = arith.constant 0 : index
    %1012 = vector.load %arg3[%c4_313, %c2_314, %c0_315, %c0_316] : memref<5x5x60x20xf32, #tpu.memory_space<vmem>>, vector<1x1x60x20xf32>
    %1013 = vector.shape_cast %1012 : vector<1x1x60x20xf32> to vector<60x20xf32>
    %1014 = vector.shape_cast %1011 : vector<60x20xf32> to vector<1x1x60x20xf32>
    tpu.vector_store %arg3[%c4_313, %c2_314, %c0_315, %c0_316], %1014 {strides = array<i32>} : memref<5x5x60x20xf32, #tpu.memory_space<vmem>>, vector<1x1x60x20xf32>,
    %cst_317 = arith.constant 0.000000e+00 : f32
    %1015 = vector.broadcast %cst_317 : f32 to vector<60x20xf32>
    %1016 = arith.cmpf ogt, %981, %1015 : vector<60x20xf32>
    %cst_318 = arith.constant 3.450000e-01 : f32
    %1017 = vector.broadcast %cst_318 : f32 to vector<60x20xf32>
    %1018 = arith.mulf %981, %1017 : vector<60x20xf32>
    %1019 = arith.select %1016, %981, %1018 : vector<60x20xi1>, vector<60x20xf32>
    %1020 = math.tanh %1019 : vector<60x20xf32>
    %1021 = arith.mulf %1020, %1020 : vector<60x20xf32>
    %c4_319 = arith.constant 4 : index
    %c3_320 = arith.constant 3 : index
    %c0_321 = arith.constant 0 : index
    %c0_322 = arith.constant 0 : index
    %1022 = vector.load %arg3[%c4_319, %c3_320, %c0_321, %c0_322] : memref<5x5x60x20xf32, #tpu.memory_space<vmem>>, vector<1x1x60x20xf32>
    %1023 = vector.shape_cast %1022 : vector<1x1x60x20xf32> to vector<60x20xf32>
    %1024 = vector.shape_cast %1021 : vector<60x20xf32> to vector<1x1x60x20xf32>
    tpu.vector_store %arg3[%c4_319, %c3_320, %c0_321, %c0_322], %1024 {strides = array<i32>} : memref<5x5x60x20xf32, #tpu.memory_space<vmem>>, vector<1x1x60x20xf32>,
    %cst_323 = arith.constant 0.000000e+00 : f32
    %1025 = vector.broadcast %cst_323 : f32 to vector<60x20xf32>
    %1026 = arith.cmpf ogt, %984, %1025 : vector<60x20xf32>
    %cst_324 = arith.constant 3.450000e-01 : f32
    %1027 = vector.broadcast %cst_324 : f32 to vector<60x20xf32>
    %1028 = arith.mulf %984, %1027 : vector<60x20xf32>
    %1029 = arith.select %1026, %984, %1028 : vector<60x20xi1>, vector<60x20xf32>
    %1030 = math.tanh %1029 : vector<60x20xf32>
    %1031 = arith.mulf %1030, %1030 : vector<60x20xf32>
    %c4_325 = arith.constant 4 : index
    %c4_326 = arith.constant 4 : index
    %c0_327 = arith.constant 0 : index
    %c0_328 = arith.constant 0 : index
    %1032 = vector.load %arg3[%c4_325, %c4_326, %c0_327, %c0_328] : memref<5x5x60x20xf32, #tpu.memory_space<vmem>>, vector<1x1x60x20xf32>
    %1033 = vector.shape_cast %1032 : vector<1x1x60x20xf32> to vector<60x20xf32>
    %1034 = vector.shape_cast %1031 : vector<60x20xf32> to vector<1x1x60x20xf32>
    tpu.vector_store %arg3[%c4_325, %c4_326, %c0_327, %c0_328], %1034 {strides = array<i32>} : memref<5x5x60x20xf32, #tpu.memory_space<vmem>>, vector<1x1x60x20xf32>,
    return
  }
  func.func @transform_0(%arg0: i32) -> i32 {
    %c0_i32 = arith.constant 0 : i32
    %c0_i32_0 = arith.constant 0 : i32
    return %c0_i32 : i32
  }
  func.func @transform_1(%arg0: i32) -> (i32, i32, i32, i32) {
    %c0_i32 = arith.constant 0 : i32
    %c0_i32_0 = arith.constant 0 : i32
    %c0_i32_1 = arith.constant 0 : i32
    %c0_i32_2 = arith.constant 0 : i32
    %c0_i32_3 = arith.constant 0 : i32
    return %c0_i32, %c0_i32_0, %c0_i32_1, %c0_i32_2 : i32, i32, i32, i32
  }
  func.func @transform_2(%arg0: i32) -> (i32, i32, i32, i32) {
    %c0_i32 = arith.constant 0 : i32
    %c0_i32_0 = arith.constant 0 : i32
    %c0_i32_1 = arith.constant 0 : i32
    %c0_i32_2 = arith.constant 0 : i32
    %c0_i32_3 = arith.constant 0 : i32
    return %c0_i32, %c0_i32_0, %c0_i32_1, %c0_i32_2 : i32, i32, i32, i32
  }
}

</mosaic_0001>

<llo_original>
// kernel: _model_forward.1
$region0: #{_model_forward.1}
  #allocation0 [shape = 'u32[]', space=smem, size = 0x4, offset = 0x4, fixed_abs, tag = 'smem constant byte address 0x4 - core index']
  #allocation1 [shape = 'u32[144,128]{1,0:T(1,128)}', space=vmem, size = 0x12000, scoped, tag = 'internal scratch']
  %s0 = inlined_call_operand.vmem [shape: f32[45], index: 0, kind: input, shape index: {}]
  %s1 = inlined_call_operand.vmem [shape: f32[5,1,66,24], index: 1, kind: input, shape index: {}]
  %s2 = inlined_call_operand.vmem [shape: f32[5,5,60,20], index: 2, kind: output, shape index: {}]
  %s3 = sld [smem:[#allocation0]]
  $region22: #{_model_forward.1} parent=0
    _
  %s5 = ssub.s32 1, %s3
  %s6 = scalar_select 0, %s5, %s3
  $region1: #{_model_forward.1} parent=0
    #allocation2 [shape = 'u8[512]{0}', space=smem, size = 0x200, scoped, tag = 'input window, operand 0, single buffered']
    #allocation3 [shape = 's32[1]{0}', space=sflag, size = 0x4, scoped, tag = 'scoped memory for _model_forward.1']
    %7 = vsyncpa [#allocation3], 0
    // Predicated region
    $region2: #{_model_forward.1} parent=1 // pred_check
      _
    $region3: #{_model_forward.1} parent=1 // pred_check_branch
      %9 = sbr.rel (0) target = $region5
    $region4: #{_model_forward.1} parent=1 // pred_region
      %s11 = ssub.s32 16, 16
      %12 = vsyncadd [#allocation3], %s11
      %s14 = sshll.u32 %s0, 4
      %s15 = int_to_ptr.vmem [resolvable:$true] %s14
      %17 = dma.vmem_to_smem %s15, 16, [#allocation2], [#allocation3]
    $region5: #{_model_forward.1} parent=1 // pred_fallthru
      _
    // Predicated region
    $region6: #{_model_forward.1} parent=1 // pred_check
      _
    $region7: #{_model_forward.1} parent=1 // pred_check_branch
      %19 = sbr.rel (0) target = $region9
    $region8: #{_model_forward.1} parent=1 // pred_region
      _
    $region9: #{_model_forward.1} parent=1 // pred_fallthru
      _
    // Predicated region
    $region10: #{_model_forward.1} parent=1 // pred_check
      _
    $region11: #{_model_forward.1} parent=1 // pred_check_branch
      %21 = sbr.rel (0) target = $region13
    $region12: #{_model_forward.1} parent=1 // pred_region
      %22 = dma.done [#allocation3], 16
    $region13: #{_model_forward.1} parent=1 // pred_fallthru
      _
    %23 = sfence
    %s24 = sld [smem:[#allocation2 + $0x8]]
    %s25 = sld [smem:[#allocation2 + $0x7]]
    %s26 = sld [smem:[#allocation2 + $0x6]]
    %s27 = sld [smem:[#allocation2 + $0x5]]
    %s28 = sld [smem:[#allocation2 + $0x4]]
    %s29 = sld [smem:[#allocation2 + $0x3]]
    %s30 = sld [smem:[#allocation2 + $0x2]]
    %s31 = sld [smem:[#allocation2 + $0x1]]
    %s32 = sld [smem:[#allocation2]]
    %s33 = sld [smem:[#allocation2 + $0x11]]
    %s34 = sld [smem:[#allocation2 + $0x10]]
    %s35 = sld [smem:[#allocation2 + $0xf]]
    %s36 = sld [smem:[#allocation2 + $0xe]]
    %s37 = sld [smem:[#allocation2 + $0xd]]
    %s38 = sld [smem:[#allocation2 + $0xc]]
    %s39 = sld [smem:[#allocation2 + $0xb]]
    %s40 = sld [smem:[#allocation2 + $0xa]]
    %s41 = sld [smem:[#allocation2 + $0x9]]
    %s42 = sld [smem:[#allocation2 + $0x1a]]
    %s43 = sld [smem:[#allocation2 + $0x19]]
    %s44 = sld [smem:[#allocation2 + $0x18]]
    %s45 = sld [smem:[#allocation2 + $0x17]]
    %s46 = sld [smem:[#allocation2 + $0x16]]
    %s47 = sld [smem:[#allocation2 + $0x15]]
    %s48 = sld [smem:[#allocation2 + $0x14]]
    %s49 = sld [smem:[#allocation2 + $0x13]]
    %s50 = sld [smem:[#allocation2 + $0x12]]
    %s51 = sld [smem:[#allocation2 + $0x23]]
    %s52 = sld [smem:[#allocation2 + $0x22]]
    %s53 = sld [smem:[#allocation2 + $0x21]]
    %s54 = sld [smem:[#allocation2 + $0x20]]
    %s55 = sld [smem:[#allocation2 + $0x1f]]
    %s56 = sld [smem:[#allocation2 + $0x1e]]
    %s57 = sld [smem:[#allocation2 + $0x1d]]
    %s58 = sld [smem:[#allocation2 + $0x1c]]
    %s59 = sld [smem:[#allocation2 + $0x1b]]
    %s60 = sld [smem:[#allocation2 + $0x2c]]
    %s61 = sld [smem:[#allocation2 + $0x2b]]
    %s62 = sld [smem:[#allocation2 + $0x2a]]
    %s63 = sld [smem:[#allocation2 + $0x29]]
    %s64 = sld [smem:[#allocation2 + $0x28]]
    %s65 = sld [smem:[#allocation2 + $0x27]]
    %s66 = sld [smem:[#allocation2 + $0x26]]
    %s67 = sld [smem:[#allocation2 + $0x25]]
    %s68 = sld [smem:[#allocation2 + $0x24]]
    %v69 = vld [vmem:[%s1] sm:$0xff]
    %v70 = vld [vmem:[%s1 + $0x8] sm:$0xff]
    %v71 = vld [vmem:[%s1 + $0x10] sm:$0xff]
    %v72 = vld [vmem:[%s1 + $0x18] sm:$0xff]
    %v73 = vld [vmem:[%s1 + $0x20] sm:$0xff]
    %v74 = vld [vmem:[%s1 + $0x28] sm:$0xff]
    %v75 = vld [vmem:[%s1 + $0x30] sm:$0xff]
    %v76 = vld [vmem:[%s1 + $0x38] sm:$0xf]
    %v77 = vstv %s24
    %v78 = vmul.f32 %v69, %v77
    %v79 = vmul.f32 %v70, %v77
    %v80 = vmul.f32 %v71, %v77
    %v81 = vmul.f32 %v72, %v77
    %v82 = vmul.f32 %v73, %v77
    %v83 = vmul.f32 %v74, %v77
    %v84 = vmul.f32 %v75, %v77
    %v85 = vmul.f32 %v76, %v77
    %v86 = vstv %s33
    %v87 = vmul.f32 %v69, %v86
    %v88 = vmul.f32 %v70, %v86
    %v89 = vmul.f32 %v71, %v86
    %v90 = vmul.f32 %v72, %v86
    %v91 = vmul.f32 %v73, %v86
    %v92 = vmul.f32 %v74, %v86
    %v93 = vmul.f32 %v75, %v86
    %v94 = vmul.f32 %v76, %v86
    %v95 = vstv %s42
    %v96 = vmul.f32 %v69, %v95
    %v97 = vmul.f32 %v70, %v95
    %v98 = vmul.f32 %v71, %v95
    %v99 = vmul.f32 %v72, %v95
    %v100 = vmul.f32 %v73, %v95
    %v101 = vmul.f32 %v74, %v95
    %v102 = vmul.f32 %v75, %v95
    %v103 = vmul.f32 %v76, %v95
    %v104 = vstv %s51
    %v105 = vmul.f32 %v69, %v104
    %v106 = vmul.f32 %v70, %v104
    %v107 = vmul.f32 %v71, %v104
    %v108 = vmul.f32 %v72, %v104
    %v109 = vmul.f32 %v73, %v104
    %v110 = vmul.f32 %v74, %v104
    %v111 = vmul.f32 %v75, %v104
    %v112 = vmul.f32 %v76, %v104
    %v113 = vstv %s60
    %v114 = vmul.f32 %v69, %v113
    %v115 = vmul.f32 %v70, %v113
    %v116 = vmul.f32 %v71, %v113
    %v117 = vmul.f32 %v72, %v113
    %v118 = vmul.f32 %v73, %v113
    %v119 = vmul.f32 %v74, %v113
    %v120 = vmul.f32 %v75, %v113
    %v121 = vmul.f32 %v76, %v113
    %v122 = vstv %s25
    %v123 = vmul.f32 %v69, %v122
    %v124 = vmul.f32 %v70, %v122
    %v125 = vmul.f32 %v71, %v122
    %v126 = vmul.f32 %v72, %v122
    %v127 = vmul.f32 %v73, %v122
    %v128 = vmul.f32 %v74, %v122
    %v129 = vmul.f32 %v75, %v122
    %v130 = vmul.f32 %v76, %v122
    %139 = vrot.lane.b32.xlu0 %v123, 126
    %v140 = vpop.permute.xlu0 %139
    %141 = vrot.lane.b32.xlu0 %v124, 126
    %v142 = vpop.permute.xlu0 %141
    %143 = vrot.lane.b32.xlu0 %v125, 126
    %v144 = vpop.permute.xlu0 %143
    %145 = vrot.lane.b32.xlu0 %v126, 126
    %v146 = vpop.permute.xlu0 %145
    %147 = vrot.lane.b32.xlu0 %v127, 126
    %v148 = vpop.permute.xlu0 %147
    %149 = vrot.lane.b32.xlu0 %v128, 126
    %v150 = vpop.permute.xlu0 %149
    %151 = vrot.lane.b32.xlu0 %v129, 126
    %v152 = vpop.permute.xlu0 %151
    %153 = vrot.lane.b32.xlu0 %v130, 126
    %v154 = vpop.permute.xlu0 %153
    %v163 = vadd.f32 %v78, %v140
    %v164 = vadd.f32 %v79, %v142
    %v165 = vadd.f32 %v80, %v144
    %v166 = vadd.f32 %v81, %v146
    %v167 = vadd.f32 %v82, %v148
    %v168 = vadd.f32 %v83, %v150
    %v169 = vadd.f32 %v84, %v152
    %v170 = vadd.f32 %v85, %v154
    %v171 = vstv %s34
    %v172 = vmul.f32 %v69, %v171
    %v173 = vmul.f32 %v70, %v171
    %v174 = vmul.f32 %v71, %v171
    %v175 = vmul.f32 %v72, %v171
    %v176 = vmul.f32 %v73, %v171
    %v177 = vmul.f32 %v74, %v171
    %v178 = vmul.f32 %v75, %v171
    %v179 = vmul.f32 %v76, %v171
    %188 = vrot.lane.b32.xlu0 %v172, 126
    %v189 = vpop.permute.xlu0 %188
    %190 = vrot.lane.b32.xlu0 %v173, 126
    %v191 = vpop.permute.xlu0 %190
    %192 = vrot.lane.b32.xlu0 %v174, 126
    %v193 = vpop.permute.xlu0 %192
    %194 = vrot.lane.b32.xlu0 %v175, 126
    %v195 = vpop.permute.xlu0 %194
    %196 = vrot.lane.b32.xlu0 %v176, 126
    %v197 = vpop.permute.xlu0 %196
    %198 = vrot.lane.b32.xlu0 %v177, 126
    %v199 = vpop.permute.xlu0 %198
    %200 = vrot.lane.b32.xlu0 %v178, 126
    %v201 = vpop.permute.xlu0 %200
    %202 = vrot.lane.b32.xlu0 %v179, 126
    %v203 = vpop.permute.xlu0 %202
    %v212 = vadd.f32 %v87, %v189
    %v213 = vadd.f32 %v88, %v191
    %v214 = vadd.f32 %v89, %v193
    %v215 = vadd.f32 %v90, %v195
    %v216 = vadd.f32 %v91, %v197
    %v217 = vadd.f32 %v92, %v199
    %v218 = vadd.f32 %v93, %v201
    %v219 = vadd.f32 %v94, %v203
    %v220 = vstv %s43
    %v221 = vmul.f32 %v69, %v220
    %v222 = vmul.f32 %v70, %v220
    %v223 = vmul.f32 %v71, %v220
    %v224 = vmul.f32 %v72, %v220
    %v225 = vmul.f32 %v73, %v220
    %v226 = vmul.f32 %v74, %v220
    %v227 = vmul.f32 %v75, %v220
    %v228 = vmul.f32 %v76, %v220
    %237 = vrot.lane.b32.xlu0 %v221, 126
    %v238 = vpop.permute.xlu0 %237
    %239 = vrot.lane.b32.xlu0 %v222, 126
    %v240 = vpop.permute.xlu0 %239
    %241 = vrot.lane.b32.xlu0 %v223, 126
    %v242 = vpop.permute.xlu0 %241
    %243 = vrot.lane.b32.xlu0 %v224, 126
    %v244 = vpop.permute.xlu0 %243
    %245 = vrot.lane.b32.xlu0 %v225, 126
    %v246 = vpop.permute.xlu0 %245
    %247 = vrot.lane.b32.xlu0 %v226, 126
    %v248 = vpop.permute.xlu0 %247
    %249 = vrot.lane.b32.xlu0 %v227, 126
    %v250 = vpop.permute.xlu0 %249
    %251 = vrot.lane.b32.xlu0 %v228, 126
    %v252 = vpop.permute.xlu0 %251
    %v261 = vadd.f32 %v96, %v238
    %v262 = vadd.f32 %v97, %v240
    %v263 = vadd.f32 %v98, %v242
    %v264 = vadd.f32 %v99, %v244
    %v265 = vadd.f32 %v100, %v246
    %v266 = vadd.f32 %v101, %v248
    %v267 = vadd.f32 %v102, %v250
    %v268 = vadd.f32 %v103, %v252
    %v269 = vstv %s52
    %v270 = vmul.f32 %v69, %v269
    %v271 = vmul.f32 %v70, %v269
    %v272 = vmul.f32 %v71, %v269
    %v273 = vmul.f32 %v72, %v269
    %v274 = vmul.f32 %v73, %v269
    %v275 = vmul.f32 %v74, %v269
    %v276 = vmul.f32 %v75, %v269
    %v277 = vmul.f32 %v76, %v269
    %286 = vrot.lane.b32.xlu0 %v270, 126
    %v287 = vpop.permute.xlu0 %286
    %288 = vrot.lane.b32.xlu0 %v271, 126
    %v289 = vpop.permute.xlu0 %288
    %290 = vrot.lane.b32.xlu0 %v272, 126
    %v291 = vpop.permute.xlu0 %290
    %292 = vrot.lane.b32.xlu0 %v273, 126
    %v293 = vpop.permute.xlu0 %292
    %294 = vrot.lane.b32.xlu0 %v274, 126
    %v295 = vpop.permute.xlu0 %294
    %296 = vrot.lane.b32.xlu0 %v275, 126
    %v297 = vpop.permute.xlu0 %296
    %298 = vrot.lane.b32.xlu0 %v276, 126
    %v299 = vpop.permute.xlu0 %298
    %300 = vrot.lane.b32.xlu0 %v277, 126
    %v301 = vpop.permute.xlu0 %300
    %v310 = vadd.f32 %v105, %v287
    %v311 = vadd.f32 %v106, %v289
    %v312 = vadd.f32 %v107, %v291
    %v313 = vadd.f32 %v108, %v293
    %v314 = vadd.f32 %v109, %v295
    %v315 = vadd.f32 %v110, %v297
    %v316 = vadd.f32 %v111, %v299
    %v317 = vadd.f32 %v112, %v301
    %v318 = vstv %s61
    %v319 = vmul.f32 %v69, %v318
    %v320 = vmul.f32 %v70, %v318
    %v321 = vmul.f32 %v71, %v318
    %v322 = vmul.f32 %v72, %v318
    %v323 = vmul.f32 %v73, %v318
    %v324 = vmul.f32 %v74, %v318
    %v325 = vmul.f32 %v75, %v318
    %v326 = vmul.f32 %v76, %v318
    %335 = vrot.lane.b32.xlu0 %v319, 126
    %v336 = vpop.permute.xlu0 %335
    %337 = vrot.lane.b32.xlu0 %v320, 126
    %v338 = vpop.permute.xlu0 %337
    %339 = vrot.lane.b32.xlu0 %v321, 126
    %v340 = vpop.permute.xlu0 %339
    %341 = vrot.lane.b32.xlu0 %v322, 126
    %v342 = vpop.permute.xlu0 %341
    %343 = vrot.lane.b32.xlu0 %v323, 126
    %v344 = vpop.permute.xlu0 %343
    %345 = vrot.lane.b32.xlu0 %v324, 126
    %v346 = vpop.permute.xlu0 %345
    %347 = vrot.lane.b32.xlu0 %v325, 126
    %v348 = vpop.permute.xlu0 %347
    %349 = vrot.lane.b32.xlu0 %v326, 126
    %v350 = vpop.permute.xlu0 %349
    %v359 = vadd.f32 %v114, %v336
    %v360 = vadd.f32 %v115, %v338
    %v361 = vadd.f32 %v116, %v340
    %v362 = vadd.f32 %v117, %v342
    %v363 = vadd.f32 %v118, %v344
    %v364 = vadd.f32 %v119, %v346
    %v365 = vadd.f32 %v120, %v348
    %v366 = vadd.f32 %v121, %v350
    %v367 = vstv %s26
    %v368 = vmul.f32 %v69, %v367
    %v369 = vmul.f32 %v70, %v367
    %v370 = vmul.f32 %v71, %v367
    %v371 = vmul.f32 %v72, %v367
    %v372 = vmul.f32 %v73, %v367
    %v373 = vmul.f32 %v74, %v367
    %v374 = vmul.f32 %v75, %v367
    %v375 = vmul.f32 %v76, %v367
    %384 = vrot.lane.b32.xlu0 %v368, 124
    %v385 = vpop.permute.xlu0 %384
    %386 = vrot.lane.b32.xlu0 %v369, 124
    %v387 = vpop.permute.xlu0 %386
    %388 = vrot.lane.b32.xlu0 %v370, 124
    %v389 = vpop.permute.xlu0 %388
    %390 = vrot.lane.b32.xlu0 %v371, 124
    %v391 = vpop.permute.xlu0 %390
    %392 = vrot.lane.b32.xlu0 %v372, 124
    %v393 = vpop.permute.xlu0 %392
    %394 = vrot.lane.b32.xlu0 %v373, 124
    %v395 = vpop.permute.xlu0 %394
    %396 = vrot.lane.b32.xlu0 %v374, 124
    %v397 = vpop.permute.xlu0 %396
    %398 = vrot.lane.b32.xlu0 %v375, 124
    %v399 = vpop.permute.xlu0 %398
    %v408 = vadd.f32 %v163, %v385
    %v409 = vadd.f32 %v164, %v387
    %v410 = vadd.f32 %v165, %v389
    %v411 = vadd.f32 %v166, %v391
    %v412 = vadd.f32 %v167, %v393
    %v413 = vadd.f32 %v168, %v395
    %v414 = vadd.f32 %v169, %v397
    %v415 = vadd.f32 %v170, %v399
    %v416 = vstv %s35
    %v417 = vmul.f32 %v69, %v416
    %v418 = vmul.f32 %v70, %v416
    %v419 = vmul.f32 %v71, %v416
    %v420 = vmul.f32 %v72, %v416
    %v421 = vmul.f32 %v73, %v416
    %v422 = vmul.f32 %v74, %v416
    %v423 = vmul.f32 %v75, %v416
    %v424 = vmul.f32 %v76, %v416
    %433 = vrot.lane.b32.xlu0 %v417, 124
    %v434 = vpop.permute.xlu0 %433
    %435 = vrot.lane.b32.xlu0 %v418, 124
    %v436 = vpop.permute.xlu0 %435
    %437 = vrot.lane.b32.xlu0 %v419, 124
    %v438 = vpop.permute.xlu0 %437
    %439 = vrot.lane.b32.xlu0 %v420, 124
    %v440 = vpop.permute.xlu0 %439
    %441 = vrot.lane.b32.xlu0 %v421, 124
    %v442 = vpop.permute.xlu0 %441
    %443 = vrot.lane.b32.xlu0 %v422, 124
    %v444 = vpop.permute.xlu0 %443
    %445 = vrot.lane.b32.xlu0 %v423, 124
    %v446 = vpop.permute.xlu0 %445
    %447 = vrot.lane.b32.xlu0 %v424, 124
    %v448 = vpop.permute.xlu0 %447
    %v457 = vadd.f32 %v212, %v434
    %v458 = vadd.f32 %v213, %v436
    %v459 = vadd.f32 %v214, %v438
    %v460 = vadd.f32 %v215, %v440
    %v461 = vadd.f32 %v216, %v442
    %v462 = vadd.f32 %v217, %v444
    %v463 = vadd.f32 %v218, %v446
    %v464 = vadd.f32 %v219, %v448
    %v465 = vstv %s44
    %v466 = vmul.f32 %v69, %v465
    %v467 = vmul.f32 %v70, %v465
    %v468 = vmul.f32 %v71, %v465
    %v469 = vmul.f32 %v72, %v465
    %v470 = vmul.f32 %v73, %v465
    %v471 = vmul.f32 %v74, %v465
    %v472 = vmul.f32 %v75, %v465
    %v473 = vmul.f32 %v76, %v465
    %482 = vrot.lane.b32.xlu0 %v466, 124
    %v483 = vpop.permute.xlu0 %482
    %484 = vrot.lane.b32.xlu0 %v467, 124
    %v485 = vpop.permute.xlu0 %484
    %486 = vrot.lane.b32.xlu0 %v468, 124
    %v487 = vpop.permute.xlu0 %486
    %488 = vrot.lane.b32.xlu0 %v469, 124
    %v489 = vpop.permute.xlu0 %488
    %490 = vrot.lane.b32.xlu0 %v470, 124
    %v491 = vpop.permute.xlu0 %490
    %492 = vrot.lane.b32.xlu0 %v471, 124
    %v493 = vpop.permute.xlu0 %492
    %494 = vrot.lane.b32.xlu0 %v472, 124
    %v495 = vpop.permute.xlu0 %494
    %496 = vrot.lane.b32.xlu0 %v473, 124
    %v497 = vpop.permute.xlu0 %496
    %v506 = vadd.f32 %v261, %v483
    %v507 = vadd.f32 %v262, %v485
    %v508 = vadd.f32 %v263, %v487
    %v509 = vadd.f32 %v264, %v489
    %v510 = vadd.f32 %v265, %v491
    %v511 = vadd.f32 %v266, %v493
    %v512 = vadd.f32 %v267, %v495
    %v513 = vadd.f32 %v268, %v497
    %v514 = vstv %s53
    %v515 = vmul.f32 %v69, %v514
    %v516 = vmul.f32 %v70, %v514
    %v517 = vmul.f32 %v71, %v514
    %v518 = vmul.f32 %v72, %v514
    %v519 = vmul.f32 %v73, %v514
    %v520 = vmul.f32 %v74, %v514
    %v521 = vmul.f32 %v75, %v514
    %v522 = vmul.f32 %v76, %v514
    %531 = vrot.lane.b32.xlu0 %v515, 124
    %v532 = vpop.permute.xlu0 %531
    %533 = vrot.lane.b32.xlu0 %v516, 124
    %v534 = vpop.permute.xlu0 %533
    %535 = vrot.lane.b32.xlu0 %v517, 124
    %v536 = vpop.permute.xlu0 %535
    %537 = vrot.lane.b32.xlu0 %v518, 124
    %v538 = vpop.permute.xlu0 %537
    %539 = vrot.lane.b32.xlu0 %v519, 124
    %v540 = vpop.permute.xlu0 %539
    %541 = vrot.lane.b32.xlu0 %v520, 124
    %v542 = vpop.permute.xlu0 %541
    %543 = vrot.lane.b32.xlu0 %v521, 124
    %v544 = vpop.permute.xlu0 %543
    %545 = vrot.lane.b32.xlu0 %v522, 124
    %v546 = vpop.permute.xlu0 %545
    %v555 = vadd.f32 %v310, %v532
    %v556 = vadd.f32 %v311, %v534
    %v557 = vadd.f32 %v312, %v536
    %v558 = vadd.f32 %v313, %v538
    %v559 = vadd.f32 %v314, %v540
    %v560 = vadd.f32 %v315, %v542
    %v561 = vadd.f32 %v316, %v544
    %v562 = vadd.f32 %v317, %v546
    %v563 = vstv %s62
    %v564 = vmul.f32 %v69, %v563
    %v565 = vmul.f32 %v70, %v563
    %v566 = vmul.f32 %v71, %v563
    %v567 = vmul.f32 %v72, %v563
    %v568 = vmul.f32 %v73, %v563
    %v569 = vmul.f32 %v74, %v563
    %v570 = vmul.f32 %v75, %v563
    %v571 = vmul.f32 %v76, %v563
    %580 = vrot.lane.b32.xlu0 %v564, 124
    %v581 = vpop.permute.xlu0 %580
    %582 = vrot.lane.b32.xlu0 %v565, 124
    %v583 = vpop.permute.xlu0 %582
    %584 = vrot.lane.b32.xlu0 %v566, 124
    %v585 = vpop.permute.xlu0 %584
    %586 = vrot.lane.b32.xlu0 %v567, 124
    %v587 = vpop.permute.xlu0 %586
    %588 = vrot.lane.b32.xlu0 %v568, 124
    %v589 = vpop.permute.xlu0 %588
    %590 = vrot.lane.b32.xlu0 %v569, 124
    %v591 = vpop.permute.xlu0 %590
    %592 = vrot.lane.b32.xlu0 %v570, 124
    %v593 = vpop.permute.xlu0 %592
    %594 = vrot.lane.b32.xlu0 %v571, 124
    %v595 = vpop.permute.xlu0 %594
    %v604 = vadd.f32 %v359, %v581
    %v605 = vadd.f32 %v360, %v583
    %v606 = vadd.f32 %v361, %v585
    %v607 = vadd.f32 %v362, %v587
    %v608 = vadd.f32 %v363, %v589
    %v609 = vadd.f32 %v364, %v591
    %v610 = vadd.f32 %v365, %v593
    %v611 = vadd.f32 %v366, %v595
    %v612 = vld [vmem:[%s1 + $0x3] sm:$0xff]
    %v613 = vld [vmem:[%s1 + $0xb] sm:$0xff]
    %v614 = vld [vmem:[%s1 + $0x13] sm:$0xff]
    %v615 = vld [vmem:[%s1 + $0x1b] sm:$0xff]
    %v616 = vld [vmem:[%s1 + $0x23] sm:$0xff]
    %v617 = vld [vmem:[%s1 + $0x2b] sm:$0xff]
    %v618 = vld [vmem:[%s1 + $0x33] sm:$0xff]
    %v619 = vld [vmem:[%s1 + $0x3b] sm:$0xf]
    %v620 = vstv %s27
    %v621 = vmul.f32 %v612, %v620
    %v622 = vmul.f32 %v613, %v620
    %v623 = vmul.f32 %v614, %v620
    %v624 = vmul.f32 %v615, %v620
    %v625 = vmul.f32 %v616, %v620
    %v626 = vmul.f32 %v617, %v620
    %v627 = vmul.f32 %v618, %v620
    %v628 = vmul.f32 %v619, %v620
    %v629 = vadd.f32 %v408, %v621
    %v630 = vadd.f32 %v409, %v622
    %v631 = vadd.f32 %v410, %v623
    %v632 = vadd.f32 %v411, %v624
    %v633 = vadd.f32 %v412, %v625
    %v634 = vadd.f32 %v413, %v626
    %v635 = vadd.f32 %v414, %v627
    %v636 = vadd.f32 %v415, %v628
    %v637 = vstv %s36
    %v638 = vmul.f32 %v612, %v637
    %v639 = vmul.f32 %v613, %v637
    %v640 = vmul.f32 %v614, %v637
    %v641 = vmul.f32 %v615, %v637
    %v642 = vmul.f32 %v616, %v637
    %v643 = vmul.f32 %v617, %v637
    %v644 = vmul.f32 %v618, %v637
    %v645 = vmul.f32 %v619, %v637
    %v646 = vadd.f32 %v457, %v638
    %v647 = vadd.f32 %v458, %v639
    %v648 = vadd.f32 %v459, %v640
    %v649 = vadd.f32 %v460, %v641
    %v650 = vadd.f32 %v461, %v642
    %v651 = vadd.f32 %v462, %v643
    %v652 = vadd.f32 %v463, %v644
    %v653 = vadd.f32 %v464, %v645
    %v654 = vstv %s45
    %v655 = vmul.f32 %v612, %v654
    %v656 = vmul.f32 %v613, %v654
    %v657 = vmul.f32 %v614, %v654
    %v658 = vmul.f32 %v615, %v654
    %v659 = vmul.f32 %v616, %v654
    %v660 = vmul.f32 %v617, %v654
    %v661 = vmul.f32 %v618, %v654
    %v662 = vmul.f32 %v619, %v654
    %v663 = vadd.f32 %v506, %v655
    %v664 = vadd.f32 %v507, %v656
    %v665 = vadd.f32 %v508, %v657
    %v666 = vadd.f32 %v509, %v658
    %v667 = vadd.f32 %v510, %v659
    %v668 = vadd.f32 %v511, %v660
    %v669 = vadd.f32 %v512, %v661
    %v670 = vadd.f32 %v513, %v662
    %v671 = vstv %s54
    %v672 = vmul.f32 %v612, %v671
    %v673 = vmul.f32 %v613, %v671
    %v674 = vmul.f32 %v614, %v671
    %v675 = vmul.f32 %v615, %v671
    %v676 = vmul.f32 %v616, %v671
    %v677 = vmul.f32 %v617, %v671
    %v678 = vmul.f32 %v618, %v671
    %v679 = vmul.f32 %v619, %v671
    %v680 = vadd.f32 %v555, %v672
    %v681 = vadd.f32 %v556, %v673
    %v682 = vadd.f32 %v557, %v674
    %v683 = vadd.f32 %v558, %v675
    %v684 = vadd.f32 %v559, %v676
    %v685 = vadd.f32 %v560, %v677
    %v686 = vadd.f32 %v561, %v678
    %v687 = vadd.f32 %v562, %v679
    %v688 = vstv %s63
    %v689 = vmul.f32 %v612, %v688
    %v690 = vmul.f32 %v613, %v688
    %v691 = vmul.f32 %v614, %v688
    %v692 = vmul.f32 %v615, %v688
    %v693 = vmul.f32 %v616, %v688
    %v694 = vmul.f32 %v617, %v688
    %v695 = vmul.f32 %v618, %v688
    %v696 = vmul.f32 %v619, %v688
    %v697 = vadd.f32 %v604, %v689
    %v698 = vadd.f32 %v605, %v690
    %v699 = vadd.f32 %v606, %v691
    %v700 = vadd.f32 %v607, %v692
    %v701 = vadd.f32 %v608, %v693
    %v702 = vadd.f32 %v609, %v694
    %v703 = vadd.f32 %v610, %v695
    %v704 = vadd.f32 %v611, %v696
    %v705 = vstv %s28
    %v706 = vmul.f32 %v612, %v705
    %v707 = vmul.f32 %v613, %v705
    %v708 = vmul.f32 %v614, %v705
    %v709 = vmul.f32 %v615, %v705
    %v710 = vmul.f32 %v616, %v705
    %v711 = vmul.f32 %v617, %v705
    %v712 = vmul.f32 %v618, %v705
    %v713 = vmul.f32 %v619, %v705
    %722 = vrot.lane.b32.xlu0 %v706, 126
    %v723 = vpop.permute.xlu0 %722
    %724 = vrot.lane.b32.xlu0 %v707, 126
    %v725 = vpop.permute.xlu0 %724
    %726 = vrot.lane.b32.xlu0 %v708, 126
    %v727 = vpop.permute.xlu0 %726
    %728 = vrot.lane.b32.xlu0 %v709, 126
    %v729 = vpop.permute.xlu0 %728
    %730 = vrot.lane.b32.xlu0 %v710, 126
    %v731 = vpop.permute.xlu0 %730
    %732 = vrot.lane.b32.xlu0 %v711, 126
    %v733 = vpop.permute.xlu0 %732
    %734 = vrot.lane.b32.xlu0 %v712, 126
    %v735 = vpop.permute.xlu0 %734
    %736 = vrot.lane.b32.xlu0 %v713, 126
    %v737 = vpop.permute.xlu0 %736
    %v746 = vadd.f32 %v629, %v723
    %v747 = vadd.f32 %v630, %v725
    %v748 = vadd.f32 %v631, %v727
    %v749 = vadd.f32 %v632, %v729
    %v750 = vadd.f32 %v633, %v731
    %v751 = vadd.f32 %v634, %v733
    %v752 = vadd.f32 %v635, %v735
    %v753 = vadd.f32 %v636, %v737
    %v754 = vstv %s37
    %v755 = vmul.f32 %v612, %v754
    %v756 = vmul.f32 %v613, %v754
    %v757 = vmul.f32 %v614, %v754
    %v758 = vmul.f32 %v615, %v754
    %v759 = vmul.f32 %v616, %v754
    %v760 = vmul.f32 %v617, %v754
    %v761 = vmul.f32 %v618, %v754
    %v762 = vmul.f32 %v619, %v754
    %771 = vrot.lane.b32.xlu0 %v755, 126
    %v772 = vpop.permute.xlu0 %771
    %773 = vrot.lane.b32.xlu0 %v756, 126
    %v774 = vpop.permute.xlu0 %773
    %775 = vrot.lane.b32.xlu0 %v757, 126
    %v776 = vpop.permute.xlu0 %775
    %777 = vrot.lane.b32.xlu0 %v758, 126
    %v778 = vpop.permute.xlu0 %777
    %779 = vrot.lane.b32.xlu0 %v759, 126
    %v780 = vpop.permute.xlu0 %779
    %781 = vrot.lane.b32.xlu0 %v760, 126
    %v782 = vpop.permute.xlu0 %781
    %783 = vrot.lane.b32.xlu0 %v761, 126
    %v784 = vpop.permute.xlu0 %783
    %785 = vrot.lane.b32.xlu0 %v762, 126
    %v786 = vpop.permute.xlu0 %785
    %v795 = vadd.f32 %v646, %v772
    %v796 = vadd.f32 %v647, %v774
    %v797 = vadd.f32 %v648, %v776
    %v798 = vadd.f32 %v649, %v778
    %v799 = vadd.f32 %v650, %v780
    %v800 = vadd.f32 %v651, %v782
    %v801 = vadd.f32 %v652, %v784
    %v802 = vadd.f32 %v653, %v786
    %v803 = vstv %s46
    %v804 = vmul.f32 %v612, %v803
    %v805 = vmul.f32 %v613, %v803
    %v806 = vmul.f32 %v614, %v803
    %v807 = vmul.f32 %v615, %v803
    %v808 = vmul.f32 %v616, %v803
    %v809 = vmul.f32 %v617, %v803
    %v810 = vmul.f32 %v618, %v803
    %v811 = vmul.f32 %v619, %v803
    %820 = vrot.lane.b32.xlu0 %v804, 126
    %v821 = vpop.permute.xlu0 %820
    %822 = vrot.lane.b32.xlu0 %v805, 126
    %v823 = vpop.permute.xlu0 %822
    %824 = vrot.lane.b32.xlu0 %v806, 126
    %v825 = vpop.permute.xlu0 %824
    %826 = vrot.lane.b32.xlu0 %v807, 126
    %v827 = vpop.permute.xlu0 %826
    %828 = vrot.lane.b32.xlu0 %v808, 126
    %v829 = vpop.permute.xlu0 %828
    %830 = vrot.lane.b32.xlu0 %v809, 126
    %v831 = vpop.permute.xlu0 %830
    %832 = vrot.lane.b32.xlu0 %v810, 126
    %v833 = vpop.permute.xlu0 %832
    %834 = vrot.lane.b32.xlu0 %v811, 126
    %v835 = vpop.permute.xlu0 %834
    %v844 = vadd.f32 %v663, %v821
    %v845 = vadd.f32 %v664, %v823
    %v846 = vadd.f32 %v665, %v825
    %v847 = vadd.f32 %v666, %v827
    %v848 = vadd.f32 %v667, %v829
    %v849 = vadd.f32 %v668, %v831
    %v850 = vadd.f32 %v669, %v833
    %v851 = vadd.f32 %v670, %v835
    %v852 = vstv %s55
    %v853 = vmul.f32 %v612, %v852
    %v854 = vmul.f32 %v613, %v852
    %v855 = vmul.f32 %v614, %v852
    %v856 = vmul.f32 %v615, %v852
    %v857 = vmul.f32 %v616, %v852
    %v858 = vmul.f32 %v617, %v852
    %v859 = vmul.f32 %v618, %v852
    %v860 = vmul.f32 %v619, %v852
    %869 = vrot.lane.b32.xlu0 %v853, 126
    %v870 = vpop.permute.xlu0 %869
    %871 = vrot.lane.b32.xlu0 %v854, 126
    %v872 = vpop.permute.xlu0 %871
    %873 = vrot.lane.b32.xlu0 %v855, 126
    %v874 = vpop.permute.xlu0 %873
    %875 = vrot.lane.b32.xlu0 %v856, 126
    %v876 = vpop.permute.xlu0 %875
    %877 = vrot.lane.b32.xlu0 %v857, 126
    %v878 = vpop.permute.xlu0 %877
    %879 = vrot.lane.b32.xlu0 %v858, 126
    %v880 = vpop.permute.xlu0 %879
    %881 = vrot.lane.b32.xlu0 %v859, 126
    %v882 = vpop.permute.xlu0 %881
    %883 = vrot.lane.b32.xlu0 %v860, 126
    %v884 = vpop.permute.xlu0 %883
    %v893 = vadd.f32 %v680, %v870
    %v894 = vadd.f32 %v681, %v872
    %v895 = vadd.f32 %v682, %v874
    %v896 = vadd.f32 %v683, %v876
    %v897 = vadd.f32 %v684, %v878
    %v898 = vadd.f32 %v685, %v880
    %v899 = vadd.f32 %v686, %v882
    %v900 = vadd.f32 %v687, %v884
    %v901 = vstv %s64
    %v902 = vmul.f32 %v612, %v901
    %v903 = vmul.f32 %v613, %v901
    %v904 = vmul.f32 %v614, %v901
    %v905 = vmul.f32 %v615, %v901
    %v906 = vmul.f32 %v616, %v901
    %v907 = vmul.f32 %v617, %v901
    %v908 = vmul.f32 %v618, %v901
    %v909 = vmul.f32 %v619, %v901
    %918 = vrot.lane.b32.xlu0 %v902, 126
    %v919 = vpop.permute.xlu0 %918
    %920 = vrot.lane.b32.xlu0 %v903, 126
    %v921 = vpop.permute.xlu0 %920
    %922 = vrot.lane.b32.xlu0 %v904, 126
    %v923 = vpop.permute.xlu0 %922
    %924 = vrot.lane.b32.xlu0 %v905, 126
    %v925 = vpop.permute.xlu0 %924
    %926 = vrot.lane.b32.xlu0 %v906, 126
    %v927 = vpop.permute.xlu0 %926
    %928 = vrot.lane.b32.xlu0 %v907, 126
    %v929 = vpop.permute.xlu0 %928
    %930 = vrot.lane.b32.xlu0 %v908, 126
    %v931 = vpop.permute.xlu0 %930
    %932 = vrot.lane.b32.xlu0 %v909, 126
    %v933 = vpop.permute.xlu0 %932
    %v942 = vadd.f32 %v697, %v919
    %v943 = vadd.f32 %v698, %v921
    %v944 = vadd.f32 %v699, %v923
    %v945 = vadd.f32 %v700, %v925
    %v946 = vadd.f32 %v701, %v927
    %v947 = vadd.f32 %v702, %v929
    %v948 = vadd.f32 %v703, %v931
    %v949 = vadd.f32 %v704, %v933
    %v950 = vstv %s29
    %v951 = vmul.f32 %v612, %v950
    %v952 = vmul.f32 %v613, %v950
    %v953 = vmul.f32 %v614, %v950
    %v954 = vmul.f32 %v615, %v950
    %v955 = vmul.f32 %v616, %v950
    %v956 = vmul.f32 %v617, %v950
    %v957 = vmul.f32 %v618, %v950
    %v958 = vmul.f32 %v619, %v950
    %967 = vrot.lane.b32.xlu0 %v951, 124
    %v968 = vpop.permute.xlu0 %967
    %969 = vrot.lane.b32.xlu0 %v952, 124
    %v970 = vpop.permute.xlu0 %969
    %971 = vrot.lane.b32.xlu0 %v953, 124
    %v972 = vpop.permute.xlu0 %971
    %973 = vrot.lane.b32.xlu0 %v954, 124
    %v974 = vpop.permute.xlu0 %973
    %975 = vrot.lane.b32.xlu0 %v955, 124
    %v976 = vpop.permute.xlu0 %975
    %977 = vrot.lane.b32.xlu0 %v956, 124
    %v978 = vpop.permute.xlu0 %977
    %979 = vrot.lane.b32.xlu0 %v957, 124
    %v980 = vpop.permute.xlu0 %979
    %981 = vrot.lane.b32.xlu0 %v958, 124
    %v982 = vpop.permute.xlu0 %981
    %v991 = vadd.f32 %v746, %v968
    %v992 = vadd.f32 %v747, %v970
    %v993 = vadd.f32 %v748, %v972
    %v994 = vadd.f32 %v749, %v974
    %v995 = vadd.f32 %v750, %v976
    %v996 = vadd.f32 %v751, %v978
    %v997 = vadd.f32 %v752, %v980
    %v998 = vadd.f32 %v753, %v982
    %v999 = vstv %s38
    %v1000 = vmul.f32 %v612, %v999
    %v1001 = vmul.f32 %v613, %v999
    %v1002 = vmul.f32 %v614, %v999
    %v1003 = vmul.f32 %v615, %v999
    %v1004 = vmul.f32 %v616, %v999
    %v1005 = vmul.f32 %v617, %v999
    %v1006 = vmul.f32 %v618, %v999
    %v1007 = vmul.f32 %v619, %v999
    %1016 = vrot.lane.b32.xlu0 %v1000, 124
    %v1017 = vpop.permute.xlu0 %1016
    %1018 = vrot.lane.b32.xlu0 %v1001, 124
    %v1019 = vpop.permute.xlu0 %1018
    %1020 = vrot.lane.b32.xlu0 %v1002, 124
    %v1021 = vpop.permute.xlu0 %1020
    %1022 = vrot.lane.b32.xlu0 %v1003, 124
    %v1023 = vpop.permute.xlu0 %1022
    %1024 = vrot.lane.b32.xlu0 %v1004, 124
    %v1025 = vpop.permute.xlu0 %1024
    %1026 = vrot.lane.b32.xlu0 %v1005, 124
    %v1027 = vpop.permute.xlu0 %1026
    %1028 = vrot.lane.b32.xlu0 %v1006, 124
    %v1029 = vpop.permute.xlu0 %1028
    %1030 = vrot.lane.b32.xlu0 %v1007, 124
    %v1031 = vpop.permute.xlu0 %1030
    %v1040 = vadd.f32 %v795, %v1017
    %v1041 = vadd.f32 %v796, %v1019
    %v1042 = vadd.f32 %v797, %v1021
    %v1043 = vadd.f32 %v798, %v1023
    %v1044 = vadd.f32 %v799, %v1025
    %v1045 = vadd.f32 %v800, %v1027
    %v1046 = vadd.f32 %v801, %v1029
    %v1047 = vadd.f32 %v802, %v1031
    %v1048 = vstv %s47
    %v1049 = vmul.f32 %v612, %v1048
    %v1050 = vmul.f32 %v613, %v1048
    %v1051 = vmul.f32 %v614, %v1048
    %v1052 = vmul.f32 %v615, %v1048
    %v1053 = vmul.f32 %v616, %v1048
    %v1054 = vmul.f32 %v617, %v1048
    %v1055 = vmul.f32 %v618, %v1048
    %v1056 = vmul.f32 %v619, %v1048
    %1065 = vrot.lane.b32.xlu0 %v1049, 124
    %v1066 = vpop.permute.xlu0 %1065
    %1067 = vrot.lane.b32.xlu0 %v1050, 124
    %v1068 = vpop.permute.xlu0 %1067
    %1069 = vrot.lane.b32.xlu0 %v1051, 124
    %v1070 = vpop.permute.xlu0 %1069
    %1071 = vrot.lane.b32.xlu0 %v1052, 124
    %v1072 = vpop.permute.xlu0 %1071
    %1073 = vrot.lane.b32.xlu0 %v1053, 124
    %v1074 = vpop.permute.xlu0 %1073
    %1075 = vrot.lane.b32.xlu0 %v1054, 124
    %v1076 = vpop.permute.xlu0 %1075
    %1077 = vrot.lane.b32.xlu0 %v1055, 124
    %v1078 = vpop.permute.xlu0 %1077
    %1079 = vrot.lane.b32.xlu0 %v1056, 124
    %v1080 = vpop.permute.xlu0 %1079
    %v1089 = vadd.f32 %v844, %v1066
    %v1090 = vadd.f32 %v845, %v1068
    %v1091 = vadd.f32 %v846, %v1070
    %v1092 = vadd.f32 %v847, %v1072
    %v1093 = vadd.f32 %v848, %v1074
    %v1094 = vadd.f32 %v849, %v1076
    %v1095 = vadd.f32 %v850, %v1078
    %v1096 = vadd.f32 %v851, %v1080
    %v1097 = vstv %s56
    %v1098 = vmul.f32 %v612, %v1097
    %v1099 = vmul.f32 %v613, %v1097
    %v1100 = vmul.f32 %v614, %v1097
    %v1101 = vmul.f32 %v615, %v1097
    %v1102 = vmul.f32 %v616, %v1097
    %v1103 = vmul.f32 %v617, %v1097
    %v1104 = vmul.f32 %v618, %v1097
    %v1105 = vmul.f32 %v619, %v1097
    %1114 = vrot.lane.b32.xlu0 %v1098, 124
    %v1115 = vpop.permute.xlu0 %1114
    %1116 = vrot.lane.b32.xlu0 %v1099, 124
    %v1117 = vpop.permute.xlu0 %1116
    %1118 = vrot.lane.b32.xlu0 %v1100, 124
    %v1119 = vpop.permute.xlu0 %1118
    %1120 = vrot.lane.b32.xlu0 %v1101, 124
    %v1121 = vpop.permute.xlu0 %1120
    %1122 = vrot.lane.b32.xlu0 %v1102, 124
    %v1123 = vpop.permute.xlu0 %1122
    %1124 = vrot.lane.b32.xlu0 %v1103, 124
    %v1125 = vpop.permute.xlu0 %1124
    %1126 = vrot.lane.b32.xlu0 %v1104, 124
    %v1127 = vpop.permute.xlu0 %1126
    %1128 = vrot.lane.b32.xlu0 %v1105, 124
    %v1129 = vpop.permute.xlu0 %1128
    %v1138 = vadd.f32 %v893, %v1115
    %v1139 = vadd.f32 %v894, %v1117
    %v1140 = vadd.f32 %v895, %v1119
    %v1141 = vadd.f32 %v896, %v1121
    %v1142 = vadd.f32 %v897, %v1123
    %v1143 = vadd.f32 %v898, %v1125
    %v1144 = vadd.f32 %v899, %v1127
    %v1145 = vadd.f32 %v900, %v1129
    %v1146 = vstv %s65
    %v1147 = vmul.f32 %v612, %v1146
    %v1148 = vmul.f32 %v613, %v1146
    %v1149 = vmul.f32 %v614, %v1146
    %v1150 = vmul.f32 %v615, %v1146
    %v1151 = vmul.f32 %v616, %v1146
    %v1152 = vmul.f32 %v617, %v1146
    %v1153 = vmul.f32 %v618, %v1146
    %v1154 = vmul.f32 %v619, %v1146
    %1163 = vrot.lane.b32.xlu0 %v1147, 124
    %v1164 = vpop.permute.xlu0 %1163
    %1165 = vrot.lane.b32.xlu0 %v1148, 124
    %v1166 = vpop.permute.xlu0 %1165
    %1167 = vrot.lane.b32.xlu0 %v1149, 124
    %v1168 = vpop.permute.xlu0 %1167
    %1169 = vrot.lane.b32.xlu0 %v1150, 124
    %v1170 = vpop.permute.xlu0 %1169
    %1171 = vrot.lane.b32.xlu0 %v1151, 124
    %v1172 = vpop.permute.xlu0 %1171
    %1173 = vrot.lane.b32.xlu0 %v1152, 124
    %v1174 = vpop.permute.xlu0 %1173
    %1175 = vrot.lane.b32.xlu0 %v1153, 124
    %v1176 = vpop.permute.xlu0 %1175
    %1177 = vrot.lane.b32.xlu0 %v1154, 124
    %v1178 = vpop.permute.xlu0 %1177
    %v1187 = vadd.f32 %v942, %v1164
    %v1188 = vadd.f32 %v943, %v1166
    %v1189 = vadd.f32 %v944, %v1168
    %v1190 = vadd.f32 %v945, %v1170
    %v1191 = vadd.f32 %v946, %v1172
    %v1192 = vadd.f32 %v947, %v1174
    %v1193 = vadd.f32 %v948, %v1176
    %v1194 = vadd.f32 %v949, %v1178
    %v1195 = vld [vmem:[%s1 + $0x6] sm:$0xff]
    %v1196 = vld [vmem:[%s1 + $0xe] sm:$0xff]
    %v1197 = vld [vmem:[%s1 + $0x16] sm:$0xff]
    %v1198 = vld [vmem:[%s1 + $0x1e] sm:$0xff]
    %v1199 = vld [vmem:[%s1 + $0x26] sm:$0xff]
    %v1200 = vld [vmem:[%s1 + $0x2e] sm:$0xff]
    %v1201 = vld [vmem:[%s1 + $0x36] sm:$0xff]
    %v1202 = vld [vmem:[%s1 + $0x3e] sm:$0xf]
    %v1203 = vstv %s30
    %v1204 = vmul.f32 %v1195, %v1203
    %v1205 = vmul.f32 %v1196, %v1203
    %v1206 = vmul.f32 %v1197, %v1203
    %v1207 = vmul.f32 %v1198, %v1203
    %v1208 = vmul.f32 %v1199, %v1203
    %v1209 = vmul.f32 %v1200, %v1203
    %v1210 = vmul.f32 %v1201, %v1203
    %v1211 = vmul.f32 %v1202, %v1203
    %v1212 = vadd.f32 %v991, %v1204
    %v1213 = vadd.f32 %v992, %v1205
    %v1214 = vadd.f32 %v993, %v1206
    %v1215 = vadd.f32 %v994, %v1207
    %v1216 = vadd.f32 %v995, %v1208
    %v1217 = vadd.f32 %v996, %v1209
    %v1218 = vadd.f32 %v997, %v1210
    %v1219 = vadd.f32 %v998, %v1211
    %v1220 = vstv %s39
    %v1221 = vmul.f32 %v1195, %v1220
    %v1222 = vmul.f32 %v1196, %v1220
    %v1223 = vmul.f32 %v1197, %v1220
    %v1224 = vmul.f32 %v1198, %v1220
    %v1225 = vmul.f32 %v1199, %v1220
    %v1226 = vmul.f32 %v1200, %v1220
    %v1227 = vmul.f32 %v1201, %v1220
    %v1228 = vmul.f32 %v1202, %v1220
    %v1229 = vadd.f32 %v1040, %v1221
    %v1230 = vadd.f32 %v1041, %v1222
    %v1231 = vadd.f32 %v1042, %v1223
    %v1232 = vadd.f32 %v1043, %v1224
    %v1233 = vadd.f32 %v1044, %v1225
    %v1234 = vadd.f32 %v1045, %v1226
    %v1235 = vadd.f32 %v1046, %v1227
    %v1236 = vadd.f32 %v1047, %v1228
    %v1237 = vstv %s48
    %v1238 = vmul.f32 %v1195, %v1237
    %v1239 = vmul.f32 %v1196, %v1237
    %v1240 = vmul.f32 %v1197, %v1237
    %v1241 = vmul.f32 %v1198, %v1237
    %v1242 = vmul.f32 %v1199, %v1237
    %v1243 = vmul.f32 %v1200, %v1237
    %v1244 = vmul.f32 %v1201, %v1237
    %v1245 = vmul.f32 %v1202, %v1237
    %v1246 = vadd.f32 %v1089, %v1238
    %v1247 = vadd.f32 %v1090, %v1239
    %v1248 = vadd.f32 %v1091, %v1240
    %v1249 = vadd.f32 %v1092, %v1241
    %v1250 = vadd.f32 %v1093, %v1242
    %v1251 = vadd.f32 %v1094, %v1243
    %v1252 = vadd.f32 %v1095, %v1244
    %v1253 = vadd.f32 %v1096, %v1245
    %v1254 = vstv %s57
    %v1255 = vmul.f32 %v1195, %v1254
    %v1256 = vmul.f32 %v1196, %v1254
    %v1257 = vmul.f32 %v1197, %v1254
    %v1258 = vmul.f32 %v1198, %v1254
    %v1259 = vmul.f32 %v1199, %v1254
    %v1260 = vmul.f32 %v1200, %v1254
    %v1261 = vmul.f32 %v1201, %v1254
    %v1262 = vmul.f32 %v1202, %v1254
    %v1263 = vadd.f32 %v1138, %v1255
    %v1264 = vadd.f32 %v1139, %v1256
    %v1265 = vadd.f32 %v1140, %v1257
    %v1266 = vadd.f32 %v1141, %v1258
    %v1267 = vadd.f32 %v1142, %v1259
    %v1268 = vadd.f32 %v1143, %v1260
    %v1269 = vadd.f32 %v1144, %v1261
    %v1270 = vadd.f32 %v1145, %v1262
    %v1271 = vstv %s66
    %v1272 = vmul.f32 %v1195, %v1271
    %v1273 = vmul.f32 %v1196, %v1271
    %v1274 = vmul.f32 %v1197, %v1271
    %v1275 = vmul.f32 %v1198, %v1271
    %v1276 = vmul.f32 %v1199, %v1271
    %v1277 = vmul.f32 %v1200, %v1271
    %v1278 = vmul.f32 %v1201, %v1271
    %v1279 = vmul.f32 %v1202, %v1271
    %v1280 = vadd.f32 %v1187, %v1272
    %v1281 = vadd.f32 %v1188, %v1273
    %v1282 = vadd.f32 %v1189, %v1274
    %v1283 = vadd.f32 %v1190, %v1275
    %v1284 = vadd.f32 %v1191, %v1276
    %v1285 = vadd.f32 %v1192, %v1277
    %v1286 = vadd.f32 %v1193, %v1278
    %v1287 = vadd.f32 %v1194, %v1279
    %v1288 = vstv %s31
    %v1289 = vmul.f32 %v1195, %v1288
    %v1290 = vmul.f32 %v1196, %v1288
    %v1291 = vmul.f32 %v1197, %v1288
    %v1292 = vmul.f32 %v1198, %v1288
    %v1293 = vmul.f32 %v1199, %v1288
    %v1294 = vmul.f32 %v1200, %v1288
    %v1295 = vmul.f32 %v1201, %v1288
    %v1296 = vmul.f32 %v1202, %v1288
    %1305 = vrot.lane.b32.xlu0 %v1289, 126
    %v1306 = vpop.permute.xlu0 %1305
    %1307 = vrot.lane.b32.xlu0 %v1290, 126
    %v1308 = vpop.permute.xlu0 %1307
    %1309 = vrot.lane.b32.xlu0 %v1291, 126
    %v1310 = vpop.permute.xlu0 %1309
    %1311 = vrot.lane.b32.xlu0 %v1292, 126
    %v1312 = vpop.permute.xlu0 %1311
    %1313 = vrot.lane.b32.xlu0 %v1293, 126
    %v1314 = vpop.permute.xlu0 %1313
    %1315 = vrot.lane.b32.xlu0 %v1294, 126
    %v1316 = vpop.permute.xlu0 %1315
    %1317 = vrot.lane.b32.xlu0 %v1295, 126
    %v1318 = vpop.permute.xlu0 %1317
    %1319 = vrot.lane.b32.xlu0 %v1296, 126
    %v1320 = vpop.permute.xlu0 %1319
    %v1329 = vadd.f32 %v1212, %v1306
    %v1330 = vadd.f32 %v1213, %v1308
    %v1331 = vadd.f32 %v1214, %v1310
    %v1332 = vadd.f32 %v1215, %v1312
    %v1333 = vadd.f32 %v1216, %v1314
    %v1334 = vadd.f32 %v1217, %v1316
    %v1335 = vadd.f32 %v1218, %v1318
    %v1336 = vadd.f32 %v1219, %v1320
    %v1337 = vstv %s40
    %v1338 = vmul.f32 %v1195, %v1337
    %v1339 = vmul.f32 %v1196, %v1337
    %v1340 = vmul.f32 %v1197, %v1337
    %v1341 = vmul.f32 %v1198, %v1337
    %v1342 = vmul.f32 %v1199, %v1337
    %v1343 = vmul.f32 %v1200, %v1337
    %v1344 = vmul.f32 %v1201, %v1337
    %v1345 = vmul.f32 %v1202, %v1337
    %1354 = vrot.lane.b32.xlu0 %v1338, 126
    %v1355 = vpop.permute.xlu0 %1354
    %1356 = vrot.lane.b32.xlu0 %v1339, 126
    %v1357 = vpop.permute.xlu0 %1356
    %1358 = vrot.lane.b32.xlu0 %v1340, 126
    %v1359 = vpop.permute.xlu0 %1358
    %1360 = vrot.lane.b32.xlu0 %v1341, 126
    %v1361 = vpop.permute.xlu0 %1360
    %1362 = vrot.lane.b32.xlu0 %v1342, 126
    %v1363 = vpop.permute.xlu0 %1362
    %1364 = vrot.lane.b32.xlu0 %v1343, 126
    %v1365 = vpop.permute.xlu0 %1364
    %1366 = vrot.lane.b32.xlu0 %v1344, 126
    %v1367 = vpop.permute.xlu0 %1366
    %1368 = vrot.lane.b32.xlu0 %v1345, 126
    %v1369 = vpop.permute.xlu0 %1368
    %v1378 = vadd.f32 %v1229, %v1355
    %v1379 = vadd.f32 %v1230, %v1357
    %v1380 = vadd.f32 %v1231, %v1359
    %v1381 = vadd.f32 %v1232, %v1361
    %v1382 = vadd.f32 %v1233, %v1363
    %v1383 = vadd.f32 %v1234, %v1365
    %v1384 = vadd.f32 %v1235, %v1367
    %v1385 = vadd.f32 %v1236, %v1369
    %v1386 = vstv %s49
    %v1387 = vmul.f32 %v1195, %v1386
    %v1388 = vmul.f32 %v1196, %v1386
    %v1389 = vmul.f32 %v1197, %v1386
    %v1390 = vmul.f32 %v1198, %v1386
    %v1391 = vmul.f32 %v1199, %v1386
    %v1392 = vmul.f32 %v1200, %v1386
    %v1393 = vmul.f32 %v1201, %v1386
    %v1394 = vmul.f32 %v1202, %v1386
    %1403 = vrot.lane.b32.xlu0 %v1387, 126
    %v1404 = vpop.permute.xlu0 %1403
    %1405 = vrot.lane.b32.xlu0 %v1388, 126
    %v1406 = vpop.permute.xlu0 %1405
    %1407 = vrot.lane.b32.xlu0 %v1389, 126
    %v1408 = vpop.permute.xlu0 %1407
    %1409 = vrot.lane.b32.xlu0 %v1390, 126
    %v1410 = vpop.permute.xlu0 %1409
    %1411 = vrot.lane.b32.xlu0 %v1391, 126
    %v1412 = vpop.permute.xlu0 %1411
    %1413 = vrot.lane.b32.xlu0 %v1392, 126
    %v1414 = vpop.permute.xlu0 %1413
    %1415 = vrot.lane.b32.xlu0 %v1393, 126
    %v1416 = vpop.permute.xlu0 %1415
    %1417 = vrot.lane.b32.xlu0 %v1394, 126
    %v1418 = vpop.permute.xlu0 %1417
    %v1427 = vadd.f32 %v1246, %v1404
    %v1428 = vadd.f32 %v1247, %v1406
    %v1429 = vadd.f32 %v1248, %v1408
    %v1430 = vadd.f32 %v1249, %v1410
    %v1431 = vadd.f32 %v1250, %v1412
    %v1432 = vadd.f32 %v1251, %v1414
    %v1433 = vadd.f32 %v1252, %v1416
    %v1434 = vadd.f32 %v1253, %v1418
    %v1435 = vstv %s58
    %v1436 = vmul.f32 %v1195, %v1435
    %v1437 = vmul.f32 %v1196, %v1435
    %v1438 = vmul.f32 %v1197, %v1435
    %v1439 = vmul.f32 %v1198, %v1435
    %v1440 = vmul.f32 %v1199, %v1435
    %v1441 = vmul.f32 %v1200, %v1435
    %v1442 = vmul.f32 %v1201, %v1435
    %v1443 = vmul.f32 %v1202, %v1435
    %1452 = vrot.lane.b32.xlu0 %v1436, 126
    %v1453 = vpop.permute.xlu0 %1452
    %1454 = vrot.lane.b32.xlu0 %v1437, 126
    %v1455 = vpop.permute.xlu0 %1454
    %1456 = vrot.lane.b32.xlu0 %v1438, 126
    %v1457 = vpop.permute.xlu0 %1456
    %1458 = vrot.lane.b32.xlu0 %v1439, 126
    %v1459 = vpop.permute.xlu0 %1458
    %1460 = vrot.lane.b32.xlu0 %v1440, 126
    %v1461 = vpop.permute.xlu0 %1460
    %1462 = vrot.lane.b32.xlu0 %v1441, 126
    %v1463 = vpop.permute.xlu0 %1462
    %1464 = vrot.lane.b32.xlu0 %v1442, 126
    %v1465 = vpop.permute.xlu0 %1464
    %1466 = vrot.lane.b32.xlu0 %v1443, 126
    %v1467 = vpop.permute.xlu0 %1466
    %v1476 = vadd.f32 %v1263, %v1453
    %v1477 = vadd.f32 %v1264, %v1455
    %v1478 = vadd.f32 %v1265, %v1457
    %v1479 = vadd.f32 %v1266, %v1459
    %v1480 = vadd.f32 %v1267, %v1461
    %v1481 = vadd.f32 %v1268, %v1463
    %v1482 = vadd.f32 %v1269, %v1465
    %v1483 = vadd.f32 %v1270, %v1467
    %v1484 = vstv %s67
    %v1485 = vmul.f32 %v1195, %v1484
    %v1486 = vmul.f32 %v1196, %v1484
    %v1487 = vmul.f32 %v1197, %v1484
    %v1488 = vmul.f32 %v1198, %v1484
    %v1489 = vmul.f32 %v1199, %v1484
    %v1490 = vmul.f32 %v1200, %v1484
    %v1491 = vmul.f32 %v1201, %v1484
    %v1492 = vmul.f32 %v1202, %v1484
    %1501 = vrot.lane.b32.xlu0 %v1485, 126
    %v1502 = vpop.permute.xlu0 %1501
    %1503 = vrot.lane.b32.xlu0 %v1486, 126
    %v1504 = vpop.permute.xlu0 %1503
    %1505 = vrot.lane.b32.xlu0 %v1487, 126
    %v1506 = vpop.permute.xlu0 %1505
    %1507 = vrot.lane.b32.xlu0 %v1488, 126
    %v1508 = vpop.permute.xlu0 %1507
    %1509 = vrot.lane.b32.xlu0 %v1489, 126
    %v1510 = vpop.permute.xlu0 %1509
    %1511 = vrot.lane.b32.xlu0 %v1490, 126
    %v1512 = vpop.permute.xlu0 %1511
    %1513 = vrot.lane.b32.xlu0 %v1491, 126
    %v1514 = vpop.permute.xlu0 %1513
    %1515 = vrot.lane.b32.xlu0 %v1492, 126
    %v1516 = vpop.permute.xlu0 %1515
    %v1525 = vadd.f32 %v1280, %v1502
    %v1526 = vadd.f32 %v1281, %v1504
    %v1527 = vadd.f32 %v1282, %v1506
    %v1528 = vadd.f32 %v1283, %v1508
    %v1529 = vadd.f32 %v1284, %v1510
    %v1530 = vadd.f32 %v1285, %v1512
    %v1531 = vadd.f32 %v1286, %v1514
    %v1532 = vadd.f32 %v1287, %v1516
    %v1533 = vstv %s32
    %v1534 = vmul.f32 %v1195, %v1533
    %v1535 = vmul.f32 %v1196, %v1533
    %v1536 = vmul.f32 %v1197, %v1533
    %v1537 = vmul.f32 %v1198, %v1533
    %v1538 = vmul.f32 %v1199, %v1533
    %v1539 = vmul.f32 %v1200, %v1533
    %v1540 = vmul.f32 %v1201, %v1533
    %v1541 = vmul.f32 %v1202, %v1533
    %1550 = vrot.lane.b32.xlu0 %v1534, 124
    %v1551 = vpop.permute.xlu0 %1550
    %1552 = vrot.lane.b32.xlu0 %v1535, 124
    %v1553 = vpop.permute.xlu0 %1552
    %1554 = vrot.lane.b32.xlu0 %v1536, 124
    %v1555 = vpop.permute.xlu0 %1554
    %1556 = vrot.lane.b32.xlu0 %v1537, 124
    %v1557 = vpop.permute.xlu0 %1556
    %1558 = vrot.lane.b32.xlu0 %v1538, 124
    %v1559 = vpop.permute.xlu0 %1558
    %1560 = vrot.lane.b32.xlu0 %v1539, 124
    %v1561 = vpop.permute.xlu0 %1560
    %1562 = vrot.lane.b32.xlu0 %v1540, 124
    %v1563 = vpop.permute.xlu0 %1562
    %1564 = vrot.lane.b32.xlu0 %v1541, 124
    %v1565 = vpop.permute.xlu0 %1564
    %v1574 = vadd.f32 %v1329, %v1551
    %v1575 = vadd.f32 %v1330, %v1553
    %v1576 = vadd.f32 %v1331, %v1555
    %v1577 = vadd.f32 %v1332, %v1557
    %v1578 = vadd.f32 %v1333, %v1559
    %v1579 = vadd.f32 %v1334, %v1561
    %v1580 = vadd.f32 %v1335, %v1563
    %v1581 = vadd.f32 %v1336, %v1565
    %v1582 = vstv %s41
    %v1583 = vmul.f32 %v1195, %v1582
    %v1584 = vmul.f32 %v1196, %v1582
    %v1585 = vmul.f32 %v1197, %v1582
    %v1586 = vmul.f32 %v1198, %v1582
    %v1587 = vmul.f32 %v1199, %v1582
    %v1588 = vmul.f32 %v1200, %v1582
    %v1589 = vmul.f32 %v1201, %v1582
    %v1590 = vmul.f32 %v1202, %v1582
    %1599 = vrot.lane.b32.xlu0 %v1583, 124
    %v1600 = vpop.permute.xlu0 %1599
    %1601 = vrot.lane.b32.xlu0 %v1584, 124
    %v1602 = vpop.permute.xlu0 %1601
    %1603 = vrot.lane.b32.xlu0 %v1585, 124
    %v1604 = vpop.permute.xlu0 %1603
    %1605 = vrot.lane.b32.xlu0 %v1586, 124
    %v1606 = vpop.permute.xlu0 %1605
    %1607 = vrot.lane.b32.xlu0 %v1587, 124
    %v1608 = vpop.permute.xlu0 %1607
    %1609 = vrot.lane.b32.xlu0 %v1588, 124
    %v1610 = vpop.permute.xlu0 %1609
    %1611 = vrot.lane.b32.xlu0 %v1589, 124
    %v1612 = vpop.permute.xlu0 %1611
    %1613 = vrot.lane.b32.xlu0 %v1590, 124
    %v1614 = vpop.permute.xlu0 %1613
    %v1623 = vadd.f32 %v1378, %v1600
    %v1624 = vadd.f32 %v1379, %v1602
    %v1625 = vadd.f32 %v1380, %v1604
    %v1626 = vadd.f32 %v1381, %v1606
    %v1627 = vadd.f32 %v1382, %v1608
    %v1628 = vadd.f32 %v1383, %v1610
    %v1629 = vadd.f32 %v1384, %v1612
    %v1630 = vadd.f32 %v1385, %v1614
    %v1631 = vstv %s50
    %v1632 = vmul.f32 %v1195, %v1631
    %v1633 = vmul.f32 %v1196, %v1631
    %v1634 = vmul.f32 %v1197, %v1631
    %v1635 = vmul.f32 %v1198, %v1631
    %v1636 = vmul.f32 %v1199, %v1631
    %v1637 = vmul.f32 %v1200, %v1631
    %v1638 = vmul.f32 %v1201, %v1631
    %v1639 = vmul.f32 %v1202, %v1631
    %1648 = vrot.lane.b32.xlu0 %v1632, 124
    %v1649 = vpop.permute.xlu0 %1648
    %1650 = vrot.lane.b32.xlu0 %v1633, 124
    %v1651 = vpop.permute.xlu0 %1650
    %1652 = vrot.lane.b32.xlu0 %v1634, 124
    %v1653 = vpop.permute.xlu0 %1652
    %1654 = vrot.lane.b32.xlu0 %v1635, 124
    %v1655 = vpop.permute.xlu0 %1654
    %1656 = vrot.lane.b32.xlu0 %v1636, 124
    %v1657 = vpop.permute.xlu0 %1656
    %1658 = vrot.lane.b32.xlu0 %v1637, 124
    %v1659 = vpop.permute.xlu0 %1658
    %1660 = vrot.lane.b32.xlu0 %v1638, 124
    %v1661 = vpop.permute.xlu0 %1660
    %1662 = vrot.lane.b32.xlu0 %v1639, 124
    %v1663 = vpop.permute.xlu0 %1662
    %v1672 = vadd.f32 %v1427, %v1649
    %v1673 = vadd.f32 %v1428, %v1651
    %v1674 = vadd.f32 %v1429, %v1653
    %v1675 = vadd.f32 %v1430, %v1655
    %v1676 = vadd.f32 %v1431, %v1657
    %v1677 = vadd.f32 %v1432, %v1659
    %v1678 = vadd.f32 %v1433, %v1661
    %v1679 = vadd.f32 %v1434, %v1663
    %v1680 = vstv %s59
    %v1681 = vmul.f32 %v1195, %v1680
    %v1682 = vmul.f32 %v1196, %v1680
    %v1683 = vmul.f32 %v1197, %v1680
    %v1684 = vmul.f32 %v1198, %v1680
    %v1685 = vmul.f32 %v1199, %v1680
    %v1686 = vmul.f32 %v1200, %v1680
    %v1687 = vmul.f32 %v1201, %v1680
    %v1688 = vmul.f32 %v1202, %v1680
    %1697 = vrot.lane.b32.xlu0 %v1681, 124
    %v1698 = vpop.permute.xlu0 %1697
    %1699 = vrot.lane.b32.xlu0 %v1682, 124
    %v1700 = vpop.permute.xlu0 %1699
    %1701 = vrot.lane.b32.xlu0 %v1683, 124
    %v1702 = vpop.permute.xlu0 %1701
    %1703 = vrot.lane.b32.xlu0 %v1684, 124
    %v1704 = vpop.permute.xlu0 %1703
    %1705 = vrot.lane.b32.xlu0 %v1685, 124
    %v1706 = vpop.permute.xlu0 %1705
    %1707 = vrot.lane.b32.xlu0 %v1686, 124
    %v1708 = vpop.permute.xlu0 %1707
    %1709 = vrot.lane.b32.xlu0 %v1687, 124
    %v1710 = vpop.permute.xlu0 %1709
    %1711 = vrot.lane.b32.xlu0 %v1688, 124
    %v1712 = vpop.permute.xlu0 %1711
    %v1721 = vadd.f32 %v1476, %v1698
    %v1722 = vadd.f32 %v1477, %v1700
    %v1723 = vadd.f32 %v1478, %v1702
    %v1724 = vadd.f32 %v1479, %v1704
    %v1725 = vadd.f32 %v1480, %v1706
    %v1726 = vadd.f32 %v1481, %v1708
    %v1727 = vadd.f32 %v1482, %v1710
    %v1728 = vadd.f32 %v1483, %v1712
    %v1729 = vstv %s68
    %v1730 = vmul.f32 %v1195, %v1729
    %v1731 = vmul.f32 %v1196, %v1729
    %v1732 = vmul.f32 %v1197, %v1729
    %v1733 = vmul.f32 %v1198, %v1729
    %v1734 = vmul.f32 %v1199, %v1729
    %v1735 = vmul.f32 %v1200, %v1729
    %v1736 = vmul.f32 %v1201, %v1729
    %v1737 = vmul.f32 %v1202, %v1729
    %1746 = vrot.lane.b32.xlu0 %v1730, 124
    %v1747 = vpop.permute.xlu0 %1746
    %1748 = vrot.lane.b32.xlu0 %v1731, 124
    %v1749 = vpop.permute.xlu0 %1748
    %1750 = vrot.lane.b32.xlu0 %v1732, 124
    %v1751 = vpop.permute.xlu0 %1750
    %1752 = vrot.lane.b32.xlu0 %v1733, 124
    %v1753 = vpop.permute.xlu0 %1752
    %1754 = vrot.lane.b32.xlu0 %v1734, 124
    %v1755 = vpop.permute.xlu0 %1754
    %1756 = vrot.lane.b32.xlu0 %v1735, 124
    %v1757 = vpop.permute.xlu0 %1756
    %1758 = vrot.lane.b32.xlu0 %v1736, 124
    %v1759 = vpop.permute.xlu0 %1758
    %1760 = vrot.lane.b32.xlu0 %v1737, 124
    %v1761 = vpop.permute.xlu0 %1760
    %v1770 = vadd.f32 %v1525, %v1747
    %v1771 = vadd.f32 %v1526, %v1749
    %v1772 = vadd.f32 %v1527, %v1751
    %v1773 = vadd.f32 %v1528, %v1753
    %v1774 = vadd.f32 %v1529, %v1755
    %v1775 = vadd.f32 %v1530, %v1757
    %v1776 = vadd.f32 %v1531, %v1759
    %v1777 = vadd.f32 %v1532, %v1761
    %vm1778 = vcmp.gt.f32.partialorder %v1574, 0.0
    %vm1779 = vcmp.gt.f32.partialorder %v1575, 0.0
    %vm1780 = vcmp.gt.f32.partialorder %v1576, 0.0
    %vm1781 = vcmp.gt.f32.partialorder %v1577, 0.0
    %vm1782 = vcmp.gt.f32.partialorder %v1578, 0.0
    %vm1783 = vcmp.gt.f32.partialorder %v1579, 0.0
    %vm1784 = vcmp.gt.f32.partialorder %v1580, 0.0
    %vm1785 = vcmp.gt.f32.partialorder %v1581, 0.0
    %v1786 = vmul.f32 %v1574, 0.345
    %v1787 = vmul.f32 %v1575, 0.345
    %v1788 = vmul.f32 %v1576, 0.345
    %v1789 = vmul.f32 %v1577, 0.345
    %v1790 = vmul.f32 %v1578, 0.345
    %v1791 = vmul.f32 %v1579, 0.345
    %v1792 = vmul.f32 %v1580, 0.345
    %v1793 = vmul.f32 %v1581, 0.345
    %v1794 = vsel %vm1778, %v1574, %v1786
    %v1795 = vsel %vm1779, %v1575, %v1787
    %v1796 = vsel %vm1780, %v1576, %v1788
    %v1797 = vsel %vm1781, %v1577, %v1789
    %v1798 = vsel %vm1782, %v1578, %v1790
    %v1799 = vsel %vm1783, %v1579, %v1791
    %v1800 = vsel %vm1784, %v1580, %v1792
    %v1801 = vsel %vm1785, %v1581, %v1793
    %v1802 = vtanh.pop %v1794
    %v1803 = vtanh.pop %v1795
    %v1804 = vtanh.pop %v1796
    %v1805 = vtanh.pop %v1797
    %v1806 = vtanh.pop %v1798
    %v1807 = vtanh.pop %v1799
    %v1808 = vtanh.pop %v1800
    %v1809 = vtanh.pop %v1801
    %v1810 = vmul.f32 %v1802, %v1802
    %v1811 = vmul.f32 %v1803, %v1803
    %v1812 = vmul.f32 %v1804, %v1804
    %v1813 = vmul.f32 %v1805, %v1805
    %v1814 = vmul.f32 %v1806, %v1806
    %v1815 = vmul.f32 %v1807, %v1807
    %v1816 = vmul.f32 %v1808, %v1808
    %v1817 = vmul.f32 %v1809, %v1809
    %vm1818 = vcmask 162816
    %1819 = vst.msk [vmem:[%s2] sm:$0xff] %vm1818, %v1810
    %1820 = vst.msk [vmem:[%s2 + $0x8] sm:$0xff] %vm1818, %v1811
    %1821 = vst.msk [vmem:[%s2 + $0x10] sm:$0xff] %vm1818, %v1812
    %1822 = vst.msk [vmem:[%s2 + $0x18] sm:$0xff] %vm1818, %v1813
    %1823 = vst.msk [vmem:[%s2 + $0x20] sm:$0xff] %vm1818, %v1814
    %1824 = vst.msk [vmem:[%s2 + $0x28] sm:$0xff] %vm1818, %v1815
    %1825 = vst.msk [vmem:[%s2 + $0x30] sm:$0xff] %vm1818, %v1816
    %vm1826 = vcmask 158720
    %1827 = vst.msk [vmem:[%s2 + $0x38] sm:$0xf] %vm1826, %v1817
    %vm1828 = vcmp.gt.f32.partialorder %v1623, 0.0
    %vm1829 = vcmp.gt.f32.partialorder %v1624, 0.0
    %vm1830 = vcmp.gt.f32.partialorder %v1625, 0.0
    %vm1831 = vcmp.gt.f32.partialorder %v1626, 0.0
    %vm1832 = vcmp.gt.f32.partialorder %v1627, 0.0
    %vm1833 = vcmp.gt.f32.partialorder %v1628, 0.0
    %vm1834 = vcmp.gt.f32.partialorder %v1629, 0.0
    %vm1835 = vcmp.gt.f32.partialorder %v1630, 0.0
    %v1836 = vmul.f32 %v1623, 0.345
    %v1837 = vmul.f32 %v1624, 0.345
    %v1838 = vmul.f32 %v1625, 0.345
    %v1839 = vmul.f32 %v1626, 0.345
    %v1840 = vmul.f32 %v1627, 0.345
    %v1841 = vmul.f32 %v1628, 0.345
    %v1842 = vmul.f32 %v1629, 0.345
    %v1843 = vmul.f32 %v1630, 0.345
    %v1844 = vsel %vm1828, %v1623, %v1836
    %v1845 = vsel %vm1829, %v1624, %v1837
    %v1846 = vsel %vm1830, %v1625, %v1838
    %v1847 = vsel %vm1831, %v1626, %v1839
    %v1848 = vsel %vm1832, %v1627, %v1840
    %v1849 = vsel %vm1833, %v1628, %v1841
    %v1850 = vsel %vm1834, %v1629, %v1842
    %v1851 = vsel %vm1835, %v1630, %v1843
    %v1852 = vtanh.pop %v1844
    %v1853 = vtanh.pop %v1845
    %v1854 = vtanh.pop %v1846
    %v1855 = vtanh.pop %v1847
    %v1856 = vtanh.pop %v1848
    %v1857 = vtanh.pop %v1849
    %v1858 = vtanh.pop %v1850
    %v1859 = vtanh.pop %v1851
    %v1860 = vmul.f32 %v1852, %v1852
    %v1861 = vmul.f32 %v1853, %v1853
    %v1862 = vmul.f32 %v1854, %v1854
    %v1863 = vmul.f32 %v1855, %v1855
    %v1864 = vmul.f32 %v1856, %v1856
    %v1865 = vmul.f32 %v1857, %v1857
    %v1866 = vmul.f32 %v1858, %v1858
    %v1867 = vmul.f32 %v1859, %v1859
    %s1868 = scalar_lea.vmem %s2, 64
    %1869 = vst.msk [vmem:[%s1868] sm:$0xff] %vm1818, %v1860
    %1870 = vst.msk [vmem:[%s1868 + $0x8] sm:$0xff] %vm1818, %v1861
    %1871 = vst.msk [vmem:[%s1868 + $0x10] sm:$0xff] %vm1818, %v1862
    %1872 = vst.msk [vmem:[%s1868 + $0x18] sm:$0xff] %vm1818, %v1863
    %1873 = vst.msk [vmem:[%s1868 + $0x20] sm:$0xff] %vm1818, %v1864
    %1874 = vst.msk [vmem:[%s1868 + $0x28] sm:$0xff] %vm1818, %v1865
    %1875 = vst.msk [vmem:[%s1868 + $0x30] sm:$0xff] %vm1818, %v1866
    %1876 = vst.msk [vmem:[%s1868 + $0x38] sm:$0xf] %vm1826, %v1867
    %vm1877 = vcmp.gt.f32.partialorder %v1672, 0.0
    %vm1878 = vcmp.gt.f32.partialorder %v1673, 0.0
    %vm1879 = vcmp.gt.f32.partialorder %v1674, 0.0
    %vm1880 = vcmp.gt.f32.partialorder %v1675, 0.0
    %vm1881 = vcmp.gt.f32.partialorder %v1676, 0.0
    %vm1882 = vcmp.gt.f32.partialorder %v1677, 0.0
    %vm1883 = vcmp.gt.f32.partialorder %v1678, 0.0
    %vm1884 = vcmp.gt.f32.partialorder %v1679, 0.0
    %v1885 = vmul.f32 %v1672, 0.345
    %v1886 = vmul.f32 %v1673, 0.345
    %v1887 = vmul.f32 %v1674, 0.345
    %v1888 = vmul.f32 %v1675, 0.345
    %v1889 = vmul.f32 %v1676, 0.345
    %v1890 = vmul.f32 %v1677, 0.345
    %v1891 = vmul.f32 %v1678, 0.345
    %v1892 = vmul.f32 %v1679, 0.345
    %v1893 = vsel %vm1877, %v1672, %v1885
    %v1894 = vsel %vm1878, %v1673, %v1886
    %v1895 = vsel %vm1879, %v1674, %v1887
    %v1896 = vsel %vm1880, %v1675, %v1888
    %v1897 = vsel %vm1881, %v1676, %v1889
    %v1898 = vsel %vm1882, %v1677, %v1890
    %v1899 = vsel %vm1883, %v1678, %v1891
    %v1900 = vsel %vm1884, %v1679, %v1892
    %v1901 = vtanh.pop %v1893
    %v1902 = vtanh.pop %v1894
    %v1903 = vtanh.pop %v1895
    %v1904 = vtanh.pop %v1896
    %v1905 = vtanh.pop %v1897
    %v1906 = vtanh.pop %v1898
    %v1907 = vtanh.pop %v1899
    %v1908 = vtanh.pop %v1900
    %v1909 = vmul.f32 %v1901, %v1901
    %v1910 = vmul.f32 %v1902, %v1902
    %v1911 = vmul.f32 %v1903, %v1903
    %v1912 = vmul.f32 %v1904, %v1904
    %v1913 = vmul.f32 %v1905, %v1905
    %v1914 = vmul.f32 %v1906, %v1906
    %v1915 = vmul.f32 %v1907, %v1907
    %v1916 = vmul.f32 %v1908, %v1908
    %s1917 = scalar_lea.vmem %s2, 128
    %1918 = vst.msk [vmem:[%s1917] sm:$0xff] %vm1818, %v1909
    %1919 = vst.msk [vmem:[%s1917 + $0x8] sm:$0xff] %vm1818, %v1910
    %1920 = vst.msk [vmem:[%s1917 + $0x10] sm:$0xff] %vm1818, %v1911
    %1921 = vst.msk [vmem:[%s1917 + $0x18] sm:$0xff] %vm1818, %v1912
    %1922 = vst.msk [vmem:[%s1917 + $0x20] sm:$0xff] %vm1818, %v1913
    %1923 = vst.msk [vmem:[%s1917 + $0x28] sm:$0xff] %vm1818, %v1914
    %1924 = vst.msk [vmem:[%s1917 + $0x30] sm:$0xff] %vm1818, %v1915
    %1925 = vst.msk [vmem:[%s1917 + $0x38] sm:$0xf] %vm1826, %v1916
    %vm1926 = vcmp.gt.f32.partialorder %v1721, 0.0
    %vm1927 = vcmp.gt.f32.partialorder %v1722, 0.0
    %vm1928 = vcmp.gt.f32.partialorder %v1723, 0.0
    %vm1929 = vcmp.gt.f32.partialorder %v1724, 0.0
    %vm1930 = vcmp.gt.f32.partialorder %v1725, 0.0
    %vm1931 = vcmp.gt.f32.partialorder %v1726, 0.0
    %vm1932 = vcmp.gt.f32.partialorder %v1727, 0.0
    %vm1933 = vcmp.gt.f32.partialorder %v1728, 0.0
    %v1934 = vmul.f32 %v1721, 0.345
    %v1935 = vmul.f32 %v1722, 0.345
    %v1936 = vmul.f32 %v1723, 0.345
    %v1937 = vmul.f32 %v1724, 0.345
    %v1938 = vmul.f32 %v1725, 0.345
    %v1939 = vmul.f32 %v1726, 0.345
    %v1940 = vmul.f32 %v1727, 0.345
    %v1941 = vmul.f32 %v1728, 0.345
    %v1942 = vsel %vm1926, %v1721, %v1934
    %v1943 = vsel %vm1927, %v1722, %v1935
    %v1944 = vsel %vm1928, %v1723, %v1936
    %v1945 = vsel %vm1929, %v1724, %v1937
    %v1946 = vsel %vm1930, %v1725, %v1938
    %v1947 = vsel %vm1931, %v1726, %v1939
    %v1948 = vsel %vm1932, %v1727, %v1940
    %v1949 = vsel %vm1933, %v1728, %v1941
    %v1950 = vtanh.pop %v1942
    %v1951 = vtanh.pop %v1943
    %v1952 = vtanh.pop %v1944
    %v1953 = vtanh.pop %v1945
    %v1954 = vtanh.pop %v1946
    %v1955 = vtanh.pop %v1947
    %v1956 = vtanh.pop %v1948
    %v1957 = vtanh.pop %v1949
    %v1958 = vmul.f32 %v1950, %v1950
    %v1959 = vmul.f32 %v1951, %v1951
    %v1960 = vmul.f32 %v1952, %v1952
    %v1961 = vmul.f32 %v1953, %v1953
    %v1962 = vmul.f32 %v1954, %v1954
    %v1963 = vmul.f32 %v1955, %v1955
    %v1964 = vmul.f32 %v1956, %v1956
    %v1965 = vmul.f32 %v1957, %v1957
    %s1966 = scalar_lea.vmem %s2, 192
    %1967 = vst.msk [vmem:[%s1966] sm:$0xff] %vm1818, %v1958
    %1968 = vst.msk [vmem:[%s1966 + $0x8] sm:$0xff] %vm1818, %v1959
    %1969 = vst.msk [vmem:[%s1966 + $0x10] sm:$0xff] %vm1818, %v1960
    %1970 = vst.msk [vmem:[%s1966 + $0x18] sm:$0xff] %vm1818, %v1961
    %1971 = vst.msk [vmem:[%s1966 + $0x20] sm:$0xff] %vm1818, %v1962
    %1972 = vst.msk [vmem:[%s1966 + $0x28] sm:$0xff] %vm1818, %v1963
    %1973 = vst.msk [vmem:[%s1966 + $0x30] sm:$0xff] %vm1818, %v1964
    %1974 = vst.msk [vmem:[%s1966 + $0x38] sm:$0xf] %vm1826, %v1965
    %vm1975 = vcmp.gt.f32.partialorder %v1770, 0.0
    %vm1976 = vcmp.gt.f32.partialorder %v1771, 0.0
    %vm1977 = vcmp.gt.f32.partialorder %v1772, 0.0
    %vm1978 = vcmp.gt.f32.partialorder %v1773, 0.0
    %vm1979 = vcmp.gt.f32.partialorder %v1774, 0.0
    %vm1980 = vcmp.gt.f32.partialorder %v1775, 0.0
    %vm1981 = vcmp.gt.f32.partialorder %v1776, 0.0
    %vm1982 = vcmp.gt.f32.partialorder %v1777, 0.0
    %v1983 = vmul.f32 %v1770, 0.345
    %v1984 = vmul.f32 %v1771, 0.345
    %v1985 = vmul.f32 %v1772, 0.345
    %v1986 = vmul.f32 %v1773, 0.345
    %v1987 = vmul.f32 %v1774, 0.345
    %v1988 = vmul.f32 %v1775, 0.345
    %v1989 = vmul.f32 %v1776, 0.345
    %v1990 = vmul.f32 %v1777, 0.345
    %v1991 = vsel %vm1975, %v1770, %v1983
    %v1992 = vsel %vm1976, %v1771, %v1984
    %v1993 = vsel %vm1977, %v1772, %v1985
    %v1994 = vsel %vm1978, %v1773, %v1986
    %v1995 = vsel %vm1979, %v1774, %v1987
    %v1996 = vsel %vm1980, %v1775, %v1988
    %v1997 = vsel %vm1981, %v1776, %v1989
    %v1998 = vsel %vm1982, %v1777, %v1990
    %v1999 = vtanh.pop %v1991
    %v2000 = vtanh.pop %v1992
    %v2001 = vtanh.pop %v1993
    %v2002 = vtanh.pop %v1994
    %v2003 = vtanh.pop %v1995
    %v2004 = vtanh.pop %v1996
    %v2005 = vtanh.pop %v1997
    %v2006 = vtanh.pop %v1998
    %v2007 = vmul.f32 %v1999, %v1999
    %v2008 = vmul.f32 %v2000, %v2000
    %v2009 = vmul.f32 %v2001, %v2001
    %v2010 = vmul.f32 %v2002, %v2002
    %v2011 = vmul.f32 %v2003, %v2003
    %v2012 = vmul.f32 %v2004, %v2004
    %v2013 = vmul.f32 %v2005, %v2005
    %v2014 = vmul.f32 %v2006, %v2006
    %s2015 = scalar_lea.vmem %s2, 256
    %2016 = vst.msk [vmem:[%s2015] sm:$0xff] %vm1818, %v2007
    %2017 = vst.msk [vmem:[%s2015 + $0x8] sm:$0xff] %vm1818, %v2008
    %2018 = vst.msk [vmem:[%s2015 + $0x10] sm:$0xff] %vm1818, %v2009
    %2019 = vst.msk [vmem:[%s2015 + $0x18] sm:$0xff] %vm1818, %v2010
    %2020 = vst.msk [vmem:[%s2015 + $0x20] sm:$0xff] %vm1818, %v2011
    %2021 = vst.msk [vmem:[%s2015 + $0x28] sm:$0xff] %vm1818, %v2012
    %2022 = vst.msk [vmem:[%s2015 + $0x30] sm:$0xff] %vm1818, %v2013
    %2023 = vst.msk [vmem:[%s2015 + $0x38] sm:$0xf] %vm1826, %v2014
    %s2024 = scalar_lea.vmem %s1, 72
    %v2025 = vld [vmem:[%s2024] sm:$0xff]
    %v2026 = vld [vmem:[%s2024 + $0x8] sm:$0xff]
    %v2027 = vld [vmem:[%s2024 + $0x10] sm:$0xff]
    %v2028 = vld [vmem:[%s2024 + $0x18] sm:$0xff]
    %v2029 = vld [vmem:[%s2024 + $0x20] sm:$0xff]
    %v2030 = vld [vmem:[%s2024 + $0x28] sm:$0xff]
    %v2031 = vld [vmem:[%s2024 + $0x30] sm:$0xff]
    %v2032 = vld [vmem:[%s2024 + $0x38] sm:$0xf]
    %v2033 = vmul.f32 %v2025, %v77
    %v2034 = vmul.f32 %v2026, %v77
    %v2035 = vmul.f32 %v2027, %v77
    %v2036 = vmul.f32 %v2028, %v77
    %v2037 = vmul.f32 %v2029, %v77
    %v2038 = vmul.f32 %v2030, %v77
    %v2039 = vmul.f32 %v2031, %v77
    %v2040 = vmul.f32 %v2032, %v77
    %v2041 = vmul.f32 %v2025, %v86
    %v2042 = vmul.f32 %v2026, %v86
    %v2043 = vmul.f32 %v2027, %v86
    %v2044 = vmul.f32 %v2028, %v86
    %v2045 = vmul.f32 %v2029, %v86
    %v2046 = vmul.f32 %v2030, %v86
    %v2047 = vmul.f32 %v2031, %v86
    %v2048 = vmul.f32 %v2032, %v86
    %v2049 = vmul.f32 %v2025, %v95
    %v2050 = vmul.f32 %v2026, %v95
    %v2051 = vmul.f32 %v2027, %v95
    %v2052 = vmul.f32 %v2028, %v95
    %v2053 = vmul.f32 %v2029, %v95
    %v2054 = vmul.f32 %v2030, %v95
    %v2055 = vmul.f32 %v2031, %v95
    %v2056 = vmul.f32 %v2032, %v95
    %v2057 = vmul.f32 %v2025, %v104
    %v2058 = vmul.f32 %v2026, %v104
    %v2059 = vmul.f32 %v2027, %v104
    %v2060 = vmul.f32 %v2028, %v104
    %v2061 = vmul.f32 %v2029, %v104
    %v2062 = vmul.f32 %v2030, %v104
    %v2063 = vmul.f32 %v2031, %v104
    %v2064 = vmul.f32 %v2032, %v104
    %v2065 = vmul.f32 %v2025, %v113
    %v2066 = vmul.f32 %v2026, %v113
    %v2067 = vmul.f32 %v2027, %v113
    %v2068 = vmul.f32 %v2028, %v113
    %v2069 = vmul.f32 %v2029, %v113
    %v2070 = vmul.f32 %v2030, %v113
    %v2071 = vmul.f32 %v2031, %v113
    %v2072 = vmul.f32 %v2032, %v113
    %v2073 = vmul.f32 %v2025, %v122
    %v2074 = vmul.f32 %v2026, %v122
    %v2075 = vmul.f32 %v2027, %v122
    %v2076 = vmul.f32 %v2028, %v122
    %v2077 = vmul.f32 %v2029, %v122
    %v2078 = vmul.f32 %v2030, %v122
    %v2079 = vmul.f32 %v2031, %v122
    %v2080 = vmul.f32 %v2032, %v122
    %2089 = vrot.lane.b32.xlu0 %v2073, 126
    %v2090 = vpop.permute.xlu0 %2089
    %2091 = vrot.lane.b32.xlu0 %v2074, 126
    %v2092 = vpop.permute.xlu0 %2091
    %2093 = vrot.lane.b32.xlu0 %v2075, 126
    %v2094 = vpop.permute.xlu0 %2093
    %2095 = vrot.lane.b32.xlu0 %v2076, 126
    %v2096 = vpop.permute.xlu0 %2095
    %2097 = vrot.lane.b32.xlu0 %v2077, 126
    %v2098 = vpop.permute.xlu0 %2097
    %2099 = vrot.lane.b32.xlu0 %v2078, 126
    %v2100 = vpop.permute.xlu0 %2099
    %2101 = vrot.lane.b32.xlu0 %v2079, 126
    %v2102 = vpop.permute.xlu0 %2101
    %2103 = vrot.lane.b32.xlu0 %v2080, 126
    %v2104 = vpop.permute.xlu0 %2103
    %v2113 = vadd.f32 %v2033, %v2090
    %v2114 = vadd.f32 %v2034, %v2092
    %v2115 = vadd.f32 %v2035, %v2094
    %v2116 = vadd.f32 %v2036, %v2096
    %v2117 = vadd.f32 %v2037, %v2098
    %v2118 = vadd.f32 %v2038, %v2100
    %v2119 = vadd.f32 %v2039, %v2102
    %v2120 = vadd.f32 %v2040, %v2104
    %v2121 = vmul.f32 %v2025, %v171
    %v2122 = vmul.f32 %v2026, %v171
    %v2123 = vmul.f32 %v2027, %v171
    %v2124 = vmul.f32 %v2028, %v171
    %v2125 = vmul.f32 %v2029, %v171
    %v2126 = vmul.f32 %v2030, %v171
    %v2127 = vmul.f32 %v2031, %v171
    %v2128 = vmul.f32 %v2032, %v171
    %2137 = vrot.lane.b32.xlu0 %v2121, 126
    %v2138 = vpop.permute.xlu0 %2137
    %2139 = vrot.lane.b32.xlu0 %v2122, 126
    %v2140 = vpop.permute.xlu0 %2139
    %2141 = vrot.lane.b32.xlu0 %v2123, 126
    %v2142 = vpop.permute.xlu0 %2141
    %2143 = vrot.lane.b32.xlu0 %v2124, 126
    %v2144 = vpop.permute.xlu0 %2143
    %2145 = vrot.lane.b32.xlu0 %v2125, 126
    %v2146 = vpop.permute.xlu0 %2145
    %2147 = vrot.lane.b32.xlu0 %v2126, 126
    %v2148 = vpop.permute.xlu0 %2147
    %2149 = vrot.lane.b32.xlu0 %v2127, 126
    %v2150 = vpop.permute.xlu0 %2149
    %2151 = vrot.lane.b32.xlu0 %v2128, 126
    %v2152 = vpop.permute.xlu0 %2151
    %v2161 = vadd.f32 %v2041, %v2138
    %v2162 = vadd.f32 %v2042, %v2140
    %v2163 = vadd.f32 %v2043, %v2142
    %v2164 = vadd.f32 %v2044, %v2144
    %v2165 = vadd.f32 %v2045, %v2146
    %v2166 = vadd.f32 %v2046, %v2148
    %v2167 = vadd.f32 %v2047, %v2150
    %v2168 = vadd.f32 %v2048, %v2152
    %v2169 = vmul.f32 %v2025, %v220
    %v2170 = vmul.f32 %v2026, %v220
    %v2171 = vmul.f32 %v2027, %v220
    %v2172 = vmul.f32 %v2028, %v220
    %v2173 = vmul.f32 %v2029, %v220
    %v2174 = vmul.f32 %v2030, %v220
    %v2175 = vmul.f32 %v2031, %v220
    %v2176 = vmul.f32 %v2032, %v220
    %2185 = vrot.lane.b32.xlu0 %v2169, 126
    %v2186 = vpop.permute.xlu0 %2185
    %2187 = vrot.lane.b32.xlu0 %v2170, 126
    %v2188 = vpop.permute.xlu0 %2187
    %2189 = vrot.lane.b32.xlu0 %v2171, 126
    %v2190 = vpop.permute.xlu0 %2189
    %2191 = vrot.lane.b32.xlu0 %v2172, 126
    %v2192 = vpop.permute.xlu0 %2191
    %2193 = vrot.lane.b32.xlu0 %v2173, 126
    %v2194 = vpop.permute.xlu0 %2193
    %2195 = vrot.lane.b32.xlu0 %v2174, 126
    %v2196 = vpop.permute.xlu0 %2195
    %2197 = vrot.lane.b32.xlu0 %v2175, 126
    %v2198 = vpop.permute.xlu0 %2197
    %2199 = vrot.lane.b32.xlu0 %v2176, 126
    %v2200 = vpop.permute.xlu0 %2199
    %v2209 = vadd.f32 %v2049, %v2186
    %v2210 = vadd.f32 %v2050, %v2188
    %v2211 = vadd.f32 %v2051, %v2190
    %v2212 = vadd.f32 %v2052, %v2192
    %v2213 = vadd.f32 %v2053, %v2194
    %v2214 = vadd.f32 %v2054, %v2196
    %v2215 = vadd.f32 %v2055, %v2198
    %v2216 = vadd.f32 %v2056, %v2200
    %v2217 = vmul.f32 %v2025, %v269
    %v2218 = vmul.f32 %v2026, %v269
    %v2219 = vmul.f32 %v2027, %v269
    %v2220 = vmul.f32 %v2028, %v269
    %v2221 = vmul.f32 %v2029, %v269
    %v2222 = vmul.f32 %v2030, %v269
    %v2223 = vmul.f32 %v2031, %v269
    %v2224 = vmul.f32 %v2032, %v269
    %2233 = vrot.lane.b32.xlu0 %v2217, 126
    %v2234 = vpop.permute.xlu0 %2233
    %2235 = vrot.lane.b32.xlu0 %v2218, 126
    %v2236 = vpop.permute.xlu0 %2235
    %2237 = vrot.lane.b32.xlu0 %v2219, 126
    %v2238 = vpop.permute.xlu0 %2237
    %2239 = vrot.lane.b32.xlu0 %v2220, 126
    %v2240 = vpop.permute.xlu0 %2239
    %2241 = vrot.lane.b32.xlu0 %v2221, 126
    %v2242 = vpop.permute.xlu0 %2241
    %2243 = vrot.lane.b32.xlu0 %v2222, 126
    %v2244 = vpop.permute.xlu0 %2243
    %2245 = vrot.lane.b32.xlu0 %v2223, 126
    %v2246 = vpop.permute.xlu0 %2245
    %2247 = vrot.lane.b32.xlu0 %v2224, 126
    %v2248 = vpop.permute.xlu0 %2247
    %v2257 = vadd.f32 %v2057, %v2234
    %v2258 = vadd.f32 %v2058, %v2236
    %v2259 = vadd.f32 %v2059, %v2238
    %v2260 = vadd.f32 %v2060, %v2240
    %v2261 = vadd.f32 %v2061, %v2242
    %v2262 = vadd.f32 %v2062, %v2244
    %v2263 = vadd.f32 %v2063, %v2246
    %v2264 = vadd.f32 %v2064, %v2248
    %v2265 = vmul.f32 %v2025, %v318
    %v2266 = vmul.f32 %v2026, %v318
    %v2267 = vmul.f32 %v2027, %v318
    %v2268 = vmul.f32 %v2028, %v318
    %v2269 = vmul.f32 %v2029, %v318
    %v2270 = vmul.f32 %v2030, %v318
    %v2271 = vmul.f32 %v2031, %v318
    %v2272 = vmul.f32 %v2032, %v318
    %2281 = vrot.lane.b32.xlu0 %v2265, 126
    %v2282 = vpop.permute.xlu0 %2281
    %2283 = vrot.lane.b32.xlu0 %v2266, 126
    %v2284 = vpop.permute.xlu0 %2283
    %2285 = vrot.lane.b32.xlu0 %v2267, 126
    %v2286 = vpop.permute.xlu0 %2285
    %2287 = vrot.lane.b32.xlu0 %v2268, 126
    %v2288 = vpop.permute.xlu0 %2287
    %2289 = vrot.lane.b32.xlu0 %v2269, 126
    %v2290 = vpop.permute.xlu0 %2289
    %2291 = vrot.lane.b32.xlu0 %v2270, 126
    %v2292 = vpop.permute.xlu0 %2291
    %2293 = vrot.lane.b32.xlu0 %v2271, 126
    %v2294 = vpop.permute.xlu0 %2293
    %2295 = vrot.lane.b32.xlu0 %v2272, 126
    %v2296 = vpop.permute.xlu0 %2295
    %v2305 = vadd.f32 %v2065, %v2282
    %v2306 = vadd.f32 %v2066, %v2284
    %v2307 = vadd.f32 %v2067, %v2286
    %v2308 = vadd.f32 %v2068, %v2288
    %v2309 = vadd.f32 %v2069, %v2290
    %v2310 = vadd.f32 %v2070, %v2292
    %v2311 = vadd.f32 %v2071, %v2294
    %v2312 = vadd.f32 %v2072, %v2296
    %v2313 = vmul.f32 %v2025, %v367
    %v2314 = vmul.f32 %v2026, %v367
    %v2315 = vmul.f32 %v2027, %v367
    %v2316 = vmul.f32 %v2028, %v367
    %v2317 = vmul.f32 %v2029, %v367
    %v2318 = vmul.f32 %v2030, %v367
    %v2319 = vmul.f32 %v2031, %v367
    %v2320 = vmul.f32 %v2032, %v367
    %2329 = vrot.lane.b32.xlu0 %v2313, 124
    %v2330 = vpop.permute.xlu0 %2329
    %2331 = vrot.lane.b32.xlu0 %v2314, 124
    %v2332 = vpop.permute.xlu0 %2331
    %2333 = vrot.lane.b32.xlu0 %v2315, 124
    %v2334 = vpop.permute.xlu0 %2333
    %2335 = vrot.lane.b32.xlu0 %v2316, 124
    %v2336 = vpop.permute.xlu0 %2335
    %2337 = vrot.lane.b32.xlu0 %v2317, 124
    %v2338 = vpop.permute.xlu0 %2337
    %2339 = vrot.lane.b32.xlu0 %v2318, 124
    %v2340 = vpop.permute.xlu0 %2339
    %2341 = vrot.lane.b32.xlu0 %v2319, 124
    %v2342 = vpop.permute.xlu0 %2341
    %2343 = vrot.lane.b32.xlu0 %v2320, 124
    %v2344 = vpop.permute.xlu0 %2343
    %v2353 = vadd.f32 %v2113, %v2330
    %v2354 = vadd.f32 %v2114, %v2332
    %v2355 = vadd.f32 %v2115, %v2334
    %v2356 = vadd.f32 %v2116, %v2336
    %v2357 = vadd.f32 %v2117, %v2338
    %v2358 = vadd.f32 %v2118, %v2340
    %v2359 = vadd.f32 %v2119, %v2342
    %v2360 = vadd.f32 %v2120, %v2344
    %v2361 = vmul.f32 %v2025, %v416
    %v2362 = vmul.f32 %v2026, %v416
    %v2363 = vmul.f32 %v2027, %v416
    %v2364 = vmul.f32 %v2028, %v416
    %v2365 = vmul.f32 %v2029, %v416
    %v2366 = vmul.f32 %v2030, %v416
    %v2367 = vmul.f32 %v2031, %v416
    %v2368 = vmul.f32 %v2032, %v416
    %2377 = vrot.lane.b32.xlu0 %v2361, 124
    %v2378 = vpop.permute.xlu0 %2377
    %2379 = vrot.lane.b32.xlu0 %v2362, 124
    %v2380 = vpop.permute.xlu0 %2379
    %2381 = vrot.lane.b32.xlu0 %v2363, 124
    %v2382 = vpop.permute.xlu0 %2381
    %2383 = vrot.lane.b32.xlu0 %v2364, 124
    %v2384 = vpop.permute.xlu0 %2383
    %2385 = vrot.lane.b32.xlu0 %v2365, 124
    %v2386 = vpop.permute.xlu0 %2385
    %2387 = vrot.lane.b32.xlu0 %v2366, 124
    %v2388 = vpop.permute.xlu0 %2387
    %2389 = vrot.lane.b32.xlu0 %v2367, 124
    %v2390 = vpop.permute.xlu0 %2389
    %2391 = vrot.lane.b32.xlu0 %v2368, 124
    %v2392 = vpop.permute.xlu0 %2391
    %v2401 = vadd.f32 %v2161, %v2378
    %v2402 = vadd.f32 %v2162, %v2380
    %v2403 = vadd.f32 %v2163, %v2382
    %v2404 = vadd.f32 %v2164, %v2384
    %v2405 = vadd.f32 %v2165, %v2386
    %v2406 = vadd.f32 %v2166, %v2388
    %v2407 = vadd.f32 %v2167, %v2390
    %v2408 = vadd.f32 %v2168, %v2392
    %v2409 = vmul.f32 %v2025, %v465
    %v2410 = vmul.f32 %v2026, %v465
    %v2411 = vmul.f32 %v2027, %v465
    %v2412 = vmul.f32 %v2028, %v465
    %v2413 = vmul.f32 %v2029, %v465
    %v2414 = vmul.f32 %v2030, %v465
    %v2415 = vmul.f32 %v2031, %v465
    %v2416 = vmul.f32 %v2032, %v465
    %2425 = vrot.lane.b32.xlu0 %v2409, 124
    %v2426 = vpop.permute.xlu0 %2425
    %2427 = vrot.lane.b32.xlu0 %v2410, 124
    %v2428 = vpop.permute.xlu0 %2427
    %2429 = vrot.lane.b32.xlu0 %v2411, 124
    %v2430 = vpop.permute.xlu0 %2429
    %2431 = vrot.lane.b32.xlu0 %v2412, 124
    %v2432 = vpop.permute.xlu0 %2431
    %2433 = vrot.lane.b32.xlu0 %v2413, 124
    %v2434 = vpop.permute.xlu0 %2433
    %2435 = vrot.lane.b32.xlu0 %v2414, 124
    %v2436 = vpop.permute.xlu0 %2435
    %2437 = vrot.lane.b32.xlu0 %v2415, 124
    %v2438 = vpop.permute.xlu0 %2437
    %2439 = vrot.lane.b32.xlu0 %v2416, 124
    %v2440 = vpop.permute.xlu0 %2439
    %v2449 = vadd.f32 %v2209, %v2426
    %v2450 = vadd.f32 %v2210, %v2428
    %v2451 = vadd.f32 %v2211, %v2430
    %v2452 = vadd.f32 %v2212, %v2432
    %v2453 = vadd.f32 %v2213, %v2434
    %v2454 = vadd.f32 %v2214, %v2436
    %v2455 = vadd.f32 %v2215, %v2438
    %v2456 = vadd.f32 %v2216, %v2440
    %v2457 = vmul.f32 %v2025, %v514
    %v2458 = vmul.f32 %v2026, %v514
    %v2459 = vmul.f32 %v2027, %v514
    %v2460 = vmul.f32 %v2028, %v514
    %v2461 = vmul.f32 %v2029, %v514
    %v2462 = vmul.f32 %v2030, %v514
    %v2463 = vmul.f32 %v2031, %v514
    %v2464 = vmul.f32 %v2032, %v514
    %2473 = vrot.lane.b32.xlu0 %v2457, 124
    %v2474 = vpop.permute.xlu0 %2473
    %2475 = vrot.lane.b32.xlu0 %v2458, 124
    %v2476 = vpop.permute.xlu0 %2475
    %2477 = vrot.lane.b32.xlu0 %v2459, 124
    %v2478 = vpop.permute.xlu0 %2477
    %2479 = vrot.lane.b32.xlu0 %v2460, 124
    %v2480 = vpop.permute.xlu0 %2479
    %2481 = vrot.lane.b32.xlu0 %v2461, 124
    %v2482 = vpop.permute.xlu0 %2481
    %2483 = vrot.lane.b32.xlu0 %v2462, 124
    %v2484 = vpop.permute.xlu0 %2483
    %2485 = vrot.lane.b32.xlu0 %v2463, 124
    %v2486 = vpop.permute.xlu0 %2485
    %2487 = vrot.lane.b32.xlu0 %v2464, 124
    %v2488 = vpop.permute.xlu0 %2487
    %v2497 = vadd.f32 %v2257, %v2474
    %v2498 = vadd.f32 %v2258, %v2476
    %v2499 = vadd.f32 %v2259, %v2478
    %v2500 = vadd.f32 %v2260, %v2480
    %v2501 = vadd.f32 %v2261, %v2482
    %v2502 = vadd.f32 %v2262, %v2484
    %v2503 = vadd.f32 %v2263, %v2486
    %v2504 = vadd.f32 %v2264, %v2488
    %v2505 = vmul.f32 %v2025, %v563
    %v2506 = vmul.f32 %v2026, %v563
    %v2507 = vmul.f32 %v2027, %v563
    %v2508 = vmul.f32 %v2028, %v563
    %v2509 = vmul.f32 %v2029, %v563
    %v2510 = vmul.f32 %v2030, %v563
    %v2511 = vmul.f32 %v2031, %v563
    %v2512 = vmul.f32 %v2032, %v563
    %2521 = vrot.lane.b32.xlu0 %v2505, 124
    %v2522 = vpop.permute.xlu0 %2521
    %2523 = vrot.lane.b32.xlu0 %v2506, 124
    %v2524 = vpop.permute.xlu0 %2523
    %2525 = vrot.lane.b32.xlu0 %v2507, 124
    %v2526 = vpop.permute.xlu0 %2525
    %2527 = vrot.lane.b32.xlu0 %v2508, 124
    %v2528 = vpop.permute.xlu0 %2527
    %2529 = vrot.lane.b32.xlu0 %v2509, 124
    %v2530 = vpop.permute.xlu0 %2529
    %2531 = vrot.lane.b32.xlu0 %v2510, 124
    %v2532 = vpop.permute.xlu0 %2531
    %2533 = vrot.lane.b32.xlu0 %v2511, 124
    %v2534 = vpop.permute.xlu0 %2533
    %2535 = vrot.lane.b32.xlu0 %v2512, 124
    %v2536 = vpop.permute.xlu0 %2535
    %v2545 = vadd.f32 %v2305, %v2522
    %v2546 = vadd.f32 %v2306, %v2524
    %v2547 = vadd.f32 %v2307, %v2526
    %v2548 = vadd.f32 %v2308, %v2528
    %v2549 = vadd.f32 %v2309, %v2530
    %v2550 = vadd.f32 %v2310, %v2532
    %v2551 = vadd.f32 %v2311, %v2534
    %v2552 = vadd.f32 %v2312, %v2536
    %v2553 = vld [vmem:[%s2024 + $0x3] sm:$0xff]
    %v2554 = vld [vmem:[%s2024 + $0xb] sm:$0xff]
    %v2555 = vld [vmem:[%s2024 + $0x13] sm:$0xff]
    %v2556 = vld [vmem:[%s2024 + $0x1b] sm:$0xff]
    %v2557 = vld [vmem:[%s2024 + $0x23] sm:$0xff]
    %v2558 = vld [vmem:[%s2024 + $0x2b] sm:$0xff]
    %v2559 = vld [vmem:[%s2024 + $0x33] sm:$0xff]
    %v2560 = vld [vmem:[%s2024 + $0x3b] sm:$0xf]
    %v2561 = vmul.f32 %v2553, %v620
    %v2562 = vmul.f32 %v2554, %v620
    %v2563 = vmul.f32 %v2555, %v620
    %v2564 = vmul.f32 %v2556, %v620
    %v2565 = vmul.f32 %v2557, %v620
    %v2566 = vmul.f32 %v2558, %v620
    %v2567 = vmul.f32 %v2559, %v620
    %v2568 = vmul.f32 %v2560, %v620
    %v2569 = vadd.f32 %v2353, %v2561
    %v2570 = vadd.f32 %v2354, %v2562
    %v2571 = vadd.f32 %v2355, %v2563
    %v2572 = vadd.f32 %v2356, %v2564
    %v2573 = vadd.f32 %v2357, %v2565
    %v2574 = vadd.f32 %v2358, %v2566
    %v2575 = vadd.f32 %v2359, %v2567
    %v2576 = vadd.f32 %v2360, %v2568
    %v2577 = vmul.f32 %v2553, %v637
    %v2578 = vmul.f32 %v2554, %v637
    %v2579 = vmul.f32 %v2555, %v637
    %v2580 = vmul.f32 %v2556, %v637
    %v2581 = vmul.f32 %v2557, %v637
    %v2582 = vmul.f32 %v2558, %v637
    %v2583 = vmul.f32 %v2559, %v637
    %v2584 = vmul.f32 %v2560, %v637
    %v2585 = vadd.f32 %v2401, %v2577
    %v2586 = vadd.f32 %v2402, %v2578
    %v2587 = vadd.f32 %v2403, %v2579
    %v2588 = vadd.f32 %v2404, %v2580
    %v2589 = vadd.f32 %v2405, %v2581
    %v2590 = vadd.f32 %v2406, %v2582
    %v2591 = vadd.f32 %v2407, %v2583
    %v2592 = vadd.f32 %v2408, %v2584
    %v2593 = vmul.f32 %v2553, %v654
    %v2594 = vmul.f32 %v2554, %v654
    %v2595 = vmul.f32 %v2555, %v654
    %v2596 = vmul.f32 %v2556, %v654
    %v2597 = vmul.f32 %v2557, %v654
    %v2598 = vmul.f32 %v2558, %v654
    %v2599 = vmul.f32 %v2559, %v654
    %v2600 = vmul.f32 %v2560, %v654
    %v2601 = vadd.f32 %v2449, %v2593
    %v2602 = vadd.f32 %v2450, %v2594
    %v2603 = vadd.f32 %v2451, %v2595
    %v2604 = vadd.f32 %v2452, %v2596
    %v2605 = vadd.f32 %v2453, %v2597
    %v2606 = vadd.f32 %v2454, %v2598
    %v2607 = vadd.f32 %v2455, %v2599
    %v2608 = vadd.f32 %v2456, %v2600
    %v2609 = vmul.f32 %v2553, %v671
    %v2610 = vmul.f32 %v2554, %v671
    %v2611 = vmul.f32 %v2555, %v671
    %v2612 = vmul.f32 %v2556, %v671
    %v2613 = vmul.f32 %v2557, %v671
    %v2614 = vmul.f32 %v2558, %v671
    %v2615 = vmul.f32 %v2559, %v671
    %v2616 = vmul.f32 %v2560, %v671
    %v2617 = vadd.f32 %v2497, %v2609
    %v2618 = vadd.f32 %v2498, %v2610
    %v2619 = vadd.f32 %v2499, %v2611
    %v2620 = vadd.f32 %v2500, %v2612
    %v2621 = vadd.f32 %v2501, %v2613
    %v2622 = vadd.f32 %v2502, %v2614
    %v2623 = vadd.f32 %v2503, %v2615
    %v2624 = vadd.f32 %v2504, %v2616
    %v2625 = vmul.f32 %v2553, %v688
    %v2626 = vmul.f32 %v2554, %v688
    %v2627 = vmul.f32 %v2555, %v688
    %v2628 = vmul.f32 %v2556, %v688
    %v2629 = vmul.f32 %v2557, %v688
    %v2630 = vmul.f32 %v2558, %v688
    %v2631 = vmul.f32 %v2559, %v688
    %v2632 = vmul.f32 %v2560, %v688
    %v2633 = vadd.f32 %v2545, %v2625
    %v2634 = vadd.f32 %v2546, %v2626
    %v2635 = vadd.f32 %v2547, %v2627
    %v2636 = vadd.f32 %v2548, %v2628
    %v2637 = vadd.f32 %v2549, %v2629
    %v2638 = vadd.f32 %v2550, %v2630
    %v2639 = vadd.f32 %v2551, %v2631
    %v2640 = vadd.f32 %v2552, %v2632
    %v2641 = vmul.f32 %v2553, %v705
    %v2642 = vmul.f32 %v2554, %v705
    %v2643 = vmul.f32 %v2555, %v705
    %v2644 = vmul.f32 %v2556, %v705
    %v2645 = vmul.f32 %v2557, %v705
    %v2646 = vmul.f32 %v2558, %v705
    %v2647 = vmul.f32 %v2559, %v705
    %v2648 = vmul.f32 %v2560, %v705
    %2657 = vrot.lane.b32.xlu0 %v2641, 126
    %v2658 = vpop.permute.xlu0 %2657
    %2659 = vrot.lane.b32.xlu0 %v2642, 126
    %v2660 = vpop.permute.xlu0 %2659
    %2661 = vrot.lane.b32.xlu0 %v2643, 126
    %v2662 = vpop.permute.xlu0 %2661
    %2663 = vrot.lane.b32.xlu0 %v2644, 126
    %v2664 = vpop.permute.xlu0 %2663
    %2665 = vrot.lane.b32.xlu0 %v2645, 126
    %v2666 = vpop.permute.xlu0 %2665
    %2667 = vrot.lane.b32.xlu0 %v2646, 126
    %v2668 = vpop.permute.xlu0 %2667
    %2669 = vrot.lane.b32.xlu0 %v2647, 126
    %v2670 = vpop.permute.xlu0 %2669
    %2671 = vrot.lane.b32.xlu0 %v2648, 126
    %v2672 = vpop.permute.xlu0 %2671
    %v2681 = vadd.f32 %v2569, %v2658
    %v2682 = vadd.f32 %v2570, %v2660
    %v2683 = vadd.f32 %v2571, %v2662
    %v2684 = vadd.f32 %v2572, %v2664
    %v2685 = vadd.f32 %v2573, %v2666
    %v2686 = vadd.f32 %v2574, %v2668
    %v2687 = vadd.f32 %v2575, %v2670
    %v2688 = vadd.f32 %v2576, %v2672
    %v2689 = vmul.f32 %v2553, %v754
    %v2690 = vmul.f32 %v2554, %v754
    %v2691 = vmul.f32 %v2555, %v754
    %v2692 = vmul.f32 %v2556, %v754
    %v2693 = vmul.f32 %v2557, %v754
    %v2694 = vmul.f32 %v2558, %v754
    %v2695 = vmul.f32 %v2559, %v754
    %v2696 = vmul.f32 %v2560, %v754
    %2705 = vrot.lane.b32.xlu0 %v2689, 126
    %v2706 = vpop.permute.xlu0 %2705
    %2707 = vrot.lane.b32.xlu0 %v2690, 126
    %v2708 = vpop.permute.xlu0 %2707
    %2709 = vrot.lane.b32.xlu0 %v2691, 126
    %v2710 = vpop.permute.xlu0 %2709
    %2711 = vrot.lane.b32.xlu0 %v2692, 126
    %v2712 = vpop.permute.xlu0 %2711
    %2713 = vrot.lane.b32.xlu0 %v2693, 126
    %v2714 = vpop.permute.xlu0 %2713
    %2715 = vrot.lane.b32.xlu0 %v2694, 126
    %v2716 = vpop.permute.xlu0 %2715
    %2717 = vrot.lane.b32.xlu0 %v2695, 126
    %v2718 = vpop.permute.xlu0 %2717
    %2719 = vrot.lane.b32.xlu0 %v2696, 126
    %v2720 = vpop.permute.xlu0 %2719
    %v2729 = vadd.f32 %v2585, %v2706
    %v2730 = vadd.f32 %v2586, %v2708
    %v2731 = vadd.f32 %v2587, %v2710
    %v2732 = vadd.f32 %v2588, %v2712
    %v2733 = vadd.f32 %v2589, %v2714
    %v2734 = vadd.f32 %v2590, %v2716
    %v2735 = vadd.f32 %v2591, %v2718
    %v2736 = vadd.f32 %v2592, %v2720
    %v2737 = vmul.f32 %v2553, %v803
    %v2738 = vmul.f32 %v2554, %v803
    %v2739 = vmul.f32 %v2555, %v803
    %v2740 = vmul.f32 %v2556, %v803
    %v2741 = vmul.f32 %v2557, %v803
    %v2742 = vmul.f32 %v2558, %v803
    %v2743 = vmul.f32 %v2559, %v803
    %v2744 = vmul.f32 %v2560, %v803
    %2753 = vrot.lane.b32.xlu0 %v2737, 126
    %v2754 = vpop.permute.xlu0 %2753
    %2755 = vrot.lane.b32.xlu0 %v2738, 126
    %v2756 = vpop.permute.xlu0 %2755
    %2757 = vrot.lane.b32.xlu0 %v2739, 126
    %v2758 = vpop.permute.xlu0 %2757
    %2759 = vrot.lane.b32.xlu0 %v2740, 126
    %v2760 = vpop.permute.xlu0 %2759
    %2761 = vrot.lane.b32.xlu0 %v2741, 126
    %v2762 = vpop.permute.xlu0 %2761
    %2763 = vrot.lane.b32.xlu0 %v2742, 126
    %v2764 = vpop.permute.xlu0 %2763
    %2765 = vrot.lane.b32.xlu0 %v2743, 126
    %v2766 = vpop.permute.xlu0 %2765
    %2767 = vrot.lane.b32.xlu0 %v2744, 126
    %v2768 = vpop.permute.xlu0 %2767
    %v2777 = vadd.f32 %v2601, %v2754
    %v2778 = vadd.f32 %v2602, %v2756
    %v2779 = vadd.f32 %v2603, %v2758
    %v2780 = vadd.f32 %v2604, %v2760
    %v2781 = vadd.f32 %v2605, %v2762
    %v2782 = vadd.f32 %v2606, %v2764
    %v2783 = vadd.f32 %v2607, %v2766
    %v2784 = vadd.f32 %v2608, %v2768
    %v2785 = vmul.f32 %v2553, %v852
    %v2786 = vmul.f32 %v2554, %v852
    %v2787 = vmul.f32 %v2555, %v852
    %v2788 = vmul.f32 %v2556, %v852
    %v2789 = vmul.f32 %v2557, %v852
    %v2790 = vmul.f32 %v2558, %v852
    %v2791 = vmul.f32 %v2559, %v852
    %v2792 = vmul.f32 %v2560, %v852
    %2801 = vrot.lane.b32.xlu0 %v2785, 126
    %v2802 = vpop.permute.xlu0 %2801
    %2803 = vrot.lane.b32.xlu0 %v2786, 126
    %v2804 = vpop.permute.xlu0 %2803
    %2805 = vrot.lane.b32.xlu0 %v2787, 126
    %v2806 = vpop.permute.xlu0 %2805
    %2807 = vrot.lane.b32.xlu0 %v2788, 126
    %v2808 = vpop.permute.xlu0 %2807
    %2809 = vrot.lane.b32.xlu0 %v2789, 126
    %v2810 = vpop.permute.xlu0 %2809
    %2811 = vrot.lane.b32.xlu0 %v2790, 126
    %v2812 = vpop.permute.xlu0 %2811
    %2813 = vrot.lane.b32.xlu0 %v2791, 126
    %v2814 = vpop.permute.xlu0 %2813
    %2815 = vrot.lane.b32.xlu0 %v2792, 126
    %v2816 = vpop.permute.xlu0 %2815
    %v2825 = vadd.f32 %v2617, %v2802
    %v2826 = vadd.f32 %v2618, %v2804
    %v2827 = vadd.f32 %v2619, %v2806
    %v2828 = vadd.f32 %v2620, %v2808
    %v2829 = vadd.f32 %v2621, %v2810
    %v2830 = vadd.f32 %v2622, %v2812
    %v2831 = vadd.f32 %v2623, %v2814
    %v2832 = vadd.f32 %v2624, %v2816
    %v2833 = vmul.f32 %v2553, %v901
    %v2834 = vmul.f32 %v2554, %v901
    %v2835 = vmul.f32 %v2555, %v901
    %v2836 = vmul.f32 %v2556, %v901
    %v2837 = vmul.f32 %v2557, %v901
    %v2838 = vmul.f32 %v2558, %v901
    %v2839 = vmul.f32 %v2559, %v901
    %v2840 = vmul.f32 %v2560, %v901
    %2849 = vrot.lane.b32.xlu0 %v2833, 126
    %v2850 = vpop.permute.xlu0 %2849
    %2851 = vrot.lane.b32.xlu0 %v2834, 126
    %v2852 = vpop.permute.xlu0 %2851
    %2853 = vrot.lane.b32.xlu0 %v2835, 126
    %v2854 = vpop.permute.xlu0 %2853
    %2855 = vrot.lane.b32.xlu0 %v2836, 126
    %v2856 = vpop.permute.xlu0 %2855
    %2857 = vrot.lane.b32.xlu0 %v2837, 126
    %v2858 = vpop.permute.xlu0 %2857
    %2859 = vrot.lane.b32.xlu0 %v2838, 126
    %v2860 = vpop.permute.xlu0 %2859
    %2861 = vrot.lane.b32.xlu0 %v2839, 126
    %v2862 = vpop.permute.xlu0 %2861
    %2863 = vrot.lane.b32.xlu0 %v2840, 126
    %v2864 = vpop.permute.xlu0 %2863
    %v2873 = vadd.f32 %v2633, %v2850
    %v2874 = vadd.f32 %v2634, %v2852
    %v2875 = vadd.f32 %v2635, %v2854
    %v2876 = vadd.f32 %v2636, %v2856
    %v2877 = vadd.f32 %v2637, %v2858
    %v2878 = vadd.f32 %v2638, %v2860
    %v2879 = vadd.f32 %v2639, %v2862
    %v2880 = vadd.f32 %v2640, %v2864
    %v2881 = vmul.f32 %v2553, %v950
    %v2882 = vmul.f32 %v2554, %v950
    %v2883 = vmul.f32 %v2555, %v950
    %v2884 = vmul.f32 %v2556, %v950
    %v2885 = vmul.f32 %v2557, %v950
    %v2886 = vmul.f32 %v2558, %v950
    %v2887 = vmul.f32 %v2559, %v950
    %v2888 = vmul.f32 %v2560, %v950
    %2897 = vrot.lane.b32.xlu0 %v2881, 124
    %v2898 = vpop.permute.xlu0 %2897
    %2899 = vrot.lane.b32.xlu0 %v2882, 124
    %v2900 = vpop.permute.xlu0 %2899
    %2901 = vrot.lane.b32.xlu0 %v2883, 124
    %v2902 = vpop.permute.xlu0 %2901
    %2903 = vrot.lane.b32.xlu0 %v2884, 124
    %v2904 = vpop.permute.xlu0 %2903
    %2905 = vrot.lane.b32.xlu0 %v2885, 124
    %v2906 = vpop.permute.xlu0 %2905
    %2907 = vrot.lane.b32.xlu0 %v2886, 124
    %v2908 = vpop.permute.xlu0 %2907
    %2909 = vrot.lane.b32.xlu0 %v2887, 124
    %v2910 = vpop.permute.xlu0 %2909
    %2911 = vrot.lane.b32.xlu0 %v2888, 124
    %v2912 = vpop.permute.xlu0 %2911
    %v2921 = vadd.f32 %v2681, %v2898
    %v2922 = vadd.f32 %v2682, %v2900
    %v2923 = vadd.f32 %v2683, %v2902
    %v2924 = vadd.f32 %v2684, %v2904
    %v2925 = vadd.f32 %v2685, %v2906
    %v2926 = vadd.f32 %v2686, %v2908
    %v2927 = vadd.f32 %v2687, %v2910
    %v2928 = vadd.f32 %v2688, %v2912
    %v2929 = vmul.f32 %v2553, %v999
    %v2930 = vmul.f32 %v2554, %v999
    %v2931 = vmul.f32 %v2555, %v999
    %v2932 = vmul.f32 %v2556, %v999
    %v2933 = vmul.f32 %v2557, %v999
    %v2934 = vmul.f32 %v2558, %v999
    %v2935 = vmul.f32 %v2559, %v999
    %v2936 = vmul.f32 %v2560, %v999
    %2945 = vrot.lane.b32.xlu0 %v2929, 124
    %v2946 = vpop.permute.xlu0 %2945
    %2947 = vrot.lane.b32.xlu0 %v2930, 124
    %v2948 = vpop.permute.xlu0 %2947
    %2949 = vrot.lane.b32.xlu0 %v2931, 124
    %v2950 = vpop.permute.xlu0 %2949
    %2951 = vrot.lane.b32.xlu0 %v2932, 124
    %v2952 = vpop.permute.xlu0 %2951
    %2953 = vrot.lane.b32.xlu0 %v2933, 124
    %v2954 = vpop.permute.xlu0 %2953
    %2955 = vrot.lane.b32.xlu0 %v2934, 124
    %v2956 = vpop.permute.xlu0 %2955
    %2957 = vrot.lane.b32.xlu0 %v2935, 124
    %v2958 = vpop.permute.xlu0 %2957
    %2959 = vrot.lane.b32.xlu0 %v2936, 124
    %v2960 = vpop.permute.xlu0 %2959
    %v2969 = vadd.f32 %v2729, %v2946
    %v2970 = vadd.f32 %v2730, %v2948
    %v2971 = vadd.f32 %v2731, %v2950
    %v2972 = vadd.f32 %v2732, %v2952
    %v2973 = vadd.f32 %v2733, %v2954
    %v2974 = vadd.f32 %v2734, %v2956
    %v2975 = vadd.f32 %v2735, %v2958
    %v2976 = vadd.f32 %v2736, %v2960
    %v2977 = vmul.f32 %v2553, %v1048
    %v2978 = vmul.f32 %v2554, %v1048
    %v2979 = vmul.f32 %v2555, %v1048
    %v2980 = vmul.f32 %v2556, %v1048
    %v2981 = vmul.f32 %v2557, %v1048
    %v2982 = vmul.f32 %v2558, %v1048
    %v2983 = vmul.f32 %v2559, %v1048
    %v2984 = vmul.f32 %v2560, %v1048
    %2993 = vrot.lane.b32.xlu0 %v2977, 124
    %v2994 = vpop.permute.xlu0 %2993
    %2995 = vrot.lane.b32.xlu0 %v2978, 124
    %v2996 = vpop.permute.xlu0 %2995
    %2997 = vrot.lane.b32.xlu0 %v2979, 124
    %v2998 = vpop.permute.xlu0 %2997
    %2999 = vrot.lane.b32.xlu0 %v2980, 124
    %v3000 = vpop.permute.xlu0 %2999
    %3001 = vrot.lane.b32.xlu0 %v2981, 124
    %v3002 = vpop.permute.xlu0 %3001
    %3003 = vrot.lane.b32.xlu0 %v2982, 124
    %v3004 = vpop.permute.xlu0 %3003
    %3005 = vrot.lane.b32.xlu0 %v2983, 124
    %v3006 = vpop.permute.xlu0 %3005
    %3007 = vrot.lane.b32.xlu0 %v2984, 124
    %v3008 = vpop.permute.xlu0 %3007
    %v3017 = vadd.f32 %v2777, %v2994
    %v3018 = vadd.f32 %v2778, %v2996
    %v3019 = vadd.f32 %v2779, %v2998
    %v3020 = vadd.f32 %v2780, %v3000
    %v3021 = vadd.f32 %v2781, %v3002
    %v3022 = vadd.f32 %v2782, %v3004
    %v3023 = vadd.f32 %v2783, %v3006
    %v3024 = vadd.f32 %v2784, %v3008
    %v3025 = vmul.f32 %v2553, %v1097
    %v3026 = vmul.f32 %v2554, %v1097
    %v3027 = vmul.f32 %v2555, %v1097
    %v3028 = vmul.f32 %v2556, %v1097
    %v3029 = vmul.f32 %v2557, %v1097
    %v3030 = vmul.f32 %v2558, %v1097
    %v3031 = vmul.f32 %v2559, %v1097
    %v3032 = vmul.f32 %v2560, %v1097
    %3041 = vrot.lane.b32.xlu0 %v3025, 124
    %v3042 = vpop.permute.xlu0 %3041
    %3043 = vrot.lane.b32.xlu0 %v3026, 124
    %v3044 = vpop.permute.xlu0 %3043
    %3045 = vrot.lane.b32.xlu0 %v3027, 124
    %v3046 = vpop.permute.xlu0 %3045
    %3047 = vrot.lane.b32.xlu0 %v3028, 124
    %v3048 = vpop.permute.xlu0 %3047
    %3049 = vrot.lane.b32.xlu0 %v3029, 124
    %v3050 = vpop.permute.xlu0 %3049
    %3051 = vrot.lane.b32.xlu0 %v3030, 124
    %v3052 = vpop.permute.xlu0 %3051
    %3053 = vrot.lane.b32.xlu0 %v3031, 124
    %v3054 = vpop.permute.xlu0 %3053
    %3055 = vrot.lane.b32.xlu0 %v3032, 124
    %v3056 = vpop.permute.xlu0 %3055
    %v3065 = vadd.f32 %v2825, %v3042
    %v3066 = vadd.f32 %v2826, %v3044
    %v3067 = vadd.f32 %v2827, %v3046
    %v3068 = vadd.f32 %v2828, %v3048
    %v3069 = vadd.f32 %v2829, %v3050
    %v3070 = vadd.f32 %v2830, %v3052
    %v3071 = vadd.f32 %v2831, %v3054
    %v3072 = vadd.f32 %v2832, %v3056
    %v3073 = vmul.f32 %v2553, %v1146
    %v3074 = vmul.f32 %v2554, %v1146
    %v3075 = vmul.f32 %v2555, %v1146
    %v3076 = vmul.f32 %v2556, %v1146
    %v3077 = vmul.f32 %v2557, %v1146
    %v3078 = vmul.f32 %v2558, %v1146
    %v3079 = vmul.f32 %v2559, %v1146
    %v3080 = vmul.f32 %v2560, %v1146
    %3089 = vrot.lane.b32.xlu0 %v3073, 124
    %v3090 = vpop.permute.xlu0 %3089
    %3091 = vrot.lane.b32.xlu0 %v3074, 124
    %v3092 = vpop.permute.xlu0 %3091
    %3093 = vrot.lane.b32.xlu0 %v3075, 124
    %v3094 = vpop.permute.xlu0 %3093
    %3095 = vrot.lane.b32.xlu0 %v3076, 124
    %v3096 = vpop.permute.xlu0 %3095
    %3097 = vrot.lane.b32.xlu0 %v3077, 124
    %v3098 = vpop.permute.xlu0 %3097
    %3099 = vrot.lane.b32.xlu0 %v3078, 124
    %v3100 = vpop.permute.xlu0 %3099
    %3101 = vrot.lane.b32.xlu0 %v3079, 124
    %v3102 = vpop.permute.xlu0 %3101
    %3103 = vrot.lane.b32.xlu0 %v3080, 124
    %v3104 = vpop.permute.xlu0 %3103
    %v3113 = vadd.f32 %v2873, %v3090
    %v3114 = vadd.f32 %v2874, %v3092
    %v3115 = vadd.f32 %v2875, %v3094
    %v3116 = vadd.f32 %v2876, %v3096
    %v3117 = vadd.f32 %v2877, %v3098
    %v3118 = vadd.f32 %v2878, %v3100
    %v3119 = vadd.f32 %v2879, %v3102
    %v3120 = vadd.f32 %v2880, %v3104
    %v3121 = vld [vmem:[%s2024 + $0x6] sm:$0xff]
    %v3122 = vld [vmem:[%s2024 + $0xe] sm:$0xff]
    %v3123 = vld [vmem:[%s2024 + $0x16] sm:$0xff]
    %v3124 = vld [vmem:[%s2024 + $0x1e] sm:$0xff]
    %v3125 = vld [vmem:[%s2024 + $0x26] sm:$0xff]
    %v3126 = vld [vmem:[%s2024 + $0x2e] sm:$0xff]
    %v3127 = vld [vmem:[%s2024 + $0x36] sm:$0xff]
    %v3128 = vld [vmem:[%s2024 + $0x3e] sm:$0xf]
    %v3129 = vmul.f32 %v3121, %v1203
    %v3130 = vmul.f32 %v3122, %v1203
    %v3131 = vmul.f32 %v3123, %v1203
    %v3132 = vmul.f32 %v3124, %v1203
    %v3133 = vmul.f32 %v3125, %v1203
    %v3134 = vmul.f32 %v3126, %v1203
    %v3135 = vmul.f32 %v3127, %v1203
    %v3136 = vmul.f32 %v3128, %v1203
    %v3137 = vadd.f32 %v2921, %v3129
    %v3138 = vadd.f32 %v2922, %v3130
    %v3139 = vadd.f32 %v2923, %v3131
    %v3140 = vadd.f32 %v2924, %v3132
    %v3141 = vadd.f32 %v2925, %v3133
    %v3142 = vadd.f32 %v2926, %v3134
    %v3143 = vadd.f32 %v2927, %v3135
    %v3144 = vadd.f32 %v2928, %v3136
    %v3145 = vmul.f32 %v3121, %v1220
    %v3146 = vmul.f32 %v3122, %v1220
    %v3147 = vmul.f32 %v3123, %v1220
    %v3148 = vmul.f32 %v3124, %v1220
    %v3149 = vmul.f32 %v3125, %v1220
    %v3150 = vmul.f32 %v3126, %v1220
    %v3151 = vmul.f32 %v3127, %v1220
    %v3152 = vmul.f32 %v3128, %v1220
    %v3153 = vadd.f32 %v2969, %v3145
    %v3154 = vadd.f32 %v2970, %v3146
    %v3155 = vadd.f32 %v2971, %v3147
    %v3156 = vadd.f32 %v2972, %v3148
    %v3157 = vadd.f32 %v2973, %v3149
    %v3158 = vadd.f32 %v2974, %v3150
    %v3159 = vadd.f32 %v2975, %v3151
    %v3160 = vadd.f32 %v2976, %v3152
    %v3161 = vmul.f32 %v3121, %v1237
    %v3162 = vmul.f32 %v3122, %v1237
    %v3163 = vmul.f32 %v3123, %v1237
    %v3164 = vmul.f32 %v3124, %v1237
    %v3165 = vmul.f32 %v3125, %v1237
    %v3166 = vmul.f32 %v3126, %v1237
    %v3167 = vmul.f32 %v3127, %v1237
    %v3168 = vmul.f32 %v3128, %v1237
    %v3169 = vadd.f32 %v3017, %v3161
    %v3170 = vadd.f32 %v3018, %v3162
    %v3171 = vadd.f32 %v3019, %v3163
    %v3172 = vadd.f32 %v3020, %v3164
    %v3173 = vadd.f32 %v3021, %v3165
    %v3174 = vadd.f32 %v3022, %v3166
    %v3175 = vadd.f32 %v3023, %v3167
    %v3176 = vadd.f32 %v3024, %v3168
    %v3177 = vmul.f32 %v3121, %v1254
    %v3178 = vmul.f32 %v3122, %v1254
    %v3179 = vmul.f32 %v3123, %v1254
    %v3180 = vmul.f32 %v3124, %v1254
    %v3181 = vmul.f32 %v3125, %v1254
    %v3182 = vmul.f32 %v3126, %v1254
    %v3183 = vmul.f32 %v3127, %v1254
    %v3184 = vmul.f32 %v3128, %v1254
    %v3185 = vadd.f32 %v3065, %v3177
    %v3186 = vadd.f32 %v3066, %v3178
    %v3187 = vadd.f32 %v3067, %v3179
    %v3188 = vadd.f32 %v3068, %v3180
    %v3189 = vadd.f32 %v3069, %v3181
    %v3190 = vadd.f32 %v3070, %v3182
    %v3191 = vadd.f32 %v3071, %v3183
    %v3192 = vadd.f32 %v3072, %v3184
    %v3193 = vmul.f32 %v3121, %v1271
    %v3194 = vmul.f32 %v3122, %v1271
    %v3195 = vmul.f32 %v3123, %v1271
    %v3196 = vmul.f32 %v3124, %v1271
    %v3197 = vmul.f32 %v3125, %v1271
    %v3198 = vmul.f32 %v3126, %v1271
    %v3199 = vmul.f32 %v3127, %v1271
    %v3200 = vmul.f32 %v3128, %v1271
    %v3201 = vadd.f32 %v3113, %v3193
    %v3202 = vadd.f32 %v3114, %v3194
    %v3203 = vadd.f32 %v3115, %v3195
    %v3204 = vadd.f32 %v3116, %v3196
    %v3205 = vadd.f32 %v3117, %v3197
    %v3206 = vadd.f32 %v3118, %v3198
    %v3207 = vadd.f32 %v3119, %v3199
    %v3208 = vadd.f32 %v3120, %v3200
    %v3209 = vmul.f32 %v3121, %v1288
    %v3210 = vmul.f32 %v3122, %v1288
    %v3211 = vmul.f32 %v3123, %v1288
    %v3212 = vmul.f32 %v3124, %v1288
    %v3213 = vmul.f32 %v3125, %v1288
    %v3214 = vmul.f32 %v3126, %v1288
    %v3215 = vmul.f32 %v3127, %v1288
    %v3216 = vmul.f32 %v3128, %v1288
    %3225 = vrot.lane.b32.xlu0 %v3209, 126
    %v3226 = vpop.permute.xlu0 %3225
    %3227 = vrot.lane.b32.xlu0 %v3210, 126
    %v3228 = vpop.permute.xlu0 %3227
    %3229 = vrot.lane.b32.xlu0 %v3211, 126
    %v3230 = vpop.permute.xlu0 %3229
    %3231 = vrot.lane.b32.xlu0 %v3212, 126
    %v3232 = vpop.permute.xlu0 %3231
    %3233 = vrot.lane.b32.xlu0 %v3213, 126
    %v3234 = vpop.permute.xlu0 %3233
    %3235 = vrot.lane.b32.xlu0 %v3214, 126
    %v3236 = vpop.permute.xlu0 %3235
    %3237 = vrot.lane.b32.xlu0 %v3215, 126
    %v3238 = vpop.permute.xlu0 %3237
    %3239 = vrot.lane.b32.xlu0 %v3216, 126
    %v3240 = vpop.permute.xlu0 %3239
    %v3249 = vadd.f32 %v3137, %v3226
    %v3250 = vadd.f32 %v3138, %v3228
    %v3251 = vadd.f32 %v3139, %v3230
    %v3252 = vadd.f32 %v3140, %v3232
    %v3253 = vadd.f32 %v3141, %v3234
    %v3254 = vadd.f32 %v3142, %v3236
    %v3255 = vadd.f32 %v3143, %v3238
    %v3256 = vadd.f32 %v3144, %v3240
    %v3257 = vmul.f32 %v3121, %v1337
    %v3258 = vmul.f32 %v3122, %v1337
    %v3259 = vmul.f32 %v3123, %v1337
    %v3260 = vmul.f32 %v3124, %v1337
    %v3261 = vmul.f32 %v3125, %v1337
    %v3262 = vmul.f32 %v3126, %v1337
    %v3263 = vmul.f32 %v3127, %v1337
    %v3264 = vmul.f32 %v3128, %v1337
    %3273 = vrot.lane.b32.xlu0 %v3257, 126
    %v3274 = vpop.permute.xlu0 %3273
    %3275 = vrot.lane.b32.xlu0 %v3258, 126
    %v3276 = vpop.permute.xlu0 %3275
    %3277 = vrot.lane.b32.xlu0 %v3259, 126
    %v3278 = vpop.permute.xlu0 %3277
    %3279 = vrot.lane.b32.xlu0 %v3260, 126
    %v3280 = vpop.permute.xlu0 %3279
    %3281 = vrot.lane.b32.xlu0 %v3261, 126
    %v3282 = vpop.permute.xlu0 %3281
    %3283 = vrot.lane.b32.xlu0 %v3262, 126
    %v3284 = vpop.permute.xlu0 %3283
    %3285 = vrot.lane.b32.xlu0 %v3263, 126
    %v3286 = vpop.permute.xlu0 %3285
    %3287 = vrot.lane.b32.xlu0 %v3264, 126
    %v3288 = vpop.permute.xlu0 %3287
    %v3297 = vadd.f32 %v3153, %v3274
    %v3298 = vadd.f32 %v3154, %v3276
    %v3299 = vadd.f32 %v3155, %v3278
    %v3300 = vadd.f32 %v3156, %v3280
    %v3301 = vadd.f32 %v3157, %v3282
    %v3302 = vadd.f32 %v3158, %v3284
    %v3303 = vadd.f32 %v3159, %v3286
    %v3304 = vadd.f32 %v3160, %v3288
    %v3305 = vmul.f32 %v3121, %v1386
    %v3306 = vmul.f32 %v3122, %v1386
    %v3307 = vmul.f32 %v3123, %v1386
    %v3308 = vmul.f32 %v3124, %v1386
    %v3309 = vmul.f32 %v3125, %v1386
    %v3310 = vmul.f32 %v3126, %v1386
    %v3311 = vmul.f32 %v3127, %v1386
    %v3312 = vmul.f32 %v3128, %v1386
    %3321 = vrot.lane.b32.xlu0 %v3305, 126
    %v3322 = vpop.permute.xlu0 %3321
    %3323 = vrot.lane.b32.xlu0 %v3306, 126
    %v3324 = vpop.permute.xlu0 %3323
    %3325 = vrot.lane.b32.xlu0 %v3307, 126
    %v3326 = vpop.permute.xlu0 %3325
    %3327 = vrot.lane.b32.xlu0 %v3308, 126
    %v3328 = vpop.permute.xlu0 %3327
    %3329 = vrot.lane.b32.xlu0 %v3309, 126
    %v3330 = vpop.permute.xlu0 %3329
    %3331 = vrot.lane.b32.xlu0 %v3310, 126
    %v3332 = vpop.permute.xlu0 %3331
    %3333 = vrot.lane.b32.xlu0 %v3311, 126
    %v3334 = vpop.permute.xlu0 %3333
    %3335 = vrot.lane.b32.xlu0 %v3312, 126
    %v3336 = vpop.permute.xlu0 %3335
    %v3345 = vadd.f32 %v3169, %v3322
    %v3346 = vadd.f32 %v3170, %v3324
    %v3347 = vadd.f32 %v3171, %v3326
    %v3348 = vadd.f32 %v3172, %v3328
    %v3349 = vadd.f32 %v3173, %v3330
    %v3350 = vadd.f32 %v3174, %v3332
    %v3351 = vadd.f32 %v3175, %v3334
    %v3352 = vadd.f32 %v3176, %v3336
    %v3353 = vmul.f32 %v3121, %v1435
    %v3354 = vmul.f32 %v3122, %v1435
    %v3355 = vmul.f32 %v3123, %v1435
    %v3356 = vmul.f32 %v3124, %v1435
    %v3357 = vmul.f32 %v3125, %v1435
    %v3358 = vmul.f32 %v3126, %v1435
    %v3359 = vmul.f32 %v3127, %v1435
    %v3360 = vmul.f32 %v3128, %v1435
    %3369 = vrot.lane.b32.xlu0 %v3353, 126
    %v3370 = vpop.permute.xlu0 %3369
    %3371 = vrot.lane.b32.xlu0 %v3354, 126
    %v3372 = vpop.permute.xlu0 %3371
    %3373 = vrot.lane.b32.xlu0 %v3355, 126
    %v3374 = vpop.permute.xlu0 %3373
    %3375 = vrot.lane.b32.xlu0 %v3356, 126
    %v3376 = vpop.permute.xlu0 %3375
    %3377 = vrot.lane.b32.xlu0 %v3357, 126
    %v3378 = vpop.permute.xlu0 %3377
    %3379 = vrot.lane.b32.xlu0 %v3358, 126
    %v3380 = vpop.permute.xlu0 %3379
    %3381 = vrot.lane.b32.xlu0 %v3359, 126
    %v3382 = vpop.permute.xlu0 %3381
    %3383 = vrot.lane.b32.xlu0 %v3360, 126
    %v3384 = vpop.permute.xlu0 %3383
    %v3393 = vadd.f32 %v3185, %v3370
    %v3394 = vadd.f32 %v3186, %v3372
    %v3395 = vadd.f32 %v3187, %v3374
    %v3396 = vadd.f32 %v3188, %v3376
    %v3397 = vadd.f32 %v3189, %v3378
    %v3398 = vadd.f32 %v3190, %v3380
    %v3399 = vadd.f32 %v3191, %v3382
    %v3400 = vadd.f32 %v3192, %v3384
    %v3401 = vmul.f32 %v3121, %v1484
    %v3402 = vmul.f32 %v3122, %v1484
    %v3403 = vmul.f32 %v3123, %v1484
    %v3404 = vmul.f32 %v3124, %v1484
    %v3405 = vmul.f32 %v3125, %v1484
    %v3406 = vmul.f32 %v3126, %v1484
    %v3407 = vmul.f32 %v3127, %v1484
    %v3408 = vmul.f32 %v3128, %v1484
    %3417 = vrot.lane.b32.xlu0 %v3401, 126
    %v3418 = vpop.permute.xlu0 %3417
    %3419 = vrot.lane.b32.xlu0 %v3402, 126
    %v3420 = vpop.permute.xlu0 %3419
    %3421 = vrot.lane.b32.xlu0 %v3403, 126
    %v3422 = vpop.permute.xlu0 %3421
    %3423 = vrot.lane.b32.xlu0 %v3404, 126
    %v3424 = vpop.permute.xlu0 %3423
    %3425 = vrot.lane.b32.xlu0 %v3405, 126
    %v3426 = vpop.permute.xlu0 %3425
    %3427 = vrot.lane.b32.xlu0 %v3406, 126
    %v3428 = vpop.permute.xlu0 %3427
    %3429 = vrot.lane.b32.xlu0 %v3407, 126
    %v3430 = vpop.permute.xlu0 %3429
    %3431 = vrot.lane.b32.xlu0 %v3408, 126
    %v3432 = vpop.permute.xlu0 %3431
    %v3441 = vadd.f32 %v3201, %v3418
    %v3442 = vadd.f32 %v3202, %v3420
    %v3443 = vadd.f32 %v3203, %v3422
    %v3444 = vadd.f32 %v3204, %v3424
    %v3445 = vadd.f32 %v3205, %v3426
    %v3446 = vadd.f32 %v3206, %v3428
    %v3447 = vadd.f32 %v3207, %v3430
    %v3448 = vadd.f32 %v3208, %v3432
    %v3449 = vmul.f32 %v3121, %v1533
    %v3450 = vmul.f32 %v3122, %v1533
    %v3451 = vmul.f32 %v3123, %v1533
    %v3452 = vmul.f32 %v3124, %v1533
    %v3453 = vmul.f32 %v3125, %v1533
    %v3454 = vmul.f32 %v3126, %v1533
    %v3455 = vmul.f32 %v3127, %v1533
    %v3456 = vmul.f32 %v3128, %v1533
    %3465 = vrot.lane.b32.xlu0 %v3449, 124
    %v3466 = vpop.permute.xlu0 %3465
    %3467 = vrot.lane.b32.xlu0 %v3450, 124
    %v3468 = vpop.permute.xlu0 %3467
    %3469 = vrot.lane.b32.xlu0 %v3451, 124
    %v3470 = vpop.permute.xlu0 %3469
    %3471 = vrot.lane.b32.xlu0 %v3452, 124
    %v3472 = vpop.permute.xlu0 %3471
    %3473 = vrot.lane.b32.xlu0 %v3453, 124
    %v3474 = vpop.permute.xlu0 %3473
    %3475 = vrot.lane.b32.xlu0 %v3454, 124
    %v3476 = vpop.permute.xlu0 %3475
    %3477 = vrot.lane.b32.xlu0 %v3455, 124
    %v3478 = vpop.permute.xlu0 %3477
    %3479 = vrot.lane.b32.xlu0 %v3456, 124
    %v3480 = vpop.permute.xlu0 %3479
    %v3489 = vadd.f32 %v3249, %v3466
    %v3490 = vadd.f32 %v3250, %v3468
    %v3491 = vadd.f32 %v3251, %v3470
    %v3492 = vadd.f32 %v3252, %v3472
    %v3493 = vadd.f32 %v3253, %v3474
    %v3494 = vadd.f32 %v3254, %v3476
    %v3495 = vadd.f32 %v3255, %v3478
    %v3496 = vadd.f32 %v3256, %v3480
    %v3497 = vmul.f32 %v3121, %v1582
    %v3498 = vmul.f32 %v3122, %v1582
    %v3499 = vmul.f32 %v3123, %v1582
    %v3500 = vmul.f32 %v3124, %v1582
    %v3501 = vmul.f32 %v3125, %v1582
    %v3502 = vmul.f32 %v3126, %v1582
    %v3503 = vmul.f32 %v3127, %v1582
    %v3504 = vmul.f32 %v3128, %v1582
    %3513 = vrot.lane.b32.xlu0 %v3497, 124
    %v3514 = vpop.permute.xlu0 %3513
    %3515 = vrot.lane.b32.xlu0 %v3498, 124
    %v3516 = vpop.permute.xlu0 %3515
    %3517 = vrot.lane.b32.xlu0 %v3499, 124
    %v3518 = vpop.permute.xlu0 %3517
    %3519 = vrot.lane.b32.xlu0 %v3500, 124
    %v3520 = vpop.permute.xlu0 %3519
    %3521 = vrot.lane.b32.xlu0 %v3501, 124
    %v3522 = vpop.permute.xlu0 %3521
    %3523 = vrot.lane.b32.xlu0 %v3502, 124
    %v3524 = vpop.permute.xlu0 %3523
    %3525 = vrot.lane.b32.xlu0 %v3503, 124
    %v3526 = vpop.permute.xlu0 %3525
    %3527 = vrot.lane.b32.xlu0 %v3504, 124
    %v3528 = vpop.permute.xlu0 %3527
    %v3537 = vadd.f32 %v3297, %v3514
    %v3538 = vadd.f32 %v3298, %v3516
    %v3539 = vadd.f32 %v3299, %v3518
    %v3540 = vadd.f32 %v3300, %v3520
    %v3541 = vadd.f32 %v3301, %v3522
    %v3542 = vadd.f32 %v3302, %v3524
    %v3543 = vadd.f32 %v3303, %v3526
    %v3544 = vadd.f32 %v3304, %v3528
    %v3545 = vmul.f32 %v3121, %v1631
    %v3546 = vmul.f32 %v3122, %v1631
    %v3547 = vmul.f32 %v3123, %v1631
    %v3548 = vmul.f32 %v3124, %v1631
    %v3549 = vmul.f32 %v3125, %v1631
    %v3550 = vmul.f32 %v3126, %v1631
    %v3551 = vmul.f32 %v3127, %v1631
    %v3552 = vmul.f32 %v3128, %v1631
    %3561 = vrot.lane.b32.xlu0 %v3545, 124
    %v3562 = vpop.permute.xlu0 %3561
    %3563 = vrot.lane.b32.xlu0 %v3546, 124
    %v3564 = vpop.permute.xlu0 %3563
    %3565 = vrot.lane.b32.xlu0 %v3547, 124
    %v3566 = vpop.permute.xlu0 %3565
    %3567 = vrot.lane.b32.xlu0 %v3548, 124
    %v3568 = vpop.permute.xlu0 %3567
    %3569 = vrot.lane.b32.xlu0 %v3549, 124
    %v3570 = vpop.permute.xlu0 %3569
    %3571 = vrot.lane.b32.xlu0 %v3550, 124
    %v3572 = vpop.permute.xlu0 %3571
    %3573 = vrot.lane.b32.xlu0 %v3551, 124
    %v3574 = vpop.permute.xlu0 %3573
    %3575 = vrot.lane.b32.xlu0 %v3552, 124
    %v3576 = vpop.permute.xlu0 %3575
    %v3585 = vadd.f32 %v3345, %v3562
    %v3586 = vadd.f32 %v3346, %v3564
    %v3587 = vadd.f32 %v3347, %v3566
    %v3588 = vadd.f32 %v3348, %v3568
    %v3589 = vadd.f32 %v3349, %v3570
    %v3590 = vadd.f32 %v3350, %v3572
    %v3591 = vadd.f32 %v3351, %v3574
    %v3592 = vadd.f32 %v3352, %v3576
    %v3593 = vmul.f32 %v3121, %v1680
    %v3594 = vmul.f32 %v3122, %v1680
    %v3595 = vmul.f32 %v3123, %v1680
    %v3596 = vmul.f32 %v3124, %v1680
    %v3597 = vmul.f32 %v3125, %v1680
    %v3598 = vmul.f32 %v3126, %v1680
    %v3599 = vmul.f32 %v3127, %v1680
    %v3600 = vmul.f32 %v3128, %v1680
    %3609 = vrot.lane.b32.xlu0 %v3593, 124
    %v3610 = vpop.permute.xlu0 %3609
    %3611 = vrot.lane.b32.xlu0 %v3594, 124
    %v3612 = vpop.permute.xlu0 %3611
    %3613 = vrot.lane.b32.xlu0 %v3595, 124
    %v3614 = vpop.permute.xlu0 %3613
    %3615 = vrot.lane.b32.xlu0 %v3596, 124
    %v3616 = vpop.permute.xlu0 %3615
    %3617 = vrot.lane.b32.xlu0 %v3597, 124
    %v3618 = vpop.permute.xlu0 %3617
    %3619 = vrot.lane.b32.xlu0 %v3598, 124
    %v3620 = vpop.permute.xlu0 %3619
    %3621 = vrot.lane.b32.xlu0 %v3599, 124
    %v3622 = vpop.permute.xlu0 %3621
    %3623 = vrot.lane.b32.xlu0 %v3600, 124
    %v3624 = vpop.permute.xlu0 %3623
    %v3633 = vadd.f32 %v3393, %v3610
    %v3634 = vadd.f32 %v3394, %v3612
    %v3635 = vadd.f32 %v3395, %v3614
    %v3636 = vadd.f32 %v3396, %v3616
    %v3637 = vadd.f32 %v3397, %v3618
    %v3638 = vadd.f32 %v3398, %v3620
    %v3639 = vadd.f32 %v3399, %v3622
    %v3640 = vadd.f32 %v3400, %v3624
    %v3641 = vmul.f32 %v3121, %v1729
    %v3642 = vmul.f32 %v3122, %v1729
    %v3643 = vmul.f32 %v3123, %v1729
    %v3644 = vmul.f32 %v3124, %v1729
    %v3645 = vmul.f32 %v3125, %v1729
    %v3646 = vmul.f32 %v3126, %v1729
    %v3647 = vmul.f32 %v3127, %v1729
    %v3648 = vmul.f32 %v3128, %v1729
    %3657 = vrot.lane.b32.xlu0 %v3641, 124
    %v3658 = vpop.permute.xlu0 %3657
    %3659 = vrot.lane.b32.xlu0 %v3642, 124
    %v3660 = vpop.permute.xlu0 %3659
    %3661 = vrot.lane.b32.xlu0 %v3643, 124
    %v3662 = vpop.permute.xlu0 %3661
    %3663 = vrot.lane.b32.xlu0 %v3644, 124
    %v3664 = vpop.permute.xlu0 %3663
    %3665 = vrot.lane.b32.xlu0 %v3645, 124
    %v3666 = vpop.permute.xlu0 %3665
    %3667 = vrot.lane.b32.xlu0 %v3646, 124
    %v3668 = vpop.permute.xlu0 %3667
    %3669 = vrot.lane.b32.xlu0 %v3647, 124
    %v3670 = vpop.permute.xlu0 %3669
    %3671 = vrot.lane.b32.xlu0 %v3648, 124
    %v3672 = vpop.permute.xlu0 %3671
    %v3681 = vadd.f32 %v3441, %v3658
    %v3682 = vadd.f32 %v3442, %v3660
    %v3683 = vadd.f32 %v3443, %v3662
    %v3684 = vadd.f32 %v3444, %v3664
    %v3685 = vadd.f32 %v3445, %v3666
    %v3686 = vadd.f32 %v3446, %v3668
    %v3687 = vadd.f32 %v3447, %v3670
    %v3688 = vadd.f32 %v3448, %v3672
    %vm3689 = vcmp.gt.f32.partialorder %v3489, 0.0
    %vm3690 = vcmp.gt.f32.partialorder %v3490, 0.0
    %vm3691 = vcmp.gt.f32.partialorder %v3491, 0.0
    %vm3692 = vcmp.gt.f32.partialorder %v3492, 0.0
    %vm3693 = vcmp.gt.f32.partialorder %v3493, 0.0
    %vm3694 = vcmp.gt.f32.partialorder %v3494, 0.0
    %vm3695 = vcmp.gt.f32.partialorder %v3495, 0.0
    %vm3696 = vcmp.gt.f32.partialorder %v3496, 0.0
    %v3697 = vmul.f32 %v3489, 0.345
    %v3698 = vmul.f32 %v3490, 0.345
    %v3699 = vmul.f32 %v3491, 0.345
    %v3700 = vmul.f32 %v3492, 0.345
    %v3701 = vmul.f32 %v3493, 0.345
    %v3702 = vmul.f32 %v3494, 0.345
    %v3703 = vmul.f32 %v3495, 0.345
    %v3704 = vmul.f32 %v3496, 0.345
    %v3705 = vsel %vm3689, %v3489, %v3697
    %v3706 = vsel %vm3690, %v3490, %v3698
    %v3707 = vsel %vm3691, %v3491, %v3699
    %v3708 = vsel %vm3692, %v3492, %v3700
    %v3709 = vsel %vm3693, %v3493, %v3701
    %v3710 = vsel %vm3694, %v3494, %v3702
    %v3711 = vsel %vm3695, %v3495, %v3703
    %v3712 = vsel %vm3696, %v3496, %v3704
    %v3713 = vtanh.pop %v3705
    %v3714 = vtanh.pop %v3706
    %v3715 = vtanh.pop %v3707
    %v3716 = vtanh.pop %v3708
    %v3717 = vtanh.pop %v3709
    %v3718 = vtanh.pop %v3710
    %v3719 = vtanh.pop %v3711
    %v3720 = vtanh.pop %v3712
    %v3721 = vmul.f32 %v3713, %v3713
    %v3722 = vmul.f32 %v3714, %v3714
    %v3723 = vmul.f32 %v3715, %v3715
    %v3724 = vmul.f32 %v3716, %v3716
    %v3725 = vmul.f32 %v3717, %v3717
    %v3726 = vmul.f32 %v3718, %v3718
    %v3727 = vmul.f32 %v3719, %v3719
    %v3728 = vmul.f32 %v3720, %v3720
    %s3729 = scalar_lea.vmem %s2, 320
    %3730 = vst.msk [vmem:[%s3729] sm:$0xff] %vm1818, %v3721
    %3731 = vst.msk [vmem:[%s3729 + $0x8] sm:$0xff] %vm1818, %v3722
    %3732 = vst.msk [vmem:[%s3729 + $0x10] sm:$0xff] %vm1818, %v3723
    %3733 = vst.msk [vmem:[%s3729 + $0x18] sm:$0xff] %vm1818, %v3724
    %3734 = vst.msk [vmem:[%s3729 + $0x20] sm:$0xff] %vm1818, %v3725
    %3735 = vst.msk [vmem:[%s3729 + $0x28] sm:$0xff] %vm1818, %v3726
    %3736 = vst.msk [vmem:[%s3729 + $0x30] sm:$0xff] %vm1818, %v3727
    %3737 = vst.msk [vmem:[%s3729 + $0x38] sm:$0xf] %vm1826, %v3728
    %vm3738 = vcmp.gt.f32.partialorder %v3537, 0.0
    %vm3739 = vcmp.gt.f32.partialorder %v3538, 0.0
    %vm3740 = vcmp.gt.f32.partialorder %v3539, 0.0
    %vm3741 = vcmp.gt.f32.partialorder %v3540, 0.0
    %vm3742 = vcmp.gt.f32.partialorder %v3541, 0.0
    %vm3743 = vcmp.gt.f32.partialorder %v3542, 0.0
    %vm3744 = vcmp.gt.f32.partialorder %v3543, 0.0
    %vm3745 = vcmp.gt.f32.partialorder %v3544, 0.0
    %v3746 = vmul.f32 %v3537, 0.345
    %v3747 = vmul.f32 %v3538, 0.345
    %v3748 = vmul.f32 %v3539, 0.345
    %v3749 = vmul.f32 %v3540, 0.345
    %v3750 = vmul.f32 %v3541, 0.345
    %v3751 = vmul.f32 %v3542, 0.345
    %v3752 = vmul.f32 %v3543, 0.345
    %v3753 = vmul.f32 %v3544, 0.345
    %v3754 = vsel %vm3738, %v3537, %v3746
    %v3755 = vsel %vm3739, %v3538, %v3747
    %v3756 = vsel %vm3740, %v3539, %v3748
    %v3757 = vsel %vm3741, %v3540, %v3749
    %v3758 = vsel %vm3742, %v3541, %v3750
    %v3759 = vsel %vm3743, %v3542, %v3751
    %v3760 = vsel %vm3744, %v3543, %v3752
    %v3761 = vsel %vm3745, %v3544, %v3753
    %v3762 = vtanh.pop %v3754
    %v3763 = vtanh.pop %v3755
    %v3764 = vtanh.pop %v3756
    %v3765 = vtanh.pop %v3757
    %v3766 = vtanh.pop %v3758
    %v3767 = vtanh.pop %v3759
    %v3768 = vtanh.pop %v3760
    %v3769 = vtanh.pop %v3761
    %v3770 = vmul.f32 %v3762, %v3762
    %v3771 = vmul.f32 %v3763, %v3763
    %v3772 = vmul.f32 %v3764, %v3764
    %v3773 = vmul.f32 %v3765, %v3765
    %v3774 = vmul.f32 %v3766, %v3766
    %v3775 = vmul.f32 %v3767, %v3767
    %v3776 = vmul.f32 %v3768, %v3768
    %v3777 = vmul.f32 %v3769, %v3769
    %s3778 = scalar_lea.vmem %s2, 384
    %3779 = vst.msk [vmem:[%s3778] sm:$0xff] %vm1818, %v3770
    %3780 = vst.msk [vmem:[%s3778 + $0x8] sm:$0xff] %vm1818, %v3771
    %3781 = vst.msk [vmem:[%s3778 + $0x10] sm:$0xff] %vm1818, %v3772
    %3782 = vst.msk [vmem:[%s3778 + $0x18] sm:$0xff] %vm1818, %v3773
    %3783 = vst.msk [vmem:[%s3778 + $0x20] sm:$0xff] %vm1818, %v3774
    %3784 = vst.msk [vmem:[%s3778 + $0x28] sm:$0xff] %vm1818, %v3775
    %3785 = vst.msk [vmem:[%s3778 + $0x30] sm:$0xff] %vm1818, %v3776
    %3786 = vst.msk [vmem:[%s3778 + $0x38] sm:$0xf] %vm1826, %v3777
    %vm3787 = vcmp.gt.f32.partialorder %v3585, 0.0
    %vm3788 = vcmp.gt.f32.partialorder %v3586, 0.0
    %vm3789 = vcmp.gt.f32.partialorder %v3587, 0.0
    %vm3790 = vcmp.gt.f32.partialorder %v3588, 0.0
    %vm3791 = vcmp.gt.f32.partialorder %v3589, 0.0
    %vm3792 = vcmp.gt.f32.partialorder %v3590, 0.0
    %vm3793 = vcmp.gt.f32.partialorder %v3591, 0.0
    %vm3794 = vcmp.gt.f32.partialorder %v3592, 0.0
    %v3795 = vmul.f32 %v3585, 0.345
    %v3796 = vmul.f32 %v3586, 0.345
    %v3797 = vmul.f32 %v3587, 0.345
    %v3798 = vmul.f32 %v3588, 0.345
    %v3799 = vmul.f32 %v3589, 0.345
    %v3800 = vmul.f32 %v3590, 0.345
    %v3801 = vmul.f32 %v3591, 0.345
    %v3802 = vmul.f32 %v3592, 0.345
    %v3803 = vsel %vm3787, %v3585, %v3795
    %v3804 = vsel %vm3788, %v3586, %v3796
    %v3805 = vsel %vm3789, %v3587, %v3797
    %v3806 = vsel %vm3790, %v3588, %v3798
    %v3807 = vsel %vm3791, %v3589, %v3799
    %v3808 = vsel %vm3792, %v3590, %v3800
    %v3809 = vsel %vm3793, %v3591, %v3801
    %v3810 = vsel %vm3794, %v3592, %v3802
    %v3811 = vtanh.pop %v3803
    %v3812 = vtanh.pop %v3804
    %v3813 = vtanh.pop %v3805
    %v3814 = vtanh.pop %v3806
    %v3815 = vtanh.pop %v3807
    %v3816 = vtanh.pop %v3808
    %v3817 = vtanh.pop %v3809
    %v3818 = vtanh.pop %v3810
    %v3819 = vmul.f32 %v3811, %v3811
    %v3820 = vmul.f32 %v3812, %v3812
    %v3821 = vmul.f32 %v3813, %v3813
    %v3822 = vmul.f32 %v3814, %v3814
    %v3823 = vmul.f32 %v3815, %v3815
    %v3824 = vmul.f32 %v3816, %v3816
    %v3825 = vmul.f32 %v3817, %v3817
    %v3826 = vmul.f32 %v3818, %v3818
    %s3827 = scalar_lea.vmem %s2, 448
    %3828 = vst.msk [vmem:[%s3827] sm:$0xff] %vm1818, %v3819
    %3829 = vst.msk [vmem:[%s3827 + $0x8] sm:$0xff] %vm1818, %v3820
    %3830 = vst.msk [vmem:[%s3827 + $0x10] sm:$0xff] %vm1818, %v3821
    %3831 = vst.msk [vmem:[%s3827 + $0x18] sm:$0xff] %vm1818, %v3822
    %3832 = vst.msk [vmem:[%s3827 + $0x20] sm:$0xff] %vm1818, %v3823
    %3833 = vst.msk [vmem:[%s3827 + $0x28] sm:$0xff] %vm1818, %v3824
    %3834 = vst.msk [vmem:[%s3827 + $0x30] sm:$0xff] %vm1818, %v3825
    %3835 = vst.msk [vmem:[%s3827 + $0x38] sm:$0xf] %vm1826, %v3826
    %vm3836 = vcmp.gt.f32.partialorder %v3633, 0.0
    %vm3837 = vcmp.gt.f32.partialorder %v3634, 0.0
    %vm3838 = vcmp.gt.f32.partialorder %v3635, 0.0
    %vm3839 = vcmp.gt.f32.partialorder %v3636, 0.0
    %vm3840 = vcmp.gt.f32.partialorder %v3637, 0.0
    %vm3841 = vcmp.gt.f32.partialorder %v3638, 0.0
    %vm3842 = vcmp.gt.f32.partialorder %v3639, 0.0
    %vm3843 = vcmp.gt.f32.partialorder %v3640, 0.0
    %v3844 = vmul.f32 %v3633, 0.345
    %v3845 = vmul.f32 %v3634, 0.345
    %v3846 = vmul.f32 %v3635, 0.345
    %v3847 = vmul.f32 %v3636, 0.345
    %v3848 = vmul.f32 %v3637, 0.345
    %v3849 = vmul.f32 %v3638, 0.345
    %v3850 = vmul.f32 %v3639, 0.345
    %v3851 = vmul.f32 %v3640, 0.345
    %v3852 = vsel %vm3836, %v3633, %v3844
    %v3853 = vsel %vm3837, %v3634, %v3845
    %v3854 = vsel %vm3838, %v3635, %v3846
    %v3855 = vsel %vm3839, %v3636, %v3847
    %v3856 = vsel %vm3840, %v3637, %v3848
    %v3857 = vsel %vm3841, %v3638, %v3849
    %v3858 = vsel %vm3842, %v3639, %v3850
    %v3859 = vsel %vm3843, %v3640, %v3851
    %v3860 = vtanh.pop %v3852
    %v3861 = vtanh.pop %v3853
    %v3862 = vtanh.pop %v3854
    %v3863 = vtanh.pop %v3855
    %v3864 = vtanh.pop %v3856
    %v3865 = vtanh.pop %v3857
    %v3866 = vtanh.pop %v3858
    %v3867 = vtanh.pop %v3859
    %v3868 = vmul.f32 %v3860, %v3860
    %v3869 = vmul.f32 %v3861, %v3861
    %v3870 = vmul.f32 %v3862, %v3862
    %v3871 = vmul.f32 %v3863, %v3863
    %v3872 = vmul.f32 %v3864, %v3864
    %v3873 = vmul.f32 %v3865, %v3865
    %v3874 = vmul.f32 %v3866, %v3866
    %v3875 = vmul.f32 %v3867, %v3867
    %s3876 = scalar_lea.vmem %s2, 512
    %3877 = vst.msk [vmem:[%s3876] sm:$0xff] %vm1818, %v3868
    %3878 = vst.msk [vmem:[%s3876 + $0x8] sm:$0xff] %vm1818, %v3869
    %3879 = vst.msk [vmem:[%s3876 + $0x10] sm:$0xff] %vm1818, %v3870
    %3880 = vst.msk [vmem:[%s3876 + $0x18] sm:$0xff] %vm1818, %v3871
    %3881 = vst.msk [vmem:[%s3876 + $0x20] sm:$0xff] %vm1818, %v3872
    %3882 = vst.msk [vmem:[%s3876 + $0x28] sm:$0xff] %vm1818, %v3873
    %3883 = vst.msk [vmem:[%s3876 + $0x30] sm:$0xff] %vm1818, %v3874
    %3884 = vst.msk [vmem:[%s3876 + $0x38] sm:$0xf] %vm1826, %v3875
    %vm3885 = vcmp.gt.f32.partialorder %v3681, 0.0
    %vm3886 = vcmp.gt.f32.partialorder %v3682, 0.0
    %vm3887 = vcmp.gt.f32.partialorder %v3683, 0.0
    %vm3888 = vcmp.gt.f32.partialorder %v3684, 0.0
    %vm3889 = vcmp.gt.f32.partialorder %v3685, 0.0
    %vm3890 = vcmp.gt.f32.partialorder %v3686, 0.0
    %vm3891 = vcmp.gt.f32.partialorder %v3687, 0.0
    %vm3892 = vcmp.gt.f32.partialorder %v3688, 0.0
    %v3893 = vmul.f32 %v3681, 0.345
    %v3894 = vmul.f32 %v3682, 0.345
    %v3895 = vmul.f32 %v3683, 0.345
    %v3896 = vmul.f32 %v3684, 0.345
    %v3897 = vmul.f32 %v3685, 0.345
    %v3898 = vmul.f32 %v3686, 0.345
    %v3899 = vmul.f32 %v3687, 0.345
    %v3900 = vmul.f32 %v3688, 0.345
    %v3901 = vsel %vm3885, %v3681, %v3893
    %v3902 = vsel %vm3886, %v3682, %v3894
    %v3903 = vsel %vm3887, %v3683, %v3895
    %v3904 = vsel %vm3888, %v3684, %v3896
    %v3905 = vsel %vm3889, %v3685, %v3897
    %v3906 = vsel %vm3890, %v3686, %v3898
    %v3907 = vsel %vm3891, %v3687, %v3899
    %v3908 = vsel %vm3892, %v3688, %v3900
    %v3909 = vtanh.pop %v3901
    %v3910 = vtanh.pop %v3902
    %v3911 = vtanh.pop %v3903
    %v3912 = vtanh.pop %v3904
    %v3913 = vtanh.pop %v3905
    %v3914 = vtanh.pop %v3906
    %v3915 = vtanh.pop %v3907
    %v3916 = vtanh.pop %v3908
    %v3917 = vmul.f32 %v3909, %v3909
    %v3918 = vmul.f32 %v3910, %v3910
    %v3919 = vmul.f32 %v3911, %v3911
    %v3920 = vmul.f32 %v3912, %v3912
    %v3921 = vmul.f32 %v3913, %v3913
    %v3922 = vmul.f32 %v3914, %v3914
    %v3923 = vmul.f32 %v3915, %v3915
    %v3924 = vmul.f32 %v3916, %v3916
    %s3925 = scalar_lea.vmem %s2, 576
    %3926 = vst.msk [vmem:[%s3925] sm:$0xff] %vm1818, %v3917
    %3927 = vst.msk [vmem:[%s3925 + $0x8] sm:$0xff] %vm1818, %v3918
    %3928 = vst.msk [vmem:[%s3925 + $0x10] sm:$0xff] %vm1818, %v3919
    %3929 = vst.msk [vmem:[%s3925 + $0x18] sm:$0xff] %vm1818, %v3920
    %3930 = vst.msk [vmem:[%s3925 + $0x20] sm:$0xff] %vm1818, %v3921
    %3931 = vst.msk [vmem:[%s3925 + $0x28] sm:$0xff] %vm1818, %v3922
    %3932 = vst.msk [vmem:[%s3925 + $0x30] sm:$0xff] %vm1818, %v3923
    %3933 = vst.msk [vmem:[%s3925 + $0x38] sm:$0xf] %vm1826, %v3924
    %s3934 = scalar_lea.vmem %s1, 144
    %v3935 = vld [vmem:[%s3934] sm:$0xff]
    %v3936 = vld [vmem:[%s3934 + $0x8] sm:$0xff]
    %v3937 = vld [vmem:[%s3934 + $0x10] sm:$0xff]
    %v3938 = vld [vmem:[%s3934 + $0x18] sm:$0xff]
    %v3939 = vld [vmem:[%s3934 + $0x20] sm:$0xff]
    %v3940 = vld [vmem:[%s3934 + $0x28] sm:$0xff]
    %v3941 = vld [vmem:[%s3934 + $0x30] sm:$0xff]
    %v3942 = vld [vmem:[%s3934 + $0x38] sm:$0xf]
    %v3943 = vmul.f32 %v3935, %v77
    %v3944 = vmul.f32 %v3936, %v77
    %v3945 = vmul.f32 %v3937, %v77
    %v3946 = vmul.f32 %v3938, %v77
    %v3947 = vmul.f32 %v3939, %v77
    %v3948 = vmul.f32 %v3940, %v77
    %v3949 = vmul.f32 %v3941, %v77
    %v3950 = vmul.f32 %v3942, %v77
    %v3951 = vmul.f32 %v3935, %v86
    %v3952 = vmul.f32 %v3936, %v86
    %v3953 = vmul.f32 %v3937, %v86
    %v3954 = vmul.f32 %v3938, %v86
    %v3955 = vmul.f32 %v3939, %v86
    %v3956 = vmul.f32 %v3940, %v86
    %v3957 = vmul.f32 %v3941, %v86
    %v3958 = vmul.f32 %v3942, %v86
    %v3959 = vmul.f32 %v3935, %v95
    %v3960 = vmul.f32 %v3936, %v95
    %v3961 = vmul.f32 %v3937, %v95
    %v3962 = vmul.f32 %v3938, %v95
    %v3963 = vmul.f32 %v3939, %v95
    %v3964 = vmul.f32 %v3940, %v95
    %v3965 = vmul.f32 %v3941, %v95
    %v3966 = vmul.f32 %v3942, %v95
    %v3967 = vmul.f32 %v3935, %v104
    %v3968 = vmul.f32 %v3936, %v104
    %v3969 = vmul.f32 %v3937, %v104
    %v3970 = vmul.f32 %v3938, %v104
    %v3971 = vmul.f32 %v3939, %v104
    %v3972 = vmul.f32 %v3940, %v104
    %v3973 = vmul.f32 %v3941, %v104
    %v3974 = vmul.f32 %v3942, %v104
    %v3975 = vmul.f32 %v3935, %v113
    %v3976 = vmul.f32 %v3936, %v113
    %v3977 = vmul.f32 %v3937, %v113
    %v3978 = vmul.f32 %v3938, %v113
    %v3979 = vmul.f32 %v3939, %v113
    %v3980 = vmul.f32 %v3940, %v113
    %v3981 = vmul.f32 %v3941, %v113
    %v3982 = vmul.f32 %v3942, %v113
    %v3983 = vmul.f32 %v3935, %v122
    %v3984 = vmul.f32 %v3936, %v122
    %v3985 = vmul.f32 %v3937, %v122
    %v3986 = vmul.f32 %v3938, %v122
    %v3987 = vmul.f32 %v3939, %v122
    %v3988 = vmul.f32 %v3940, %v122
    %v3989 = vmul.f32 %v3941, %v122
    %v3990 = vmul.f32 %v3942, %v122
    %3999 = vrot.lane.b32.xlu0 %v3983, 126
    %v4000 = vpop.permute.xlu0 %3999
    %4001 = vrot.lane.b32.xlu0 %v3984, 126
    %v4002 = vpop.permute.xlu0 %4001
    %4003 = vrot.lane.b32.xlu0 %v3985, 126
    %v4004 = vpop.permute.xlu0 %4003
    %4005 = vrot.lane.b32.xlu0 %v3986, 126
    %v4006 = vpop.permute.xlu0 %4005
    %4007 = vrot.lane.b32.xlu0 %v3987, 126
    %v4008 = vpop.permute.xlu0 %4007
    %4009 = vrot.lane.b32.xlu0 %v3988, 126
    %v4010 = vpop.permute.xlu0 %4009
    %4011 = vrot.lane.b32.xlu0 %v3989, 126
    %v4012 = vpop.permute.xlu0 %4011
    %4013 = vrot.lane.b32.xlu0 %v3990, 126
    %v4014 = vpop.permute.xlu0 %4013
    %v4023 = vadd.f32 %v3943, %v4000
    %v4024 = vadd.f32 %v3944, %v4002
    %v4025 = vadd.f32 %v3945, %v4004
    %v4026 = vadd.f32 %v3946, %v4006
    %v4027 = vadd.f32 %v3947, %v4008
    %v4028 = vadd.f32 %v3948, %v4010
    %v4029 = vadd.f32 %v3949, %v4012
    %v4030 = vadd.f32 %v3950, %v4014
    %v4031 = vmul.f32 %v3935, %v171
    %v4032 = vmul.f32 %v3936, %v171
    %v4033 = vmul.f32 %v3937, %v171
    %v4034 = vmul.f32 %v3938, %v171
    %v4035 = vmul.f32 %v3939, %v171
    %v4036 = vmul.f32 %v3940, %v171
    %v4037 = vmul.f32 %v3941, %v171
    %v4038 = vmul.f32 %v3942, %v171
    %4047 = vrot.lane.b32.xlu0 %v4031, 126
    %v4048 = vpop.permute.xlu0 %4047
    %4049 = vrot.lane.b32.xlu0 %v4032, 126
    %v4050 = vpop.permute.xlu0 %4049
    %4051 = vrot.lane.b32.xlu0 %v4033, 126
    %v4052 = vpop.permute.xlu0 %4051
    %4053 = vrot.lane.b32.xlu0 %v4034, 126
    %v4054 = vpop.permute.xlu0 %4053
    %4055 = vrot.lane.b32.xlu0 %v4035, 126
    %v4056 = vpop.permute.xlu0 %4055
    %4057 = vrot.lane.b32.xlu0 %v4036, 126
    %v4058 = vpop.permute.xlu0 %4057
    %4059 = vrot.lane.b32.xlu0 %v4037, 126
    %v4060 = vpop.permute.xlu0 %4059
    %4061 = vrot.lane.b32.xlu0 %v4038, 126
    %v4062 = vpop.permute.xlu0 %4061
    %v4071 = vadd.f32 %v3951, %v4048
    %v4072 = vadd.f32 %v3952, %v4050
    %v4073 = vadd.f32 %v3953, %v4052
    %v4074 = vadd.f32 %v3954, %v4054
    %v4075 = vadd.f32 %v3955, %v4056
    %v4076 = vadd.f32 %v3956, %v4058
    %v4077 = vadd.f32 %v3957, %v4060
    %v4078 = vadd.f32 %v3958, %v4062
    %v4079 = vmul.f32 %v3935, %v220
    %v4080 = vmul.f32 %v3936, %v220
    %v4081 = vmul.f32 %v3937, %v220
    %v4082 = vmul.f32 %v3938, %v220
    %v4083 = vmul.f32 %v3939, %v220
    %v4084 = vmul.f32 %v3940, %v220
    %v4085 = vmul.f32 %v3941, %v220
    %v4086 = vmul.f32 %v3942, %v220
    %4095 = vrot.lane.b32.xlu0 %v4079, 126
    %v4096 = vpop.permute.xlu0 %4095
    %4097 = vrot.lane.b32.xlu0 %v4080, 126
    %v4098 = vpop.permute.xlu0 %4097
    %4099 = vrot.lane.b32.xlu0 %v4081, 126
    %v4100 = vpop.permute.xlu0 %4099
    %4101 = vrot.lane.b32.xlu0 %v4082, 126
    %v4102 = vpop.permute.xlu0 %4101
    %4103 = vrot.lane.b32.xlu0 %v4083, 126
    %v4104 = vpop.permute.xlu0 %4103
    %4105 = vrot.lane.b32.xlu0 %v4084, 126
    %v4106 = vpop.permute.xlu0 %4105
    %4107 = vrot.lane.b32.xlu0 %v4085, 126
    %v4108 = vpop.permute.xlu0 %4107
    %4109 = vrot.lane.b32.xlu0 %v4086, 126
    %v4110 = vpop.permute.xlu0 %4109
    %v4119 = vadd.f32 %v3959, %v4096
    %v4120 = vadd.f32 %v3960, %v4098
    %v4121 = vadd.f32 %v3961, %v4100
    %v4122 = vadd.f32 %v3962, %v4102
    %v4123 = vadd.f32 %v3963, %v4104
    %v4124 = vadd.f32 %v3964, %v4106
    %v4125 = vadd.f32 %v3965, %v4108
    %v4126 = vadd.f32 %v3966, %v4110
    %v4127 = vmul.f32 %v3935, %v269
    %v4128 = vmul.f32 %v3936, %v269
    %v4129 = vmul.f32 %v3937, %v269
    %v4130 = vmul.f32 %v3938, %v269
    %v4131 = vmul.f32 %v3939, %v269
    %v4132 = vmul.f32 %v3940, %v269
    %v4133 = vmul.f32 %v3941, %v269
    %v4134 = vmul.f32 %v3942, %v269
    %4143 = vrot.lane.b32.xlu0 %v4127, 126
    %v4144 = vpop.permute.xlu0 %4143
    %4145 = vrot.lane.b32.xlu0 %v4128, 126
    %v4146 = vpop.permute.xlu0 %4145
    %4147 = vrot.lane.b32.xlu0 %v4129, 126
    %v4148 = vpop.permute.xlu0 %4147
    %4149 = vrot.lane.b32.xlu0 %v4130, 126
    %v4150 = vpop.permute.xlu0 %4149
    %4151 = vrot.lane.b32.xlu0 %v4131, 126
    %v4152 = vpop.permute.xlu0 %4151
    %4153 = vrot.lane.b32.xlu0 %v4132, 126
    %v4154 = vpop.permute.xlu0 %4153
    %4155 = vrot.lane.b32.xlu0 %v4133, 126
    %v4156 = vpop.permute.xlu0 %4155
    %4157 = vrot.lane.b32.xlu0 %v4134, 126
    %v4158 = vpop.permute.xlu0 %4157
    %v4167 = vadd.f32 %v3967, %v4144
    %v4168 = vadd.f32 %v3968, %v4146
    %v4169 = vadd.f32 %v3969, %v4148
    %v4170 = vadd.f32 %v3970, %v4150
    %v4171 = vadd.f32 %v3971, %v4152
    %v4172 = vadd.f32 %v3972, %v4154
    %v4173 = vadd.f32 %v3973, %v4156
    %v4174 = vadd.f32 %v3974, %v4158
    %v4175 = vmul.f32 %v3935, %v318
    %v4176 = vmul.f32 %v3936, %v318
    %v4177 = vmul.f32 %v3937, %v318
    %v4178 = vmul.f32 %v3938, %v318
    %v4179 = vmul.f32 %v3939, %v318
    %v4180 = vmul.f32 %v3940, %v318
    %v4181 = vmul.f32 %v3941, %v318
    %v4182 = vmul.f32 %v3942, %v318
    %4191 = vrot.lane.b32.xlu0 %v4175, 126
    %v4192 = vpop.permute.xlu0 %4191
    %4193 = vrot.lane.b32.xlu0 %v4176, 126
    %v4194 = vpop.permute.xlu0 %4193
    %4195 = vrot.lane.b32.xlu0 %v4177, 126
    %v4196 = vpop.permute.xlu0 %4195
    %4197 = vrot.lane.b32.xlu0 %v4178, 126
    %v4198 = vpop.permute.xlu0 %4197
    %4199 = vrot.lane.b32.xlu0 %v4179, 126
    %v4200 = vpop.permute.xlu0 %4199
    %4201 = vrot.lane.b32.xlu0 %v4180, 126
    %v4202 = vpop.permute.xlu0 %4201
    %4203 = vrot.lane.b32.xlu0 %v4181, 126
    %v4204 = vpop.permute.xlu0 %4203
    %4205 = vrot.lane.b32.xlu0 %v4182, 126
    %v4206 = vpop.permute.xlu0 %4205
    %v4215 = vadd.f32 %v3975, %v4192
    %v4216 = vadd.f32 %v3976, %v4194
    %v4217 = vadd.f32 %v3977, %v4196
    %v4218 = vadd.f32 %v3978, %v4198
    %v4219 = vadd.f32 %v3979, %v4200
    %v4220 = vadd.f32 %v3980, %v4202
    %v4221 = vadd.f32 %v3981, %v4204
    %v4222 = vadd.f32 %v3982, %v4206
    %v4223 = vmul.f32 %v3935, %v367
    %v4224 = vmul.f32 %v3936, %v367
    %v4225 = vmul.f32 %v3937, %v367
    %v4226 = vmul.f32 %v3938, %v367
    %v4227 = vmul.f32 %v3939, %v367
    %v4228 = vmul.f32 %v3940, %v367
    %v4229 = vmul.f32 %v3941, %v367
    %v4230 = vmul.f32 %v3942, %v367
    %4239 = vrot.lane.b32.xlu0 %v4223, 124
    %v4240 = vpop.permute.xlu0 %4239
    %4241 = vrot.lane.b32.xlu0 %v4224, 124
    %v4242 = vpop.permute.xlu0 %4241
    %4243 = vrot.lane.b32.xlu0 %v4225, 124
    %v4244 = vpop.permute.xlu0 %4243
    %4245 = vrot.lane.b32.xlu0 %v4226, 124
    %v4246 = vpop.permute.xlu0 %4245
    %4247 = vrot.lane.b32.xlu0 %v4227, 124
    %v4248 = vpop.permute.xlu0 %4247
    %4249 = vrot.lane.b32.xlu0 %v4228, 124
    %v4250 = vpop.permute.xlu0 %4249
    %4251 = vrot.lane.b32.xlu0 %v4229, 124
    %v4252 = vpop.permute.xlu0 %4251
    %4253 = vrot.lane.b32.xlu0 %v4230, 124
    %v4254 = vpop.permute.xlu0 %4253
    %v4263 = vadd.f32 %v4023, %v4240
    %v4264 = vadd.f32 %v4024, %v4242
    %v4265 = vadd.f32 %v4025, %v4244
    %v4266 = vadd.f32 %v4026, %v4246
    %v4267 = vadd.f32 %v4027, %v4248
    %v4268 = vadd.f32 %v4028, %v4250
    %v4269 = vadd.f32 %v4029, %v4252
    %v4270 = vadd.f32 %v4030, %v4254
    %v4271 = vmul.f32 %v3935, %v416
    %v4272 = vmul.f32 %v3936, %v416
    %v4273 = vmul.f32 %v3937, %v416
    %v4274 = vmul.f32 %v3938, %v416
    %v4275 = vmul.f32 %v3939, %v416
    %v4276 = vmul.f32 %v3940, %v416
    %v4277 = vmul.f32 %v3941, %v416
    %v4278 = vmul.f32 %v3942, %v416
    %4287 = vrot.lane.b32.xlu0 %v4271, 124
    %v4288 = vpop.permute.xlu0 %4287
    %4289 = vrot.lane.b32.xlu0 %v4272, 124
    %v4290 = vpop.permute.xlu0 %4289
    %4291 = vrot.lane.b32.xlu0 %v4273, 124
    %v4292 = vpop.permute.xlu0 %4291
    %4293 = vrot.lane.b32.xlu0 %v4274, 124
    %v4294 = vpop.permute.xlu0 %4293
    %4295 = vrot.lane.b32.xlu0 %v4275, 124
    %v4296 = vpop.permute.xlu0 %4295
    %4297 = vrot.lane.b32.xlu0 %v4276, 124
    %v4298 = vpop.permute.xlu0 %4297
    %4299 = vrot.lane.b32.xlu0 %v4277, 124
    %v4300 = vpop.permute.xlu0 %4299
    %4301 = vrot.lane.b32.xlu0 %v4278, 124
    %v4302 = vpop.permute.xlu0 %4301
    %v4311 = vadd.f32 %v4071, %v4288
    %v4312 = vadd.f32 %v4072, %v4290
    %v4313 = vadd.f32 %v4073, %v4292
    %v4314 = vadd.f32 %v4074, %v4294
    %v4315 = vadd.f32 %v4075, %v4296
    %v4316 = vadd.f32 %v4076, %v4298
    %v4317 = vadd.f32 %v4077, %v4300
    %v4318 = vadd.f32 %v4078, %v4302
    %v4319 = vmul.f32 %v3935, %v465
    %v4320 = vmul.f32 %v3936, %v465
    %v4321 = vmul.f32 %v3937, %v465
    %v4322 = vmul.f32 %v3938, %v465
    %v4323 = vmul.f32 %v3939, %v465
    %v4324 = vmul.f32 %v3940, %v465
    %v4325 = vmul.f32 %v3941, %v465
    %v4326 = vmul.f32 %v3942, %v465
    %4335 = vrot.lane.b32.xlu0 %v4319, 124
    %v4336 = vpop.permute.xlu0 %4335
    %4337 = vrot.lane.b32.xlu0 %v4320, 124
    %v4338 = vpop.permute.xlu0 %4337
    %4339 = vrot.lane.b32.xlu0 %v4321, 124
    %v4340 = vpop.permute.xlu0 %4339
    %4341 = vrot.lane.b32.xlu0 %v4322, 124
    %v4342 = vpop.permute.xlu0 %4341
    %4343 = vrot.lane.b32.xlu0 %v4323, 124
    %v4344 = vpop.permute.xlu0 %4343
    %4345 = vrot.lane.b32.xlu0 %v4324, 124
    %v4346 = vpop.permute.xlu0 %4345
    %4347 = vrot.lane.b32.xlu0 %v4325, 124
    %v4348 = vpop.permute.xlu0 %4347
    %4349 = vrot.lane.b32.xlu0 %v4326, 124
    %v4350 = vpop.permute.xlu0 %4349
    %v4359 = vadd.f32 %v4119, %v4336
    %v4360 = vadd.f32 %v4120, %v4338
    %v4361 = vadd.f32 %v4121, %v4340
    %v4362 = vadd.f32 %v4122, %v4342
    %v4363 = vadd.f32 %v4123, %v4344
    %v4364 = vadd.f32 %v4124, %v4346
    %v4365 = vadd.f32 %v4125, %v4348
    %v4366 = vadd.f32 %v4126, %v4350
    %v4367 = vmul.f32 %v3935, %v514
    %v4368 = vmul.f32 %v3936, %v514
    %v4369 = vmul.f32 %v3937, %v514
    %v4370 = vmul.f32 %v3938, %v514
    %v4371 = vmul.f32 %v3939, %v514
    %v4372 = vmul.f32 %v3940, %v514
    %v4373 = vmul.f32 %v3941, %v514
    %v4374 = vmul.f32 %v3942, %v514
    %4383 = vrot.lane.b32.xlu0 %v4367, 124
    %v4384 = vpop.permute.xlu0 %4383
    %4385 = vrot.lane.b32.xlu0 %v4368, 124
    %v4386 = vpop.permute.xlu0 %4385
    %4387 = vrot.lane.b32.xlu0 %v4369, 124
    %v4388 = vpop.permute.xlu0 %4387
    %4389 = vrot.lane.b32.xlu0 %v4370, 124
    %v4390 = vpop.permute.xlu0 %4389
    %4391 = vrot.lane.b32.xlu0 %v4371, 124
    %v4392 = vpop.permute.xlu0 %4391
    %4393 = vrot.lane.b32.xlu0 %v4372, 124
    %v4394 = vpop.permute.xlu0 %4393
    %4395 = vrot.lane.b32.xlu0 %v4373, 124
    %v4396 = vpop.permute.xlu0 %4395
    %4397 = vrot.lane.b32.xlu0 %v4374, 124
    %v4398 = vpop.permute.xlu0 %4397
    %v4407 = vadd.f32 %v4167, %v4384
    %v4408 = vadd.f32 %v4168, %v4386
    %v4409 = vadd.f32 %v4169, %v4388
    %v4410 = vadd.f32 %v4170, %v4390
    %v4411 = vadd.f32 %v4171, %v4392
    %v4412 = vadd.f32 %v4172, %v4394
    %v4413 = vadd.f32 %v4173, %v4396
    %v4414 = vadd.f32 %v4174, %v4398
    %v4415 = vmul.f32 %v3935, %v563
    %v4416 = vmul.f32 %v3936, %v563
    %v4417 = vmul.f32 %v3937, %v563
    %v4418 = vmul.f32 %v3938, %v563
    %v4419 = vmul.f32 %v3939, %v563
    %v4420 = vmul.f32 %v3940, %v563
    %v4421 = vmul.f32 %v3941, %v563
    %v4422 = vmul.f32 %v3942, %v563
    %4431 = vrot.lane.b32.xlu0 %v4415, 124
    %v4432 = vpop.permute.xlu0 %4431
    %4433 = vrot.lane.b32.xlu0 %v4416, 124
    %v4434 = vpop.permute.xlu0 %4433
    %4435 = vrot.lane.b32.xlu0 %v4417, 124
    %v4436 = vpop.permute.xlu0 %4435
    %4437 = vrot.lane.b32.xlu0 %v4418, 124
    %v4438 = vpop.permute.xlu0 %4437
    %4439 = vrot.lane.b32.xlu0 %v4419, 124
    %v4440 = vpop.permute.xlu0 %4439
    %4441 = vrot.lane.b32.xlu0 %v4420, 124
    %v4442 = vpop.permute.xlu0 %4441
    %4443 = vrot.lane.b32.xlu0 %v4421, 124
    %v4444 = vpop.permute.xlu0 %4443
    %4445 = vrot.lane.b32.xlu0 %v4422, 124
    %v4446 = vpop.permute.xlu0 %4445
    %v4455 = vadd.f32 %v4215, %v4432
    %v4456 = vadd.f32 %v4216, %v4434
    %v4457 = vadd.f32 %v4217, %v4436
    %v4458 = vadd.f32 %v4218, %v4438
    %v4459 = vadd.f32 %v4219, %v4440
    %v4460 = vadd.f32 %v4220, %v4442
    %v4461 = vadd.f32 %v4221, %v4444
    %v4462 = vadd.f32 %v4222, %v4446
    %v4463 = vld [vmem:[%s3934 + $0x3] sm:$0xff]
    %v4464 = vld [vmem:[%s3934 + $0xb] sm:$0xff]
    %v4465 = vld [vmem:[%s3934 + $0x13] sm:$0xff]
    %v4466 = vld [vmem:[%s3934 + $0x1b] sm:$0xff]
    %v4467 = vld [vmem:[%s3934 + $0x23] sm:$0xff]
    %v4468 = vld [vmem:[%s3934 + $0x2b] sm:$0xff]
    %v4469 = vld [vmem:[%s3934 + $0x33] sm:$0xff]
    %v4470 = vld [vmem:[%s3934 + $0x3b] sm:$0xf]
    %v4471 = vmul.f32 %v4463, %v620
    %v4472 = vmul.f32 %v4464, %v620
    %v4473 = vmul.f32 %v4465, %v620
    %v4474 = vmul.f32 %v4466, %v620
    %v4475 = vmul.f32 %v4467, %v620
    %v4476 = vmul.f32 %v4468, %v620
    %v4477 = vmul.f32 %v4469, %v620
    %v4478 = vmul.f32 %v4470, %v620
    %v4479 = vadd.f32 %v4263, %v4471
    %v4480 = vadd.f32 %v4264, %v4472
    %v4481 = vadd.f32 %v4265, %v4473
    %v4482 = vadd.f32 %v4266, %v4474
    %v4483 = vadd.f32 %v4267, %v4475
    %v4484 = vadd.f32 %v4268, %v4476
    %v4485 = vadd.f32 %v4269, %v4477
    %v4486 = vadd.f32 %v4270, %v4478
    %v4487 = vmul.f32 %v4463, %v637
    %v4488 = vmul.f32 %v4464, %v637
    %v4489 = vmul.f32 %v4465, %v637
    %v4490 = vmul.f32 %v4466, %v637
    %v4491 = vmul.f32 %v4467, %v637
    %v4492 = vmul.f32 %v4468, %v637
    %v4493 = vmul.f32 %v4469, %v637
    %v4494 = vmul.f32 %v4470, %v637
    %v4495 = vadd.f32 %v4311, %v4487
    %v4496 = vadd.f32 %v4312, %v4488
    %v4497 = vadd.f32 %v4313, %v4489
    %v4498 = vadd.f32 %v4314, %v4490
    %v4499 = vadd.f32 %v4315, %v4491
    %v4500 = vadd.f32 %v4316, %v4492
    %v4501 = vadd.f32 %v4317, %v4493
    %v4502 = vadd.f32 %v4318, %v4494
    %v4503 = vmul.f32 %v4463, %v654
    %v4504 = vmul.f32 %v4464, %v654
    %v4505 = vmul.f32 %v4465, %v654
    %v4506 = vmul.f32 %v4466, %v654
    %v4507 = vmul.f32 %v4467, %v654
    %v4508 = vmul.f32 %v4468, %v654
    %v4509 = vmul.f32 %v4469, %v654
    %v4510 = vmul.f32 %v4470, %v654
    %v4511 = vadd.f32 %v4359, %v4503
    %v4512 = vadd.f32 %v4360, %v4504
    %v4513 = vadd.f32 %v4361, %v4505
    %v4514 = vadd.f32 %v4362, %v4506
    %v4515 = vadd.f32 %v4363, %v4507
    %v4516 = vadd.f32 %v4364, %v4508
    %v4517 = vadd.f32 %v4365, %v4509
    %v4518 = vadd.f32 %v4366, %v4510
    %v4519 = vmul.f32 %v4463, %v671
    %v4520 = vmul.f32 %v4464, %v671
    %v4521 = vmul.f32 %v4465, %v671
    %v4522 = vmul.f32 %v4466, %v671
    %v4523 = vmul.f32 %v4467, %v671
    %v4524 = vmul.f32 %v4468, %v671
    %v4525 = vmul.f32 %v4469, %v671
    %v4526 = vmul.f32 %v4470, %v671
    %v4527 = vadd.f32 %v4407, %v4519
    %v4528 = vadd.f32 %v4408, %v4520
    %v4529 = vadd.f32 %v4409, %v4521
    %v4530 = vadd.f32 %v4410, %v4522
    %v4531 = vadd.f32 %v4411, %v4523
    %v4532 = vadd.f32 %v4412, %v4524
    %v4533 = vadd.f32 %v4413, %v4525
    %v4534 = vadd.f32 %v4414, %v4526
    %v4535 = vmul.f32 %v4463, %v688
    %v4536 = vmul.f32 %v4464, %v688
    %v4537 = vmul.f32 %v4465, %v688
    %v4538 = vmul.f32 %v4466, %v688
    %v4539 = vmul.f32 %v4467, %v688
    %v4540 = vmul.f32 %v4468, %v688
    %v4541 = vmul.f32 %v4469, %v688
    %v4542 = vmul.f32 %v4470, %v688
    %v4543 = vadd.f32 %v4455, %v4535
    %v4544 = vadd.f32 %v4456, %v4536
    %v4545 = vadd.f32 %v4457, %v4537
    %v4546 = vadd.f32 %v4458, %v4538
    %v4547 = vadd.f32 %v4459, %v4539
    %v4548 = vadd.f32 %v4460, %v4540
    %v4549 = vadd.f32 %v4461, %v4541
    %v4550 = vadd.f32 %v4462, %v4542
    %v4551 = vmul.f32 %v4463, %v705
    %v4552 = vmul.f32 %v4464, %v705
    %v4553 = vmul.f32 %v4465, %v705
    %v4554 = vmul.f32 %v4466, %v705
    %v4555 = vmul.f32 %v4467, %v705
    %v4556 = vmul.f32 %v4468, %v705
    %v4557 = vmul.f32 %v4469, %v705
    %v4558 = vmul.f32 %v4470, %v705
    %4567 = vrot.lane.b32.xlu0 %v4551, 126
    %v4568 = vpop.permute.xlu0 %4567
    %4569 = vrot.lane.b32.xlu0 %v4552, 126
    %v4570 = vpop.permute.xlu0 %4569
    %4571 = vrot.lane.b32.xlu0 %v4553, 126
    %v4572 = vpop.permute.xlu0 %4571
    %4573 = vrot.lane.b32.xlu0 %v4554, 126
    %v4574 = vpop.permute.xlu0 %4573
    %4575 = vrot.lane.b32.xlu0 %v4555, 126
    %v4576 = vpop.permute.xlu0 %4575
    %4577 = vrot.lane.b32.xlu0 %v4556, 126
    %v4578 = vpop.permute.xlu0 %4577
    %4579 = vrot.lane.b32.xlu0 %v4557, 126
    %v4580 = vpop.permute.xlu0 %4579
    %4581 = vrot.lane.b32.xlu0 %v4558, 126
    %v4582 = vpop.permute.xlu0 %4581
    %v4591 = vadd.f32 %v4479, %v4568
    %v4592 = vadd.f32 %v4480, %v4570
    %v4593 = vadd.f32 %v4481, %v4572
    %v4594 = vadd.f32 %v4482, %v4574
    %v4595 = vadd.f32 %v4483, %v4576
    %v4596 = vadd.f32 %v4484, %v4578
    %v4597 = vadd.f32 %v4485, %v4580
    %v4598 = vadd.f32 %v4486, %v4582
    %v4599 = vmul.f32 %v4463, %v754
    %v4600 = vmul.f32 %v4464, %v754
    %v4601 = vmul.f32 %v4465, %v754
    %v4602 = vmul.f32 %v4466, %v754
    %v4603 = vmul.f32 %v4467, %v754
    %v4604 = vmul.f32 %v4468, %v754
    %v4605 = vmul.f32 %v4469, %v754
    %v4606 = vmul.f32 %v4470, %v754
    %4615 = vrot.lane.b32.xlu0 %v4599, 126
    %v4616 = vpop.permute.xlu0 %4615
    %4617 = vrot.lane.b32.xlu0 %v4600, 126
    %v4618 = vpop.permute.xlu0 %4617
    %4619 = vrot.lane.b32.xlu0 %v4601, 126
    %v4620 = vpop.permute.xlu0 %4619
    %4621 = vrot.lane.b32.xlu0 %v4602, 126
    %v4622 = vpop.permute.xlu0 %4621
    %4623 = vrot.lane.b32.xlu0 %v4603, 126
    %v4624 = vpop.permute.xlu0 %4623
    %4625 = vrot.lane.b32.xlu0 %v4604, 126
    %v4626 = vpop.permute.xlu0 %4625
    %4627 = vrot.lane.b32.xlu0 %v4605, 126
    %v4628 = vpop.permute.xlu0 %4627
    %4629 = vrot.lane.b32.xlu0 %v4606, 126
    %v4630 = vpop.permute.xlu0 %4629
    %v4639 = vadd.f32 %v4495, %v4616
    %v4640 = vadd.f32 %v4496, %v4618
    %v4641 = vadd.f32 %v4497, %v4620
    %v4642 = vadd.f32 %v4498, %v4622
    %v4643 = vadd.f32 %v4499, %v4624
    %v4644 = vadd.f32 %v4500, %v4626
    %v4645 = vadd.f32 %v4501, %v4628
    %v4646 = vadd.f32 %v4502, %v4630
    %v4647 = vmul.f32 %v4463, %v803
    %v4648 = vmul.f32 %v4464, %v803
    %v4649 = vmul.f32 %v4465, %v803
    %v4650 = vmul.f32 %v4466, %v803
    %v4651 = vmul.f32 %v4467, %v803
    %v4652 = vmul.f32 %v4468, %v803
    %v4653 = vmul.f32 %v4469, %v803
    %v4654 = vmul.f32 %v4470, %v803
    %4663 = vrot.lane.b32.xlu0 %v4647, 126
    %v4664 = vpop.permute.xlu0 %4663
    %4665 = vrot.lane.b32.xlu0 %v4648, 126
    %v4666 = vpop.permute.xlu0 %4665
    %4667 = vrot.lane.b32.xlu0 %v4649, 126
    %v4668 = vpop.permute.xlu0 %4667
    %4669 = vrot.lane.b32.xlu0 %v4650, 126
    %v4670 = vpop.permute.xlu0 %4669
    %4671 = vrot.lane.b32.xlu0 %v4651, 126
    %v4672 = vpop.permute.xlu0 %4671
    %4673 = vrot.lane.b32.xlu0 %v4652, 126
    %v4674 = vpop.permute.xlu0 %4673
    %4675 = vrot.lane.b32.xlu0 %v4653, 126
    %v4676 = vpop.permute.xlu0 %4675
    %4677 = vrot.lane.b32.xlu0 %v4654, 126
    %v4678 = vpop.permute.xlu0 %4677
    %v4687 = vadd.f32 %v4511, %v4664
    %v4688 = vadd.f32 %v4512, %v4666
    %v4689 = vadd.f32 %v4513, %v4668
    %v4690 = vadd.f32 %v4514, %v4670
    %v4691 = vadd.f32 %v4515, %v4672
    %v4692 = vadd.f32 %v4516, %v4674
    %v4693 = vadd.f32 %v4517, %v4676
    %v4694 = vadd.f32 %v4518, %v4678
    %v4695 = vmul.f32 %v4463, %v852
    %v4696 = vmul.f32 %v4464, %v852
    %v4697 = vmul.f32 %v4465, %v852
    %v4698 = vmul.f32 %v4466, %v852
    %v4699 = vmul.f32 %v4467, %v852
    %v4700 = vmul.f32 %v4468, %v852
    %v4701 = vmul.f32 %v4469, %v852
    %v4702 = vmul.f32 %v4470, %v852
    %4711 = vrot.lane.b32.xlu0 %v4695, 126
    %v4712 = vpop.permute.xlu0 %4711
    %4713 = vrot.lane.b32.xlu0 %v4696, 126
    %v4714 = vpop.permute.xlu0 %4713
    %4715 = vrot.lane.b32.xlu0 %v4697, 126
    %v4716 = vpop.permute.xlu0 %4715
    %4717 = vrot.lane.b32.xlu0 %v4698, 126
    %v4718 = vpop.permute.xlu0 %4717
    %4719 = vrot.lane.b32.xlu0 %v4699, 126
    %v4720 = vpop.permute.xlu0 %4719
    %4721 = vrot.lane.b32.xlu0 %v4700, 126
    %v4722 = vpop.permute.xlu0 %4721
    %4723 = vrot.lane.b32.xlu0 %v4701, 126
    %v4724 = vpop.permute.xlu0 %4723
    %4725 = vrot.lane.b32.xlu0 %v4702, 126
    %v4726 = vpop.permute.xlu0 %4725
    %v4735 = vadd.f32 %v4527, %v4712
    %v4736 = vadd.f32 %v4528, %v4714
    %v4737 = vadd.f32 %v4529, %v4716
    %v4738 = vadd.f32 %v4530, %v4718
    %v4739 = vadd.f32 %v4531, %v4720
    %v4740 = vadd.f32 %v4532, %v4722
    %v4741 = vadd.f32 %v4533, %v4724
    %v4742 = vadd.f32 %v4534, %v4726
    %v4743 = vmul.f32 %v4463, %v901
    %v4744 = vmul.f32 %v4464, %v901
    %v4745 = vmul.f32 %v4465, %v901
    %v4746 = vmul.f32 %v4466, %v901
    %v4747 = vmul.f32 %v4467, %v901
    %v4748 = vmul.f32 %v4468, %v901
    %v4749 = vmul.f32 %v4469, %v901
    %v4750 = vmul.f32 %v4470, %v901
    %4759 = vrot.lane.b32.xlu0 %v4743, 126
    %v4760 = vpop.permute.xlu0 %4759
    %4761 = vrot.lane.b32.xlu0 %v4744, 126
    %v4762 = vpop.permute.xlu0 %4761
    %4763 = vrot.lane.b32.xlu0 %v4745, 126
    %v4764 = vpop.permute.xlu0 %4763
    %4765 = vrot.lane.b32.xlu0 %v4746, 126
    %v4766 = vpop.permute.xlu0 %4765
    %4767 = vrot.lane.b32.xlu0 %v4747, 126
    %v4768 = vpop.permute.xlu0 %4767
    %4769 = vrot.lane.b32.xlu0 %v4748, 126
    %v4770 = vpop.permute.xlu0 %4769
    %4771 = vrot.lane.b32.xlu0 %v4749, 126
    %v4772 = vpop.permute.xlu0 %4771
    %4773 = vrot.lane.b32.xlu0 %v4750, 126
    %v4774 = vpop.permute.xlu0 %4773
    %v4783 = vadd.f32 %v4543, %v4760
    %v4784 = vadd.f32 %v4544, %v4762
    %v4785 = vadd.f32 %v4545, %v4764
    %v4786 = vadd.f32 %v4546, %v4766
    %v4787 = vadd.f32 %v4547, %v4768
    %v4788 = vadd.f32 %v4548, %v4770
    %v4789 = vadd.f32 %v4549, %v4772
    %v4790 = vadd.f32 %v4550, %v4774
    %v4791 = vmul.f32 %v4463, %v950
    %v4792 = vmul.f32 %v4464, %v950
    %v4793 = vmul.f32 %v4465, %v950
    %v4794 = vmul.f32 %v4466, %v950
    %v4795 = vmul.f32 %v4467, %v950
    %v4796 = vmul.f32 %v4468, %v950
    %v4797 = vmul.f32 %v4469, %v950
    %v4798 = vmul.f32 %v4470, %v950
    %4807 = vrot.lane.b32.xlu0 %v4791, 124
    %v4808 = vpop.permute.xlu0 %4807
    %4809 = vrot.lane.b32.xlu0 %v4792, 124
    %v4810 = vpop.permute.xlu0 %4809
    %4811 = vrot.lane.b32.xlu0 %v4793, 124
    %v4812 = vpop.permute.xlu0 %4811
    %4813 = vrot.lane.b32.xlu0 %v4794, 124
    %v4814 = vpop.permute.xlu0 %4813
    %4815 = vrot.lane.b32.xlu0 %v4795, 124
    %v4816 = vpop.permute.xlu0 %4815
    %4817 = vrot.lane.b32.xlu0 %v4796, 124
    %v4818 = vpop.permute.xlu0 %4817
    %4819 = vrot.lane.b32.xlu0 %v4797, 124
    %v4820 = vpop.permute.xlu0 %4819
    %4821 = vrot.lane.b32.xlu0 %v4798, 124
    %v4822 = vpop.permute.xlu0 %4821
    %v4831 = vadd.f32 %v4591, %v4808
    %v4832 = vadd.f32 %v4592, %v4810
    %v4833 = vadd.f32 %v4593, %v4812
    %v4834 = vadd.f32 %v4594, %v4814
    %v4835 = vadd.f32 %v4595, %v4816
    %v4836 = vadd.f32 %v4596, %v4818
    %v4837 = vadd.f32 %v4597, %v4820
    %v4838 = vadd.f32 %v4598, %v4822
    %v4839 = vmul.f32 %v4463, %v999
    %v4840 = vmul.f32 %v4464, %v999
    %v4841 = vmul.f32 %v4465, %v999
    %v4842 = vmul.f32 %v4466, %v999
    %v4843 = vmul.f32 %v4467, %v999
    %v4844 = vmul.f32 %v4468, %v999
    %v4845 = vmul.f32 %v4469, %v999
    %v4846 = vmul.f32 %v4470, %v999
    %4855 = vrot.lane.b32.xlu0 %v4839, 124
    %v4856 = vpop.permute.xlu0 %4855
    %4857 = vrot.lane.b32.xlu0 %v4840, 124
    %v4858 = vpop.permute.xlu0 %4857
    %4859 = vrot.lane.b32.xlu0 %v4841, 124
    %v4860 = vpop.permute.xlu0 %4859
    %4861 = vrot.lane.b32.xlu0 %v4842, 124
    %v4862 = vpop.permute.xlu0 %4861
    %4863 = vrot.lane.b32.xlu0 %v4843, 124
    %v4864 = vpop.permute.xlu0 %4863
    %4865 = vrot.lane.b32.xlu0 %v4844, 124
    %v4866 = vpop.permute.xlu0 %4865
    %4867 = vrot.lane.b32.xlu0 %v4845, 124
    %v4868 = vpop.permute.xlu0 %4867
    %4869 = vrot.lane.b32.xlu0 %v4846, 124
    %v4870 = vpop.permute.xlu0 %4869
    %v4879 = vadd.f32 %v4639, %v4856
    %v4880 = vadd.f32 %v4640, %v4858
    %v4881 = vadd.f32 %v4641, %v4860
    %v4882 = vadd.f32 %v4642, %v4862
    %v4883 = vadd.f32 %v4643, %v4864
    %v4884 = vadd.f32 %v4644, %v4866
    %v4885 = vadd.f32 %v4645, %v4868
    %v4886 = vadd.f32 %v4646, %v4870
    %v4887 = vmul.f32 %v4463, %v1048
    %v4888 = vmul.f32 %v4464, %v1048
    %v4889 = vmul.f32 %v4465, %v1048
    %v4890 = vmul.f32 %v4466, %v1048
    %v4891 = vmul.f32 %v4467, %v1048
    %v4892 = vmul.f32 %v4468, %v1048
    %v4893 = vmul.f32 %v4469, %v1048
    %v4894 = vmul.f32 %v4470, %v1048
    %4903 = vrot.lane.b32.xlu0 %v4887, 124
    %v4904 = vpop.permute.xlu0 %4903
    %4905 = vrot.lane.b32.xlu0 %v4888, 124
    %v4906 = vpop.permute.xlu0 %4905
    %4907 = vrot.lane.b32.xlu0 %v4889, 124
    %v4908 = vpop.permute.xlu0 %4907
    %4909 = vrot.lane.b32.xlu0 %v4890, 124
    %v4910 = vpop.permute.xlu0 %4909
    %4911 = vrot.lane.b32.xlu0 %v4891, 124
    %v4912 = vpop.permute.xlu0 %4911
    %4913 = vrot.lane.b32.xlu0 %v4892, 124
    %v4914 = vpop.permute.xlu0 %4913
    %4915 = vrot.lane.b32.xlu0 %v4893, 124
    %v4916 = vpop.permute.xlu0 %4915
    %4917 = vrot.lane.b32.xlu0 %v4894, 124
    %v4918 = vpop.permute.xlu0 %4917
    %v4927 = vadd.f32 %v4687, %v4904
    %v4928 = vadd.f32 %v4688, %v4906
    %v4929 = vadd.f32 %v4689, %v4908
    %v4930 = vadd.f32 %v4690, %v4910
    %v4931 = vadd.f32 %v4691, %v4912
    %v4932 = vadd.f32 %v4692, %v4914
    %v4933 = vadd.f32 %v4693, %v4916
    %v4934 = vadd.f32 %v4694, %v4918
    %v4935 = vmul.f32 %v4463, %v1097
    %v4936 = vmul.f32 %v4464, %v1097
    %v4937 = vmul.f32 %v4465, %v1097
    %v4938 = vmul.f32 %v4466, %v1097
    %v4939 = vmul.f32 %v4467, %v1097
    %v4940 = vmul.f32 %v4468, %v1097
    %v4941 = vmul.f32 %v4469, %v1097
    %v4942 = vmul.f32 %v4470, %v1097
    %4951 = vrot.lane.b32.xlu0 %v4935, 124
    %v4952 = vpop.permute.xlu0 %4951
    %4953 = vrot.lane.b32.xlu0 %v4936, 124
    %v4954 = vpop.permute.xlu0 %4953
    %4955 = vrot.lane.b32.xlu0 %v4937, 124
    %v4956 = vpop.permute.xlu0 %4955
    %4957 = vrot.lane.b32.xlu0 %v4938, 124
    %v4958 = vpop.permute.xlu0 %4957
    %4959 = vrot.lane.b32.xlu0 %v4939, 124
    %v4960 = vpop.permute.xlu0 %4959
    %4961 = vrot.lane.b32.xlu0 %v4940, 124
    %v4962 = vpop.permute.xlu0 %4961
    %4963 = vrot.lane.b32.xlu0 %v4941, 124
    %v4964 = vpop.permute.xlu0 %4963
    %4965 = vrot.lane.b32.xlu0 %v4942, 124
    %v4966 = vpop.permute.xlu0 %4965
    %v4975 = vadd.f32 %v4735, %v4952
    %v4976 = vadd.f32 %v4736, %v4954
    %v4977 = vadd.f32 %v4737, %v4956
    %v4978 = vadd.f32 %v4738, %v4958
    %v4979 = vadd.f32 %v4739, %v4960
    %v4980 = vadd.f32 %v4740, %v4962
    %v4981 = vadd.f32 %v4741, %v4964
    %v4982 = vadd.f32 %v4742, %v4966
    %v4983 = vmul.f32 %v4463, %v1146
    %v4984 = vmul.f32 %v4464, %v1146
    %v4985 = vmul.f32 %v4465, %v1146
    %v4986 = vmul.f32 %v4466, %v1146
    %v4987 = vmul.f32 %v4467, %v1146
    %v4988 = vmul.f32 %v4468, %v1146
    %v4989 = vmul.f32 %v4469, %v1146
    %v4990 = vmul.f32 %v4470, %v1146
    %4999 = vrot.lane.b32.xlu0 %v4983, 124
    %v5000 = vpop.permute.xlu0 %4999
    %5001 = vrot.lane.b32.xlu0 %v4984, 124
    %v5002 = vpop.permute.xlu0 %5001
    %5003 = vrot.lane.b32.xlu0 %v4985, 124
    %v5004 = vpop.permute.xlu0 %5003
    %5005 = vrot.lane.b32.xlu0 %v4986, 124
    %v5006 = vpop.permute.xlu0 %5005
    %5007 = vrot.lane.b32.xlu0 %v4987, 124
    %v5008 = vpop.permute.xlu0 %5007
    %5009 = vrot.lane.b32.xlu0 %v4988, 124
    %v5010 = vpop.permute.xlu0 %5009
    %5011 = vrot.lane.b32.xlu0 %v4989, 124
    %v5012 = vpop.permute.xlu0 %5011
    %5013 = vrot.lane.b32.xlu0 %v4990, 124
    %v5014 = vpop.permute.xlu0 %5013
    %v5023 = vadd.f32 %v4783, %v5000
    %v5024 = vadd.f32 %v4784, %v5002
    %v5025 = vadd.f32 %v4785, %v5004
    %v5026 = vadd.f32 %v4786, %v5006
    %v5027 = vadd.f32 %v4787, %v5008
    %v5028 = vadd.f32 %v4788, %v5010
    %v5029 = vadd.f32 %v4789, %v5012
    %v5030 = vadd.f32 %v4790, %v5014
    %v5031 = vld [vmem:[%s3934 + $0x6] sm:$0xff]
    %v5032 = vld [vmem:[%s3934 + $0xe] sm:$0xff]
    %v5033 = vld [vmem:[%s3934 + $0x16] sm:$0xff]
    %v5034 = vld [vmem:[%s3934 + $0x1e] sm:$0xff]
    %v5035 = vld [vmem:[%s3934 + $0x26] sm:$0xff]
    %v5036 = vld [vmem:[%s3934 + $0x2e] sm:$0xff]
    %v5037 = vld [vmem:[%s3934 + $0x36] sm:$0xff]
    %v5038 = vld [vmem:[%s3934 + $0x3e] sm:$0xf]
    %v5039 = vmul.f32 %v5031, %v1203
    %v5040 = vmul.f32 %v5032, %v1203
    %v5041 = vmul.f32 %v5033, %v1203
    %v5042 = vmul.f32 %v5034, %v1203
    %v5043 = vmul.f32 %v5035, %v1203
    %v5044 = vmul.f32 %v5036, %v1203
    %v5045 = vmul.f32 %v5037, %v1203
    %v5046 = vmul.f32 %v5038, %v1203
    %v5047 = vadd.f32 %v4831, %v5039
    %v5048 = vadd.f32 %v4832, %v5040
    %v5049 = vadd.f32 %v4833, %v5041
    %v5050 = vadd.f32 %v4834, %v5042
    %v5051 = vadd.f32 %v4835, %v5043
    %v5052 = vadd.f32 %v4836, %v5044
    %v5053 = vadd.f32 %v4837, %v5045
    %v5054 = vadd.f32 %v4838, %v5046
    %v5055 = vmul.f32 %v5031, %v1220
    %v5056 = vmul.f32 %v5032, %v1220
    %v5057 = vmul.f32 %v5033, %v1220
    %v5058 = vmul.f32 %v5034, %v1220
    %v5059 = vmul.f32 %v5035, %v1220
    %v5060 = vmul.f32 %v5036, %v1220
    %v5061 = vmul.f32 %v5037, %v1220
    %v5062 = vmul.f32 %v5038, %v1220
    %v5063 = vadd.f32 %v4879, %v5055
    %v5064 = vadd.f32 %v4880, %v5056
    %v5065 = vadd.f32 %v4881, %v5057
    %v5066 = vadd.f32 %v4882, %v5058
    %v5067 = vadd.f32 %v4883, %v5059
    %v5068 = vadd.f32 %v4884, %v5060
    %v5069 = vadd.f32 %v4885, %v5061
    %v5070 = vadd.f32 %v4886, %v5062
    %v5071 = vmul.f32 %v5031, %v1237
    %v5072 = vmul.f32 %v5032, %v1237
    %v5073 = vmul.f32 %v5033, %v1237
    %v5074 = vmul.f32 %v5034, %v1237
    %v5075 = vmul.f32 %v5035, %v1237
    %v5076 = vmul.f32 %v5036, %v1237
    %v5077 = vmul.f32 %v5037, %v1237
    %v5078 = vmul.f32 %v5038, %v1237
    %v5079 = vadd.f32 %v4927, %v5071
    %v5080 = vadd.f32 %v4928, %v5072
    %v5081 = vadd.f32 %v4929, %v5073
    %v5082 = vadd.f32 %v4930, %v5074
    %v5083 = vadd.f32 %v4931, %v5075
    %v5084 = vadd.f32 %v4932, %v5076
    %v5085 = vadd.f32 %v4933, %v5077
    %v5086 = vadd.f32 %v4934, %v5078
    %v5087 = vmul.f32 %v5031, %v1254
    %v5088 = vmul.f32 %v5032, %v1254
    %v5089 = vmul.f32 %v5033, %v1254
    %v5090 = vmul.f32 %v5034, %v1254
    %v5091 = vmul.f32 %v5035, %v1254
    %v5092 = vmul.f32 %v5036, %v1254
    %v5093 = vmul.f32 %v5037, %v1254
    %v5094 = vmul.f32 %v5038, %v1254
    %v5095 = vadd.f32 %v4975, %v5087
    %v5096 = vadd.f32 %v4976, %v5088
    %v5097 = vadd.f32 %v4977, %v5089
    %v5098 = vadd.f32 %v4978, %v5090
    %v5099 = vadd.f32 %v4979, %v5091
    %v5100 = vadd.f32 %v4980, %v5092
    %v5101 = vadd.f32 %v4981, %v5093
    %v5102 = vadd.f32 %v4982, %v5094
    %v5103 = vmul.f32 %v5031, %v1271
    %v5104 = vmul.f32 %v5032, %v1271
    %v5105 = vmul.f32 %v5033, %v1271
    %v5106 = vmul.f32 %v5034, %v1271
    %v5107 = vmul.f32 %v5035, %v1271
    %v5108 = vmul.f32 %v5036, %v1271
    %v5109 = vmul.f32 %v5037, %v1271
    %v5110 = vmul.f32 %v5038, %v1271
    %v5111 = vadd.f32 %v5023, %v5103
    %v5112 = vadd.f32 %v5024, %v5104
    %v5113 = vadd.f32 %v5025, %v5105
    %v5114 = vadd.f32 %v5026, %v5106
    %v5115 = vadd.f32 %v5027, %v5107
    %v5116 = vadd.f32 %v5028, %v5108
    %v5117 = vadd.f32 %v5029, %v5109
    %v5118 = vadd.f32 %v5030, %v5110
    %v5119 = vmul.f32 %v5031, %v1288
    %v5120 = vmul.f32 %v5032, %v1288
    %v5121 = vmul.f32 %v5033, %v1288
    %v5122 = vmul.f32 %v5034, %v1288
    %v5123 = vmul.f32 %v5035, %v1288
    %v5124 = vmul.f32 %v5036, %v1288
    %v5125 = vmul.f32 %v5037, %v1288
    %v5126 = vmul.f32 %v5038, %v1288
    %5135 = vrot.lane.b32.xlu0 %v5119, 126
    %v5136 = vpop.permute.xlu0 %5135
    %5137 = vrot.lane.b32.xlu0 %v5120, 126
    %v5138 = vpop.permute.xlu0 %5137
    %5139 = vrot.lane.b32.xlu0 %v5121, 126
    %v5140 = vpop.permute.xlu0 %5139
    %5141 = vrot.lane.b32.xlu0 %v5122, 126
    %v5142 = vpop.permute.xlu0 %5141
    %5143 = vrot.lane.b32.xlu0 %v5123, 126
    %v5144 = vpop.permute.xlu0 %5143
    %5145 = vrot.lane.b32.xlu0 %v5124, 126
    %v5146 = vpop.permute.xlu0 %5145
    %5147 = vrot.lane.b32.xlu0 %v5125, 126
    %v5148 = vpop.permute.xlu0 %5147
    %5149 = vrot.lane.b32.xlu0 %v5126, 126
    %v5150 = vpop.permute.xlu0 %5149
    %v5159 = vadd.f32 %v5047, %v5136
    %v5160 = vadd.f32 %v5048, %v5138
    %v5161 = vadd.f32 %v5049, %v5140
    %v5162 = vadd.f32 %v5050, %v5142
    %v5163 = vadd.f32 %v5051, %v5144
    %v5164 = vadd.f32 %v5052, %v5146
    %v5165 = vadd.f32 %v5053, %v5148
    %v5166 = vadd.f32 %v5054, %v5150
    %v5167 = vmul.f32 %v5031, %v1337
    %v5168 = vmul.f32 %v5032, %v1337
    %v5169 = vmul.f32 %v5033, %v1337
    %v5170 = vmul.f32 %v5034, %v1337
    %v5171 = vmul.f32 %v5035, %v1337
    %v5172 = vmul.f32 %v5036, %v1337
    %v5173 = vmul.f32 %v5037, %v1337
    %v5174 = vmul.f32 %v5038, %v1337
    %5183 = vrot.lane.b32.xlu0 %v5167, 126
    %v5184 = vpop.permute.xlu0 %5183
    %5185 = vrot.lane.b32.xlu0 %v5168, 126
    %v5186 = vpop.permute.xlu0 %5185
    %5187 = vrot.lane.b32.xlu0 %v5169, 126
    %v5188 = vpop.permute.xlu0 %5187
    %5189 = vrot.lane.b32.xlu0 %v5170, 126
    %v5190 = vpop.permute.xlu0 %5189
    %5191 = vrot.lane.b32.xlu0 %v5171, 126
    %v5192 = vpop.permute.xlu0 %5191
    %5193 = vrot.lane.b32.xlu0 %v5172, 126
    %v5194 = vpop.permute.xlu0 %5193
    %5195 = vrot.lane.b32.xlu0 %v5173, 126
    %v5196 = vpop.permute.xlu0 %5195
    %5197 = vrot.lane.b32.xlu0 %v5174, 126
    %v5198 = vpop.permute.xlu0 %5197
    %v5207 = vadd.f32 %v5063, %v5184
    %v5208 = vadd.f32 %v5064, %v5186
    %v5209 = vadd.f32 %v5065, %v5188
    %v5210 = vadd.f32 %v5066, %v5190
    %v5211 = vadd.f32 %v5067, %v5192
    %v5212 = vadd.f32 %v5068, %v5194
    %v5213 = vadd.f32 %v5069, %v5196
    %v5214 = vadd.f32 %v5070, %v5198
    %v5215 = vmul.f32 %v5031, %v1386
    %v5216 = vmul.f32 %v5032, %v1386
    %v5217 = vmul.f32 %v5033, %v1386
    %v5218 = vmul.f32 %v5034, %v1386
    %v5219 = vmul.f32 %v5035, %v1386
    %v5220 = vmul.f32 %v5036, %v1386
    %v5221 = vmul.f32 %v5037, %v1386
    %v5222 = vmul.f32 %v5038, %v1386
    %5231 = vrot.lane.b32.xlu0 %v5215, 126
    %v5232 = vpop.permute.xlu0 %5231
    %5233 = vrot.lane.b32.xlu0 %v5216, 126
    %v5234 = vpop.permute.xlu0 %5233
    %5235 = vrot.lane.b32.xlu0 %v5217, 126
    %v5236 = vpop.permute.xlu0 %5235
    %5237 = vrot.lane.b32.xlu0 %v5218, 126
    %v5238 = vpop.permute.xlu0 %5237
    %5239 = vrot.lane.b32.xlu0 %v5219, 126
    %v5240 = vpop.permute.xlu0 %5239
    %5241 = vrot.lane.b32.xlu0 %v5220, 126
    %v5242 = vpop.permute.xlu0 %5241
    %5243 = vrot.lane.b32.xlu0 %v5221, 126
    %v5244 = vpop.permute.xlu0 %5243
    %5245 = vrot.lane.b32.xlu0 %v5222, 126
    %v5246 = vpop.permute.xlu0 %5245
    %v5255 = vadd.f32 %v5079, %v5232
    %v5256 = vadd.f32 %v5080, %v5234
    %v5257 = vadd.f32 %v5081, %v5236
    %v5258 = vadd.f32 %v5082, %v5238
    %v5259 = vadd.f32 %v5083, %v5240
    %v5260 = vadd.f32 %v5084, %v5242
    %v5261 = vadd.f32 %v5085, %v5244
    %v5262 = vadd.f32 %v5086, %v5246
    %v5263 = vmul.f32 %v5031, %v1435
    %v5264 = vmul.f32 %v5032, %v1435
    %v5265 = vmul.f32 %v5033, %v1435
    %v5266 = vmul.f32 %v5034, %v1435
    %v5267 = vmul.f32 %v5035, %v1435
    %v5268 = vmul.f32 %v5036, %v1435
    %v5269 = vmul.f32 %v5037, %v1435
    %v5270 = vmul.f32 %v5038, %v1435
    %5279 = vrot.lane.b32.xlu0 %v5263, 126
    %v5280 = vpop.permute.xlu0 %5279
    %5281 = vrot.lane.b32.xlu0 %v5264, 126
    %v5282 = vpop.permute.xlu0 %5281
    %5283 = vrot.lane.b32.xlu0 %v5265, 126
    %v5284 = vpop.permute.xlu0 %5283
    %5285 = vrot.lane.b32.xlu0 %v5266, 126
    %v5286 = vpop.permute.xlu0 %5285
    %5287 = vrot.lane.b32.xlu0 %v5267, 126
    %v5288 = vpop.permute.xlu0 %5287
    %5289 = vrot.lane.b32.xlu0 %v5268, 126
    %v5290 = vpop.permute.xlu0 %5289
    %5291 = vrot.lane.b32.xlu0 %v5269, 126
    %v5292 = vpop.permute.xlu0 %5291
    %5293 = vrot.lane.b32.xlu0 %v5270, 126
    %v5294 = vpop.permute.xlu0 %5293
    %v5303 = vadd.f32 %v5095, %v5280
    %v5304 = vadd.f32 %v5096, %v5282
    %v5305 = vadd.f32 %v5097, %v5284
    %v5306 = vadd.f32 %v5098, %v5286
    %v5307 = vadd.f32 %v5099, %v5288
    %v5308 = vadd.f32 %v5100, %v5290
    %v5309 = vadd.f32 %v5101, %v5292
    %v5310 = vadd.f32 %v5102, %v5294
    %v5311 = vmul.f32 %v5031, %v1484
    %v5312 = vmul.f32 %v5032, %v1484
    %v5313 = vmul.f32 %v5033, %v1484
    %v5314 = vmul.f32 %v5034, %v1484
    %v5315 = vmul.f32 %v5035, %v1484
    %v5316 = vmul.f32 %v5036, %v1484
    %v5317 = vmul.f32 %v5037, %v1484
    %v5318 = vmul.f32 %v5038, %v1484
    %5327 = vrot.lane.b32.xlu0 %v5311, 126
    %v5328 = vpop.permute.xlu0 %5327
    %5329 = vrot.lane.b32.xlu0 %v5312, 126
    %v5330 = vpop.permute.xlu0 %5329
    %5331 = vrot.lane.b32.xlu0 %v5313, 126
    %v5332 = vpop.permute.xlu0 %5331
    %5333 = vrot.lane.b32.xlu0 %v5314, 126
    %v5334 = vpop.permute.xlu0 %5333
    %5335 = vrot.lane.b32.xlu0 %v5315, 126
    %v5336 = vpop.permute.xlu0 %5335
    %5337 = vrot.lane.b32.xlu0 %v5316, 126
    %v5338 = vpop.permute.xlu0 %5337
    %5339 = vrot.lane.b32.xlu0 %v5317, 126
    %v5340 = vpop.permute.xlu0 %5339
    %5341 = vrot.lane.b32.xlu0 %v5318, 126
    %v5342 = vpop.permute.xlu0 %5341
    %v5351 = vadd.f32 %v5111, %v5328
    %v5352 = vadd.f32 %v5112, %v5330
    %v5353 = vadd.f32 %v5113, %v5332
    %v5354 = vadd.f32 %v5114, %v5334
    %v5355 = vadd.f32 %v5115, %v5336
    %v5356 = vadd.f32 %v5116, %v5338
    %v5357 = vadd.f32 %v5117, %v5340
    %v5358 = vadd.f32 %v5118, %v5342
    %v5359 = vmul.f32 %v5031, %v1533
    %v5360 = vmul.f32 %v5032, %v1533
    %v5361 = vmul.f32 %v5033, %v1533
    %v5362 = vmul.f32 %v5034, %v1533
    %v5363 = vmul.f32 %v5035, %v1533
    %v5364 = vmul.f32 %v5036, %v1533
    %v5365 = vmul.f32 %v5037, %v1533
    %v5366 = vmul.f32 %v5038, %v1533
    %5375 = vrot.lane.b32.xlu0 %v5359, 124
    %v5376 = vpop.permute.xlu0 %5375
    %5377 = vrot.lane.b32.xlu0 %v5360, 124
    %v5378 = vpop.permute.xlu0 %5377
    %5379 = vrot.lane.b32.xlu0 %v5361, 124
    %v5380 = vpop.permute.xlu0 %5379
    %5381 = vrot.lane.b32.xlu0 %v5362, 124
    %v5382 = vpop.permute.xlu0 %5381
    %5383 = vrot.lane.b32.xlu0 %v5363, 124
    %v5384 = vpop.permute.xlu0 %5383
    %5385 = vrot.lane.b32.xlu0 %v5364, 124
    %v5386 = vpop.permute.xlu0 %5385
    %5387 = vrot.lane.b32.xlu0 %v5365, 124
    %v5388 = vpop.permute.xlu0 %5387
    %5389 = vrot.lane.b32.xlu0 %v5366, 124
    %v5390 = vpop.permute.xlu0 %5389
    %v5399 = vadd.f32 %v5159, %v5376
    %v5400 = vadd.f32 %v5160, %v5378
    %v5401 = vadd.f32 %v5161, %v5380
    %v5402 = vadd.f32 %v5162, %v5382
    %v5403 = vadd.f32 %v5163, %v5384
    %v5404 = vadd.f32 %v5164, %v5386
    %v5405 = vadd.f32 %v5165, %v5388
    %v5406 = vadd.f32 %v5166, %v5390
    %v5407 = vmul.f32 %v5031, %v1582
    %v5408 = vmul.f32 %v5032, %v1582
    %v5409 = vmul.f32 %v5033, %v1582
    %v5410 = vmul.f32 %v5034, %v1582
    %v5411 = vmul.f32 %v5035, %v1582
    %v5412 = vmul.f32 %v5036, %v1582
    %v5413 = vmul.f32 %v5037, %v1582
    %v5414 = vmul.f32 %v5038, %v1582
    %5423 = vrot.lane.b32.xlu0 %v5407, 124
    %v5424 = vpop.permute.xlu0 %5423
    %5425 = vrot.lane.b32.xlu0 %v5408, 124
    %v5426 = vpop.permute.xlu0 %5425
    %5427 = vrot.lane.b32.xlu0 %v5409, 124
    %v5428 = vpop.permute.xlu0 %5427
    %5429 = vrot.lane.b32.xlu0 %v5410, 124
    %v5430 = vpop.permute.xlu0 %5429
    %5431 = vrot.lane.b32.xlu0 %v5411, 124
    %v5432 = vpop.permute.xlu0 %5431
    %5433 = vrot.lane.b32.xlu0 %v5412, 124
    %v5434 = vpop.permute.xlu0 %5433
    %5435 = vrot.lane.b32.xlu0 %v5413, 124
    %v5436 = vpop.permute.xlu0 %5435
    %5437 = vrot.lane.b32.xlu0 %v5414, 124
    %v5438 = vpop.permute.xlu0 %5437
    %v5447 = vadd.f32 %v5207, %v5424
    %v5448 = vadd.f32 %v5208, %v5426
    %v5449 = vadd.f32 %v5209, %v5428
    %v5450 = vadd.f32 %v5210, %v5430
    %v5451 = vadd.f32 %v5211, %v5432
    %v5452 = vadd.f32 %v5212, %v5434
    %v5453 = vadd.f32 %v5213, %v5436
    %v5454 = vadd.f32 %v5214, %v5438
    %v5455 = vmul.f32 %v5031, %v1631
    %v5456 = vmul.f32 %v5032, %v1631
    %v5457 = vmul.f32 %v5033, %v1631
    %v5458 = vmul.f32 %v5034, %v1631
    %v5459 = vmul.f32 %v5035, %v1631
    %v5460 = vmul.f32 %v5036, %v1631
    %v5461 = vmul.f32 %v5037, %v1631
    %v5462 = vmul.f32 %v5038, %v1631
    %5471 = vrot.lane.b32.xlu0 %v5455, 124
    %v5472 = vpop.permute.xlu0 %5471
    %5473 = vrot.lane.b32.xlu0 %v5456, 124
    %v5474 = vpop.permute.xlu0 %5473
    %5475 = vrot.lane.b32.xlu0 %v5457, 124
    %v5476 = vpop.permute.xlu0 %5475
    %5477 = vrot.lane.b32.xlu0 %v5458, 124
    %v5478 = vpop.permute.xlu0 %5477
    %5479 = vrot.lane.b32.xlu0 %v5459, 124
    %v5480 = vpop.permute.xlu0 %5479
    %5481 = vrot.lane.b32.xlu0 %v5460, 124
    %v5482 = vpop.permute.xlu0 %5481
    %5483 = vrot.lane.b32.xlu0 %v5461, 124
    %v5484 = vpop.permute.xlu0 %5483
    %5485 = vrot.lane.b32.xlu0 %v5462, 124
    %v5486 = vpop.permute.xlu0 %5485
    %v5495 = vadd.f32 %v5255, %v5472
    %v5496 = vadd.f32 %v5256, %v5474
    %v5497 = vadd.f32 %v5257, %v5476
    %v5498 = vadd.f32 %v5258, %v5478
    %v5499 = vadd.f32 %v5259, %v5480
    %v5500 = vadd.f32 %v5260, %v5482
    %v5501 = vadd.f32 %v5261, %v5484
    %v5502 = vadd.f32 %v5262, %v5486
    %v5503 = vmul.f32 %v5031, %v1680
    %v5504 = vmul.f32 %v5032, %v1680
    %v5505 = vmul.f32 %v5033, %v1680
    %v5506 = vmul.f32 %v5034, %v1680
    %v5507 = vmul.f32 %v5035, %v1680
    %v5508 = vmul.f32 %v5036, %v1680
    %v5509 = vmul.f32 %v5037, %v1680
    %v5510 = vmul.f32 %v5038, %v1680
    %5519 = vrot.lane.b32.xlu0 %v5503, 124
    %v5520 = vpop.permute.xlu0 %5519
    %5521 = vrot.lane.b32.xlu0 %v5504, 124
    %v5522 = vpop.permute.xlu0 %5521
    %5523 = vrot.lane.b32.xlu0 %v5505, 124
    %v5524 = vpop.permute.xlu0 %5523
    %5525 = vrot.lane.b32.xlu0 %v5506, 124
    %v5526 = vpop.permute.xlu0 %5525
    %5527 = vrot.lane.b32.xlu0 %v5507, 124
    %v5528 = vpop.permute.xlu0 %5527
    %5529 = vrot.lane.b32.xlu0 %v5508, 124
    %v5530 = vpop.permute.xlu0 %5529
    %5531 = vrot.lane.b32.xlu0 %v5509, 124
    %v5532 = vpop.permute.xlu0 %5531
    %5533 = vrot.lane.b32.xlu0 %v5510, 124
    %v5534 = vpop.permute.xlu0 %5533
    %v5543 = vadd.f32 %v5303, %v5520
    %v5544 = vadd.f32 %v5304, %v5522
    %v5545 = vadd.f32 %v5305, %v5524
    %v5546 = vadd.f32 %v5306, %v5526
    %v5547 = vadd.f32 %v5307, %v5528
    %v5548 = vadd.f32 %v5308, %v5530
    %v5549 = vadd.f32 %v5309, %v5532
    %v5550 = vadd.f32 %v5310, %v5534
    %v5551 = vmul.f32 %v5031, %v1729
    %v5552 = vmul.f32 %v5032, %v1729
    %v5553 = vmul.f32 %v5033, %v1729
    %v5554 = vmul.f32 %v5034, %v1729
    %v5555 = vmul.f32 %v5035, %v1729
    %v5556 = vmul.f32 %v5036, %v1729
    %v5557 = vmul.f32 %v5037, %v1729
    %v5558 = vmul.f32 %v5038, %v1729
    %5567 = vrot.lane.b32.xlu0 %v5551, 124
    %v5568 = vpop.permute.xlu0 %5567
    %5569 = vrot.lane.b32.xlu0 %v5552, 124
    %v5570 = vpop.permute.xlu0 %5569
    %5571 = vrot.lane.b32.xlu0 %v5553, 124
    %v5572 = vpop.permute.xlu0 %5571
    %5573 = vrot.lane.b32.xlu0 %v5554, 124
    %v5574 = vpop.permute.xlu0 %5573
    %5575 = vrot.lane.b32.xlu0 %v5555, 124
    %v5576 = vpop.permute.xlu0 %5575
    %5577 = vrot.lane.b32.xlu0 %v5556, 124
    %v5578 = vpop.permute.xlu0 %5577
    %5579 = vrot.lane.b32.xlu0 %v5557, 124
    %v5580 = vpop.permute.xlu0 %5579
    %5581 = vrot.lane.b32.xlu0 %v5558, 124
    %v5582 = vpop.permute.xlu0 %5581
    %v5591 = vadd.f32 %v5351, %v5568
    %v5592 = vadd.f32 %v5352, %v5570
    %v5593 = vadd.f32 %v5353, %v5572
    %v5594 = vadd.f32 %v5354, %v5574
    %v5595 = vadd.f32 %v5355, %v5576
    %v5596 = vadd.f32 %v5356, %v5578
    %v5597 = vadd.f32 %v5357, %v5580
    %v5598 = vadd.f32 %v5358, %v5582
    %vm5599 = vcmp.gt.f32.partialorder %v5399, 0.0
    %vm5600 = vcmp.gt.f32.partialorder %v5400, 0.0
    %vm5601 = vcmp.gt.f32.partialorder %v5401, 0.0
    %vm5602 = vcmp.gt.f32.partialorder %v5402, 0.0
    %vm5603 = vcmp.gt.f32.partialorder %v5403, 0.0
    %vm5604 = vcmp.gt.f32.partialorder %v5404, 0.0
    %vm5605 = vcmp.gt.f32.partialorder %v5405, 0.0
    %vm5606 = vcmp.gt.f32.partialorder %v5406, 0.0
    %v5607 = vmul.f32 %v5399, 0.345
    %v5608 = vmul.f32 %v5400, 0.345
    %v5609 = vmul.f32 %v5401, 0.345
    %v5610 = vmul.f32 %v5402, 0.345
    %v5611 = vmul.f32 %v5403, 0.345
    %v5612 = vmul.f32 %v5404, 0.345
    %v5613 = vmul.f32 %v5405, 0.345
    %v5614 = vmul.f32 %v5406, 0.345
    %v5615 = vsel %vm5599, %v5399, %v5607
    %v5616 = vsel %vm5600, %v5400, %v5608
    %v5617 = vsel %vm5601, %v5401, %v5609
    %v5618 = vsel %vm5602, %v5402, %v5610
    %v5619 = vsel %vm5603, %v5403, %v5611
    %v5620 = vsel %vm5604, %v5404, %v5612
    %v5621 = vsel %vm5605, %v5405, %v5613
    %v5622 = vsel %vm5606, %v5406, %v5614
    %v5623 = vtanh.pop %v5615
    %v5624 = vtanh.pop %v5616
    %v5625 = vtanh.pop %v5617
    %v5626 = vtanh.pop %v5618
    %v5627 = vtanh.pop %v5619
    %v5628 = vtanh.pop %v5620
    %v5629 = vtanh.pop %v5621
    %v5630 = vtanh.pop %v5622
    %v5631 = vmul.f32 %v5623, %v5623
    %v5632 = vmul.f32 %v5624, %v5624
    %v5633 = vmul.f32 %v5625, %v5625
    %v5634 = vmul.f32 %v5626, %v5626
    %v5635 = vmul.f32 %v5627, %v5627
    %v5636 = vmul.f32 %v5628, %v5628
    %v5637 = vmul.f32 %v5629, %v5629
    %v5638 = vmul.f32 %v5630, %v5630
    %s5639 = scalar_lea.vmem %s2, 640
    %5640 = vst.msk [vmem:[%s5639] sm:$0xff] %vm1818, %v5631
    %5641 = vst.msk [vmem:[%s5639 + $0x8] sm:$0xff] %vm1818, %v5632
    %5642 = vst.msk [vmem:[%s5639 + $0x10] sm:$0xff] %vm1818, %v5633
    %5643 = vst.msk [vmem:[%s5639 + $0x18] sm:$0xff] %vm1818, %v5634
    %5644 = vst.msk [vmem:[%s5639 + $0x20] sm:$0xff] %vm1818, %v5635
    %5645 = vst.msk [vmem:[%s5639 + $0x28] sm:$0xff] %vm1818, %v5636
    %5646 = vst.msk [vmem:[%s5639 + $0x30] sm:$0xff] %vm1818, %v5637
    %5647 = vst.msk [vmem:[%s5639 + $0x38] sm:$0xf] %vm1826, %v5638
    %vm5648 = vcmp.gt.f32.partialorder %v5447, 0.0
    %vm5649 = vcmp.gt.f32.partialorder %v5448, 0.0
    %vm5650 = vcmp.gt.f32.partialorder %v5449, 0.0
    %vm5651 = vcmp.gt.f32.partialorder %v5450, 0.0
    %vm5652 = vcmp.gt.f32.partialorder %v5451, 0.0
    %vm5653 = vcmp.gt.f32.partialorder %v5452, 0.0
    %vm5654 = vcmp.gt.f32.partialorder %v5453, 0.0
    %vm5655 = vcmp.gt.f32.partialorder %v5454, 0.0
    %v5656 = vmul.f32 %v5447, 0.345
    %v5657 = vmul.f32 %v5448, 0.345
    %v5658 = vmul.f32 %v5449, 0.345
    %v5659 = vmul.f32 %v5450, 0.345
    %v5660 = vmul.f32 %v5451, 0.345
    %v5661 = vmul.f32 %v5452, 0.345
    %v5662 = vmul.f32 %v5453, 0.345
    %v5663 = vmul.f32 %v5454, 0.345
    %v5664 = vsel %vm5648, %v5447, %v5656
    %v5665 = vsel %vm5649, %v5448, %v5657
    %v5666 = vsel %vm5650, %v5449, %v5658
    %v5667 = vsel %vm5651, %v5450, %v5659
    %v5668 = vsel %vm5652, %v5451, %v5660
    %v5669 = vsel %vm5653, %v5452, %v5661
    %v5670 = vsel %vm5654, %v5453, %v5662
    %v5671 = vsel %vm5655, %v5454, %v5663
    %v5672 = vtanh.pop %v5664
    %v5673 = vtanh.pop %v5665
    %v5674 = vtanh.pop %v5666
    %v5675 = vtanh.pop %v5667
    %v5676 = vtanh.pop %v5668
    %v5677 = vtanh.pop %v5669
    %v5678 = vtanh.pop %v5670
    %v5679 = vtanh.pop %v5671
    %v5680 = vmul.f32 %v5672, %v5672
    %v5681 = vmul.f32 %v5673, %v5673
    %v5682 = vmul.f32 %v5674, %v5674
    %v5683 = vmul.f32 %v5675, %v5675
    %v5684 = vmul.f32 %v5676, %v5676
    %v5685 = vmul.f32 %v5677, %v5677
    %v5686 = vmul.f32 %v5678, %v5678
    %v5687 = vmul.f32 %v5679, %v5679
    %s5688 = scalar_lea.vmem %s2, 704
    %5689 = vst.msk [vmem:[%s5688] sm:$0xff] %vm1818, %v5680
    %5690 = vst.msk [vmem:[%s5688 + $0x8] sm:$0xff] %vm1818, %v5681
    %5691 = vst.msk [vmem:[%s5688 + $0x10] sm:$0xff] %vm1818, %v5682
    %5692 = vst.msk [vmem:[%s5688 + $0x18] sm:$0xff] %vm1818, %v5683
    %5693 = vst.msk [vmem:[%s5688 + $0x20] sm:$0xff] %vm1818, %v5684
    %5694 = vst.msk [vmem:[%s5688 + $0x28] sm:$0xff] %vm1818, %v5685
    %5695 = vst.msk [vmem:[%s5688 + $0x30] sm:$0xff] %vm1818, %v5686
    %5696 = vst.msk [vmem:[%s5688 + $0x38] sm:$0xf] %vm1826, %v5687
    %vm5697 = vcmp.gt.f32.partialorder %v5495, 0.0
    %vm5698 = vcmp.gt.f32.partialorder %v5496, 0.0
    %vm5699 = vcmp.gt.f32.partialorder %v5497, 0.0
    %vm5700 = vcmp.gt.f32.partialorder %v5498, 0.0
    %vm5701 = vcmp.gt.f32.partialorder %v5499, 0.0
    %vm5702 = vcmp.gt.f32.partialorder %v5500, 0.0
    %vm5703 = vcmp.gt.f32.partialorder %v5501, 0.0
    %vm5704 = vcmp.gt.f32.partialorder %v5502, 0.0
    %v5705 = vmul.f32 %v5495, 0.345
    %v5706 = vmul.f32 %v5496, 0.345
    %v5707 = vmul.f32 %v5497, 0.345
    %v5708 = vmul.f32 %v5498, 0.345
    %v5709 = vmul.f32 %v5499, 0.345
    %v5710 = vmul.f32 %v5500, 0.345
    %v5711 = vmul.f32 %v5501, 0.345
    %v5712 = vmul.f32 %v5502, 0.345
    %v5713 = vsel %vm5697, %v5495, %v5705
    %v5714 = vsel %vm5698, %v5496, %v5706
    %v5715 = vsel %vm5699, %v5497, %v5707
    %v5716 = vsel %vm5700, %v5498, %v5708
    %v5717 = vsel %vm5701, %v5499, %v5709
    %v5718 = vsel %vm5702, %v5500, %v5710
    %v5719 = vsel %vm5703, %v5501, %v5711
    %v5720 = vsel %vm5704, %v5502, %v5712
    %v5721 = vtanh.pop %v5713
    %v5722 = vtanh.pop %v5714
    %v5723 = vtanh.pop %v5715
    %v5724 = vtanh.pop %v5716
    %v5725 = vtanh.pop %v5717
    %v5726 = vtanh.pop %v5718
    %v5727 = vtanh.pop %v5719
    %v5728 = vtanh.pop %v5720
    %v5729 = vmul.f32 %v5721, %v5721
    %v5730 = vmul.f32 %v5722, %v5722
    %v5731 = vmul.f32 %v5723, %v5723
    %v5732 = vmul.f32 %v5724, %v5724
    %v5733 = vmul.f32 %v5725, %v5725
    %v5734 = vmul.f32 %v5726, %v5726
    %v5735 = vmul.f32 %v5727, %v5727
    %v5736 = vmul.f32 %v5728, %v5728
    %s5737 = scalar_lea.vmem %s2, 768
    %5738 = vst.msk [vmem:[%s5737] sm:$0xff] %vm1818, %v5729
    %5739 = vst.msk [vmem:[%s5737 + $0x8] sm:$0xff] %vm1818, %v5730
    %5740 = vst.msk [vmem:[%s5737 + $0x10] sm:$0xff] %vm1818, %v5731
    %5741 = vst.msk [vmem:[%s5737 + $0x18] sm:$0xff] %vm1818, %v5732
    %5742 = vst.msk [vmem:[%s5737 + $0x20] sm:$0xff] %vm1818, %v5733
    %5743 = vst.msk [vmem:[%s5737 + $0x28] sm:$0xff] %vm1818, %v5734
    %5744 = vst.msk [vmem:[%s5737 + $0x30] sm:$0xff] %vm1818, %v5735
    %5745 = vst.msk [vmem:[%s5737 + $0x38] sm:$0xf] %vm1826, %v5736
    %vm5746 = vcmp.gt.f32.partialorder %v5543, 0.0
    %vm5747 = vcmp.gt.f32.partialorder %v5544, 0.0
    %vm5748 = vcmp.gt.f32.partialorder %v5545, 0.0
    %vm5749 = vcmp.gt.f32.partialorder %v5546, 0.0
    %vm5750 = vcmp.gt.f32.partialorder %v5547, 0.0
    %vm5751 = vcmp.gt.f32.partialorder %v5548, 0.0
    %vm5752 = vcmp.gt.f32.partialorder %v5549, 0.0
    %vm5753 = vcmp.gt.f32.partialorder %v5550, 0.0
    %v5754 = vmul.f32 %v5543, 0.345
    %v5755 = vmul.f32 %v5544, 0.345
    %v5756 = vmul.f32 %v5545, 0.345
    %v5757 = vmul.f32 %v5546, 0.345
    %v5758 = vmul.f32 %v5547, 0.345
    %v5759 = vmul.f32 %v5548, 0.345
    %v5760 = vmul.f32 %v5549, 0.345
    %v5761 = vmul.f32 %v5550, 0.345
    %v5762 = vsel %vm5746, %v5543, %v5754
    %v5763 = vsel %vm5747, %v5544, %v5755
    %v5764 = vsel %vm5748, %v5545, %v5756
    %v5765 = vsel %vm5749, %v5546, %v5757
    %v5766 = vsel %vm5750, %v5547, %v5758
    %v5767 = vsel %vm5751, %v5548, %v5759
    %v5768 = vsel %vm5752, %v5549, %v5760
    %v5769 = vsel %vm5753, %v5550, %v5761
    %v5770 = vtanh.pop %v5762
    %v5771 = vtanh.pop %v5763
    %v5772 = vtanh.pop %v5764
    %v5773 = vtanh.pop %v5765
    %v5774 = vtanh.pop %v5766
    %v5775 = vtanh.pop %v5767
    %v5776 = vtanh.pop %v5768
    %v5777 = vtanh.pop %v5769
    %v5778 = vmul.f32 %v5770, %v5770
    %v5779 = vmul.f32 %v5771, %v5771
    %v5780 = vmul.f32 %v5772, %v5772
    %v5781 = vmul.f32 %v5773, %v5773
    %v5782 = vmul.f32 %v5774, %v5774
    %v5783 = vmul.f32 %v5775, %v5775
    %v5784 = vmul.f32 %v5776, %v5776
    %v5785 = vmul.f32 %v5777, %v5777
    %s5786 = scalar_lea.vmem %s2, 832
    %5787 = vst.msk [vmem:[%s5786] sm:$0xff] %vm1818, %v5778
    %5788 = vst.msk [vmem:[%s5786 + $0x8] sm:$0xff] %vm1818, %v5779
    %5789 = vst.msk [vmem:[%s5786 + $0x10] sm:$0xff] %vm1818, %v5780
    %5790 = vst.msk [vmem:[%s5786 + $0x18] sm:$0xff] %vm1818, %v5781
    %5791 = vst.msk [vmem:[%s5786 + $0x20] sm:$0xff] %vm1818, %v5782
    %5792 = vst.msk [vmem:[%s5786 + $0x28] sm:$0xff] %vm1818, %v5783
    %5793 = vst.msk [vmem:[%s5786 + $0x30] sm:$0xff] %vm1818, %v5784
    %5794 = vst.msk [vmem:[%s5786 + $0x38] sm:$0xf] %vm1826, %v5785
    %vm5795 = vcmp.gt.f32.partialorder %v5591, 0.0
    %vm5796 = vcmp.gt.f32.partialorder %v5592, 0.0
    %vm5797 = vcmp.gt.f32.partialorder %v5593, 0.0
    %vm5798 = vcmp.gt.f32.partialorder %v5594, 0.0
    %vm5799 = vcmp.gt.f32.partialorder %v5595, 0.0
    %vm5800 = vcmp.gt.f32.partialorder %v5596, 0.0
    %vm5801 = vcmp.gt.f32.partialorder %v5597, 0.0
    %vm5802 = vcmp.gt.f32.partialorder %v5598, 0.0
    %v5803 = vmul.f32 %v5591, 0.345
    %v5804 = vmul.f32 %v5592, 0.345
    %v5805 = vmul.f32 %v5593, 0.345
    %v5806 = vmul.f32 %v5594, 0.345
    %v5807 = vmul.f32 %v5595, 0.345
    %v5808 = vmul.f32 %v5596, 0.345
    %v5809 = vmul.f32 %v5597, 0.345
    %v5810 = vmul.f32 %v5598, 0.345
    %v5811 = vsel %vm5795, %v5591, %v5803
    %v5812 = vsel %vm5796, %v5592, %v5804
    %v5813 = vsel %vm5797, %v5593, %v5805
    %v5814 = vsel %vm5798, %v5594, %v5806
    %v5815 = vsel %vm5799, %v5595, %v5807
    %v5816 = vsel %vm5800, %v5596, %v5808
    %v5817 = vsel %vm5801, %v5597, %v5809
    %v5818 = vsel %vm5802, %v5598, %v5810
    %v5819 = vtanh.pop %v5811
    %v5820 = vtanh.pop %v5812
    %v5821 = vtanh.pop %v5813
    %v5822 = vtanh.pop %v5814
    %v5823 = vtanh.pop %v5815
    %v5824 = vtanh.pop %v5816
    %v5825 = vtanh.pop %v5817
    %v5826 = vtanh.pop %v5818
    %v5827 = vmul.f32 %v5819, %v5819
    %v5828 = vmul.f32 %v5820, %v5820
    %v5829 = vmul.f32 %v5821, %v5821
    %v5830 = vmul.f32 %v5822, %v5822
    %v5831 = vmul.f32 %v5823, %v5823
    %v5832 = vmul.f32 %v5824, %v5824
    %v5833 = vmul.f32 %v5825, %v5825
    %v5834 = vmul.f32 %v5826, %v5826
    %s5835 = scalar_lea.vmem %s2, 896
    %5836 = vst.msk [vmem:[%s5835] sm:$0xff] %vm1818, %v5827
    %5837 = vst.msk [vmem:[%s5835 + $0x8] sm:$0xff] %vm1818, %v5828
    %5838 = vst.msk [vmem:[%s5835 + $0x10] sm:$0xff] %vm1818, %v5829
    %5839 = vst.msk [vmem:[%s5835 + $0x18] sm:$0xff] %vm1818, %v5830
    %5840 = vst.msk [vmem:[%s5835 + $0x20] sm:$0xff] %vm1818, %v5831
    %5841 = vst.msk [vmem:[%s5835 + $0x28] sm:$0xff] %vm1818, %v5832
    %5842 = vst.msk [vmem:[%s5835 + $0x30] sm:$0xff] %vm1818, %v5833
    %5843 = vst.msk [vmem:[%s5835 + $0x38] sm:$0xf] %vm1826, %v5834
    %s5844 = scalar_lea.vmem %s1, 216
    %v5845 = vld [vmem:[%s5844] sm:$0xff]
    %v5846 = vld [vmem:[%s5844 + $0x8] sm:$0xff]
    %v5847 = vld [vmem:[%s5844 + $0x10] sm:$0xff]
    %v5848 = vld [vmem:[%s5844 + $0x18] sm:$0xff]
    %v5849 = vld [vmem:[%s5844 + $0x20] sm:$0xff]
    %v5850 = vld [vmem:[%s5844 + $0x28] sm:$0xff]
    %v5851 = vld [vmem:[%s5844 + $0x30] sm:$0xff]
    %v5852 = vld [vmem:[%s5844 + $0x38] sm:$0xf]
    %v5853 = vmul.f32 %v5845, %v77
    %v5854 = vmul.f32 %v5846, %v77
    %v5855 = vmul.f32 %v5847, %v77
    %v5856 = vmul.f32 %v5848, %v77
    %v5857 = vmul.f32 %v5849, %v77
    %v5858 = vmul.f32 %v5850, %v77
    %v5859 = vmul.f32 %v5851, %v77
    %v5860 = vmul.f32 %v5852, %v77
    %v5861 = vmul.f32 %v5845, %v86
    %v5862 = vmul.f32 %v5846, %v86
    %v5863 = vmul.f32 %v5847, %v86
    %v5864 = vmul.f32 %v5848, %v86
    %v5865 = vmul.f32 %v5849, %v86
    %v5866 = vmul.f32 %v5850, %v86
    %v5867 = vmul.f32 %v5851, %v86
    %v5868 = vmul.f32 %v5852, %v86
    %v5869 = vmul.f32 %v5845, %v95
    %v5870 = vmul.f32 %v5846, %v95
    %v5871 = vmul.f32 %v5847, %v95
    %v5872 = vmul.f32 %v5848, %v95
    %v5873 = vmul.f32 %v5849, %v95
    %v5874 = vmul.f32 %v5850, %v95
    %v5875 = vmul.f32 %v5851, %v95
    %v5876 = vmul.f32 %v5852, %v95
    %v5877 = vmul.f32 %v5845, %v104
    %v5878 = vmul.f32 %v5846, %v104
    %v5879 = vmul.f32 %v5847, %v104
    %v5880 = vmul.f32 %v5848, %v104
    %v5881 = vmul.f32 %v5849, %v104
    %v5882 = vmul.f32 %v5850, %v104
    %v5883 = vmul.f32 %v5851, %v104
    %v5884 = vmul.f32 %v5852, %v104
    %v5885 = vmul.f32 %v5845, %v113
    %v5886 = vmul.f32 %v5846, %v113
    %v5887 = vmul.f32 %v5847, %v113
    %v5888 = vmul.f32 %v5848, %v113
    %v5889 = vmul.f32 %v5849, %v113
    %v5890 = vmul.f32 %v5850, %v113
    %v5891 = vmul.f32 %v5851, %v113
    %v5892 = vmul.f32 %v5852, %v113
    %v5893 = vmul.f32 %v5845, %v122
    %v5894 = vmul.f32 %v5846, %v122
    %v5895 = vmul.f32 %v5847, %v122
    %v5896 = vmul.f32 %v5848, %v122
    %v5897 = vmul.f32 %v5849, %v122
    %v5898 = vmul.f32 %v5850, %v122
    %v5899 = vmul.f32 %v5851, %v122
    %v5900 = vmul.f32 %v5852, %v122
    %5909 = vrot.lane.b32.xlu0 %v5893, 126
    %v5910 = vpop.permute.xlu0 %5909
    %5911 = vrot.lane.b32.xlu0 %v5894, 126
    %v5912 = vpop.permute.xlu0 %5911
    %5913 = vrot.lane.b32.xlu0 %v5895, 126
    %v5914 = vpop.permute.xlu0 %5913
    %5915 = vrot.lane.b32.xlu0 %v5896, 126
    %v5916 = vpop.permute.xlu0 %5915
    %5917 = vrot.lane.b32.xlu0 %v5897, 126
    %v5918 = vpop.permute.xlu0 %5917
    %5919 = vrot.lane.b32.xlu0 %v5898, 126
    %v5920 = vpop.permute.xlu0 %5919
    %5921 = vrot.lane.b32.xlu0 %v5899, 126
    %v5922 = vpop.permute.xlu0 %5921
    %5923 = vrot.lane.b32.xlu0 %v5900, 126
    %v5924 = vpop.permute.xlu0 %5923
    %v5933 = vadd.f32 %v5853, %v5910
    %v5934 = vadd.f32 %v5854, %v5912
    %v5935 = vadd.f32 %v5855, %v5914
    %v5936 = vadd.f32 %v5856, %v5916
    %v5937 = vadd.f32 %v5857, %v5918
    %v5938 = vadd.f32 %v5858, %v5920
    %v5939 = vadd.f32 %v5859, %v5922
    %v5940 = vadd.f32 %v5860, %v5924
    %v5941 = vmul.f32 %v5845, %v171
    %v5942 = vmul.f32 %v5846, %v171
    %v5943 = vmul.f32 %v5847, %v171
    %v5944 = vmul.f32 %v5848, %v171
    %v5945 = vmul.f32 %v5849, %v171
    %v5946 = vmul.f32 %v5850, %v171
    %v5947 = vmul.f32 %v5851, %v171
    %v5948 = vmul.f32 %v5852, %v171
    %5957 = vrot.lane.b32.xlu0 %v5941, 126
    %v5958 = vpop.permute.xlu0 %5957
    %5959 = vrot.lane.b32.xlu0 %v5942, 126
    %v5960 = vpop.permute.xlu0 %5959
    %5961 = vrot.lane.b32.xlu0 %v5943, 126
    %v5962 = vpop.permute.xlu0 %5961
    %5963 = vrot.lane.b32.xlu0 %v5944, 126
    %v5964 = vpop.permute.xlu0 %5963
    %5965 = vrot.lane.b32.xlu0 %v5945, 126
    %v5966 = vpop.permute.xlu0 %5965
    %5967 = vrot.lane.b32.xlu0 %v5946, 126
    %v5968 = vpop.permute.xlu0 %5967
    %5969 = vrot.lane.b32.xlu0 %v5947, 126
    %v5970 = vpop.permute.xlu0 %5969
    %5971 = vrot.lane.b32.xlu0 %v5948, 126
    %v5972 = vpop.permute.xlu0 %5971
    %v5981 = vadd.f32 %v5861, %v5958
    %v5982 = vadd.f32 %v5862, %v5960
    %v5983 = vadd.f32 %v5863, %v5962
    %v5984 = vadd.f32 %v5864, %v5964
    %v5985 = vadd.f32 %v5865, %v5966
    %v5986 = vadd.f32 %v5866, %v5968
    %v5987 = vadd.f32 %v5867, %v5970
    %v5988 = vadd.f32 %v5868, %v5972
    %v5989 = vmul.f32 %v5845, %v220
    %v5990 = vmul.f32 %v5846, %v220
    %v5991 = vmul.f32 %v5847, %v220
    %v5992 = vmul.f32 %v5848, %v220
    %v5993 = vmul.f32 %v5849, %v220
    %v5994 = vmul.f32 %v5850, %v220
    %v5995 = vmul.f32 %v5851, %v220
    %v5996 = vmul.f32 %v5852, %v220
    %6005 = vrot.lane.b32.xlu0 %v5989, 126
    %v6006 = vpop.permute.xlu0 %6005
    %6007 = vrot.lane.b32.xlu0 %v5990, 126
    %v6008 = vpop.permute.xlu0 %6007
    %6009 = vrot.lane.b32.xlu0 %v5991, 126
    %v6010 = vpop.permute.xlu0 %6009
    %6011 = vrot.lane.b32.xlu0 %v5992, 126
    %v6012 = vpop.permute.xlu0 %6011
    %6013 = vrot.lane.b32.xlu0 %v5993, 126
    %v6014 = vpop.permute.xlu0 %6013
    %6015 = vrot.lane.b32.xlu0 %v5994, 126
    %v6016 = vpop.permute.xlu0 %6015
    %6017 = vrot.lane.b32.xlu0 %v5995, 126
    %v6018 = vpop.permute.xlu0 %6017
    %6019 = vrot.lane.b32.xlu0 %v5996, 126
    %v6020 = vpop.permute.xlu0 %6019
    %v6029 = vadd.f32 %v5869, %v6006
    %v6030 = vadd.f32 %v5870, %v6008
    %v6031 = vadd.f32 %v5871, %v6010
    %v6032 = vadd.f32 %v5872, %v6012
    %v6033 = vadd.f32 %v5873, %v6014
    %v6034 = vadd.f32 %v5874, %v6016
    %v6035 = vadd.f32 %v5875, %v6018
    %v6036 = vadd.f32 %v5876, %v6020
    %v6037 = vmul.f32 %v5845, %v269
    %v6038 = vmul.f32 %v5846, %v269
    %v6039 = vmul.f32 %v5847, %v269
    %v6040 = vmul.f32 %v5848, %v269
    %v6041 = vmul.f32 %v5849, %v269
    %v6042 = vmul.f32 %v5850, %v269
    %v6043 = vmul.f32 %v5851, %v269
    %v6044 = vmul.f32 %v5852, %v269
    %6053 = vrot.lane.b32.xlu0 %v6037, 126
    %v6054 = vpop.permute.xlu0 %6053
    %6055 = vrot.lane.b32.xlu0 %v6038, 126
    %v6056 = vpop.permute.xlu0 %6055
    %6057 = vrot.lane.b32.xlu0 %v6039, 126
    %v6058 = vpop.permute.xlu0 %6057
    %6059 = vrot.lane.b32.xlu0 %v6040, 126
    %v6060 = vpop.permute.xlu0 %6059
    %6061 = vrot.lane.b32.xlu0 %v6041, 126
    %v6062 = vpop.permute.xlu0 %6061
    %6063 = vrot.lane.b32.xlu0 %v6042, 126
    %v6064 = vpop.permute.xlu0 %6063
    %6065 = vrot.lane.b32.xlu0 %v6043, 126
    %v6066 = vpop.permute.xlu0 %6065
    %6067 = vrot.lane.b32.xlu0 %v6044, 126
    %v6068 = vpop.permute.xlu0 %6067
    %v6077 = vadd.f32 %v5877, %v6054
    %v6078 = vadd.f32 %v5878, %v6056
    %v6079 = vadd.f32 %v5879, %v6058
    %v6080 = vadd.f32 %v5880, %v6060
    %v6081 = vadd.f32 %v5881, %v6062
    %v6082 = vadd.f32 %v5882, %v6064
    %v6083 = vadd.f32 %v5883, %v6066
    %v6084 = vadd.f32 %v5884, %v6068
    %v6085 = vmul.f32 %v5845, %v318
    %v6086 = vmul.f32 %v5846, %v318
    %v6087 = vmul.f32 %v5847, %v318
    %v6088 = vmul.f32 %v5848, %v318
    %v6089 = vmul.f32 %v5849, %v318
    %v6090 = vmul.f32 %v5850, %v318
    %v6091 = vmul.f32 %v5851, %v318
    %v6092 = vmul.f32 %v5852, %v318
    %6101 = vrot.lane.b32.xlu0 %v6085, 126
    %v6102 = vpop.permute.xlu0 %6101
    %6103 = vrot.lane.b32.xlu0 %v6086, 126
    %v6104 = vpop.permute.xlu0 %6103
    %6105 = vrot.lane.b32.xlu0 %v6087, 126
    %v6106 = vpop.permute.xlu0 %6105
    %6107 = vrot.lane.b32.xlu0 %v6088, 126
    %v6108 = vpop.permute.xlu0 %6107
    %6109 = vrot.lane.b32.xlu0 %v6089, 126
    %v6110 = vpop.permute.xlu0 %6109
    %6111 = vrot.lane.b32.xlu0 %v6090, 126
    %v6112 = vpop.permute.xlu0 %6111
    %6113 = vrot.lane.b32.xlu0 %v6091, 126
    %v6114 = vpop.permute.xlu0 %6113
    %6115 = vrot.lane.b32.xlu0 %v6092, 126
    %v6116 = vpop.permute.xlu0 %6115
    %v6125 = vadd.f32 %v5885, %v6102
    %v6126 = vadd.f32 %v5886, %v6104
    %v6127 = vadd.f32 %v5887, %v6106
    %v6128 = vadd.f32 %v5888, %v6108
    %v6129 = vadd.f32 %v5889, %v6110
    %v6130 = vadd.f32 %v5890, %v6112
    %v6131 = vadd.f32 %v5891, %v6114
    %v6132 = vadd.f32 %v5892, %v6116
    %v6133 = vmul.f32 %v5845, %v367
    %v6134 = vmul.f32 %v5846, %v367
    %v6135 = vmul.f32 %v5847, %v367
    %v6136 = vmul.f32 %v5848, %v367
    %v6137 = vmul.f32 %v5849, %v367
    %v6138 = vmul.f32 %v5850, %v367
    %v6139 = vmul.f32 %v5851, %v367
    %v6140 = vmul.f32 %v5852, %v367
    %6149 = vrot.lane.b32.xlu0 %v6133, 124
    %v6150 = vpop.permute.xlu0 %6149
    %6151 = vrot.lane.b32.xlu0 %v6134, 124
    %v6152 = vpop.permute.xlu0 %6151
    %6153 = vrot.lane.b32.xlu0 %v6135, 124
    %v6154 = vpop.permute.xlu0 %6153
    %6155 = vrot.lane.b32.xlu0 %v6136, 124
    %v6156 = vpop.permute.xlu0 %6155
    %6157 = vrot.lane.b32.xlu0 %v6137, 124
    %v6158 = vpop.permute.xlu0 %6157
    %6159 = vrot.lane.b32.xlu0 %v6138, 124
    %v6160 = vpop.permute.xlu0 %6159
    %6161 = vrot.lane.b32.xlu0 %v6139, 124
    %v6162 = vpop.permute.xlu0 %6161
    %6163 = vrot.lane.b32.xlu0 %v6140, 124
    %v6164 = vpop.permute.xlu0 %6163
    %v6173 = vadd.f32 %v5933, %v6150
    %v6174 = vadd.f32 %v5934, %v6152
    %v6175 = vadd.f32 %v5935, %v6154
    %v6176 = vadd.f32 %v5936, %v6156
    %v6177 = vadd.f32 %v5937, %v6158
    %v6178 = vadd.f32 %v5938, %v6160
    %v6179 = vadd.f32 %v5939, %v6162
    %v6180 = vadd.f32 %v5940, %v6164
    %v6181 = vmul.f32 %v5845, %v416
    %v6182 = vmul.f32 %v5846, %v416
    %v6183 = vmul.f32 %v5847, %v416
    %v6184 = vmul.f32 %v5848, %v416
    %v6185 = vmul.f32 %v5849, %v416
    %v6186 = vmul.f32 %v5850, %v416
    %v6187 = vmul.f32 %v5851, %v416
    %v6188 = vmul.f32 %v5852, %v416
    %6197 = vrot.lane.b32.xlu0 %v6181, 124
    %v6198 = vpop.permute.xlu0 %6197
    %6199 = vrot.lane.b32.xlu0 %v6182, 124
    %v6200 = vpop.permute.xlu0 %6199
    %6201 = vrot.lane.b32.xlu0 %v6183, 124
    %v6202 = vpop.permute.xlu0 %6201
    %6203 = vrot.lane.b32.xlu0 %v6184, 124
    %v6204 = vpop.permute.xlu0 %6203
    %6205 = vrot.lane.b32.xlu0 %v6185, 124
    %v6206 = vpop.permute.xlu0 %6205
    %6207 = vrot.lane.b32.xlu0 %v6186, 124
    %v6208 = vpop.permute.xlu0 %6207
    %6209 = vrot.lane.b32.xlu0 %v6187, 124
    %v6210 = vpop.permute.xlu0 %6209
    %6211 = vrot.lane.b32.xlu0 %v6188, 124
    %v6212 = vpop.permute.xlu0 %6211
    %v6221 = vadd.f32 %v5981, %v6198
    %v6222 = vadd.f32 %v5982, %v6200
    %v6223 = vadd.f32 %v5983, %v6202
    %v6224 = vadd.f32 %v5984, %v6204
    %v6225 = vadd.f32 %v5985, %v6206
    %v6226 = vadd.f32 %v5986, %v6208
    %v6227 = vadd.f32 %v5987, %v6210
    %v6228 = vadd.f32 %v5988, %v6212
    %v6229 = vmul.f32 %v5845, %v465
    %v6230 = vmul.f32 %v5846, %v465
    %v6231 = vmul.f32 %v5847, %v465
    %v6232 = vmul.f32 %v5848, %v465
    %v6233 = vmul.f32 %v5849, %v465
    %v6234 = vmul.f32 %v5850, %v465
    %v6235 = vmul.f32 %v5851, %v465
    %v6236 = vmul.f32 %v5852, %v465
    %6245 = vrot.lane.b32.xlu0 %v6229, 124
    %v6246 = vpop.permute.xlu0 %6245
    %6247 = vrot.lane.b32.xlu0 %v6230, 124
    %v6248 = vpop.permute.xlu0 %6247
    %6249 = vrot.lane.b32.xlu0 %v6231, 124
    %v6250 = vpop.permute.xlu0 %6249
    %6251 = vrot.lane.b32.xlu0 %v6232, 124
    %v6252 = vpop.permute.xlu0 %6251
    %6253 = vrot.lane.b32.xlu0 %v6233, 124
    %v6254 = vpop.permute.xlu0 %6253
    %6255 = vrot.lane.b32.xlu0 %v6234, 124
    %v6256 = vpop.permute.xlu0 %6255
    %6257 = vrot.lane.b32.xlu0 %v6235, 124
    %v6258 = vpop.permute.xlu0 %6257
    %6259 = vrot.lane.b32.xlu0 %v6236, 124
    %v6260 = vpop.permute.xlu0 %6259
    %v6269 = vadd.f32 %v6029, %v6246
    %v6270 = vadd.f32 %v6030, %v6248
    %v6271 = vadd.f32 %v6031, %v6250
    %v6272 = vadd.f32 %v6032, %v6252
    %v6273 = vadd.f32 %v6033, %v6254
    %v6274 = vadd.f32 %v6034, %v6256
    %v6275 = vadd.f32 %v6035, %v6258
    %v6276 = vadd.f32 %v6036, %v6260
    %v6277 = vmul.f32 %v5845, %v514
    %v6278 = vmul.f32 %v5846, %v514
    %v6279 = vmul.f32 %v5847, %v514
    %v6280 = vmul.f32 %v5848, %v514
    %v6281 = vmul.f32 %v5849, %v514
    %v6282 = vmul.f32 %v5850, %v514
    %v6283 = vmul.f32 %v5851, %v514
    %v6284 = vmul.f32 %v5852, %v514
    %6293 = vrot.lane.b32.xlu0 %v6277, 124
    %v6294 = vpop.permute.xlu0 %6293
    %6295 = vrot.lane.b32.xlu0 %v6278, 124
    %v6296 = vpop.permute.xlu0 %6295
    %6297 = vrot.lane.b32.xlu0 %v6279, 124
    %v6298 = vpop.permute.xlu0 %6297
    %6299 = vrot.lane.b32.xlu0 %v6280, 124
    %v6300 = vpop.permute.xlu0 %6299
    %6301 = vrot.lane.b32.xlu0 %v6281, 124
    %v6302 = vpop.permute.xlu0 %6301
    %6303 = vrot.lane.b32.xlu0 %v6282, 124
    %v6304 = vpop.permute.xlu0 %6303
    %6305 = vrot.lane.b32.xlu0 %v6283, 124
    %v6306 = vpop.permute.xlu0 %6305
    %6307 = vrot.lane.b32.xlu0 %v6284, 124
    %v6308 = vpop.permute.xlu0 %6307
    %v6317 = vadd.f32 %v6077, %v6294
    %v6318 = vadd.f32 %v6078, %v6296
    %v6319 = vadd.f32 %v6079, %v6298
    %v6320 = vadd.f32 %v6080, %v6300
    %v6321 = vadd.f32 %v6081, %v6302
    %v6322 = vadd.f32 %v6082, %v6304
    %v6323 = vadd.f32 %v6083, %v6306
    %v6324 = vadd.f32 %v6084, %v6308
    %v6325 = vmul.f32 %v5845, %v563
    %v6326 = vmul.f32 %v5846, %v563
    %v6327 = vmul.f32 %v5847, %v563
    %v6328 = vmul.f32 %v5848, %v563
    %v6329 = vmul.f32 %v5849, %v563
    %v6330 = vmul.f32 %v5850, %v563
    %v6331 = vmul.f32 %v5851, %v563
    %v6332 = vmul.f32 %v5852, %v563
    %6341 = vrot.lane.b32.xlu0 %v6325, 124
    %v6342 = vpop.permute.xlu0 %6341
    %6343 = vrot.lane.b32.xlu0 %v6326, 124
    %v6344 = vpop.permute.xlu0 %6343
    %6345 = vrot.lane.b32.xlu0 %v6327, 124
    %v6346 = vpop.permute.xlu0 %6345
    %6347 = vrot.lane.b32.xlu0 %v6328, 124
    %v6348 = vpop.permute.xlu0 %6347
    %6349 = vrot.lane.b32.xlu0 %v6329, 124
    %v6350 = vpop.permute.xlu0 %6349
    %6351 = vrot.lane.b32.xlu0 %v6330, 124
    %v6352 = vpop.permute.xlu0 %6351
    %6353 = vrot.lane.b32.xlu0 %v6331, 124
    %v6354 = vpop.permute.xlu0 %6353
    %6355 = vrot.lane.b32.xlu0 %v6332, 124
    %v6356 = vpop.permute.xlu0 %6355
    %v6365 = vadd.f32 %v6125, %v6342
    %v6366 = vadd.f32 %v6126, %v6344
    %v6367 = vadd.f32 %v6127, %v6346
    %v6368 = vadd.f32 %v6128, %v6348
    %v6369 = vadd.f32 %v6129, %v6350
    %v6370 = vadd.f32 %v6130, %v6352
    %v6371 = vadd.f32 %v6131, %v6354
    %v6372 = vadd.f32 %v6132, %v6356
    %v6373 = vld [vmem:[%s5844 + $0x3] sm:$0xff]
    %v6374 = vld [vmem:[%s5844 + $0xb] sm:$0xff]
    %v6375 = vld [vmem:[%s5844 + $0x13] sm:$0xff]
    %v6376 = vld [vmem:[%s5844 + $0x1b] sm:$0xff]
    %v6377 = vld [vmem:[%s5844 + $0x23] sm:$0xff]
    %v6378 = vld [vmem:[%s5844 + $0x2b] sm:$0xff]
    %v6379 = vld [vmem:[%s5844 + $0x33] sm:$0xff]
    %v6380 = vld [vmem:[%s5844 + $0x3b] sm:$0xf]
    %v6381 = vmul.f32 %v6373, %v620
    %v6382 = vmul.f32 %v6374, %v620
    %v6383 = vmul.f32 %v6375, %v620
    %v6384 = vmul.f32 %v6376, %v620
    %v6385 = vmul.f32 %v6377, %v620
    %v6386 = vmul.f32 %v6378, %v620
    %v6387 = vmul.f32 %v6379, %v620
    %v6388 = vmul.f32 %v6380, %v620
    %v6389 = vadd.f32 %v6173, %v6381
    %v6390 = vadd.f32 %v6174, %v6382
    %v6391 = vadd.f32 %v6175, %v6383
    %v6392 = vadd.f32 %v6176, %v6384
    %v6393 = vadd.f32 %v6177, %v6385
    %v6394 = vadd.f32 %v6178, %v6386
    %v6395 = vadd.f32 %v6179, %v6387
    %v6396 = vadd.f32 %v6180, %v6388
    %v6397 = vmul.f32 %v6373, %v637
    %v6398 = vmul.f32 %v6374, %v637
    %v6399 = vmul.f32 %v6375, %v637
    %v6400 = vmul.f32 %v6376, %v637
    %v6401 = vmul.f32 %v6377, %v637
    %v6402 = vmul.f32 %v6378, %v637
    %v6403 = vmul.f32 %v6379, %v637
    %v6404 = vmul.f32 %v6380, %v637
    %v6405 = vadd.f32 %v6221, %v6397
    %v6406 = vadd.f32 %v6222, %v6398
    %v6407 = vadd.f32 %v6223, %v6399
    %v6408 = vadd.f32 %v6224, %v6400
    %v6409 = vadd.f32 %v6225, %v6401
    %v6410 = vadd.f32 %v6226, %v6402
    %v6411 = vadd.f32 %v6227, %v6403
    %v6412 = vadd.f32 %v6228, %v6404
    %v6413 = vmul.f32 %v6373, %v654
    %v6414 = vmul.f32 %v6374, %v654
    %v6415 = vmul.f32 %v6375, %v654
    %v6416 = vmul.f32 %v6376, %v654
    %v6417 = vmul.f32 %v6377, %v654
    %v6418 = vmul.f32 %v6378, %v654
    %v6419 = vmul.f32 %v6379, %v654
    %v6420 = vmul.f32 %v6380, %v654
    %v6421 = vadd.f32 %v6269, %v6413
    %v6422 = vadd.f32 %v6270, %v6414
    %v6423 = vadd.f32 %v6271, %v6415
    %v6424 = vadd.f32 %v6272, %v6416
    %v6425 = vadd.f32 %v6273, %v6417
    %v6426 = vadd.f32 %v6274, %v6418
    %v6427 = vadd.f32 %v6275, %v6419
    %v6428 = vadd.f32 %v6276, %v6420
    %v6429 = vmul.f32 %v6373, %v671
    %v6430 = vmul.f32 %v6374, %v671
    %v6431 = vmul.f32 %v6375, %v671
    %v6432 = vmul.f32 %v6376, %v671
    %v6433 = vmul.f32 %v6377, %v671
    %v6434 = vmul.f32 %v6378, %v671
    %v6435 = vmul.f32 %v6379, %v671
    %v6436 = vmul.f32 %v6380, %v671
    %v6437 = vadd.f32 %v6317, %v6429
    %v6438 = vadd.f32 %v6318, %v6430
    %v6439 = vadd.f32 %v6319, %v6431
    %v6440 = vadd.f32 %v6320, %v6432
    %v6441 = vadd.f32 %v6321, %v6433
    %v6442 = vadd.f32 %v6322, %v6434
    %v6443 = vadd.f32 %v6323, %v6435
    %v6444 = vadd.f32 %v6324, %v6436
    %v6445 = vmul.f32 %v6373, %v688
    %v6446 = vmul.f32 %v6374, %v688
    %v6447 = vmul.f32 %v6375, %v688
    %v6448 = vmul.f32 %v6376, %v688
    %v6449 = vmul.f32 %v6377, %v688
    %v6450 = vmul.f32 %v6378, %v688
    %v6451 = vmul.f32 %v6379, %v688
    %v6452 = vmul.f32 %v6380, %v688
    %v6453 = vadd.f32 %v6365, %v6445
    %v6454 = vadd.f32 %v6366, %v6446
    %v6455 = vadd.f32 %v6367, %v6447
    %v6456 = vadd.f32 %v6368, %v6448
    %v6457 = vadd.f32 %v6369, %v6449
    %v6458 = vadd.f32 %v6370, %v6450
    %v6459 = vadd.f32 %v6371, %v6451
    %v6460 = vadd.f32 %v6372, %v6452
    %v6461 = vmul.f32 %v6373, %v705
    %v6462 = vmul.f32 %v6374, %v705
    %v6463 = vmul.f32 %v6375, %v705
    %v6464 = vmul.f32 %v6376, %v705
    %v6465 = vmul.f32 %v6377, %v705
    %v6466 = vmul.f32 %v6378, %v705
    %v6467 = vmul.f32 %v6379, %v705
    %v6468 = vmul.f32 %v6380, %v705
    %6477 = vrot.lane.b32.xlu0 %v6461, 126
    %v6478 = vpop.permute.xlu0 %6477
    %6479 = vrot.lane.b32.xlu0 %v6462, 126
    %v6480 = vpop.permute.xlu0 %6479
    %6481 = vrot.lane.b32.xlu0 %v6463, 126
    %v6482 = vpop.permute.xlu0 %6481
    %6483 = vrot.lane.b32.xlu0 %v6464, 126
    %v6484 = vpop.permute.xlu0 %6483
    %6485 = vrot.lane.b32.xlu0 %v6465, 126
    %v6486 = vpop.permute.xlu0 %6485
    %6487 = vrot.lane.b32.xlu0 %v6466, 126
    %v6488 = vpop.permute.xlu0 %6487
    %6489 = vrot.lane.b32.xlu0 %v6467, 126
    %v6490 = vpop.permute.xlu0 %6489
    %6491 = vrot.lane.b32.xlu0 %v6468, 126
    %v6492 = vpop.permute.xlu0 %6491
    %v6501 = vadd.f32 %v6389, %v6478
    %v6502 = vadd.f32 %v6390, %v6480
    %v6503 = vadd.f32 %v6391, %v6482
    %v6504 = vadd.f32 %v6392, %v6484
    %v6505 = vadd.f32 %v6393, %v6486
    %v6506 = vadd.f32 %v6394, %v6488
    %v6507 = vadd.f32 %v6395, %v6490
    %v6508 = vadd.f32 %v6396, %v6492
    %v6509 = vmul.f32 %v6373, %v754
    %v6510 = vmul.f32 %v6374, %v754
    %v6511 = vmul.f32 %v6375, %v754
    %v6512 = vmul.f32 %v6376, %v754
    %v6513 = vmul.f32 %v6377, %v754
    %v6514 = vmul.f32 %v6378, %v754
    %v6515 = vmul.f32 %v6379, %v754
    %v6516 = vmul.f32 %v6380, %v754
    %6525 = vrot.lane.b32.xlu0 %v6509, 126
    %v6526 = vpop.permute.xlu0 %6525
    %6527 = vrot.lane.b32.xlu0 %v6510, 126
    %v6528 = vpop.permute.xlu0 %6527
    %6529 = vrot.lane.b32.xlu0 %v6511, 126
    %v6530 = vpop.permute.xlu0 %6529
    %6531 = vrot.lane.b32.xlu0 %v6512, 126
    %v6532 = vpop.permute.xlu0 %6531
    %6533 = vrot.lane.b32.xlu0 %v6513, 126
    %v6534 = vpop.permute.xlu0 %6533
    %6535 = vrot.lane.b32.xlu0 %v6514, 126
    %v6536 = vpop.permute.xlu0 %6535
    %6537 = vrot.lane.b32.xlu0 %v6515, 126
    %v6538 = vpop.permute.xlu0 %6537
    %6539 = vrot.lane.b32.xlu0 %v6516, 126
    %v6540 = vpop.permute.xlu0 %6539
    %v6549 = vadd.f32 %v6405, %v6526
    %v6550 = vadd.f32 %v6406, %v6528
    %v6551 = vadd.f32 %v6407, %v6530
    %v6552 = vadd.f32 %v6408, %v6532
    %v6553 = vadd.f32 %v6409, %v6534
    %v6554 = vadd.f32 %v6410, %v6536
    %v6555 = vadd.f32 %v6411, %v6538
    %v6556 = vadd.f32 %v6412, %v6540
    %v6557 = vmul.f32 %v6373, %v803
    %v6558 = vmul.f32 %v6374, %v803
    %v6559 = vmul.f32 %v6375, %v803
    %v6560 = vmul.f32 %v6376, %v803
    %v6561 = vmul.f32 %v6377, %v803
    %v6562 = vmul.f32 %v6378, %v803
    %v6563 = vmul.f32 %v6379, %v803
    %v6564 = vmul.f32 %v6380, %v803
    %6573 = vrot.lane.b32.xlu0 %v6557, 126
    %v6574 = vpop.permute.xlu0 %6573
    %6575 = vrot.lane.b32.xlu0 %v6558, 126
    %v6576 = vpop.permute.xlu0 %6575
    %6577 = vrot.lane.b32.xlu0 %v6559, 126
    %v6578 = vpop.permute.xlu0 %6577
    %6579 = vrot.lane.b32.xlu0 %v6560, 126
    %v6580 = vpop.permute.xlu0 %6579
    %6581 = vrot.lane.b32.xlu0 %v6561, 126
    %v6582 = vpop.permute.xlu0 %6581
    %6583 = vrot.lane.b32.xlu0 %v6562, 126
    %v6584 = vpop.permute.xlu0 %6583
    %6585 = vrot.lane.b32.xlu0 %v6563, 126
    %v6586 = vpop.permute.xlu0 %6585
    %6587 = vrot.lane.b32.xlu0 %v6564, 126
    %v6588 = vpop.permute.xlu0 %6587
    %v6597 = vadd.f32 %v6421, %v6574
    %v6598 = vadd.f32 %v6422, %v6576
    %v6599 = vadd.f32 %v6423, %v6578
    %v6600 = vadd.f32 %v6424, %v6580
    %v6601 = vadd.f32 %v6425, %v6582
    %v6602 = vadd.f32 %v6426, %v6584
    %v6603 = vadd.f32 %v6427, %v6586
    %v6604 = vadd.f32 %v6428, %v6588
    %v6605 = vmul.f32 %v6373, %v852
    %v6606 = vmul.f32 %v6374, %v852
    %v6607 = vmul.f32 %v6375, %v852
    %v6608 = vmul.f32 %v6376, %v852
    %v6609 = vmul.f32 %v6377, %v852
    %v6610 = vmul.f32 %v6378, %v852
    %v6611 = vmul.f32 %v6379, %v852
    %v6612 = vmul.f32 %v6380, %v852
    %6621 = vrot.lane.b32.xlu0 %v6605, 126
    %v6622 = vpop.permute.xlu0 %6621
    %6623 = vrot.lane.b32.xlu0 %v6606, 126
    %v6624 = vpop.permute.xlu0 %6623
    %6625 = vrot.lane.b32.xlu0 %v6607, 126
    %v6626 = vpop.permute.xlu0 %6625
    %6627 = vrot.lane.b32.xlu0 %v6608, 126
    %v6628 = vpop.permute.xlu0 %6627
    %6629 = vrot.lane.b32.xlu0 %v6609, 126
    %v6630 = vpop.permute.xlu0 %6629
    %6631 = vrot.lane.b32.xlu0 %v6610, 126
    %v6632 = vpop.permute.xlu0 %6631
    %6633 = vrot.lane.b32.xlu0 %v6611, 126
    %v6634 = vpop.permute.xlu0 %6633
    %6635 = vrot.lane.b32.xlu0 %v6612, 126
    %v6636 = vpop.permute.xlu0 %6635
    %v6645 = vadd.f32 %v6437, %v6622
    %v6646 = vadd.f32 %v6438, %v6624
    %v6647 = vadd.f32 %v6439, %v6626
    %v6648 = vadd.f32 %v6440, %v6628
    %v6649 = vadd.f32 %v6441, %v6630
    %v6650 = vadd.f32 %v6442, %v6632
    %v6651 = vadd.f32 %v6443, %v6634
    %v6652 = vadd.f32 %v6444, %v6636
    %v6653 = vmul.f32 %v6373, %v901
    %v6654 = vmul.f32 %v6374, %v901
    %v6655 = vmul.f32 %v6375, %v901
    %v6656 = vmul.f32 %v6376, %v901
    %v6657 = vmul.f32 %v6377, %v901
    %v6658 = vmul.f32 %v6378, %v901
    %v6659 = vmul.f32 %v6379, %v901
    %v6660 = vmul.f32 %v6380, %v901
    %6669 = vrot.lane.b32.xlu0 %v6653, 126
    %v6670 = vpop.permute.xlu0 %6669
    %6671 = vrot.lane.b32.xlu0 %v6654, 126
    %v6672 = vpop.permute.xlu0 %6671
    %6673 = vrot.lane.b32.xlu0 %v6655, 126
    %v6674 = vpop.permute.xlu0 %6673
    %6675 = vrot.lane.b32.xlu0 %v6656, 126
    %v6676 = vpop.permute.xlu0 %6675
    %6677 = vrot.lane.b32.xlu0 %v6657, 126
    %v6678 = vpop.permute.xlu0 %6677
    %6679 = vrot.lane.b32.xlu0 %v6658, 126
    %v6680 = vpop.permute.xlu0 %6679
    %6681 = vrot.lane.b32.xlu0 %v6659, 126
    %v6682 = vpop.permute.xlu0 %6681
    %6683 = vrot.lane.b32.xlu0 %v6660, 126
    %v6684 = vpop.permute.xlu0 %6683
    %v6693 = vadd.f32 %v6453, %v6670
    %v6694 = vadd.f32 %v6454, %v6672
    %v6695 = vadd.f32 %v6455, %v6674
    %v6696 = vadd.f32 %v6456, %v6676
    %v6697 = vadd.f32 %v6457, %v6678
    %v6698 = vadd.f32 %v6458, %v6680
    %v6699 = vadd.f32 %v6459, %v6682
    %v6700 = vadd.f32 %v6460, %v6684
    %v6701 = vmul.f32 %v6373, %v950
    %v6702 = vmul.f32 %v6374, %v950
    %v6703 = vmul.f32 %v6375, %v950
    %v6704 = vmul.f32 %v6376, %v950
    %v6705 = vmul.f32 %v6377, %v950
    %v6706 = vmul.f32 %v6378, %v950
    %v6707 = vmul.f32 %v6379, %v950
    %v6708 = vmul.f32 %v6380, %v950
    %6717 = vrot.lane.b32.xlu0 %v6701, 124
    %v6718 = vpop.permute.xlu0 %6717
    %6719 = vrot.lane.b32.xlu0 %v6702, 124
    %v6720 = vpop.permute.xlu0 %6719
    %6721 = vrot.lane.b32.xlu0 %v6703, 124
    %v6722 = vpop.permute.xlu0 %6721
    %6723 = vrot.lane.b32.xlu0 %v6704, 124
    %v6724 = vpop.permute.xlu0 %6723
    %6725 = vrot.lane.b32.xlu0 %v6705, 124
    %v6726 = vpop.permute.xlu0 %6725
    %6727 = vrot.lane.b32.xlu0 %v6706, 124
    %v6728 = vpop.permute.xlu0 %6727
    %6729 = vrot.lane.b32.xlu0 %v6707, 124
    %v6730 = vpop.permute.xlu0 %6729
    %6731 = vrot.lane.b32.xlu0 %v6708, 124
    %v6732 = vpop.permute.xlu0 %6731
    %v6741 = vadd.f32 %v6501, %v6718
    %v6742 = vadd.f32 %v6502, %v6720
    %v6743 = vadd.f32 %v6503, %v6722
    %v6744 = vadd.f32 %v6504, %v6724
    %v6745 = vadd.f32 %v6505, %v6726
    %v6746 = vadd.f32 %v6506, %v6728
    %v6747 = vadd.f32 %v6507, %v6730
    %v6748 = vadd.f32 %v6508, %v6732
    %v6749 = vmul.f32 %v6373, %v999
    %v6750 = vmul.f32 %v6374, %v999
    %v6751 = vmul.f32 %v6375, %v999
    %v6752 = vmul.f32 %v6376, %v999
    %v6753 = vmul.f32 %v6377, %v999
    %v6754 = vmul.f32 %v6378, %v999
    %v6755 = vmul.f32 %v6379, %v999
    %v6756 = vmul.f32 %v6380, %v999
    %6765 = vrot.lane.b32.xlu0 %v6749, 124
    %v6766 = vpop.permute.xlu0 %6765
    %6767 = vrot.lane.b32.xlu0 %v6750, 124
    %v6768 = vpop.permute.xlu0 %6767
    %6769 = vrot.lane.b32.xlu0 %v6751, 124
    %v6770 = vpop.permute.xlu0 %6769
    %6771 = vrot.lane.b32.xlu0 %v6752, 124
    %v6772 = vpop.permute.xlu0 %6771
    %6773 = vrot.lane.b32.xlu0 %v6753, 124
    %v6774 = vpop.permute.xlu0 %6773
    %6775 = vrot.lane.b32.xlu0 %v6754, 124
    %v6776 = vpop.permute.xlu0 %6775
    %6777 = vrot.lane.b32.xlu0 %v6755, 124
    %v6778 = vpop.permute.xlu0 %6777
    %6779 = vrot.lane.b32.xlu0 %v6756, 124
    %v6780 = vpop.permute.xlu0 %6779
    %v6789 = vadd.f32 %v6549, %v6766
    %v6790 = vadd.f32 %v6550, %v6768
    %v6791 = vadd.f32 %v6551, %v6770
    %v6792 = vadd.f32 %v6552, %v6772
    %v6793 = vadd.f32 %v6553, %v6774
    %v6794 = vadd.f32 %v6554, %v6776
    %v6795 = vadd.f32 %v6555, %v6778
    %v6796 = vadd.f32 %v6556, %v6780
    %v6797 = vmul.f32 %v6373, %v1048
    %v6798 = vmul.f32 %v6374, %v1048
    %v6799 = vmul.f32 %v6375, %v1048
    %v6800 = vmul.f32 %v6376, %v1048
    %v6801 = vmul.f32 %v6377, %v1048
    %v6802 = vmul.f32 %v6378, %v1048
    %v6803 = vmul.f32 %v6379, %v1048
    %v6804 = vmul.f32 %v6380, %v1048
    %6813 = vrot.lane.b32.xlu0 %v6797, 124
    %v6814 = vpop.permute.xlu0 %6813
    %6815 = vrot.lane.b32.xlu0 %v6798, 124
    %v6816 = vpop.permute.xlu0 %6815
    %6817 = vrot.lane.b32.xlu0 %v6799, 124
    %v6818 = vpop.permute.xlu0 %6817
    %6819 = vrot.lane.b32.xlu0 %v6800, 124
    %v6820 = vpop.permute.xlu0 %6819
    %6821 = vrot.lane.b32.xlu0 %v6801, 124
    %v6822 = vpop.permute.xlu0 %6821
    %6823 = vrot.lane.b32.xlu0 %v6802, 124
    %v6824 = vpop.permute.xlu0 %6823
    %6825 = vrot.lane.b32.xlu0 %v6803, 124
    %v6826 = vpop.permute.xlu0 %6825
    %6827 = vrot.lane.b32.xlu0 %v6804, 124
    %v6828 = vpop.permute.xlu0 %6827
    %v6837 = vadd.f32 %v6597, %v6814
    %v6838 = vadd.f32 %v6598, %v6816
    %v6839 = vadd.f32 %v6599, %v6818
    %v6840 = vadd.f32 %v6600, %v6820
    %v6841 = vadd.f32 %v6601, %v6822
    %v6842 = vadd.f32 %v6602, %v6824
    %v6843 = vadd.f32 %v6603, %v6826
    %v6844 = vadd.f32 %v6604, %v6828
    %v6845 = vmul.f32 %v6373, %v1097
    %v6846 = vmul.f32 %v6374, %v1097
    %v6847 = vmul.f32 %v6375, %v1097
    %v6848 = vmul.f32 %v6376, %v1097
    %v6849 = vmul.f32 %v6377, %v1097
    %v6850 = vmul.f32 %v6378, %v1097
    %v6851 = vmul.f32 %v6379, %v1097
    %v6852 = vmul.f32 %v6380, %v1097
    %6861 = vrot.lane.b32.xlu0 %v6845, 124
    %v6862 = vpop.permute.xlu0 %6861
    %6863 = vrot.lane.b32.xlu0 %v6846, 124
    %v6864 = vpop.permute.xlu0 %6863
    %6865 = vrot.lane.b32.xlu0 %v6847, 124
    %v6866 = vpop.permute.xlu0 %6865
    %6867 = vrot.lane.b32.xlu0 %v6848, 124
    %v6868 = vpop.permute.xlu0 %6867
    %6869 = vrot.lane.b32.xlu0 %v6849, 124
    %v6870 = vpop.permute.xlu0 %6869
    %6871 = vrot.lane.b32.xlu0 %v6850, 124
    %v6872 = vpop.permute.xlu0 %6871
    %6873 = vrot.lane.b32.xlu0 %v6851, 124
    %v6874 = vpop.permute.xlu0 %6873
    %6875 = vrot.lane.b32.xlu0 %v6852, 124
    %v6876 = vpop.permute.xlu0 %6875
    %v6885 = vadd.f32 %v6645, %v6862
    %v6886 = vadd.f32 %v6646, %v6864
    %v6887 = vadd.f32 %v6647, %v6866
    %v6888 = vadd.f32 %v6648, %v6868
    %v6889 = vadd.f32 %v6649, %v6870
    %v6890 = vadd.f32 %v6650, %v6872
    %v6891 = vadd.f32 %v6651, %v6874
    %v6892 = vadd.f32 %v6652, %v6876
    %v6893 = vmul.f32 %v6373, %v1146
    %v6894 = vmul.f32 %v6374, %v1146
    %v6895 = vmul.f32 %v6375, %v1146
    %v6896 = vmul.f32 %v6376, %v1146
    %v6897 = vmul.f32 %v6377, %v1146
    %v6898 = vmul.f32 %v6378, %v1146
    %v6899 = vmul.f32 %v6379, %v1146
    %v6900 = vmul.f32 %v6380, %v1146
    %6909 = vrot.lane.b32.xlu0 %v6893, 124
    %v6910 = vpop.permute.xlu0 %6909
    %6911 = vrot.lane.b32.xlu0 %v6894, 124
    %v6912 = vpop.permute.xlu0 %6911
    %6913 = vrot.lane.b32.xlu0 %v6895, 124
    %v6914 = vpop.permute.xlu0 %6913
    %6915 = vrot.lane.b32.xlu0 %v6896, 124
    %v6916 = vpop.permute.xlu0 %6915
    %6917 = vrot.lane.b32.xlu0 %v6897, 124
    %v6918 = vpop.permute.xlu0 %6917
    %6919 = vrot.lane.b32.xlu0 %v6898, 124
    %v6920 = vpop.permute.xlu0 %6919
    %6921 = vrot.lane.b32.xlu0 %v6899, 124
    %v6922 = vpop.permute.xlu0 %6921
    %6923 = vrot.lane.b32.xlu0 %v6900, 124
    %v6924 = vpop.permute.xlu0 %6923
    %v6933 = vadd.f32 %v6693, %v6910
    %v6934 = vadd.f32 %v6694, %v6912
    %v6935 = vadd.f32 %v6695, %v6914
    %v6936 = vadd.f32 %v6696, %v6916
    %v6937 = vadd.f32 %v6697, %v6918
    %v6938 = vadd.f32 %v6698, %v6920
    %v6939 = vadd.f32 %v6699, %v6922
    %v6940 = vadd.f32 %v6700, %v6924
    %v6941 = vld [vmem:[%s5844 + $0x6] sm:$0xff]
    %v6942 = vld [vmem:[%s5844 + $0xe] sm:$0xff]
    %v6943 = vld [vmem:[%s5844 + $0x16] sm:$0xff]
    %v6944 = vld [vmem:[%s5844 + $0x1e] sm:$0xff]
    %v6945 = vld [vmem:[%s5844 + $0x26] sm:$0xff]
    %v6946 = vld [vmem:[%s5844 + $0x2e] sm:$0xff]
    %v6947 = vld [vmem:[%s5844 + $0x36] sm:$0xff]
    %v6948 = vld [vmem:[%s5844 + $0x3e] sm:$0xf]
    %v6949 = vmul.f32 %v6941, %v1203
    %v6950 = vmul.f32 %v6942, %v1203
    %v6951 = vmul.f32 %v6943, %v1203
    %v6952 = vmul.f32 %v6944, %v1203
    %v6953 = vmul.f32 %v6945, %v1203
    %v6954 = vmul.f32 %v6946, %v1203
    %v6955 = vmul.f32 %v6947, %v1203
    %v6956 = vmul.f32 %v6948, %v1203
    %v6957 = vadd.f32 %v6741, %v6949
    %v6958 = vadd.f32 %v6742, %v6950
    %v6959 = vadd.f32 %v6743, %v6951
    %v6960 = vadd.f32 %v6744, %v6952
    %v6961 = vadd.f32 %v6745, %v6953
    %v6962 = vadd.f32 %v6746, %v6954
    %v6963 = vadd.f32 %v6747, %v6955
    %v6964 = vadd.f32 %v6748, %v6956
    %v6965 = vmul.f32 %v6941, %v1220
    %v6966 = vmul.f32 %v6942, %v1220
    %v6967 = vmul.f32 %v6943, %v1220
    %v6968 = vmul.f32 %v6944, %v1220
    %v6969 = vmul.f32 %v6945, %v1220
    %v6970 = vmul.f32 %v6946, %v1220
    %v6971 = vmul.f32 %v6947, %v1220
    %v6972 = vmul.f32 %v6948, %v1220
    %v6973 = vadd.f32 %v6789, %v6965
    %v6974 = vadd.f32 %v6790, %v6966
    %v6975 = vadd.f32 %v6791, %v6967
    %v6976 = vadd.f32 %v6792, %v6968
    %v6977 = vadd.f32 %v6793, %v6969
    %v6978 = vadd.f32 %v6794, %v6970
    %v6979 = vadd.f32 %v6795, %v6971
    %v6980 = vadd.f32 %v6796, %v6972
    %v6981 = vmul.f32 %v6941, %v1237
    %v6982 = vmul.f32 %v6942, %v1237
    %v6983 = vmul.f32 %v6943, %v1237
    %v6984 = vmul.f32 %v6944, %v1237
    %v6985 = vmul.f32 %v6945, %v1237
    %v6986 = vmul.f32 %v6946, %v1237
    %v6987 = vmul.f32 %v6947, %v1237
    %v6988 = vmul.f32 %v6948, %v1237
    %v6989 = vadd.f32 %v6837, %v6981
    %v6990 = vadd.f32 %v6838, %v6982
    %v6991 = vadd.f32 %v6839, %v6983
    %v6992 = vadd.f32 %v6840, %v6984
    %v6993 = vadd.f32 %v6841, %v6985
    %v6994 = vadd.f32 %v6842, %v6986
    %v6995 = vadd.f32 %v6843, %v6987
    %v6996 = vadd.f32 %v6844, %v6988
    %v6997 = vmul.f32 %v6941, %v1254
    %v6998 = vmul.f32 %v6942, %v1254
    %v6999 = vmul.f32 %v6943, %v1254
    %v7000 = vmul.f32 %v6944, %v1254
    %v7001 = vmul.f32 %v6945, %v1254
    %v7002 = vmul.f32 %v6946, %v1254
    %v7003 = vmul.f32 %v6947, %v1254
    %v7004 = vmul.f32 %v6948, %v1254
    %v7005 = vadd.f32 %v6885, %v6997
    %v7006 = vadd.f32 %v6886, %v6998
    %v7007 = vadd.f32 %v6887, %v6999
    %v7008 = vadd.f32 %v6888, %v7000
    %v7009 = vadd.f32 %v6889, %v7001
    %v7010 = vadd.f32 %v6890, %v7002
    %v7011 = vadd.f32 %v6891, %v7003
    %v7012 = vadd.f32 %v6892, %v7004
    %v7013 = vmul.f32 %v6941, %v1271
    %v7014 = vmul.f32 %v6942, %v1271
    %v7015 = vmul.f32 %v6943, %v1271
    %v7016 = vmul.f32 %v6944, %v1271
    %v7017 = vmul.f32 %v6945, %v1271
    %v7018 = vmul.f32 %v6946, %v1271
    %v7019 = vmul.f32 %v6947, %v1271
    %v7020 = vmul.f32 %v6948, %v1271
    %v7021 = vadd.f32 %v6933, %v7013
    %v7022 = vadd.f32 %v6934, %v7014
    %v7023 = vadd.f32 %v6935, %v7015
    %v7024 = vadd.f32 %v6936, %v7016
    %v7025 = vadd.f32 %v6937, %v7017
    %v7026 = vadd.f32 %v6938, %v7018
    %v7027 = vadd.f32 %v6939, %v7019
    %v7028 = vadd.f32 %v6940, %v7020
    %v7029 = vmul.f32 %v6941, %v1288
    %v7030 = vmul.f32 %v6942, %v1288
    %v7031 = vmul.f32 %v6943, %v1288
    %v7032 = vmul.f32 %v6944, %v1288
    %v7033 = vmul.f32 %v6945, %v1288
    %v7034 = vmul.f32 %v6946, %v1288
    %v7035 = vmul.f32 %v6947, %v1288
    %v7036 = vmul.f32 %v6948, %v1288
    %7045 = vrot.lane.b32.xlu0 %v7029, 126
    %v7046 = vpop.permute.xlu0 %7045
    %7047 = vrot.lane.b32.xlu0 %v7030, 126
    %v7048 = vpop.permute.xlu0 %7047
    %7049 = vrot.lane.b32.xlu0 %v7031, 126
    %v7050 = vpop.permute.xlu0 %7049
    %7051 = vrot.lane.b32.xlu0 %v7032, 126
    %v7052 = vpop.permute.xlu0 %7051
    %7053 = vrot.lane.b32.xlu0 %v7033, 126
    %v7054 = vpop.permute.xlu0 %7053
    %7055 = vrot.lane.b32.xlu0 %v7034, 126
    %v7056 = vpop.permute.xlu0 %7055
    %7057 = vrot.lane.b32.xlu0 %v7035, 126
    %v7058 = vpop.permute.xlu0 %7057
    %7059 = vrot.lane.b32.xlu0 %v7036, 126
    %v7060 = vpop.permute.xlu0 %7059
    %v7069 = vadd.f32 %v6957, %v7046
    %v7070 = vadd.f32 %v6958, %v7048
    %v7071 = vadd.f32 %v6959, %v7050
    %v7072 = vadd.f32 %v6960, %v7052
    %v7073 = vadd.f32 %v6961, %v7054
    %v7074 = vadd.f32 %v6962, %v7056
    %v7075 = vadd.f32 %v6963, %v7058
    %v7076 = vadd.f32 %v6964, %v7060
    %v7077 = vmul.f32 %v6941, %v1337
    %v7078 = vmul.f32 %v6942, %v1337
    %v7079 = vmul.f32 %v6943, %v1337
    %v7080 = vmul.f32 %v6944, %v1337
    %v7081 = vmul.f32 %v6945, %v1337
    %v7082 = vmul.f32 %v6946, %v1337
    %v7083 = vmul.f32 %v6947, %v1337
    %v7084 = vmul.f32 %v6948, %v1337
    %7093 = vrot.lane.b32.xlu0 %v7077, 126
    %v7094 = vpop.permute.xlu0 %7093
    %7095 = vrot.lane.b32.xlu0 %v7078, 126
    %v7096 = vpop.permute.xlu0 %7095
    %7097 = vrot.lane.b32.xlu0 %v7079, 126
    %v7098 = vpop.permute.xlu0 %7097
    %7099 = vrot.lane.b32.xlu0 %v7080, 126
    %v7100 = vpop.permute.xlu0 %7099
    %7101 = vrot.lane.b32.xlu0 %v7081, 126
    %v7102 = vpop.permute.xlu0 %7101
    %7103 = vrot.lane.b32.xlu0 %v7082, 126
    %v7104 = vpop.permute.xlu0 %7103
    %7105 = vrot.lane.b32.xlu0 %v7083, 126
    %v7106 = vpop.permute.xlu0 %7105
    %7107 = vrot.lane.b32.xlu0 %v7084, 126
    %v7108 = vpop.permute.xlu0 %7107
    %v7117 = vadd.f32 %v6973, %v7094
    %v7118 = vadd.f32 %v6974, %v7096
    %v7119 = vadd.f32 %v6975, %v7098
    %v7120 = vadd.f32 %v6976, %v7100
    %v7121 = vadd.f32 %v6977, %v7102
    %v7122 = vadd.f32 %v6978, %v7104
    %v7123 = vadd.f32 %v6979, %v7106
    %v7124 = vadd.f32 %v6980, %v7108
    %v7125 = vmul.f32 %v6941, %v1386
    %v7126 = vmul.f32 %v6942, %v1386
    %v7127 = vmul.f32 %v6943, %v1386
    %v7128 = vmul.f32 %v6944, %v1386
    %v7129 = vmul.f32 %v6945, %v1386
    %v7130 = vmul.f32 %v6946, %v1386
    %v7131 = vmul.f32 %v6947, %v1386
    %v7132 = vmul.f32 %v6948, %v1386
    %7141 = vrot.lane.b32.xlu0 %v7125, 126
    %v7142 = vpop.permute.xlu0 %7141
    %7143 = vrot.lane.b32.xlu0 %v7126, 126
    %v7144 = vpop.permute.xlu0 %7143
    %7145 = vrot.lane.b32.xlu0 %v7127, 126
    %v7146 = vpop.permute.xlu0 %7145
    %7147 = vrot.lane.b32.xlu0 %v7128, 126
    %v7148 = vpop.permute.xlu0 %7147
    %7149 = vrot.lane.b32.xlu0 %v7129, 126
    %v7150 = vpop.permute.xlu0 %7149
    %7151 = vrot.lane.b32.xlu0 %v7130, 126
    %v7152 = vpop.permute.xlu0 %7151
    %7153 = vrot.lane.b32.xlu0 %v7131, 126
    %v7154 = vpop.permute.xlu0 %7153
    %7155 = vrot.lane.b32.xlu0 %v7132, 126
    %v7156 = vpop.permute.xlu0 %7155
    %v7165 = vadd.f32 %v6989, %v7142
    %v7166 = vadd.f32 %v6990, %v7144
    %v7167 = vadd.f32 %v6991, %v7146
    %v7168 = vadd.f32 %v6992, %v7148
    %v7169 = vadd.f32 %v6993, %v7150
    %v7170 = vadd.f32 %v6994, %v7152
    %v7171 = vadd.f32 %v6995, %v7154
    %v7172 = vadd.f32 %v6996, %v7156
    %v7173 = vmul.f32 %v6941, %v1435
    %v7174 = vmul.f32 %v6942, %v1435
    %v7175 = vmul.f32 %v6943, %v1435
    %v7176 = vmul.f32 %v6944, %v1435
    %v7177 = vmul.f32 %v6945, %v1435
    %v7178 = vmul.f32 %v6946, %v1435
    %v7179 = vmul.f32 %v6947, %v1435
    %v7180 = vmul.f32 %v6948, %v1435
    %7189 = vrot.lane.b32.xlu0 %v7173, 126
    %v7190 = vpop.permute.xlu0 %7189
    %7191 = vrot.lane.b32.xlu0 %v7174, 126
    %v7192 = vpop.permute.xlu0 %7191
    %7193 = vrot.lane.b32.xlu0 %v7175, 126
    %v7194 = vpop.permute.xlu0 %7193
    %7195 = vrot.lane.b32.xlu0 %v7176, 126
    %v7196 = vpop.permute.xlu0 %7195
    %7197 = vrot.lane.b32.xlu0 %v7177, 126
    %v7198 = vpop.permute.xlu0 %7197
    %7199 = vrot.lane.b32.xlu0 %v7178, 126
    %v7200 = vpop.permute.xlu0 %7199
    %7201 = vrot.lane.b32.xlu0 %v7179, 126
    %v7202 = vpop.permute.xlu0 %7201
    %7203 = vrot.lane.b32.xlu0 %v7180, 126
    %v7204 = vpop.permute.xlu0 %7203
    %v7213 = vadd.f32 %v7005, %v7190
    %v7214 = vadd.f32 %v7006, %v7192
    %v7215 = vadd.f32 %v7007, %v7194
    %v7216 = vadd.f32 %v7008, %v7196
    %v7217 = vadd.f32 %v7009, %v7198
    %v7218 = vadd.f32 %v7010, %v7200
    %v7219 = vadd.f32 %v7011, %v7202
    %v7220 = vadd.f32 %v7012, %v7204
    %v7221 = vmul.f32 %v6941, %v1484
    %v7222 = vmul.f32 %v6942, %v1484
    %v7223 = vmul.f32 %v6943, %v1484
    %v7224 = vmul.f32 %v6944, %v1484
    %v7225 = vmul.f32 %v6945, %v1484
    %v7226 = vmul.f32 %v6946, %v1484
    %v7227 = vmul.f32 %v6947, %v1484
    %v7228 = vmul.f32 %v6948, %v1484
    %7237 = vrot.lane.b32.xlu0 %v7221, 126
    %v7238 = vpop.permute.xlu0 %7237
    %7239 = vrot.lane.b32.xlu0 %v7222, 126
    %v7240 = vpop.permute.xlu0 %7239
    %7241 = vrot.lane.b32.xlu0 %v7223, 126
    %v7242 = vpop.permute.xlu0 %7241
    %7243 = vrot.lane.b32.xlu0 %v7224, 126
    %v7244 = vpop.permute.xlu0 %7243
    %7245 = vrot.lane.b32.xlu0 %v7225, 126
    %v7246 = vpop.permute.xlu0 %7245
    %7247 = vrot.lane.b32.xlu0 %v7226, 126
    %v7248 = vpop.permute.xlu0 %7247
    %7249 = vrot.lane.b32.xlu0 %v7227, 126
    %v7250 = vpop.permute.xlu0 %7249
    %7251 = vrot.lane.b32.xlu0 %v7228, 126
    %v7252 = vpop.permute.xlu0 %7251
    %v7261 = vadd.f32 %v7021, %v7238
    %v7262 = vadd.f32 %v7022, %v7240
    %v7263 = vadd.f32 %v7023, %v7242
    %v7264 = vadd.f32 %v7024, %v7244
    %v7265 = vadd.f32 %v7025, %v7246
    %v7266 = vadd.f32 %v7026, %v7248
    %v7267 = vadd.f32 %v7027, %v7250
    %v7268 = vadd.f32 %v7028, %v7252
    %v7269 = vmul.f32 %v6941, %v1533
    %v7270 = vmul.f32 %v6942, %v1533
    %v7271 = vmul.f32 %v6943, %v1533
    %v7272 = vmul.f32 %v6944, %v1533
    %v7273 = vmul.f32 %v6945, %v1533
    %v7274 = vmul.f32 %v6946, %v1533
    %v7275 = vmul.f32 %v6947, %v1533
    %v7276 = vmul.f32 %v6948, %v1533
    %7285 = vrot.lane.b32.xlu0 %v7269, 124
    %v7286 = vpop.permute.xlu0 %7285
    %7287 = vrot.lane.b32.xlu0 %v7270, 124
    %v7288 = vpop.permute.xlu0 %7287
    %7289 = vrot.lane.b32.xlu0 %v7271, 124
    %v7290 = vpop.permute.xlu0 %7289
    %7291 = vrot.lane.b32.xlu0 %v7272, 124
    %v7292 = vpop.permute.xlu0 %7291
    %7293 = vrot.lane.b32.xlu0 %v7273, 124
    %v7294 = vpop.permute.xlu0 %7293
    %7295 = vrot.lane.b32.xlu0 %v7274, 124
    %v7296 = vpop.permute.xlu0 %7295
    %7297 = vrot.lane.b32.xlu0 %v7275, 124
    %v7298 = vpop.permute.xlu0 %7297
    %7299 = vrot.lane.b32.xlu0 %v7276, 124
    %v7300 = vpop.permute.xlu0 %7299
    %v7309 = vadd.f32 %v7069, %v7286
    %v7310 = vadd.f32 %v7070, %v7288
    %v7311 = vadd.f32 %v7071, %v7290
    %v7312 = vadd.f32 %v7072, %v7292
    %v7313 = vadd.f32 %v7073, %v7294
    %v7314 = vadd.f32 %v7074, %v7296
    %v7315 = vadd.f32 %v7075, %v7298
    %v7316 = vadd.f32 %v7076, %v7300
    %v7317 = vmul.f32 %v6941, %v1582
    %v7318 = vmul.f32 %v6942, %v1582
    %v7319 = vmul.f32 %v6943, %v1582
    %v7320 = vmul.f32 %v6944, %v1582
    %v7321 = vmul.f32 %v6945, %v1582
    %v7322 = vmul.f32 %v6946, %v1582
    %v7323 = vmul.f32 %v6947, %v1582
    %v7324 = vmul.f32 %v6948, %v1582
    %7333 = vrot.lane.b32.xlu0 %v7317, 124
    %v7334 = vpop.permute.xlu0 %7333
    %7335 = vrot.lane.b32.xlu0 %v7318, 124
    %v7336 = vpop.permute.xlu0 %7335
    %7337 = vrot.lane.b32.xlu0 %v7319, 124
    %v7338 = vpop.permute.xlu0 %7337
    %7339 = vrot.lane.b32.xlu0 %v7320, 124
    %v7340 = vpop.permute.xlu0 %7339
    %7341 = vrot.lane.b32.xlu0 %v7321, 124
    %v7342 = vpop.permute.xlu0 %7341
    %7343 = vrot.lane.b32.xlu0 %v7322, 124
    %v7344 = vpop.permute.xlu0 %7343
    %7345 = vrot.lane.b32.xlu0 %v7323, 124
    %v7346 = vpop.permute.xlu0 %7345
    %7347 = vrot.lane.b32.xlu0 %v7324, 124
    %v7348 = vpop.permute.xlu0 %7347
    %v7357 = vadd.f32 %v7117, %v7334
    %v7358 = vadd.f32 %v7118, %v7336
    %v7359 = vadd.f32 %v7119, %v7338
    %v7360 = vadd.f32 %v7120, %v7340
    %v7361 = vadd.f32 %v7121, %v7342
    %v7362 = vadd.f32 %v7122, %v7344
    %v7363 = vadd.f32 %v7123, %v7346
    %v7364 = vadd.f32 %v7124, %v7348
    %v7365 = vmul.f32 %v6941, %v1631
    %v7366 = vmul.f32 %v6942, %v1631
    %v7367 = vmul.f32 %v6943, %v1631
    %v7368 = vmul.f32 %v6944, %v1631
    %v7369 = vmul.f32 %v6945, %v1631
    %v7370 = vmul.f32 %v6946, %v1631
    %v7371 = vmul.f32 %v6947, %v1631
    %v7372 = vmul.f32 %v6948, %v1631
    %7381 = vrot.lane.b32.xlu0 %v7365, 124
    %v7382 = vpop.permute.xlu0 %7381
    %7383 = vrot.lane.b32.xlu0 %v7366, 124
    %v7384 = vpop.permute.xlu0 %7383
    %7385 = vrot.lane.b32.xlu0 %v7367, 124
    %v7386 = vpop.permute.xlu0 %7385
    %7387 = vrot.lane.b32.xlu0 %v7368, 124
    %v7388 = vpop.permute.xlu0 %7387
    %7389 = vrot.lane.b32.xlu0 %v7369, 124
    %v7390 = vpop.permute.xlu0 %7389
    %7391 = vrot.lane.b32.xlu0 %v7370, 124
    %v7392 = vpop.permute.xlu0 %7391
    %7393 = vrot.lane.b32.xlu0 %v7371, 124
    %v7394 = vpop.permute.xlu0 %7393
    %7395 = vrot.lane.b32.xlu0 %v7372, 124
    %v7396 = vpop.permute.xlu0 %7395
    %v7405 = vadd.f32 %v7165, %v7382
    %v7406 = vadd.f32 %v7166, %v7384
    %v7407 = vadd.f32 %v7167, %v7386
    %v7408 = vadd.f32 %v7168, %v7388
    %v7409 = vadd.f32 %v7169, %v7390
    %v7410 = vadd.f32 %v7170, %v7392
    %v7411 = vadd.f32 %v7171, %v7394
    %v7412 = vadd.f32 %v7172, %v7396
    %v7413 = vmul.f32 %v6941, %v1680
    %v7414 = vmul.f32 %v6942, %v1680
    %v7415 = vmul.f32 %v6943, %v1680
    %v7416 = vmul.f32 %v6944, %v1680
    %v7417 = vmul.f32 %v6945, %v1680
    %v7418 = vmul.f32 %v6946, %v1680
    %v7419 = vmul.f32 %v6947, %v1680
    %v7420 = vmul.f32 %v6948, %v1680
    %7429 = vrot.lane.b32.xlu0 %v7413, 124
    %v7430 = vpop.permute.xlu0 %7429
    %7431 = vrot.lane.b32.xlu0 %v7414, 124
    %v7432 = vpop.permute.xlu0 %7431
    %7433 = vrot.lane.b32.xlu0 %v7415, 124
    %v7434 = vpop.permute.xlu0 %7433
    %7435 = vrot.lane.b32.xlu0 %v7416, 124
    %v7436 = vpop.permute.xlu0 %7435
    %7437 = vrot.lane.b32.xlu0 %v7417, 124
    %v7438 = vpop.permute.xlu0 %7437
    %7439 = vrot.lane.b32.xlu0 %v7418, 124
    %v7440 = vpop.permute.xlu0 %7439
    %7441 = vrot.lane.b32.xlu0 %v7419, 124
    %v7442 = vpop.permute.xlu0 %7441
    %7443 = vrot.lane.b32.xlu0 %v7420, 124
    %v7444 = vpop.permute.xlu0 %7443
    %v7453 = vadd.f32 %v7213, %v7430
    %v7454 = vadd.f32 %v7214, %v7432
    %v7455 = vadd.f32 %v7215, %v7434
    %v7456 = vadd.f32 %v7216, %v7436
    %v7457 = vadd.f32 %v7217, %v7438
    %v7458 = vadd.f32 %v7218, %v7440
    %v7459 = vadd.f32 %v7219, %v7442
    %v7460 = vadd.f32 %v7220, %v7444
    %v7461 = vmul.f32 %v6941, %v1729
    %v7462 = vmul.f32 %v6942, %v1729
    %v7463 = vmul.f32 %v6943, %v1729
    %v7464 = vmul.f32 %v6944, %v1729
    %v7465 = vmul.f32 %v6945, %v1729
    %v7466 = vmul.f32 %v6946, %v1729
    %v7467 = vmul.f32 %v6947, %v1729
    %v7468 = vmul.f32 %v6948, %v1729
    %7477 = vrot.lane.b32.xlu0 %v7461, 124
    %v7478 = vpop.permute.xlu0 %7477
    %7479 = vrot.lane.b32.xlu0 %v7462, 124
    %v7480 = vpop.permute.xlu0 %7479
    %7481 = vrot.lane.b32.xlu0 %v7463, 124
    %v7482 = vpop.permute.xlu0 %7481
    %7483 = vrot.lane.b32.xlu0 %v7464, 124
    %v7484 = vpop.permute.xlu0 %7483
    %7485 = vrot.lane.b32.xlu0 %v7465, 124
    %v7486 = vpop.permute.xlu0 %7485
    %7487 = vrot.lane.b32.xlu0 %v7466, 124
    %v7488 = vpop.permute.xlu0 %7487
    %7489 = vrot.lane.b32.xlu0 %v7467, 124
    %v7490 = vpop.permute.xlu0 %7489
    %7491 = vrot.lane.b32.xlu0 %v7468, 124
    %v7492 = vpop.permute.xlu0 %7491
    %v7501 = vadd.f32 %v7261, %v7478
    %v7502 = vadd.f32 %v7262, %v7480
    %v7503 = vadd.f32 %v7263, %v7482
    %v7504 = vadd.f32 %v7264, %v7484
    %v7505 = vadd.f32 %v7265, %v7486
    %v7506 = vadd.f32 %v7266, %v7488
    %v7507 = vadd.f32 %v7267, %v7490
    %v7508 = vadd.f32 %v7268, %v7492
    %vm7509 = vcmp.gt.f32.partialorder %v7309, 0.0
    %vm7510 = vcmp.gt.f32.partialorder %v7310, 0.0
    %vm7511 = vcmp.gt.f32.partialorder %v7311, 0.0
    %vm7512 = vcmp.gt.f32.partialorder %v7312, 0.0
    %vm7513 = vcmp.gt.f32.partialorder %v7313, 0.0
    %vm7514 = vcmp.gt.f32.partialorder %v7314, 0.0
    %vm7515 = vcmp.gt.f32.partialorder %v7315, 0.0
    %vm7516 = vcmp.gt.f32.partialorder %v7316, 0.0
    %v7517 = vmul.f32 %v7309, 0.345
    %v7518 = vmul.f32 %v7310, 0.345
    %v7519 = vmul.f32 %v7311, 0.345
    %v7520 = vmul.f32 %v7312, 0.345
    %v7521 = vmul.f32 %v7313, 0.345
    %v7522 = vmul.f32 %v7314, 0.345
    %v7523 = vmul.f32 %v7315, 0.345
    %v7524 = vmul.f32 %v7316, 0.345
    %v7525 = vsel %vm7509, %v7309, %v7517
    %v7526 = vsel %vm7510, %v7310, %v7518
    %v7527 = vsel %vm7511, %v7311, %v7519
    %v7528 = vsel %vm7512, %v7312, %v7520
    %v7529 = vsel %vm7513, %v7313, %v7521
    %v7530 = vsel %vm7514, %v7314, %v7522
    %v7531 = vsel %vm7515, %v7315, %v7523
    %v7532 = vsel %vm7516, %v7316, %v7524
    %v7533 = vtanh.pop %v7525
    %v7534 = vtanh.pop %v7526
    %v7535 = vtanh.pop %v7527
    %v7536 = vtanh.pop %v7528
    %v7537 = vtanh.pop %v7529
    %v7538 = vtanh.pop %v7530
    %v7539 = vtanh.pop %v7531
    %v7540 = vtanh.pop %v7532
    %v7541 = vmul.f32 %v7533, %v7533
    %v7542 = vmul.f32 %v7534, %v7534
    %v7543 = vmul.f32 %v7535, %v7535
    %v7544 = vmul.f32 %v7536, %v7536
    %v7545 = vmul.f32 %v7537, %v7537
    %v7546 = vmul.f32 %v7538, %v7538
    %v7547 = vmul.f32 %v7539, %v7539
    %v7548 = vmul.f32 %v7540, %v7540
    %s7549 = scalar_lea.vmem %s2, 960
    %7550 = vst.msk [vmem:[%s7549] sm:$0xff] %vm1818, %v7541
    %7551 = vst.msk [vmem:[%s7549 + $0x8] sm:$0xff] %vm1818, %v7542
    %7552 = vst.msk [vmem:[%s7549 + $0x10] sm:$0xff] %vm1818, %v7543
    %7553 = vst.msk [vmem:[%s7549 + $0x18] sm:$0xff] %vm1818, %v7544
    %7554 = vst.msk [vmem:[%s7549 + $0x20] sm:$0xff] %vm1818, %v7545
    %7555 = vst.msk [vmem:[%s7549 + $0x28] sm:$0xff] %vm1818, %v7546
    %7556 = vst.msk [vmem:[%s7549 + $0x30] sm:$0xff] %vm1818, %v7547
    %7557 = vst.msk [vmem:[%s7549 + $0x38] sm:$0xf] %vm1826, %v7548
    %vm7558 = vcmp.gt.f32.partialorder %v7357, 0.0
    %vm7559 = vcmp.gt.f32.partialorder %v7358, 0.0
    %vm7560 = vcmp.gt.f32.partialorder %v7359, 0.0
    %vm7561 = vcmp.gt.f32.partialorder %v7360, 0.0
    %vm7562 = vcmp.gt.f32.partialorder %v7361, 0.0
    %vm7563 = vcmp.gt.f32.partialorder %v7362, 0.0
    %vm7564 = vcmp.gt.f32.partialorder %v7363, 0.0
    %vm7565 = vcmp.gt.f32.partialorder %v7364, 0.0
    %v7566 = vmul.f32 %v7357, 0.345
    %v7567 = vmul.f32 %v7358, 0.345
    %v7568 = vmul.f32 %v7359, 0.345
    %v7569 = vmul.f32 %v7360, 0.345
    %v7570 = vmul.f32 %v7361, 0.345
    %v7571 = vmul.f32 %v7362, 0.345
    %v7572 = vmul.f32 %v7363, 0.345
    %v7573 = vmul.f32 %v7364, 0.345
    %v7574 = vsel %vm7558, %v7357, %v7566
    %v7575 = vsel %vm7559, %v7358, %v7567
    %v7576 = vsel %vm7560, %v7359, %v7568
    %v7577 = vsel %vm7561, %v7360, %v7569
    %v7578 = vsel %vm7562, %v7361, %v7570
    %v7579 = vsel %vm7563, %v7362, %v7571
    %v7580 = vsel %vm7564, %v7363, %v7572
    %v7581 = vsel %vm7565, %v7364, %v7573
    %v7582 = vtanh.pop %v7574
    %v7583 = vtanh.pop %v7575
    %v7584 = vtanh.pop %v7576
    %v7585 = vtanh.pop %v7577
    %v7586 = vtanh.pop %v7578
    %v7587 = vtanh.pop %v7579
    %v7588 = vtanh.pop %v7580
    %v7589 = vtanh.pop %v7581
    %v7590 = vmul.f32 %v7582, %v7582
    %v7591 = vmul.f32 %v7583, %v7583
    %v7592 = vmul.f32 %v7584, %v7584
    %v7593 = vmul.f32 %v7585, %v7585
    %v7594 = vmul.f32 %v7586, %v7586
    %v7595 = vmul.f32 %v7587, %v7587
    %v7596 = vmul.f32 %v7588, %v7588
    %v7597 = vmul.f32 %v7589, %v7589
    %s7598 = scalar_lea.vmem %s2, 1024
    %7599 = vst.msk [vmem:[%s7598] sm:$0xff] %vm1818, %v7590
    %7600 = vst.msk [vmem:[%s7598 + $0x8] sm:$0xff] %vm1818, %v7591
    %7601 = vst.msk [vmem:[%s7598 + $0x10] sm:$0xff] %vm1818, %v7592
    %7602 = vst.msk [vmem:[%s7598 + $0x18] sm:$0xff] %vm1818, %v7593
    %7603 = vst.msk [vmem:[%s7598 + $0x20] sm:$0xff] %vm1818, %v7594
    %7604 = vst.msk [vmem:[%s7598 + $0x28] sm:$0xff] %vm1818, %v7595
    %7605 = vst.msk [vmem:[%s7598 + $0x30] sm:$0xff] %vm1818, %v7596
    %7606 = vst.msk [vmem:[%s7598 + $0x38] sm:$0xf] %vm1826, %v7597
    %vm7607 = vcmp.gt.f32.partialorder %v7405, 0.0
    %vm7608 = vcmp.gt.f32.partialorder %v7406, 0.0
    %vm7609 = vcmp.gt.f32.partialorder %v7407, 0.0
    %vm7610 = vcmp.gt.f32.partialorder %v7408, 0.0
    %vm7611 = vcmp.gt.f32.partialorder %v7409, 0.0
    %vm7612 = vcmp.gt.f32.partialorder %v7410, 0.0
    %vm7613 = vcmp.gt.f32.partialorder %v7411, 0.0
    %vm7614 = vcmp.gt.f32.partialorder %v7412, 0.0
    %v7615 = vmul.f32 %v7405, 0.345
    %v7616 = vmul.f32 %v7406, 0.345
    %v7617 = vmul.f32 %v7407, 0.345
    %v7618 = vmul.f32 %v7408, 0.345
    %v7619 = vmul.f32 %v7409, 0.345
    %v7620 = vmul.f32 %v7410, 0.345
    %v7621 = vmul.f32 %v7411, 0.345
    %v7622 = vmul.f32 %v7412, 0.345
    %v7623 = vsel %vm7607, %v7405, %v7615
    %v7624 = vsel %vm7608, %v7406, %v7616
    %v7625 = vsel %vm7609, %v7407, %v7617
    %v7626 = vsel %vm7610, %v7408, %v7618
    %v7627 = vsel %vm7611, %v7409, %v7619
    %v7628 = vsel %vm7612, %v7410, %v7620
    %v7629 = vsel %vm7613, %v7411, %v7621
    %v7630 = vsel %vm7614, %v7412, %v7622
    %v7631 = vtanh.pop %v7623
    %v7632 = vtanh.pop %v7624
    %v7633 = vtanh.pop %v7625
    %v7634 = vtanh.pop %v7626
    %v7635 = vtanh.pop %v7627
    %v7636 = vtanh.pop %v7628
    %v7637 = vtanh.pop %v7629
    %v7638 = vtanh.pop %v7630
    %v7639 = vmul.f32 %v7631, %v7631
    %v7640 = vmul.f32 %v7632, %v7632
    %v7641 = vmul.f32 %v7633, %v7633
    %v7642 = vmul.f32 %v7634, %v7634
    %v7643 = vmul.f32 %v7635, %v7635
    %v7644 = vmul.f32 %v7636, %v7636
    %v7645 = vmul.f32 %v7637, %v7637
    %v7646 = vmul.f32 %v7638, %v7638
    %s7647 = scalar_lea.vmem %s2, 1088
    %7648 = vst.msk [vmem:[%s7647] sm:$0xff] %vm1818, %v7639
    %7649 = vst.msk [vmem:[%s7647 + $0x8] sm:$0xff] %vm1818, %v7640
    %7650 = vst.msk [vmem:[%s7647 + $0x10] sm:$0xff] %vm1818, %v7641
    %7651 = vst.msk [vmem:[%s7647 + $0x18] sm:$0xff] %vm1818, %v7642
    %7652 = vst.msk [vmem:[%s7647 + $0x20] sm:$0xff] %vm1818, %v7643
    %7653 = vst.msk [vmem:[%s7647 + $0x28] sm:$0xff] %vm1818, %v7644
    %7654 = vst.msk [vmem:[%s7647 + $0x30] sm:$0xff] %vm1818, %v7645
    %7655 = vst.msk [vmem:[%s7647 + $0x38] sm:$0xf] %vm1826, %v7646
    %vm7656 = vcmp.gt.f32.partialorder %v7453, 0.0
    %vm7657 = vcmp.gt.f32.partialorder %v7454, 0.0
    %vm7658 = vcmp.gt.f32.partialorder %v7455, 0.0
    %vm7659 = vcmp.gt.f32.partialorder %v7456, 0.0
    %vm7660 = vcmp.gt.f32.partialorder %v7457, 0.0
    %vm7661 = vcmp.gt.f32.partialorder %v7458, 0.0
    %vm7662 = vcmp.gt.f32.partialorder %v7459, 0.0
    %vm7663 = vcmp.gt.f32.partialorder %v7460, 0.0
    %v7664 = vmul.f32 %v7453, 0.345
    %v7665 = vmul.f32 %v7454, 0.345
    %v7666 = vmul.f32 %v7455, 0.345
    %v7667 = vmul.f32 %v7456, 0.345
    %v7668 = vmul.f32 %v7457, 0.345
    %v7669 = vmul.f32 %v7458, 0.345
    %v7670 = vmul.f32 %v7459, 0.345
    %v7671 = vmul.f32 %v7460, 0.345
    %v7672 = vsel %vm7656, %v7453, %v7664
    %v7673 = vsel %vm7657, %v7454, %v7665
    %v7674 = vsel %vm7658, %v7455, %v7666
    %v7675 = vsel %vm7659, %v7456, %v7667
    %v7676 = vsel %vm7660, %v7457, %v7668
    %v7677 = vsel %vm7661, %v7458, %v7669
    %v7678 = vsel %vm7662, %v7459, %v7670
    %v7679 = vsel %vm7663, %v7460, %v7671
    %v7680 = vtanh.pop %v7672
    %v7681 = vtanh.pop %v7673
    %v7682 = vtanh.pop %v7674
    %v7683 = vtanh.pop %v7675
    %v7684 = vtanh.pop %v7676
    %v7685 = vtanh.pop %v7677
    %v7686 = vtanh.pop %v7678
    %v7687 = vtanh.pop %v7679
    %v7688 = vmul.f32 %v7680, %v7680
    %v7689 = vmul.f32 %v7681, %v7681
    %v7690 = vmul.f32 %v7682, %v7682
    %v7691 = vmul.f32 %v7683, %v7683
    %v7692 = vmul.f32 %v7684, %v7684
    %v7693 = vmul.f32 %v7685, %v7685
    %v7694 = vmul.f32 %v7686, %v7686
    %v7695 = vmul.f32 %v7687, %v7687
    %s7696 = scalar_lea.vmem %s2, 1152
    %7697 = vst.msk [vmem:[%s7696] sm:$0xff] %vm1818, %v7688
    %7698 = vst.msk [vmem:[%s7696 + $0x8] sm:$0xff] %vm1818, %v7689
    %7699 = vst.msk [vmem:[%s7696 + $0x10] sm:$0xff] %vm1818, %v7690
    %7700 = vst.msk [vmem:[%s7696 + $0x18] sm:$0xff] %vm1818, %v7691
    %7701 = vst.msk [vmem:[%s7696 + $0x20] sm:$0xff] %vm1818, %v7692
    %7702 = vst.msk [vmem:[%s7696 + $0x28] sm:$0xff] %vm1818, %v7693
    %7703 = vst.msk [vmem:[%s7696 + $0x30] sm:$0xff] %vm1818, %v7694
    %7704 = vst.msk [vmem:[%s7696 + $0x38] sm:$0xf] %vm1826, %v7695
    %vm7705 = vcmp.gt.f32.partialorder %v7501, 0.0
    %vm7706 = vcmp.gt.f32.partialorder %v7502, 0.0
    %vm7707 = vcmp.gt.f32.partialorder %v7503, 0.0
    %vm7708 = vcmp.gt.f32.partialorder %v7504, 0.0
    %vm7709 = vcmp.gt.f32.partialorder %v7505, 0.0
    %vm7710 = vcmp.gt.f32.partialorder %v7506, 0.0
    %vm7711 = vcmp.gt.f32.partialorder %v7507, 0.0
    %vm7712 = vcmp.gt.f32.partialorder %v7508, 0.0
    %v7713 = vmul.f32 %v7501, 0.345
    %v7714 = vmul.f32 %v7502, 0.345
    %v7715 = vmul.f32 %v7503, 0.345
    %v7716 = vmul.f32 %v7504, 0.345
    %v7717 = vmul.f32 %v7505, 0.345
    %v7718 = vmul.f32 %v7506, 0.345
    %v7719 = vmul.f32 %v7507, 0.345
    %v7720 = vmul.f32 %v7508, 0.345
    %v7721 = vsel %vm7705, %v7501, %v7713
    %v7722 = vsel %vm7706, %v7502, %v7714
    %v7723 = vsel %vm7707, %v7503, %v7715
    %v7724 = vsel %vm7708, %v7504, %v7716
    %v7725 = vsel %vm7709, %v7505, %v7717
    %v7726 = vsel %vm7710, %v7506, %v7718
    %v7727 = vsel %vm7711, %v7507, %v7719
    %v7728 = vsel %vm7712, %v7508, %v7720
    %v7729 = vtanh.pop %v7721
    %v7730 = vtanh.pop %v7722
    %v7731 = vtanh.pop %v7723
    %v7732 = vtanh.pop %v7724
    %v7733 = vtanh.pop %v7725
    %v7734 = vtanh.pop %v7726
    %v7735 = vtanh.pop %v7727
    %v7736 = vtanh.pop %v7728
    %v7737 = vmul.f32 %v7729, %v7729
    %v7738 = vmul.f32 %v7730, %v7730
    %v7739 = vmul.f32 %v7731, %v7731
    %v7740 = vmul.f32 %v7732, %v7732
    %v7741 = vmul.f32 %v7733, %v7733
    %v7742 = vmul.f32 %v7734, %v7734
    %v7743 = vmul.f32 %v7735, %v7735
    %v7744 = vmul.f32 %v7736, %v7736
    %s7745 = scalar_lea.vmem %s2, 1216
    %7746 = vst.msk [vmem:[%s7745] sm:$0xff] %vm1818, %v7737
    %7747 = vst.msk [vmem:[%s7745 + $0x8] sm:$0xff] %vm1818, %v7738
    %7748 = vst.msk [vmem:[%s7745 + $0x10] sm:$0xff] %vm1818, %v7739
    %7749 = vst.msk [vmem:[%s7745 + $0x18] sm:$0xff] %vm1818, %v7740
    %7750 = vst.msk [vmem:[%s7745 + $0x20] sm:$0xff] %vm1818, %v7741
    %7751 = vst.msk [vmem:[%s7745 + $0x28] sm:$0xff] %vm1818, %v7742
    %7752 = vst.msk [vmem:[%s7745 + $0x30] sm:$0xff] %vm1818, %v7743
    %7753 = vst.msk [vmem:[%s7745 + $0x38] sm:$0xf] %vm1826, %v7744
    %s7754 = scalar_lea.vmem %s1, 288
    %v7755 = vld [vmem:[%s7754] sm:$0xff]
    %v7756 = vld [vmem:[%s7754 + $0x8] sm:$0xff]
    %v7757 = vld [vmem:[%s7754 + $0x10] sm:$0xff]
    %v7758 = vld [vmem:[%s7754 + $0x18] sm:$0xff]
    %v7759 = vld [vmem:[%s7754 + $0x20] sm:$0xff]
    %v7760 = vld [vmem:[%s7754 + $0x28] sm:$0xff]
    %v7761 = vld [vmem:[%s7754 + $0x30] sm:$0xff]
    %v7762 = vld [vmem:[%s7754 + $0x38] sm:$0xf]
    %v7763 = vmul.f32 %v7755, %v77
    %v7764 = vmul.f32 %v7756, %v77
    %v7765 = vmul.f32 %v7757, %v77
    %v7766 = vmul.f32 %v7758, %v77
    %v7767 = vmul.f32 %v7759, %v77
    %v7768 = vmul.f32 %v7760, %v77
    %v7769 = vmul.f32 %v7761, %v77
    %v7770 = vmul.f32 %v7762, %v77
    %v7771 = vmul.f32 %v7755, %v86
    %v7772 = vmul.f32 %v7756, %v86
    %v7773 = vmul.f32 %v7757, %v86
    %v7774 = vmul.f32 %v7758, %v86
    %v7775 = vmul.f32 %v7759, %v86
    %v7776 = vmul.f32 %v7760, %v86
    %v7777 = vmul.f32 %v7761, %v86
    %v7778 = vmul.f32 %v7762, %v86
    %v7779 = vmul.f32 %v7755, %v95
    %v7780 = vmul.f32 %v7756, %v95
    %v7781 = vmul.f32 %v7757, %v95
    %v7782 = vmul.f32 %v7758, %v95
    %v7783 = vmul.f32 %v7759, %v95
    %v7784 = vmul.f32 %v7760, %v95
    %v7785 = vmul.f32 %v7761, %v95
    %v7786 = vmul.f32 %v7762, %v95
    %v7787 = vmul.f32 %v7755, %v104
    %v7788 = vmul.f32 %v7756, %v104
    %v7789 = vmul.f32 %v7757, %v104
    %v7790 = vmul.f32 %v7758, %v104
    %v7791 = vmul.f32 %v7759, %v104
    %v7792 = vmul.f32 %v7760, %v104
    %v7793 = vmul.f32 %v7761, %v104
    %v7794 = vmul.f32 %v7762, %v104
    %v7795 = vmul.f32 %v7755, %v113
    %v7796 = vmul.f32 %v7756, %v113
    %v7797 = vmul.f32 %v7757, %v113
    %v7798 = vmul.f32 %v7758, %v113
    %v7799 = vmul.f32 %v7759, %v113
    %v7800 = vmul.f32 %v7760, %v113
    %v7801 = vmul.f32 %v7761, %v113
    %v7802 = vmul.f32 %v7762, %v113
    %v7803 = vmul.f32 %v7755, %v122
    %v7804 = vmul.f32 %v7756, %v122
    %v7805 = vmul.f32 %v7757, %v122
    %v7806 = vmul.f32 %v7758, %v122
    %v7807 = vmul.f32 %v7759, %v122
    %v7808 = vmul.f32 %v7760, %v122
    %v7809 = vmul.f32 %v7761, %v122
    %v7810 = vmul.f32 %v7762, %v122
    %7819 = vrot.lane.b32.xlu0 %v7803, 126
    %v7820 = vpop.permute.xlu0 %7819
    %7821 = vrot.lane.b32.xlu0 %v7804, 126
    %v7822 = vpop.permute.xlu0 %7821
    %7823 = vrot.lane.b32.xlu0 %v7805, 126
    %v7824 = vpop.permute.xlu0 %7823
    %7825 = vrot.lane.b32.xlu0 %v7806, 126
    %v7826 = vpop.permute.xlu0 %7825
    %7827 = vrot.lane.b32.xlu0 %v7807, 126
    %v7828 = vpop.permute.xlu0 %7827
    %7829 = vrot.lane.b32.xlu0 %v7808, 126
    %v7830 = vpop.permute.xlu0 %7829
    %7831 = vrot.lane.b32.xlu0 %v7809, 126
    %v7832 = vpop.permute.xlu0 %7831
    %7833 = vrot.lane.b32.xlu0 %v7810, 126
    %v7834 = vpop.permute.xlu0 %7833
    %v7843 = vadd.f32 %v7763, %v7820
    %v7844 = vadd.f32 %v7764, %v7822
    %v7845 = vadd.f32 %v7765, %v7824
    %v7846 = vadd.f32 %v7766, %v7826
    %v7847 = vadd.f32 %v7767, %v7828
    %v7848 = vadd.f32 %v7768, %v7830
    %v7849 = vadd.f32 %v7769, %v7832
    %v7850 = vadd.f32 %v7770, %v7834
    %v7851 = vmul.f32 %v7755, %v171
    %v7852 = vmul.f32 %v7756, %v171
    %v7853 = vmul.f32 %v7757, %v171
    %v7854 = vmul.f32 %v7758, %v171
    %v7855 = vmul.f32 %v7759, %v171
    %v7856 = vmul.f32 %v7760, %v171
    %v7857 = vmul.f32 %v7761, %v171
    %v7858 = vmul.f32 %v7762, %v171
    %7867 = vrot.lane.b32.xlu0 %v7851, 126
    %v7868 = vpop.permute.xlu0 %7867
    %7869 = vrot.lane.b32.xlu0 %v7852, 126
    %v7870 = vpop.permute.xlu0 %7869
    %7871 = vrot.lane.b32.xlu0 %v7853, 126
    %v7872 = vpop.permute.xlu0 %7871
    %7873 = vrot.lane.b32.xlu0 %v7854, 126
    %v7874 = vpop.permute.xlu0 %7873
    %7875 = vrot.lane.b32.xlu0 %v7855, 126
    %v7876 = vpop.permute.xlu0 %7875
    %7877 = vrot.lane.b32.xlu0 %v7856, 126
    %v7878 = vpop.permute.xlu0 %7877
    %7879 = vrot.lane.b32.xlu0 %v7857, 126
    %v7880 = vpop.permute.xlu0 %7879
    %7881 = vrot.lane.b32.xlu0 %v7858, 126
    %v7882 = vpop.permute.xlu0 %7881
    %v7891 = vadd.f32 %v7771, %v7868
    %v7892 = vadd.f32 %v7772, %v7870
    %v7893 = vadd.f32 %v7773, %v7872
    %v7894 = vadd.f32 %v7774, %v7874
    %v7895 = vadd.f32 %v7775, %v7876
    %v7896 = vadd.f32 %v7776, %v7878
    %v7897 = vadd.f32 %v7777, %v7880
    %v7898 = vadd.f32 %v7778, %v7882
    %v7899 = vmul.f32 %v7755, %v220
    %v7900 = vmul.f32 %v7756, %v220
    %v7901 = vmul.f32 %v7757, %v220
    %v7902 = vmul.f32 %v7758, %v220
    %v7903 = vmul.f32 %v7759, %v220
    %v7904 = vmul.f32 %v7760, %v220
    %v7905 = vmul.f32 %v7761, %v220
    %v7906 = vmul.f32 %v7762, %v220
    %7915 = vrot.lane.b32.xlu0 %v7899, 126
    %v7916 = vpop.permute.xlu0 %7915
    %7917 = vrot.lane.b32.xlu0 %v7900, 126
    %v7918 = vpop.permute.xlu0 %7917
    %7919 = vrot.lane.b32.xlu0 %v7901, 126
    %v7920 = vpop.permute.xlu0 %7919
    %7921 = vrot.lane.b32.xlu0 %v7902, 126
    %v7922 = vpop.permute.xlu0 %7921
    %7923 = vrot.lane.b32.xlu0 %v7903, 126
    %v7924 = vpop.permute.xlu0 %7923
    %7925 = vrot.lane.b32.xlu0 %v7904, 126
    %v7926 = vpop.permute.xlu0 %7925
    %7927 = vrot.lane.b32.xlu0 %v7905, 126
    %v7928 = vpop.permute.xlu0 %7927
    %7929 = vrot.lane.b32.xlu0 %v7906, 126
    %v7930 = vpop.permute.xlu0 %7929
    %v7939 = vadd.f32 %v7779, %v7916
    %v7940 = vadd.f32 %v7780, %v7918
    %v7941 = vadd.f32 %v7781, %v7920
    %v7942 = vadd.f32 %v7782, %v7922
    %v7943 = vadd.f32 %v7783, %v7924
    %v7944 = vadd.f32 %v7784, %v7926
    %v7945 = vadd.f32 %v7785, %v7928
    %v7946 = vadd.f32 %v7786, %v7930
    %v7947 = vmul.f32 %v7755, %v269
    %v7948 = vmul.f32 %v7756, %v269
    %v7949 = vmul.f32 %v7757, %v269
    %v7950 = vmul.f32 %v7758, %v269
    %v7951 = vmul.f32 %v7759, %v269
    %v7952 = vmul.f32 %v7760, %v269
    %v7953 = vmul.f32 %v7761, %v269
    %v7954 = vmul.f32 %v7762, %v269
    %7963 = vrot.lane.b32.xlu0 %v7947, 126
    %v7964 = vpop.permute.xlu0 %7963
    %7965 = vrot.lane.b32.xlu0 %v7948, 126
    %v7966 = vpop.permute.xlu0 %7965
    %7967 = vrot.lane.b32.xlu0 %v7949, 126
    %v7968 = vpop.permute.xlu0 %7967
    %7969 = vrot.lane.b32.xlu0 %v7950, 126
    %v7970 = vpop.permute.xlu0 %7969
    %7971 = vrot.lane.b32.xlu0 %v7951, 126
    %v7972 = vpop.permute.xlu0 %7971
    %7973 = vrot.lane.b32.xlu0 %v7952, 126
    %v7974 = vpop.permute.xlu0 %7973
    %7975 = vrot.lane.b32.xlu0 %v7953, 126
    %v7976 = vpop.permute.xlu0 %7975
    %7977 = vrot.lane.b32.xlu0 %v7954, 126
    %v7978 = vpop.permute.xlu0 %7977
    %v7987 = vadd.f32 %v7787, %v7964
    %v7988 = vadd.f32 %v7788, %v7966
    %v7989 = vadd.f32 %v7789, %v7968
    %v7990 = vadd.f32 %v7790, %v7970
    %v7991 = vadd.f32 %v7791, %v7972
    %v7992 = vadd.f32 %v7792, %v7974
    %v7993 = vadd.f32 %v7793, %v7976
    %v7994 = vadd.f32 %v7794, %v7978
    %v7995 = vmul.f32 %v7755, %v318
    %v7996 = vmul.f32 %v7756, %v318
    %v7997 = vmul.f32 %v7757, %v318
    %v7998 = vmul.f32 %v7758, %v318
    %v7999 = vmul.f32 %v7759, %v318
    %v8000 = vmul.f32 %v7760, %v318
    %v8001 = vmul.f32 %v7761, %v318
    %v8002 = vmul.f32 %v7762, %v318
    %8011 = vrot.lane.b32.xlu0 %v7995, 126
    %v8012 = vpop.permute.xlu0 %8011
    %8013 = vrot.lane.b32.xlu0 %v7996, 126
    %v8014 = vpop.permute.xlu0 %8013
    %8015 = vrot.lane.b32.xlu0 %v7997, 126
    %v8016 = vpop.permute.xlu0 %8015
    %8017 = vrot.lane.b32.xlu0 %v7998, 126
    %v8018 = vpop.permute.xlu0 %8017
    %8019 = vrot.lane.b32.xlu0 %v7999, 126
    %v8020 = vpop.permute.xlu0 %8019
    %8021 = vrot.lane.b32.xlu0 %v8000, 126
    %v8022 = vpop.permute.xlu0 %8021
    %8023 = vrot.lane.b32.xlu0 %v8001, 126
    %v8024 = vpop.permute.xlu0 %8023
    %8025 = vrot.lane.b32.xlu0 %v8002, 126
    %v8026 = vpop.permute.xlu0 %8025
    %v8035 = vadd.f32 %v7795, %v8012
    %v8036 = vadd.f32 %v7796, %v8014
    %v8037 = vadd.f32 %v7797, %v8016
    %v8038 = vadd.f32 %v7798, %v8018
    %v8039 = vadd.f32 %v7799, %v8020
    %v8040 = vadd.f32 %v7800, %v8022
    %v8041 = vadd.f32 %v7801, %v8024
    %v8042 = vadd.f32 %v7802, %v8026
    %v8043 = vmul.f32 %v7755, %v367
    %v8044 = vmul.f32 %v7756, %v367
    %v8045 = vmul.f32 %v7757, %v367
    %v8046 = vmul.f32 %v7758, %v367
    %v8047 = vmul.f32 %v7759, %v367
    %v8048 = vmul.f32 %v7760, %v367
    %v8049 = vmul.f32 %v7761, %v367
    %v8050 = vmul.f32 %v7762, %v367
    %8059 = vrot.lane.b32.xlu0 %v8043, 124
    %v8060 = vpop.permute.xlu0 %8059
    %8061 = vrot.lane.b32.xlu0 %v8044, 124
    %v8062 = vpop.permute.xlu0 %8061
    %8063 = vrot.lane.b32.xlu0 %v8045, 124
    %v8064 = vpop.permute.xlu0 %8063
    %8065 = vrot.lane.b32.xlu0 %v8046, 124
    %v8066 = vpop.permute.xlu0 %8065
    %8067 = vrot.lane.b32.xlu0 %v8047, 124
    %v8068 = vpop.permute.xlu0 %8067
    %8069 = vrot.lane.b32.xlu0 %v8048, 124
    %v8070 = vpop.permute.xlu0 %8069
    %8071 = vrot.lane.b32.xlu0 %v8049, 124
    %v8072 = vpop.permute.xlu0 %8071
    %8073 = vrot.lane.b32.xlu0 %v8050, 124
    %v8074 = vpop.permute.xlu0 %8073
    %v8083 = vadd.f32 %v7843, %v8060
    %v8084 = vadd.f32 %v7844, %v8062
    %v8085 = vadd.f32 %v7845, %v8064
    %v8086 = vadd.f32 %v7846, %v8066
    %v8087 = vadd.f32 %v7847, %v8068
    %v8088 = vadd.f32 %v7848, %v8070
    %v8089 = vadd.f32 %v7849, %v8072
    %v8090 = vadd.f32 %v7850, %v8074
    %v8091 = vmul.f32 %v7755, %v416
    %v8092 = vmul.f32 %v7756, %v416
    %v8093 = vmul.f32 %v7757, %v416
    %v8094 = vmul.f32 %v7758, %v416
    %v8095 = vmul.f32 %v7759, %v416
    %v8096 = vmul.f32 %v7760, %v416
    %v8097 = vmul.f32 %v7761, %v416
    %v8098 = vmul.f32 %v7762, %v416
    %8107 = vrot.lane.b32.xlu0 %v8091, 124
    %v8108 = vpop.permute.xlu0 %8107
    %8109 = vrot.lane.b32.xlu0 %v8092, 124
    %v8110 = vpop.permute.xlu0 %8109
    %8111 = vrot.lane.b32.xlu0 %v8093, 124
    %v8112 = vpop.permute.xlu0 %8111
    %8113 = vrot.lane.b32.xlu0 %v8094, 124
    %v8114 = vpop.permute.xlu0 %8113
    %8115 = vrot.lane.b32.xlu0 %v8095, 124
    %v8116 = vpop.permute.xlu0 %8115
    %8117 = vrot.lane.b32.xlu0 %v8096, 124
    %v8118 = vpop.permute.xlu0 %8117
    %8119 = vrot.lane.b32.xlu0 %v8097, 124
    %v8120 = vpop.permute.xlu0 %8119
    %8121 = vrot.lane.b32.xlu0 %v8098, 124
    %v8122 = vpop.permute.xlu0 %8121
    %v8131 = vadd.f32 %v7891, %v8108
    %v8132 = vadd.f32 %v7892, %v8110
    %v8133 = vadd.f32 %v7893, %v8112
    %v8134 = vadd.f32 %v7894, %v8114
    %v8135 = vadd.f32 %v7895, %v8116
    %v8136 = vadd.f32 %v7896, %v8118
    %v8137 = vadd.f32 %v7897, %v8120
    %v8138 = vadd.f32 %v7898, %v8122
    %v8139 = vmul.f32 %v7755, %v465
    %v8140 = vmul.f32 %v7756, %v465
    %v8141 = vmul.f32 %v7757, %v465
    %v8142 = vmul.f32 %v7758, %v465
    %v8143 = vmul.f32 %v7759, %v465
    %v8144 = vmul.f32 %v7760, %v465
    %v8145 = vmul.f32 %v7761, %v465
    %v8146 = vmul.f32 %v7762, %v465
    %8155 = vrot.lane.b32.xlu0 %v8139, 124
    %v8156 = vpop.permute.xlu0 %8155
    %8157 = vrot.lane.b32.xlu0 %v8140, 124
    %v8158 = vpop.permute.xlu0 %8157
    %8159 = vrot.lane.b32.xlu0 %v8141, 124
    %v8160 = vpop.permute.xlu0 %8159
    %8161 = vrot.lane.b32.xlu0 %v8142, 124
    %v8162 = vpop.permute.xlu0 %8161
    %8163 = vrot.lane.b32.xlu0 %v8143, 124
    %v8164 = vpop.permute.xlu0 %8163
    %8165 = vrot.lane.b32.xlu0 %v8144, 124
    %v8166 = vpop.permute.xlu0 %8165
    %8167 = vrot.lane.b32.xlu0 %v8145, 124
    %v8168 = vpop.permute.xlu0 %8167
    %8169 = vrot.lane.b32.xlu0 %v8146, 124
    %v8170 = vpop.permute.xlu0 %8169
    %v8179 = vadd.f32 %v7939, %v8156
    %v8180 = vadd.f32 %v7940, %v8158
    %v8181 = vadd.f32 %v7941, %v8160
    %v8182 = vadd.f32 %v7942, %v8162
    %v8183 = vadd.f32 %v7943, %v8164
    %v8184 = vadd.f32 %v7944, %v8166
    %v8185 = vadd.f32 %v7945, %v8168
    %v8186 = vadd.f32 %v7946, %v8170
    %v8187 = vmul.f32 %v7755, %v514
    %v8188 = vmul.f32 %v7756, %v514
    %v8189 = vmul.f32 %v7757, %v514
    %v8190 = vmul.f32 %v7758, %v514
    %v8191 = vmul.f32 %v7759, %v514
    %v8192 = vmul.f32 %v7760, %v514
    %v8193 = vmul.f32 %v7761, %v514
    %v8194 = vmul.f32 %v7762, %v514
    %8203 = vrot.lane.b32.xlu0 %v8187, 124
    %v8204 = vpop.permute.xlu0 %8203
    %8205 = vrot.lane.b32.xlu0 %v8188, 124
    %v8206 = vpop.permute.xlu0 %8205
    %8207 = vrot.lane.b32.xlu0 %v8189, 124
    %v8208 = vpop.permute.xlu0 %8207
    %8209 = vrot.lane.b32.xlu0 %v8190, 124
    %v8210 = vpop.permute.xlu0 %8209
    %8211 = vrot.lane.b32.xlu0 %v8191, 124
    %v8212 = vpop.permute.xlu0 %8211
    %8213 = vrot.lane.b32.xlu0 %v8192, 124
    %v8214 = vpop.permute.xlu0 %8213
    %8215 = vrot.lane.b32.xlu0 %v8193, 124
    %v8216 = vpop.permute.xlu0 %8215
    %8217 = vrot.lane.b32.xlu0 %v8194, 124
    %v8218 = vpop.permute.xlu0 %8217
    %v8227 = vadd.f32 %v7987, %v8204
    %v8228 = vadd.f32 %v7988, %v8206
    %v8229 = vadd.f32 %v7989, %v8208
    %v8230 = vadd.f32 %v7990, %v8210
    %v8231 = vadd.f32 %v7991, %v8212
    %v8232 = vadd.f32 %v7992, %v8214
    %v8233 = vadd.f32 %v7993, %v8216
    %v8234 = vadd.f32 %v7994, %v8218
    %v8235 = vmul.f32 %v7755, %v563
    %v8236 = vmul.f32 %v7756, %v563
    %v8237 = vmul.f32 %v7757, %v563
    %v8238 = vmul.f32 %v7758, %v563
    %v8239 = vmul.f32 %v7759, %v563
    %v8240 = vmul.f32 %v7760, %v563
    %v8241 = vmul.f32 %v7761, %v563
    %v8242 = vmul.f32 %v7762, %v563
    %8251 = vrot.lane.b32.xlu0 %v8235, 124
    %v8252 = vpop.permute.xlu0 %8251
    %8253 = vrot.lane.b32.xlu0 %v8236, 124
    %v8254 = vpop.permute.xlu0 %8253
    %8255 = vrot.lane.b32.xlu0 %v8237, 124
    %v8256 = vpop.permute.xlu0 %8255
    %8257 = vrot.lane.b32.xlu0 %v8238, 124
    %v8258 = vpop.permute.xlu0 %8257
    %8259 = vrot.lane.b32.xlu0 %v8239, 124
    %v8260 = vpop.permute.xlu0 %8259
    %8261 = vrot.lane.b32.xlu0 %v8240, 124
    %v8262 = vpop.permute.xlu0 %8261
    %8263 = vrot.lane.b32.xlu0 %v8241, 124
    %v8264 = vpop.permute.xlu0 %8263
    %8265 = vrot.lane.b32.xlu0 %v8242, 124
    %v8266 = vpop.permute.xlu0 %8265
    %v8275 = vadd.f32 %v8035, %v8252
    %v8276 = vadd.f32 %v8036, %v8254
    %v8277 = vadd.f32 %v8037, %v8256
    %v8278 = vadd.f32 %v8038, %v8258
    %v8279 = vadd.f32 %v8039, %v8260
    %v8280 = vadd.f32 %v8040, %v8262
    %v8281 = vadd.f32 %v8041, %v8264
    %v8282 = vadd.f32 %v8042, %v8266
    %v8283 = vld [vmem:[%s7754 + $0x3] sm:$0xff]
    %v8284 = vld [vmem:[%s7754 + $0xb] sm:$0xff]
    %v8285 = vld [vmem:[%s7754 + $0x13] sm:$0xff]
    %v8286 = vld [vmem:[%s7754 + $0x1b] sm:$0xff]
    %v8287 = vld [vmem:[%s7754 + $0x23] sm:$0xff]
    %v8288 = vld [vmem:[%s7754 + $0x2b] sm:$0xff]
    %v8289 = vld [vmem:[%s7754 + $0x33] sm:$0xff]
    %v8290 = vld [vmem:[%s7754 + $0x3b] sm:$0xf]
    %v8291 = vmul.f32 %v8283, %v620
    %v8292 = vmul.f32 %v8284, %v620
    %v8293 = vmul.f32 %v8285, %v620
    %v8294 = vmul.f32 %v8286, %v620
    %v8295 = vmul.f32 %v8287, %v620
    %v8296 = vmul.f32 %v8288, %v620
    %v8297 = vmul.f32 %v8289, %v620
    %v8298 = vmul.f32 %v8290, %v620
    %v8299 = vadd.f32 %v8083, %v8291
    %v8300 = vadd.f32 %v8084, %v8292
    %v8301 = vadd.f32 %v8085, %v8293
    %v8302 = vadd.f32 %v8086, %v8294
    %v8303 = vadd.f32 %v8087, %v8295
    %v8304 = vadd.f32 %v8088, %v8296
    %v8305 = vadd.f32 %v8089, %v8297
    %v8306 = vadd.f32 %v8090, %v8298
    %v8307 = vmul.f32 %v8283, %v637
    %v8308 = vmul.f32 %v8284, %v637
    %v8309 = vmul.f32 %v8285, %v637
    %v8310 = vmul.f32 %v8286, %v637
    %v8311 = vmul.f32 %v8287, %v637
    %v8312 = vmul.f32 %v8288, %v637
    %v8313 = vmul.f32 %v8289, %v637
    %v8314 = vmul.f32 %v8290, %v637
    %v8315 = vadd.f32 %v8131, %v8307
    %v8316 = vadd.f32 %v8132, %v8308
    %v8317 = vadd.f32 %v8133, %v8309
    %v8318 = vadd.f32 %v8134, %v8310
    %v8319 = vadd.f32 %v8135, %v8311
    %v8320 = vadd.f32 %v8136, %v8312
    %v8321 = vadd.f32 %v8137, %v8313
    %v8322 = vadd.f32 %v8138, %v8314
    %v8323 = vmul.f32 %v8283, %v654
    %v8324 = vmul.f32 %v8284, %v654
    %v8325 = vmul.f32 %v8285, %v654
    %v8326 = vmul.f32 %v8286, %v654
    %v8327 = vmul.f32 %v8287, %v654
    %v8328 = vmul.f32 %v8288, %v654
    %v8329 = vmul.f32 %v8289, %v654
    %v8330 = vmul.f32 %v8290, %v654
    %v8331 = vadd.f32 %v8179, %v8323
    %v8332 = vadd.f32 %v8180, %v8324
    %v8333 = vadd.f32 %v8181, %v8325
    %v8334 = vadd.f32 %v8182, %v8326
    %v8335 = vadd.f32 %v8183, %v8327
    %v8336 = vadd.f32 %v8184, %v8328
    %v8337 = vadd.f32 %v8185, %v8329
    %v8338 = vadd.f32 %v8186, %v8330
    %v8339 = vmul.f32 %v8283, %v671
    %v8340 = vmul.f32 %v8284, %v671
    %v8341 = vmul.f32 %v8285, %v671
    %v8342 = vmul.f32 %v8286, %v671
    %v8343 = vmul.f32 %v8287, %v671
    %v8344 = vmul.f32 %v8288, %v671
    %v8345 = vmul.f32 %v8289, %v671
    %v8346 = vmul.f32 %v8290, %v671
    %v8347 = vadd.f32 %v8227, %v8339
    %v8348 = vadd.f32 %v8228, %v8340
    %v8349 = vadd.f32 %v8229, %v8341
    %v8350 = vadd.f32 %v8230, %v8342
    %v8351 = vadd.f32 %v8231, %v8343
    %v8352 = vadd.f32 %v8232, %v8344
    %v8353 = vadd.f32 %v8233, %v8345
    %v8354 = vadd.f32 %v8234, %v8346
    %v8355 = vmul.f32 %v8283, %v688
    %v8356 = vmul.f32 %v8284, %v688
    %v8357 = vmul.f32 %v8285, %v688
    %v8358 = vmul.f32 %v8286, %v688
    %v8359 = vmul.f32 %v8287, %v688
    %v8360 = vmul.f32 %v8288, %v688
    %v8361 = vmul.f32 %v8289, %v688
    %v8362 = vmul.f32 %v8290, %v688
    %v8363 = vadd.f32 %v8275, %v8355
    %v8364 = vadd.f32 %v8276, %v8356
    %v8365 = vadd.f32 %v8277, %v8357
    %v8366 = vadd.f32 %v8278, %v8358
    %v8367 = vadd.f32 %v8279, %v8359
    %v8368 = vadd.f32 %v8280, %v8360
    %v8369 = vadd.f32 %v8281, %v8361
    %v8370 = vadd.f32 %v8282, %v8362
    %v8371 = vmul.f32 %v8283, %v705
    %v8372 = vmul.f32 %v8284, %v705
    %v8373 = vmul.f32 %v8285, %v705
    %v8374 = vmul.f32 %v8286, %v705
    %v8375 = vmul.f32 %v8287, %v705
    %v8376 = vmul.f32 %v8288, %v705
    %v8377 = vmul.f32 %v8289, %v705
    %v8378 = vmul.f32 %v8290, %v705
    %8387 = vrot.lane.b32.xlu0 %v8371, 126
    %v8388 = vpop.permute.xlu0 %8387
    %8389 = vrot.lane.b32.xlu0 %v8372, 126
    %v8390 = vpop.permute.xlu0 %8389
    %8391 = vrot.lane.b32.xlu0 %v8373, 126
    %v8392 = vpop.permute.xlu0 %8391
    %8393 = vrot.lane.b32.xlu0 %v8374, 126
    %v8394 = vpop.permute.xlu0 %8393
    %8395 = vrot.lane.b32.xlu0 %v8375, 126
    %v8396 = vpop.permute.xlu0 %8395
    %8397 = vrot.lane.b32.xlu0 %v8376, 126
    %v8398 = vpop.permute.xlu0 %8397
    %8399 = vrot.lane.b32.xlu0 %v8377, 126
    %v8400 = vpop.permute.xlu0 %8399
    %8401 = vrot.lane.b32.xlu0 %v8378, 126
    %v8402 = vpop.permute.xlu0 %8401
    %v8411 = vadd.f32 %v8299, %v8388
    %v8412 = vadd.f32 %v8300, %v8390
    %v8413 = vadd.f32 %v8301, %v8392
    %v8414 = vadd.f32 %v8302, %v8394
    %v8415 = vadd.f32 %v8303, %v8396
    %v8416 = vadd.f32 %v8304, %v8398
    %v8417 = vadd.f32 %v8305, %v8400
    %v8418 = vadd.f32 %v8306, %v8402
    %v8419 = vmul.f32 %v8283, %v754
    %v8420 = vmul.f32 %v8284, %v754
    %v8421 = vmul.f32 %v8285, %v754
    %v8422 = vmul.f32 %v8286, %v754
    %v8423 = vmul.f32 %v8287, %v754
    %v8424 = vmul.f32 %v8288, %v754
    %v8425 = vmul.f32 %v8289, %v754
    %v8426 = vmul.f32 %v8290, %v754
    %8435 = vrot.lane.b32.xlu0 %v8419, 126
    %v8436 = vpop.permute.xlu0 %8435
    %8437 = vrot.lane.b32.xlu0 %v8420, 126
    %v8438 = vpop.permute.xlu0 %8437
    %8439 = vrot.lane.b32.xlu0 %v8421, 126
    %v8440 = vpop.permute.xlu0 %8439
    %8441 = vrot.lane.b32.xlu0 %v8422, 126
    %v8442 = vpop.permute.xlu0 %8441
    %8443 = vrot.lane.b32.xlu0 %v8423, 126
    %v8444 = vpop.permute.xlu0 %8443
    %8445 = vrot.lane.b32.xlu0 %v8424, 126
    %v8446 = vpop.permute.xlu0 %8445
    %8447 = vrot.lane.b32.xlu0 %v8425, 126
    %v8448 = vpop.permute.xlu0 %8447
    %8449 = vrot.lane.b32.xlu0 %v8426, 126
    %v8450 = vpop.permute.xlu0 %8449
    %v8459 = vadd.f32 %v8315, %v8436
    %v8460 = vadd.f32 %v8316, %v8438
    %v8461 = vadd.f32 %v8317, %v8440
    %v8462 = vadd.f32 %v8318, %v8442
    %v8463 = vadd.f32 %v8319, %v8444
    %v8464 = vadd.f32 %v8320, %v8446
    %v8465 = vadd.f32 %v8321, %v8448
    %v8466 = vadd.f32 %v8322, %v8450
    %v8467 = vmul.f32 %v8283, %v803
    %v8468 = vmul.f32 %v8284, %v803
    %v8469 = vmul.f32 %v8285, %v803
    %v8470 = vmul.f32 %v8286, %v803
    %v8471 = vmul.f32 %v8287, %v803
    %v8472 = vmul.f32 %v8288, %v803
    %v8473 = vmul.f32 %v8289, %v803
    %v8474 = vmul.f32 %v8290, %v803
    %8483 = vrot.lane.b32.xlu0 %v8467, 126
    %v8484 = vpop.permute.xlu0 %8483
    %8485 = vrot.lane.b32.xlu0 %v8468, 126
    %v8486 = vpop.permute.xlu0 %8485
    %8487 = vrot.lane.b32.xlu0 %v8469, 126
    %v8488 = vpop.permute.xlu0 %8487
    %8489 = vrot.lane.b32.xlu0 %v8470, 126
    %v8490 = vpop.permute.xlu0 %8489
    %8491 = vrot.lane.b32.xlu0 %v8471, 126
    %v8492 = vpop.permute.xlu0 %8491
    %8493 = vrot.lane.b32.xlu0 %v8472, 126
    %v8494 = vpop.permute.xlu0 %8493
    %8495 = vrot.lane.b32.xlu0 %v8473, 126
    %v8496 = vpop.permute.xlu0 %8495
    %8497 = vrot.lane.b32.xlu0 %v8474, 126
    %v8498 = vpop.permute.xlu0 %8497
    %v8507 = vadd.f32 %v8331, %v8484
    %v8508 = vadd.f32 %v8332, %v8486
    %v8509 = vadd.f32 %v8333, %v8488
    %v8510 = vadd.f32 %v8334, %v8490
    %v8511 = vadd.f32 %v8335, %v8492
    %v8512 = vadd.f32 %v8336, %v8494
    %v8513 = vadd.f32 %v8337, %v8496
    %v8514 = vadd.f32 %v8338, %v8498
    %v8515 = vmul.f32 %v8283, %v852
    %v8516 = vmul.f32 %v8284, %v852
    %v8517 = vmul.f32 %v8285, %v852
    %v8518 = vmul.f32 %v8286, %v852
    %v8519 = vmul.f32 %v8287, %v852
    %v8520 = vmul.f32 %v8288, %v852
    %v8521 = vmul.f32 %v8289, %v852
    %v8522 = vmul.f32 %v8290, %v852
    %8531 = vrot.lane.b32.xlu0 %v8515, 126
    %v8532 = vpop.permute.xlu0 %8531
    %8533 = vrot.lane.b32.xlu0 %v8516, 126
    %v8534 = vpop.permute.xlu0 %8533
    %8535 = vrot.lane.b32.xlu0 %v8517, 126
    %v8536 = vpop.permute.xlu0 %8535
    %8537 = vrot.lane.b32.xlu0 %v8518, 126
    %v8538 = vpop.permute.xlu0 %8537
    %8539 = vrot.lane.b32.xlu0 %v8519, 126
    %v8540 = vpop.permute.xlu0 %8539
    %8541 = vrot.lane.b32.xlu0 %v8520, 126
    %v8542 = vpop.permute.xlu0 %8541
    %8543 = vrot.lane.b32.xlu0 %v8521, 126
    %v8544 = vpop.permute.xlu0 %8543
    %8545 = vrot.lane.b32.xlu0 %v8522, 126
    %v8546 = vpop.permute.xlu0 %8545
    %v8555 = vadd.f32 %v8347, %v8532
    %v8556 = vadd.f32 %v8348, %v8534
    %v8557 = vadd.f32 %v8349, %v8536
    %v8558 = vadd.f32 %v8350, %v8538
    %v8559 = vadd.f32 %v8351, %v8540
    %v8560 = vadd.f32 %v8352, %v8542
    %v8561 = vadd.f32 %v8353, %v8544
    %v8562 = vadd.f32 %v8354, %v8546
    %v8563 = vmul.f32 %v8283, %v901
    %v8564 = vmul.f32 %v8284, %v901
    %v8565 = vmul.f32 %v8285, %v901
    %v8566 = vmul.f32 %v8286, %v901
    %v8567 = vmul.f32 %v8287, %v901
    %v8568 = vmul.f32 %v8288, %v901
    %v8569 = vmul.f32 %v8289, %v901
    %v8570 = vmul.f32 %v8290, %v901
    %8579 = vrot.lane.b32.xlu0 %v8563, 126
    %v8580 = vpop.permute.xlu0 %8579
    %8581 = vrot.lane.b32.xlu0 %v8564, 126
    %v8582 = vpop.permute.xlu0 %8581
    %8583 = vrot.lane.b32.xlu0 %v8565, 126
    %v8584 = vpop.permute.xlu0 %8583
    %8585 = vrot.lane.b32.xlu0 %v8566, 126
    %v8586 = vpop.permute.xlu0 %8585
    %8587 = vrot.lane.b32.xlu0 %v8567, 126
    %v8588 = vpop.permute.xlu0 %8587
    %8589 = vrot.lane.b32.xlu0 %v8568, 126
    %v8590 = vpop.permute.xlu0 %8589
    %8591 = vrot.lane.b32.xlu0 %v8569, 126
    %v8592 = vpop.permute.xlu0 %8591
    %8593 = vrot.lane.b32.xlu0 %v8570, 126
    %v8594 = vpop.permute.xlu0 %8593
    %v8603 = vadd.f32 %v8363, %v8580
    %v8604 = vadd.f32 %v8364, %v8582
    %v8605 = vadd.f32 %v8365, %v8584
    %v8606 = vadd.f32 %v8366, %v8586
    %v8607 = vadd.f32 %v8367, %v8588
    %v8608 = vadd.f32 %v8368, %v8590
    %v8609 = vadd.f32 %v8369, %v8592
    %v8610 = vadd.f32 %v8370, %v8594
    %v8611 = vmul.f32 %v8283, %v950
    %v8612 = vmul.f32 %v8284, %v950
    %v8613 = vmul.f32 %v8285, %v950
    %v8614 = vmul.f32 %v8286, %v950
    %v8615 = vmul.f32 %v8287, %v950
    %v8616 = vmul.f32 %v8288, %v950
    %v8617 = vmul.f32 %v8289, %v950
    %v8618 = vmul.f32 %v8290, %v950
    %8627 = vrot.lane.b32.xlu0 %v8611, 124
    %v8628 = vpop.permute.xlu0 %8627
    %8629 = vrot.lane.b32.xlu0 %v8612, 124
    %v8630 = vpop.permute.xlu0 %8629
    %8631 = vrot.lane.b32.xlu0 %v8613, 124
    %v8632 = vpop.permute.xlu0 %8631
    %8633 = vrot.lane.b32.xlu0 %v8614, 124
    %v8634 = vpop.permute.xlu0 %8633
    %8635 = vrot.lane.b32.xlu0 %v8615, 124
    %v8636 = vpop.permute.xlu0 %8635
    %8637 = vrot.lane.b32.xlu0 %v8616, 124
    %v8638 = vpop.permute.xlu0 %8637
    %8639 = vrot.lane.b32.xlu0 %v8617, 124
    %v8640 = vpop.permute.xlu0 %8639
    %8641 = vrot.lane.b32.xlu0 %v8618, 124
    %v8642 = vpop.permute.xlu0 %8641
    %v8651 = vadd.f32 %v8411, %v8628
    %v8652 = vadd.f32 %v8412, %v8630
    %v8653 = vadd.f32 %v8413, %v8632
    %v8654 = vadd.f32 %v8414, %v8634
    %v8655 = vadd.f32 %v8415, %v8636
    %v8656 = vadd.f32 %v8416, %v8638
    %v8657 = vadd.f32 %v8417, %v8640
    %v8658 = vadd.f32 %v8418, %v8642
    %v8659 = vmul.f32 %v8283, %v999
    %v8660 = vmul.f32 %v8284, %v999
    %v8661 = vmul.f32 %v8285, %v999
    %v8662 = vmul.f32 %v8286, %v999
    %v8663 = vmul.f32 %v8287, %v999
    %v8664 = vmul.f32 %v8288, %v999
    %v8665 = vmul.f32 %v8289, %v999
    %v8666 = vmul.f32 %v8290, %v999
    %8675 = vrot.lane.b32.xlu0 %v8659, 124
    %v8676 = vpop.permute.xlu0 %8675
    %8677 = vrot.lane.b32.xlu0 %v8660, 124
    %v8678 = vpop.permute.xlu0 %8677
    %8679 = vrot.lane.b32.xlu0 %v8661, 124
    %v8680 = vpop.permute.xlu0 %8679
    %8681 = vrot.lane.b32.xlu0 %v8662, 124
    %v8682 = vpop.permute.xlu0 %8681
    %8683 = vrot.lane.b32.xlu0 %v8663, 124
    %v8684 = vpop.permute.xlu0 %8683
    %8685 = vrot.lane.b32.xlu0 %v8664, 124
    %v8686 = vpop.permute.xlu0 %8685
    %8687 = vrot.lane.b32.xlu0 %v8665, 124
    %v8688 = vpop.permute.xlu0 %8687
    %8689 = vrot.lane.b32.xlu0 %v8666, 124
    %v8690 = vpop.permute.xlu0 %8689
    %v8699 = vadd.f32 %v8459, %v8676
    %v8700 = vadd.f32 %v8460, %v8678
    %v8701 = vadd.f32 %v8461, %v8680
    %v8702 = vadd.f32 %v8462, %v8682
    %v8703 = vadd.f32 %v8463, %v8684
    %v8704 = vadd.f32 %v8464, %v8686
    %v8705 = vadd.f32 %v8465, %v8688
    %v8706 = vadd.f32 %v8466, %v8690
    %v8707 = vmul.f32 %v8283, %v1048
    %v8708 = vmul.f32 %v8284, %v1048
    %v8709 = vmul.f32 %v8285, %v1048
    %v8710 = vmul.f32 %v8286, %v1048
    %v8711 = vmul.f32 %v8287, %v1048
    %v8712 = vmul.f32 %v8288, %v1048
    %v8713 = vmul.f32 %v8289, %v1048
    %v8714 = vmul.f32 %v8290, %v1048
    %8723 = vrot.lane.b32.xlu0 %v8707, 124
    %v8724 = vpop.permute.xlu0 %8723
    %8725 = vrot.lane.b32.xlu0 %v8708, 124
    %v8726 = vpop.permute.xlu0 %8725
    %8727 = vrot.lane.b32.xlu0 %v8709, 124
    %v8728 = vpop.permute.xlu0 %8727
    %8729 = vrot.lane.b32.xlu0 %v8710, 124
    %v8730 = vpop.permute.xlu0 %8729
    %8731 = vrot.lane.b32.xlu0 %v8711, 124
    %v8732 = vpop.permute.xlu0 %8731
    %8733 = vrot.lane.b32.xlu0 %v8712, 124
    %v8734 = vpop.permute.xlu0 %8733
    %8735 = vrot.lane.b32.xlu0 %v8713, 124
    %v8736 = vpop.permute.xlu0 %8735
    %8737 = vrot.lane.b32.xlu0 %v8714, 124
    %v8738 = vpop.permute.xlu0 %8737
    %v8747 = vadd.f32 %v8507, %v8724
    %v8748 = vadd.f32 %v8508, %v8726
    %v8749 = vadd.f32 %v8509, %v8728
    %v8750 = vadd.f32 %v8510, %v8730
    %v8751 = vadd.f32 %v8511, %v8732
    %v8752 = vadd.f32 %v8512, %v8734
    %v8753 = vadd.f32 %v8513, %v8736
    %v8754 = vadd.f32 %v8514, %v8738
    %v8755 = vmul.f32 %v8283, %v1097
    %v8756 = vmul.f32 %v8284, %v1097
    %v8757 = vmul.f32 %v8285, %v1097
    %v8758 = vmul.f32 %v8286, %v1097
    %v8759 = vmul.f32 %v8287, %v1097
    %v8760 = vmul.f32 %v8288, %v1097
    %v8761 = vmul.f32 %v8289, %v1097
    %v8762 = vmul.f32 %v8290, %v1097
    %8771 = vrot.lane.b32.xlu0 %v8755, 124
    %v8772 = vpop.permute.xlu0 %8771
    %8773 = vrot.lane.b32.xlu0 %v8756, 124
    %v8774 = vpop.permute.xlu0 %8773
    %8775 = vrot.lane.b32.xlu0 %v8757, 124
    %v8776 = vpop.permute.xlu0 %8775
    %8777 = vrot.lane.b32.xlu0 %v8758, 124
    %v8778 = vpop.permute.xlu0 %8777
    %8779 = vrot.lane.b32.xlu0 %v8759, 124
    %v8780 = vpop.permute.xlu0 %8779
    %8781 = vrot.lane.b32.xlu0 %v8760, 124
    %v8782 = vpop.permute.xlu0 %8781
    %8783 = vrot.lane.b32.xlu0 %v8761, 124
    %v8784 = vpop.permute.xlu0 %8783
    %8785 = vrot.lane.b32.xlu0 %v8762, 124
    %v8786 = vpop.permute.xlu0 %8785
    %v8795 = vadd.f32 %v8555, %v8772
    %v8796 = vadd.f32 %v8556, %v8774
    %v8797 = vadd.f32 %v8557, %v8776
    %v8798 = vadd.f32 %v8558, %v8778
    %v8799 = vadd.f32 %v8559, %v8780
    %v8800 = vadd.f32 %v8560, %v8782
    %v8801 = vadd.f32 %v8561, %v8784
    %v8802 = vadd.f32 %v8562, %v8786
    %v8803 = vmul.f32 %v8283, %v1146
    %v8804 = vmul.f32 %v8284, %v1146
    %v8805 = vmul.f32 %v8285, %v1146
    %v8806 = vmul.f32 %v8286, %v1146
    %v8807 = vmul.f32 %v8287, %v1146
    %v8808 = vmul.f32 %v8288, %v1146
    %v8809 = vmul.f32 %v8289, %v1146
    %v8810 = vmul.f32 %v8290, %v1146
    %8819 = vrot.lane.b32.xlu0 %v8803, 124
    %v8820 = vpop.permute.xlu0 %8819
    %8821 = vrot.lane.b32.xlu0 %v8804, 124
    %v8822 = vpop.permute.xlu0 %8821
    %8823 = vrot.lane.b32.xlu0 %v8805, 124
    %v8824 = vpop.permute.xlu0 %8823
    %8825 = vrot.lane.b32.xlu0 %v8806, 124
    %v8826 = vpop.permute.xlu0 %8825
    %8827 = vrot.lane.b32.xlu0 %v8807, 124
    %v8828 = vpop.permute.xlu0 %8827
    %8829 = vrot.lane.b32.xlu0 %v8808, 124
    %v8830 = vpop.permute.xlu0 %8829
    %8831 = vrot.lane.b32.xlu0 %v8809, 124
    %v8832 = vpop.permute.xlu0 %8831
    %8833 = vrot.lane.b32.xlu0 %v8810, 124
    %v8834 = vpop.permute.xlu0 %8833
    %v8843 = vadd.f32 %v8603, %v8820
    %v8844 = vadd.f32 %v8604, %v8822
    %v8845 = vadd.f32 %v8605, %v8824
    %v8846 = vadd.f32 %v8606, %v8826
    %v8847 = vadd.f32 %v8607, %v8828
    %v8848 = vadd.f32 %v8608, %v8830
    %v8849 = vadd.f32 %v8609, %v8832
    %v8850 = vadd.f32 %v8610, %v8834
    %v8851 = vld [vmem:[%s7754 + $0x6] sm:$0xff]
    %v8852 = vld [vmem:[%s7754 + $0xe] sm:$0xff]
    %v8853 = vld [vmem:[%s7754 + $0x16] sm:$0xff]
    %v8854 = vld [vmem:[%s7754 + $0x1e] sm:$0xff]
    %v8855 = vld [vmem:[%s7754 + $0x26] sm:$0xff]
    %v8856 = vld [vmem:[%s7754 + $0x2e] sm:$0xff]
    %v8857 = vld [vmem:[%s7754 + $0x36] sm:$0xff]
    %v8858 = vld [vmem:[%s7754 + $0x3e] sm:$0xf]
    %v8859 = vmul.f32 %v8851, %v1203
    %v8860 = vmul.f32 %v8852, %v1203
    %v8861 = vmul.f32 %v8853, %v1203
    %v8862 = vmul.f32 %v8854, %v1203
    %v8863 = vmul.f32 %v8855, %v1203
    %v8864 = vmul.f32 %v8856, %v1203
    %v8865 = vmul.f32 %v8857, %v1203
    %v8866 = vmul.f32 %v8858, %v1203
    %v8867 = vadd.f32 %v8651, %v8859
    %v8868 = vadd.f32 %v8652, %v8860
    %v8869 = vadd.f32 %v8653, %v8861
    %v8870 = vadd.f32 %v8654, %v8862
    %v8871 = vadd.f32 %v8655, %v8863
    %v8872 = vadd.f32 %v8656, %v8864
    %v8873 = vadd.f32 %v8657, %v8865
    %v8874 = vadd.f32 %v8658, %v8866
    %v8875 = vmul.f32 %v8851, %v1220
    %v8876 = vmul.f32 %v8852, %v1220
    %v8877 = vmul.f32 %v8853, %v1220
    %v8878 = vmul.f32 %v8854, %v1220
    %v8879 = vmul.f32 %v8855, %v1220
    %v8880 = vmul.f32 %v8856, %v1220
    %v8881 = vmul.f32 %v8857, %v1220
    %v8882 = vmul.f32 %v8858, %v1220
    %v8883 = vadd.f32 %v8699, %v8875
    %v8884 = vadd.f32 %v8700, %v8876
    %v8885 = vadd.f32 %v8701, %v8877
    %v8886 = vadd.f32 %v8702, %v8878
    %v8887 = vadd.f32 %v8703, %v8879
    %v8888 = vadd.f32 %v8704, %v8880
    %v8889 = vadd.f32 %v8705, %v8881
    %v8890 = vadd.f32 %v8706, %v8882
    %v8891 = vmul.f32 %v8851, %v1237
    %v8892 = vmul.f32 %v8852, %v1237
    %v8893 = vmul.f32 %v8853, %v1237
    %v8894 = vmul.f32 %v8854, %v1237
    %v8895 = vmul.f32 %v8855, %v1237
    %v8896 = vmul.f32 %v8856, %v1237
    %v8897 = vmul.f32 %v8857, %v1237
    %v8898 = vmul.f32 %v8858, %v1237
    %v8899 = vadd.f32 %v8747, %v8891
    %v8900 = vadd.f32 %v8748, %v8892
    %v8901 = vadd.f32 %v8749, %v8893
    %v8902 = vadd.f32 %v8750, %v8894
    %v8903 = vadd.f32 %v8751, %v8895
    %v8904 = vadd.f32 %v8752, %v8896
    %v8905 = vadd.f32 %v8753, %v8897
    %v8906 = vadd.f32 %v8754, %v8898
    %v8907 = vmul.f32 %v8851, %v1254
    %v8908 = vmul.f32 %v8852, %v1254
    %v8909 = vmul.f32 %v8853, %v1254
    %v8910 = vmul.f32 %v8854, %v1254
    %v8911 = vmul.f32 %v8855, %v1254
    %v8912 = vmul.f32 %v8856, %v1254
    %v8913 = vmul.f32 %v8857, %v1254
    %v8914 = vmul.f32 %v8858, %v1254
    %v8915 = vadd.f32 %v8795, %v8907
    %v8916 = vadd.f32 %v8796, %v8908
    %v8917 = vadd.f32 %v8797, %v8909
    %v8918 = vadd.f32 %v8798, %v8910
    %v8919 = vadd.f32 %v8799, %v8911
    %v8920 = vadd.f32 %v8800, %v8912
    %v8921 = vadd.f32 %v8801, %v8913
    %v8922 = vadd.f32 %v8802, %v8914
    %v8923 = vmul.f32 %v8851, %v1271
    %v8924 = vmul.f32 %v8852, %v1271
    %v8925 = vmul.f32 %v8853, %v1271
    %v8926 = vmul.f32 %v8854, %v1271
    %v8927 = vmul.f32 %v8855, %v1271
    %v8928 = vmul.f32 %v8856, %v1271
    %v8929 = vmul.f32 %v8857, %v1271
    %v8930 = vmul.f32 %v8858, %v1271
    %v8931 = vadd.f32 %v8843, %v8923
    %v8932 = vadd.f32 %v8844, %v8924
    %v8933 = vadd.f32 %v8845, %v8925
    %v8934 = vadd.f32 %v8846, %v8926
    %v8935 = vadd.f32 %v8847, %v8927
    %v8936 = vadd.f32 %v8848, %v8928
    %v8937 = vadd.f32 %v8849, %v8929
    %v8938 = vadd.f32 %v8850, %v8930
    %v8939 = vmul.f32 %v8851, %v1288
    %v8940 = vmul.f32 %v8852, %v1288
    %v8941 = vmul.f32 %v8853, %v1288
    %v8942 = vmul.f32 %v8854, %v1288
    %v8943 = vmul.f32 %v8855, %v1288
    %v8944 = vmul.f32 %v8856, %v1288
    %v8945 = vmul.f32 %v8857, %v1288
    %v8946 = vmul.f32 %v8858, %v1288
    %8955 = vrot.lane.b32.xlu0 %v8939, 126
    %v8956 = vpop.permute.xlu0 %8955
    %8957 = vrot.lane.b32.xlu0 %v8940, 126
    %v8958 = vpop.permute.xlu0 %8957
    %8959 = vrot.lane.b32.xlu0 %v8941, 126
    %v8960 = vpop.permute.xlu0 %8959
    %8961 = vrot.lane.b32.xlu0 %v8942, 126
    %v8962 = vpop.permute.xlu0 %8961
    %8963 = vrot.lane.b32.xlu0 %v8943, 126
    %v8964 = vpop.permute.xlu0 %8963
    %8965 = vrot.lane.b32.xlu0 %v8944, 126
    %v8966 = vpop.permute.xlu0 %8965
    %8967 = vrot.lane.b32.xlu0 %v8945, 126
    %v8968 = vpop.permute.xlu0 %8967
    %8969 = vrot.lane.b32.xlu0 %v8946, 126
    %v8970 = vpop.permute.xlu0 %8969
    %v8979 = vadd.f32 %v8867, %v8956
    %v8980 = vadd.f32 %v8868, %v8958
    %v8981 = vadd.f32 %v8869, %v8960
    %v8982 = vadd.f32 %v8870, %v8962
    %v8983 = vadd.f32 %v8871, %v8964
    %v8984 = vadd.f32 %v8872, %v8966
    %v8985 = vadd.f32 %v8873, %v8968
    %v8986 = vadd.f32 %v8874, %v8970
    %v8987 = vmul.f32 %v8851, %v1337
    %v8988 = vmul.f32 %v8852, %v1337
    %v8989 = vmul.f32 %v8853, %v1337
    %v8990 = vmul.f32 %v8854, %v1337
    %v8991 = vmul.f32 %v8855, %v1337
    %v8992 = vmul.f32 %v8856, %v1337
    %v8993 = vmul.f32 %v8857, %v1337
    %v8994 = vmul.f32 %v8858, %v1337
    %9003 = vrot.lane.b32.xlu0 %v8987, 126
    %v9004 = vpop.permute.xlu0 %9003
    %9005 = vrot.lane.b32.xlu0 %v8988, 126
    %v9006 = vpop.permute.xlu0 %9005
    %9007 = vrot.lane.b32.xlu0 %v8989, 126
    %v9008 = vpop.permute.xlu0 %9007
    %9009 = vrot.lane.b32.xlu0 %v8990, 126
    %v9010 = vpop.permute.xlu0 %9009
    %9011 = vrot.lane.b32.xlu0 %v8991, 126
    %v9012 = vpop.permute.xlu0 %9011
    %9013 = vrot.lane.b32.xlu0 %v8992, 126
    %v9014 = vpop.permute.xlu0 %9013
    %9015 = vrot.lane.b32.xlu0 %v8993, 126
    %v9016 = vpop.permute.xlu0 %9015
    %9017 = vrot.lane.b32.xlu0 %v8994, 126
    %v9018 = vpop.permute.xlu0 %9017
    %v9027 = vadd.f32 %v8883, %v9004
    %v9028 = vadd.f32 %v8884, %v9006
    %v9029 = vadd.f32 %v8885, %v9008
    %v9030 = vadd.f32 %v8886, %v9010
    %v9031 = vadd.f32 %v8887, %v9012
    %v9032 = vadd.f32 %v8888, %v9014
    %v9033 = vadd.f32 %v8889, %v9016
    %v9034 = vadd.f32 %v8890, %v9018
    %v9035 = vmul.f32 %v8851, %v1386
    %v9036 = vmul.f32 %v8852, %v1386
    %v9037 = vmul.f32 %v8853, %v1386
    %v9038 = vmul.f32 %v8854, %v1386
    %v9039 = vmul.f32 %v8855, %v1386
    %v9040 = vmul.f32 %v8856, %v1386
    %v9041 = vmul.f32 %v8857, %v1386
    %v9042 = vmul.f32 %v8858, %v1386
    %9051 = vrot.lane.b32.xlu0 %v9035, 126
    %v9052 = vpop.permute.xlu0 %9051
    %9053 = vrot.lane.b32.xlu0 %v9036, 126
    %v9054 = vpop.permute.xlu0 %9053
    %9055 = vrot.lane.b32.xlu0 %v9037, 126
    %v9056 = vpop.permute.xlu0 %9055
    %9057 = vrot.lane.b32.xlu0 %v9038, 126
    %v9058 = vpop.permute.xlu0 %9057
    %9059 = vrot.lane.b32.xlu0 %v9039, 126
    %v9060 = vpop.permute.xlu0 %9059
    %9061 = vrot.lane.b32.xlu0 %v9040, 126
    %v9062 = vpop.permute.xlu0 %9061
    %9063 = vrot.lane.b32.xlu0 %v9041, 126
    %v9064 = vpop.permute.xlu0 %9063
    %9065 = vrot.lane.b32.xlu0 %v9042, 126
    %v9066 = vpop.permute.xlu0 %9065
    %v9075 = vadd.f32 %v8899, %v9052
    %v9076 = vadd.f32 %v8900, %v9054
    %v9077 = vadd.f32 %v8901, %v9056
    %v9078 = vadd.f32 %v8902, %v9058
    %v9079 = vadd.f32 %v8903, %v9060
    %v9080 = vadd.f32 %v8904, %v9062
    %v9081 = vadd.f32 %v8905, %v9064
    %v9082 = vadd.f32 %v8906, %v9066
    %v9083 = vmul.f32 %v8851, %v1435
    %v9084 = vmul.f32 %v8852, %v1435
    %v9085 = vmul.f32 %v8853, %v1435
    %v9086 = vmul.f32 %v8854, %v1435
    %v9087 = vmul.f32 %v8855, %v1435
    %v9088 = vmul.f32 %v8856, %v1435
    %v9089 = vmul.f32 %v8857, %v1435
    %v9090 = vmul.f32 %v8858, %v1435
    %9099 = vrot.lane.b32.xlu0 %v9083, 126
    %v9100 = vpop.permute.xlu0 %9099
    %9101 = vrot.lane.b32.xlu0 %v9084, 126
    %v9102 = vpop.permute.xlu0 %9101
    %9103 = vrot.lane.b32.xlu0 %v9085, 126
    %v9104 = vpop.permute.xlu0 %9103
    %9105 = vrot.lane.b32.xlu0 %v9086, 126
    %v9106 = vpop.permute.xlu0 %9105
    %9107 = vrot.lane.b32.xlu0 %v9087, 126
    %v9108 = vpop.permute.xlu0 %9107
    %9109 = vrot.lane.b32.xlu0 %v9088, 126
    %v9110 = vpop.permute.xlu0 %9109
    %9111 = vrot.lane.b32.xlu0 %v9089, 126
    %v9112 = vpop.permute.xlu0 %9111
    %9113 = vrot.lane.b32.xlu0 %v9090, 126
    %v9114 = vpop.permute.xlu0 %9113
    %v9123 = vadd.f32 %v8915, %v9100
    %v9124 = vadd.f32 %v8916, %v9102
    %v9125 = vadd.f32 %v8917, %v9104
    %v9126 = vadd.f32 %v8918, %v9106
    %v9127 = vadd.f32 %v8919, %v9108
    %v9128 = vadd.f32 %v8920, %v9110
    %v9129 = vadd.f32 %v8921, %v9112
    %v9130 = vadd.f32 %v8922, %v9114
    %v9131 = vmul.f32 %v8851, %v1484
    %v9132 = vmul.f32 %v8852, %v1484
    %v9133 = vmul.f32 %v8853, %v1484
    %v9134 = vmul.f32 %v8854, %v1484
    %v9135 = vmul.f32 %v8855, %v1484
    %v9136 = vmul.f32 %v8856, %v1484
    %v9137 = vmul.f32 %v8857, %v1484
    %v9138 = vmul.f32 %v8858, %v1484
    %9147 = vrot.lane.b32.xlu0 %v9131, 126
    %v9148 = vpop.permute.xlu0 %9147
    %9149 = vrot.lane.b32.xlu0 %v9132, 126
    %v9150 = vpop.permute.xlu0 %9149
    %9151 = vrot.lane.b32.xlu0 %v9133, 126
    %v9152 = vpop.permute.xlu0 %9151
    %9153 = vrot.lane.b32.xlu0 %v9134, 126
    %v9154 = vpop.permute.xlu0 %9153
    %9155 = vrot.lane.b32.xlu0 %v9135, 126
    %v9156 = vpop.permute.xlu0 %9155
    %9157 = vrot.lane.b32.xlu0 %v9136, 126
    %v9158 = vpop.permute.xlu0 %9157
    %9159 = vrot.lane.b32.xlu0 %v9137, 126
    %v9160 = vpop.permute.xlu0 %9159
    %9161 = vrot.lane.b32.xlu0 %v9138, 126
    %v9162 = vpop.permute.xlu0 %9161
    %v9171 = vadd.f32 %v8931, %v9148
    %v9172 = vadd.f32 %v8932, %v9150
    %v9173 = vadd.f32 %v8933, %v9152
    %v9174 = vadd.f32 %v8934, %v9154
    %v9175 = vadd.f32 %v8935, %v9156
    %v9176 = vadd.f32 %v8936, %v9158
    %v9177 = vadd.f32 %v8937, %v9160
    %v9178 = vadd.f32 %v8938, %v9162
    %v9179 = vmul.f32 %v8851, %v1533
    %v9180 = vmul.f32 %v8852, %v1533
    %v9181 = vmul.f32 %v8853, %v1533
    %v9182 = vmul.f32 %v8854, %v1533
    %v9183 = vmul.f32 %v8855, %v1533
    %v9184 = vmul.f32 %v8856, %v1533
    %v9185 = vmul.f32 %v8857, %v1533
    %v9186 = vmul.f32 %v8858, %v1533
    %9195 = vrot.lane.b32.xlu0 %v9179, 124
    %v9196 = vpop.permute.xlu0 %9195
    %9197 = vrot.lane.b32.xlu0 %v9180, 124
    %v9198 = vpop.permute.xlu0 %9197
    %9199 = vrot.lane.b32.xlu0 %v9181, 124
    %v9200 = vpop.permute.xlu0 %9199
    %9201 = vrot.lane.b32.xlu0 %v9182, 124
    %v9202 = vpop.permute.xlu0 %9201
    %9203 = vrot.lane.b32.xlu0 %v9183, 124
    %v9204 = vpop.permute.xlu0 %9203
    %9205 = vrot.lane.b32.xlu0 %v9184, 124
    %v9206 = vpop.permute.xlu0 %9205
    %9207 = vrot.lane.b32.xlu0 %v9185, 124
    %v9208 = vpop.permute.xlu0 %9207
    %9209 = vrot.lane.b32.xlu0 %v9186, 124
    %v9210 = vpop.permute.xlu0 %9209
    %v9219 = vadd.f32 %v8979, %v9196
    %v9220 = vadd.f32 %v8980, %v9198
    %v9221 = vadd.f32 %v8981, %v9200
    %v9222 = vadd.f32 %v8982, %v9202
    %v9223 = vadd.f32 %v8983, %v9204
    %v9224 = vadd.f32 %v8984, %v9206
    %v9225 = vadd.f32 %v8985, %v9208
    %v9226 = vadd.f32 %v8986, %v9210
    %v9227 = vmul.f32 %v8851, %v1582
    %v9228 = vmul.f32 %v8852, %v1582
    %v9229 = vmul.f32 %v8853, %v1582
    %v9230 = vmul.f32 %v8854, %v1582
    %v9231 = vmul.f32 %v8855, %v1582
    %v9232 = vmul.f32 %v8856, %v1582
    %v9233 = vmul.f32 %v8857, %v1582
    %v9234 = vmul.f32 %v8858, %v1582
    %9243 = vrot.lane.b32.xlu0 %v9227, 124
    %v9244 = vpop.permute.xlu0 %9243
    %9245 = vrot.lane.b32.xlu0 %v9228, 124
    %v9246 = vpop.permute.xlu0 %9245
    %9247 = vrot.lane.b32.xlu0 %v9229, 124
    %v9248 = vpop.permute.xlu0 %9247
    %9249 = vrot.lane.b32.xlu0 %v9230, 124
    %v9250 = vpop.permute.xlu0 %9249
    %9251 = vrot.lane.b32.xlu0 %v9231, 124
    %v9252 = vpop.permute.xlu0 %9251
    %9253 = vrot.lane.b32.xlu0 %v9232, 124
    %v9254 = vpop.permute.xlu0 %9253
    %9255 = vrot.lane.b32.xlu0 %v9233, 124
    %v9256 = vpop.permute.xlu0 %9255
    %9257 = vrot.lane.b32.xlu0 %v9234, 124
    %v9258 = vpop.permute.xlu0 %9257
    %v9267 = vadd.f32 %v9027, %v9244
    %v9268 = vadd.f32 %v9028, %v9246
    %v9269 = vadd.f32 %v9029, %v9248
    %v9270 = vadd.f32 %v9030, %v9250
    %v9271 = vadd.f32 %v9031, %v9252
    %v9272 = vadd.f32 %v9032, %v9254
    %v9273 = vadd.f32 %v9033, %v9256
    %v9274 = vadd.f32 %v9034, %v9258
    %v9275 = vmul.f32 %v8851, %v1631
    %v9276 = vmul.f32 %v8852, %v1631
    %v9277 = vmul.f32 %v8853, %v1631
    %v9278 = vmul.f32 %v8854, %v1631
    %v9279 = vmul.f32 %v8855, %v1631
    %v9280 = vmul.f32 %v8856, %v1631
    %v9281 = vmul.f32 %v8857, %v1631
    %v9282 = vmul.f32 %v8858, %v1631
    %9291 = vrot.lane.b32.xlu0 %v9275, 124
    %v9292 = vpop.permute.xlu0 %9291
    %9293 = vrot.lane.b32.xlu0 %v9276, 124
    %v9294 = vpop.permute.xlu0 %9293
    %9295 = vrot.lane.b32.xlu0 %v9277, 124
    %v9296 = vpop.permute.xlu0 %9295
    %9297 = vrot.lane.b32.xlu0 %v9278, 124
    %v9298 = vpop.permute.xlu0 %9297
    %9299 = vrot.lane.b32.xlu0 %v9279, 124
    %v9300 = vpop.permute.xlu0 %9299
    %9301 = vrot.lane.b32.xlu0 %v9280, 124
    %v9302 = vpop.permute.xlu0 %9301
    %9303 = vrot.lane.b32.xlu0 %v9281, 124
    %v9304 = vpop.permute.xlu0 %9303
    %9305 = vrot.lane.b32.xlu0 %v9282, 124
    %v9306 = vpop.permute.xlu0 %9305
    %v9315 = vadd.f32 %v9075, %v9292
    %v9316 = vadd.f32 %v9076, %v9294
    %v9317 = vadd.f32 %v9077, %v9296
    %v9318 = vadd.f32 %v9078, %v9298
    %v9319 = vadd.f32 %v9079, %v9300
    %v9320 = vadd.f32 %v9080, %v9302
    %v9321 = vadd.f32 %v9081, %v9304
    %v9322 = vadd.f32 %v9082, %v9306
    %v9323 = vmul.f32 %v8851, %v1680
    %v9324 = vmul.f32 %v8852, %v1680
    %v9325 = vmul.f32 %v8853, %v1680
    %v9326 = vmul.f32 %v8854, %v1680
    %v9327 = vmul.f32 %v8855, %v1680
    %v9328 = vmul.f32 %v8856, %v1680
    %v9329 = vmul.f32 %v8857, %v1680
    %v9330 = vmul.f32 %v8858, %v1680
    %9339 = vrot.lane.b32.xlu0 %v9323, 124
    %v9340 = vpop.permute.xlu0 %9339
    %9341 = vrot.lane.b32.xlu0 %v9324, 124
    %v9342 = vpop.permute.xlu0 %9341
    %9343 = vrot.lane.b32.xlu0 %v9325, 124
    %v9344 = vpop.permute.xlu0 %9343
    %9345 = vrot.lane.b32.xlu0 %v9326, 124
    %v9346 = vpop.permute.xlu0 %9345
    %9347 = vrot.lane.b32.xlu0 %v9327, 124
    %v9348 = vpop.permute.xlu0 %9347
    %9349 = vrot.lane.b32.xlu0 %v9328, 124
    %v9350 = vpop.permute.xlu0 %9349
    %9351 = vrot.lane.b32.xlu0 %v9329, 124
    %v9352 = vpop.permute.xlu0 %9351
    %9353 = vrot.lane.b32.xlu0 %v9330, 124
    %v9354 = vpop.permute.xlu0 %9353
    %v9363 = vadd.f32 %v9123, %v9340
    %v9364 = vadd.f32 %v9124, %v9342
    %v9365 = vadd.f32 %v9125, %v9344
    %v9366 = vadd.f32 %v9126, %v9346
    %v9367 = vadd.f32 %v9127, %v9348
    %v9368 = vadd.f32 %v9128, %v9350
    %v9369 = vadd.f32 %v9129, %v9352
    %v9370 = vadd.f32 %v9130, %v9354
    %v9371 = vmul.f32 %v8851, %v1729
    %v9372 = vmul.f32 %v8852, %v1729
    %v9373 = vmul.f32 %v8853, %v1729
    %v9374 = vmul.f32 %v8854, %v1729
    %v9375 = vmul.f32 %v8855, %v1729
    %v9376 = vmul.f32 %v8856, %v1729
    %v9377 = vmul.f32 %v8857, %v1729
    %v9378 = vmul.f32 %v8858, %v1729
    %9387 = vrot.lane.b32.xlu0 %v9371, 124
    %v9388 = vpop.permute.xlu0 %9387
    %9389 = vrot.lane.b32.xlu0 %v9372, 124
    %v9390 = vpop.permute.xlu0 %9389
    %9391 = vrot.lane.b32.xlu0 %v9373, 124
    %v9392 = vpop.permute.xlu0 %9391
    %9393 = vrot.lane.b32.xlu0 %v9374, 124
    %v9394 = vpop.permute.xlu0 %9393
    %9395 = vrot.lane.b32.xlu0 %v9375, 124
    %v9396 = vpop.permute.xlu0 %9395
    %9397 = vrot.lane.b32.xlu0 %v9376, 124
    %v9398 = vpop.permute.xlu0 %9397
    %9399 = vrot.lane.b32.xlu0 %v9377, 124
    %v9400 = vpop.permute.xlu0 %9399
    %9401 = vrot.lane.b32.xlu0 %v9378, 124
    %v9402 = vpop.permute.xlu0 %9401
    %v9411 = vadd.f32 %v9171, %v9388
    %v9412 = vadd.f32 %v9172, %v9390
    %v9413 = vadd.f32 %v9173, %v9392
    %v9414 = vadd.f32 %v9174, %v9394
    %v9415 = vadd.f32 %v9175, %v9396
    %v9416 = vadd.f32 %v9176, %v9398
    %v9417 = vadd.f32 %v9177, %v9400
    %v9418 = vadd.f32 %v9178, %v9402
    %vm9419 = vcmp.gt.f32.partialorder %v9219, 0.0
    %vm9420 = vcmp.gt.f32.partialorder %v9220, 0.0
    %vm9421 = vcmp.gt.f32.partialorder %v9221, 0.0
    %vm9422 = vcmp.gt.f32.partialorder %v9222, 0.0
    %vm9423 = vcmp.gt.f32.partialorder %v9223, 0.0
    %vm9424 = vcmp.gt.f32.partialorder %v9224, 0.0
    %vm9425 = vcmp.gt.f32.partialorder %v9225, 0.0
    %vm9426 = vcmp.gt.f32.partialorder %v9226, 0.0
    %v9427 = vmul.f32 %v9219, 0.345
    %v9428 = vmul.f32 %v9220, 0.345
    %v9429 = vmul.f32 %v9221, 0.345
    %v9430 = vmul.f32 %v9222, 0.345
    %v9431 = vmul.f32 %v9223, 0.345
    %v9432 = vmul.f32 %v9224, 0.345
    %v9433 = vmul.f32 %v9225, 0.345
    %v9434 = vmul.f32 %v9226, 0.345
    %v9435 = vsel %vm9419, %v9219, %v9427
    %v9436 = vsel %vm9420, %v9220, %v9428
    %v9437 = vsel %vm9421, %v9221, %v9429
    %v9438 = vsel %vm9422, %v9222, %v9430
    %v9439 = vsel %vm9423, %v9223, %v9431
    %v9440 = vsel %vm9424, %v9224, %v9432
    %v9441 = vsel %vm9425, %v9225, %v9433
    %v9442 = vsel %vm9426, %v9226, %v9434
    %v9443 = vtanh.pop %v9435
    %v9444 = vtanh.pop %v9436
    %v9445 = vtanh.pop %v9437
    %v9446 = vtanh.pop %v9438
    %v9447 = vtanh.pop %v9439
    %v9448 = vtanh.pop %v9440
    %v9449 = vtanh.pop %v9441
    %v9450 = vtanh.pop %v9442
    %v9451 = vmul.f32 %v9443, %v9443
    %v9452 = vmul.f32 %v9444, %v9444
    %v9453 = vmul.f32 %v9445, %v9445
    %v9454 = vmul.f32 %v9446, %v9446
    %v9455 = vmul.f32 %v9447, %v9447
    %v9456 = vmul.f32 %v9448, %v9448
    %v9457 = vmul.f32 %v9449, %v9449
    %v9458 = vmul.f32 %v9450, %v9450
    %s9459 = scalar_lea.vmem %s2, 1280
    %9460 = vst.msk [vmem:[%s9459] sm:$0xff] %vm1818, %v9451
    %9461 = vst.msk [vmem:[%s9459 + $0x8] sm:$0xff] %vm1818, %v9452
    %9462 = vst.msk [vmem:[%s9459 + $0x10] sm:$0xff] %vm1818, %v9453
    %9463 = vst.msk [vmem:[%s9459 + $0x18] sm:$0xff] %vm1818, %v9454
    %9464 = vst.msk [vmem:[%s9459 + $0x20] sm:$0xff] %vm1818, %v9455
    %9465 = vst.msk [vmem:[%s9459 + $0x28] sm:$0xff] %vm1818, %v9456
    %9466 = vst.msk [vmem:[%s9459 + $0x30] sm:$0xff] %vm1818, %v9457
    %9467 = vst.msk [vmem:[%s9459 + $0x38] sm:$0xf] %vm1826, %v9458
    %vm9468 = vcmp.gt.f32.partialorder %v9267, 0.0
    %vm9469 = vcmp.gt.f32.partialorder %v9268, 0.0
    %vm9470 = vcmp.gt.f32.partialorder %v9269, 0.0
    %vm9471 = vcmp.gt.f32.partialorder %v9270, 0.0
    %vm9472 = vcmp.gt.f32.partialorder %v9271, 0.0
    %vm9473 = vcmp.gt.f32.partialorder %v9272, 0.0
    %vm9474 = vcmp.gt.f32.partialorder %v9273, 0.0
    %vm9475 = vcmp.gt.f32.partialorder %v9274, 0.0
    %v9476 = vmul.f32 %v9267, 0.345
    %v9477 = vmul.f32 %v9268, 0.345
    %v9478 = vmul.f32 %v9269, 0.345
    %v9479 = vmul.f32 %v9270, 0.345
    %v9480 = vmul.f32 %v9271, 0.345
    %v9481 = vmul.f32 %v9272, 0.345
    %v9482 = vmul.f32 %v9273, 0.345
    %v9483 = vmul.f32 %v9274, 0.345
    %v9484 = vsel %vm9468, %v9267, %v9476
    %v9485 = vsel %vm9469, %v9268, %v9477
    %v9486 = vsel %vm9470, %v9269, %v9478
    %v9487 = vsel %vm9471, %v9270, %v9479
    %v9488 = vsel %vm9472, %v9271, %v9480
    %v9489 = vsel %vm9473, %v9272, %v9481
    %v9490 = vsel %vm9474, %v9273, %v9482
    %v9491 = vsel %vm9475, %v9274, %v9483
    %v9492 = vtanh.pop %v9484
    %v9493 = vtanh.pop %v9485
    %v9494 = vtanh.pop %v9486
    %v9495 = vtanh.pop %v9487
    %v9496 = vtanh.pop %v9488
    %v9497 = vtanh.pop %v9489
    %v9498 = vtanh.pop %v9490
    %v9499 = vtanh.pop %v9491
    %v9500 = vmul.f32 %v9492, %v9492
    %v9501 = vmul.f32 %v9493, %v9493
    %v9502 = vmul.f32 %v9494, %v9494
    %v9503 = vmul.f32 %v9495, %v9495
    %v9504 = vmul.f32 %v9496, %v9496
    %v9505 = vmul.f32 %v9497, %v9497
    %v9506 = vmul.f32 %v9498, %v9498
    %v9507 = vmul.f32 %v9499, %v9499
    %s9508 = scalar_lea.vmem %s2, 1344
    %9509 = vst.msk [vmem:[%s9508] sm:$0xff] %vm1818, %v9500
    %9510 = vst.msk [vmem:[%s9508 + $0x8] sm:$0xff] %vm1818, %v9501
    %9511 = vst.msk [vmem:[%s9508 + $0x10] sm:$0xff] %vm1818, %v9502
    %9512 = vst.msk [vmem:[%s9508 + $0x18] sm:$0xff] %vm1818, %v9503
    %9513 = vst.msk [vmem:[%s9508 + $0x20] sm:$0xff] %vm1818, %v9504
    %9514 = vst.msk [vmem:[%s9508 + $0x28] sm:$0xff] %vm1818, %v9505
    %9515 = vst.msk [vmem:[%s9508 + $0x30] sm:$0xff] %vm1818, %v9506
    %9516 = vst.msk [vmem:[%s9508 + $0x38] sm:$0xf] %vm1826, %v9507
    %vm9517 = vcmp.gt.f32.partialorder %v9315, 0.0
    %vm9518 = vcmp.gt.f32.partialorder %v9316, 0.0
    %vm9519 = vcmp.gt.f32.partialorder %v9317, 0.0
    %vm9520 = vcmp.gt.f32.partialorder %v9318, 0.0
    %vm9521 = vcmp.gt.f32.partialorder %v9319, 0.0
    %vm9522 = vcmp.gt.f32.partialorder %v9320, 0.0
    %vm9523 = vcmp.gt.f32.partialorder %v9321, 0.0
    %vm9524 = vcmp.gt.f32.partialorder %v9322, 0.0
    %v9525 = vmul.f32 %v9315, 0.345
    %v9526 = vmul.f32 %v9316, 0.345
    %v9527 = vmul.f32 %v9317, 0.345
    %v9528 = vmul.f32 %v9318, 0.345
    %v9529 = vmul.f32 %v9319, 0.345
    %v9530 = vmul.f32 %v9320, 0.345
    %v9531 = vmul.f32 %v9321, 0.345
    %v9532 = vmul.f32 %v9322, 0.345
    %v9533 = vsel %vm9517, %v9315, %v9525
    %v9534 = vsel %vm9518, %v9316, %v9526
    %v9535 = vsel %vm9519, %v9317, %v9527
    %v9536 = vsel %vm9520, %v9318, %v9528
    %v9537 = vsel %vm9521, %v9319, %v9529
    %v9538 = vsel %vm9522, %v9320, %v9530
    %v9539 = vsel %vm9523, %v9321, %v9531
    %v9540 = vsel %vm9524, %v9322, %v9532
    %v9541 = vtanh.pop %v9533
    %v9542 = vtanh.pop %v9534
    %v9543 = vtanh.pop %v9535
    %v9544 = vtanh.pop %v9536
    %v9545 = vtanh.pop %v9537
    %v9546 = vtanh.pop %v9538
    %v9547 = vtanh.pop %v9539
    %v9548 = vtanh.pop %v9540
    %v9549 = vmul.f32 %v9541, %v9541
    %v9550 = vmul.f32 %v9542, %v9542
    %v9551 = vmul.f32 %v9543, %v9543
    %v9552 = vmul.f32 %v9544, %v9544
    %v9553 = vmul.f32 %v9545, %v9545
    %v9554 = vmul.f32 %v9546, %v9546
    %v9555 = vmul.f32 %v9547, %v9547
    %v9556 = vmul.f32 %v9548, %v9548
    %s9557 = scalar_lea.vmem %s2, 1408
    %9558 = vst.msk [vmem:[%s9557] sm:$0xff] %vm1818, %v9549
    %9559 = vst.msk [vmem:[%s9557 + $0x8] sm:$0xff] %vm1818, %v9550
    %9560 = vst.msk [vmem:[%s9557 + $0x10] sm:$0xff] %vm1818, %v9551
    %9561 = vst.msk [vmem:[%s9557 + $0x18] sm:$0xff] %vm1818, %v9552
    %9562 = vst.msk [vmem:[%s9557 + $0x20] sm:$0xff] %vm1818, %v9553
    %9563 = vst.msk [vmem:[%s9557 + $0x28] sm:$0xff] %vm1818, %v9554
    %9564 = vst.msk [vmem:[%s9557 + $0x30] sm:$0xff] %vm1818, %v9555
    %9565 = vst.msk [vmem:[%s9557 + $0x38] sm:$0xf] %vm1826, %v9556
    %vm9566 = vcmp.gt.f32.partialorder %v9363, 0.0
    %vm9567 = vcmp.gt.f32.partialorder %v9364, 0.0
    %vm9568 = vcmp.gt.f32.partialorder %v9365, 0.0
    %vm9569 = vcmp.gt.f32.partialorder %v9366, 0.0
    %vm9570 = vcmp.gt.f32.partialorder %v9367, 0.0
    %vm9571 = vcmp.gt.f32.partialorder %v9368, 0.0
    %vm9572 = vcmp.gt.f32.partialorder %v9369, 0.0
    %vm9573 = vcmp.gt.f32.partialorder %v9370, 0.0
    %v9574 = vmul.f32 %v9363, 0.345
    %v9575 = vmul.f32 %v9364, 0.345
    %v9576 = vmul.f32 %v9365, 0.345
    %v9577 = vmul.f32 %v9366, 0.345
    %v9578 = vmul.f32 %v9367, 0.345
    %v9579 = vmul.f32 %v9368, 0.345
    %v9580 = vmul.f32 %v9369, 0.345
    %v9581 = vmul.f32 %v9370, 0.345
    %v9582 = vsel %vm9566, %v9363, %v9574
    %v9583 = vsel %vm9567, %v9364, %v9575
    %v9584 = vsel %vm9568, %v9365, %v9576
    %v9585 = vsel %vm9569, %v9366, %v9577
    %v9586 = vsel %vm9570, %v9367, %v9578
    %v9587 = vsel %vm9571, %v9368, %v9579
    %v9588 = vsel %vm9572, %v9369, %v9580
    %v9589 = vsel %vm9573, %v9370, %v9581
    %v9590 = vtanh.pop %v9582
    %v9591 = vtanh.pop %v9583
    %v9592 = vtanh.pop %v9584
    %v9593 = vtanh.pop %v9585
    %v9594 = vtanh.pop %v9586
    %v9595 = vtanh.pop %v9587
    %v9596 = vtanh.pop %v9588
    %v9597 = vtanh.pop %v9589
    %v9598 = vmul.f32 %v9590, %v9590
    %v9599 = vmul.f32 %v9591, %v9591
    %v9600 = vmul.f32 %v9592, %v9592
    %v9601 = vmul.f32 %v9593, %v9593
    %v9602 = vmul.f32 %v9594, %v9594
    %v9603 = vmul.f32 %v9595, %v9595
    %v9604 = vmul.f32 %v9596, %v9596
    %v9605 = vmul.f32 %v9597, %v9597
    %s9606 = scalar_lea.vmem %s2, 1472
    %9607 = vst.msk [vmem:[%s9606] sm:$0xff] %vm1818, %v9598
    %9608 = vst.msk [vmem:[%s9606 + $0x8] sm:$0xff] %vm1818, %v9599
    %9609 = vst.msk [vmem:[%s9606 + $0x10] sm:$0xff] %vm1818, %v9600
    %9610 = vst.msk [vmem:[%s9606 + $0x18] sm:$0xff] %vm1818, %v9601
    %9611 = vst.msk [vmem:[%s9606 + $0x20] sm:$0xff] %vm1818, %v9602
    %9612 = vst.msk [vmem:[%s9606 + $0x28] sm:$0xff] %vm1818, %v9603
    %9613 = vst.msk [vmem:[%s9606 + $0x30] sm:$0xff] %vm1818, %v9604
    %9614 = vst.msk [vmem:[%s9606 + $0x38] sm:$0xf] %vm1826, %v9605
    %vm9615 = vcmp.gt.f32.partialorder %v9411, 0.0
    %vm9616 = vcmp.gt.f32.partialorder %v9412, 0.0
    %vm9617 = vcmp.gt.f32.partialorder %v9413, 0.0
    %vm9618 = vcmp.gt.f32.partialorder %v9414, 0.0
    %vm9619 = vcmp.gt.f32.partialorder %v9415, 0.0
    %vm9620 = vcmp.gt.f32.partialorder %v9416, 0.0
    %vm9621 = vcmp.gt.f32.partialorder %v9417, 0.0
    %vm9622 = vcmp.gt.f32.partialorder %v9418, 0.0
    %v9623 = vmul.f32 %v9411, 0.345
    %v9624 = vmul.f32 %v9412, 0.345
    %v9625 = vmul.f32 %v9413, 0.345
    %v9626 = vmul.f32 %v9414, 0.345
    %v9627 = vmul.f32 %v9415, 0.345
    %v9628 = vmul.f32 %v9416, 0.345
    %v9629 = vmul.f32 %v9417, 0.345
    %v9630 = vmul.f32 %v9418, 0.345
    %v9631 = vsel %vm9615, %v9411, %v9623
    %v9632 = vsel %vm9616, %v9412, %v9624
    %v9633 = vsel %vm9617, %v9413, %v9625
    %v9634 = vsel %vm9618, %v9414, %v9626
    %v9635 = vsel %vm9619, %v9415, %v9627
    %v9636 = vsel %vm9620, %v9416, %v9628
    %v9637 = vsel %vm9621, %v9417, %v9629
    %v9638 = vsel %vm9622, %v9418, %v9630
    %v9639 = vtanh.pop %v9631
    %v9640 = vtanh.pop %v9632
    %v9641 = vtanh.pop %v9633
    %v9642 = vtanh.pop %v9634
    %v9643 = vtanh.pop %v9635
    %v9644 = vtanh.pop %v9636
    %v9645 = vtanh.pop %v9637
    %v9646 = vtanh.pop %v9638
    %v9647 = vmul.f32 %v9639, %v9639
    %v9648 = vmul.f32 %v9640, %v9640
    %v9649 = vmul.f32 %v9641, %v9641
    %v9650 = vmul.f32 %v9642, %v9642
    %v9651 = vmul.f32 %v9643, %v9643
    %v9652 = vmul.f32 %v9644, %v9644
    %v9653 = vmul.f32 %v9645, %v9645
    %v9654 = vmul.f32 %v9646, %v9646
    %s9655 = scalar_lea.vmem %s2, 1536
    %9656 = vst.msk [vmem:[%s9655] sm:$0xff] %vm1818, %v9647
    %9657 = vst.msk [vmem:[%s9655 + $0x8] sm:$0xff] %vm1818, %v9648
    %9658 = vst.msk [vmem:[%s9655 + $0x10] sm:$0xff] %vm1818, %v9649
    %9659 = vst.msk [vmem:[%s9655 + $0x18] sm:$0xff] %vm1818, %v9650
    %9660 = vst.msk [vmem:[%s9655 + $0x20] sm:$0xff] %vm1818, %v9651
    %9661 = vst.msk [vmem:[%s9655 + $0x28] sm:$0xff] %vm1818, %v9652
    %9662 = vst.msk [vmem:[%s9655 + $0x30] sm:$0xff] %vm1818, %v9653
    %9663 = vst.msk [vmem:[%s9655 + $0x38] sm:$0xf] %vm1826, %v9654
    // Predicated region
    $region14: #{_model_forward.1} parent=1 // pred_check
      _
    $region15: #{_model_forward.1} parent=1 // pred_check_branch
      %9665 = sbr.rel (0) target = $region17
    $region16: #{_model_forward.1} parent=1 // pred_region
      _
    $region17: #{_model_forward.1} parent=1 // pred_fallthru
      _
    // Predicated region
    $region18: #{_model_forward.1} parent=1 // pred_check
      _
    $region19: #{_model_forward.1} parent=1 // pred_check_branch
      %9667 = sbr.rel (0) target = $region21
    $region20: #{_model_forward.1} parent=1 // pred_region
      _
    $region21: #{_model_forward.1} parent=1 // pred_fallthru
      _
    %9668 = vsyncpa [#allocation3], 1

</llo_original>
